<compile_context>
chip_gen: v7x
topology: tpu7x:2x2x1
jax: 0.10.0
libtpu: 0.0.40
codegen_flags: <defaults>
</compile_context>

<pallas_src>
import functools

import jax
import jax.numpy as jnp
from jax import lax
from jax.experimental import pallas as pl
from jax.experimental.pallas import tpu as pltpu

# ----- norse default parameters (LIFParameters / LIParameters, dt=0.01) -----
DT = 0.01
# LIF layer
LIF_TAU_SYN_INV = 1.0 / 5e-3   # 200.0
LIF_TAU_MEM_INV = 1.0 / 1e-2   # 100.0
LIF_V_LEAK = 0.0
LIF_V_TH = 1.0
LIF_V_RESET = 0.0
# LI readout
LI_TAU_SYN_INV = 1.0 / 5e-3
LI_TAU_MEM_INV = 1.0 / 1e-2
LI_V_LEAK = 0.0

LANE = 128          # vreg lanes
BATCH_ALIGN = 16    # batch is second-minor of bf16 blocks -> align to (16, 128)


def _round_up(x, m):
    return (x + m - 1) // m * m


def _pick_time_chunk(t, max_chunk=32):
    """Return (chunk, padded_T).

    Prefers the largest divisor of T <= max_chunk.  If T has no divisor >= 8
    (e.g. large prime T), pad T up to a multiple of max_chunk instead of
    degrading to chunk=1 (zero input current never spikes; the padded tail is
    sliced off after the call).
    """
    best = 1
    for c in range(min(t, max_chunk), 0, -1):
        if t % c == 0:
            best = c
            break
    if best >= 8 or t <= max_chunk:
        return best, t
    return max_chunk, _round_up(t, max_chunk)


def _pick_batch_tile(b_pad, max_tile=64, min_tiles=2):
    """Largest 16-aligned batch tile <= max_tile dividing b_pad, preferring at
    least `min_tiles` tiles so the "parallel" grid axis can shard across the
    two v7x TensorCores.  Falls back to a single tile when B is too small.
    """
    # TODO(synk): on v6e/v5e (128 MiB VMEM) max_tile can be raised toward 128
    # once vreg pressure of the unrolled inner loop is checked (review #7/#8).
    best = None
    start = min(b_pad, max_tile)
    start -= start % BATCH_ALIGN
    for tb in range(start, 0, -BATCH_ALIGN):
        if b_pad % tb == 0:
            if best is None:
                best = tb
            if b_pad // tb >= min_tiles:
                return tb
    return best if best is not None else b_pad


def _recurrent_kernel(x_ref, w_in_ref, wcat_ref, spikes_ref, readout_ref,
                      cur_s, v_s, i_s, rc_s, rv_s, ri_s):
    """One grid step == one (batch-tile, time-chunk).

    Grid = (n_batch_tiles ["parallel"], n_time_chunks ["arbitrary"]).
    LIF / LI state lives in VMEM scratch and carries across the sequential
    time axis; it is re-zeroed whenever a new batch tile starts (t_blk == 0).
    """
    t_blk = pl.program_id(1)
    chunk, tb, hid = cur_s.shape            # static (time-chunk, batch-tile, H)

    @pl.when(t_blk == 0)
    def _():
        # layer.initial_state / readout.initial_state -> zeros
        v_s[...] = jnp.zeros_like(v_s)
        i_s[...] = jnp.zeros_like(i_s)
        rc_s[...] = jnp.zeros_like(rc_s)    # z_{-1} @ w_rec == 0
        rv_s[...] = jnp.zeros_like(rv_s)
        ri_s[...] = jnp.zeros_like(ri_s)

    # --- Fused input projection for the whole chunk (review item #1) --------
    # One big parallel MXU GEMM (chunk*TB, F_in) @ (F_in, H), bf16 operands,
    # f32 accumulation.  Result stays in VMEM scratch and is re-loaded per
    # step below (keeps vreg pressure on the hot carried state only).
    f_in = x_ref.shape[-1]
    x2d = x_ref[...].reshape(chunk * tb, f_in)
    cur_s[...] = jnp.dot(
        x2d, w_in_ref[...], preferred_element_type=jnp.float32
    ).reshape(chunk, tb, hid)

    # Fused [w_rec | w_ro] weights stay resident in VMEM; hoist the load.
    # TODO(synk): on v7x (64 MiB VMEM) single-buffer this invariant block
    # (pipeline_mode=pl.Buffered(1) on its BlockSpec) for large H.
    w_cat = wcat_ref[...]                   # (H, H + O), bf16

    v, i = v_s[...], i_s[...]
    rc = rc_s[...]                          # carried z_{t-1} @ w_rec
    rv, ri = rv_s[...], ri_s[...]

    # Fully-unrolled inner time loop (chunk is a small static constant) --
    # gives the scheduler full visibility to overlap VPU state math with the
    # serial MXU matmul chain.
    for tt in range(chunk):
        cur_t = cur_s[tt]                   # (TB, H) f32, x_t @ w_in

        # ---------- LIFCell step (norse lif_step, 'super' fwd == heaviside) --
        v_dec = v + DT * LIF_TAU_MEM_INV * ((LIF_V_LEAK - v) + i)
        i_dec = i + (-DT * LIF_TAU_SYN_INV) * i
        spiked = v_dec > LIF_V_TH
        z_bf = spiked.astype(jnp.bfloat16)  # exact 0/1: matmul LHS and store
        v = jnp.where(spiked, LIF_V_RESET, v_dec)
        i = i_dec + cur_t + rc              # rc == z_{t-1} @ w_rec

        # One fused MXU matmul per step: z @ [w_rec | w_ro] (bf16 operands,
        # f32 accumulate).  The w_rec half is carried to the next step; the
        # w_ro half feeds the readout now.
        zc = jnp.dot(z_bf, w_cat, preferred_element_type=jnp.float32)
        rc = zc[:, :hid]

        # dropout(p=0.2): identity in eval mode
        # TODO(synk): training-mode dropout (random mask + 1/(1-p)) not implemented.

        # ---------- LICell readout step (norse li_step) ----------------------
        i_jump = ri + zc[:, hid:]
        rv = rv + DT * LI_TAU_MEM_INV * ((LI_V_LEAK - rv) + i_jump)
        ri = i_jump + (-DT * LI_TAU_SYN_INV) * i_jump

        # Full (16,128)/(8,128)-aligned, unmasked stores along the time axis.
        spikes_ref[tt] = z_bf               # bf16 store: lossless, half the bytes
        readout_ref[tt] = rv

    # Persist state for the next time chunk of this batch tile.
    v_s[...], i_s[...] = v, i
    rc_s[...] = rc
    rv_s[...], ri_s[...] = rv, ri


@functools.partial(jax.jit, static_argnames=("seq_length", "time_chunk"))
def memory_net_forward(x_btf, w_in, w_rec, w_ro, *, seq_length, time_chunk=None):
    """MemoryNet.forward (is_lsnn=False, eval-mode dropout).

    x_btf : [B, T, F_in]  (PyTorch layout; time is axis 1)
    w_*   : stored pre-transposed as [F_in, F_out] so the math is `x @ W`
            (== torch.nn.functional.linear(x, W.T)).
    Returns (readouts [T//seq_length, seq_length, B, F_out] f32,
             spikes   [T, B, F_in] bf16 — spikes are exactly 0/1 so bf16 is lossless).
    """
    B, T, F_in = x_btf.shape
    F_out = w_ro.shape[1]
    assert T % seq_length == 0, "seq length must divide total time steps"

    B_pad = _round_up(B, BATCH_ALIGN)
    H = _round_up(F_in, LANE)               # hidden == input_features in this module
    O = _round_up(F_out, LANE)
    if time_chunk is not None:
        chunk, T_pad = time_chunk, _round_up(T, time_chunk)
    else:
        chunk, T_pad = _pick_time_chunk(T)
    TB = _pick_batch_tile(B_pad)
    n_b, n_t = B_pad // TB, T_pad // chunk

    # Pad batch (16 for bf16 sublane packing), time (to the chunk) and features
    # (lanes) with zeros so every vector op and store is a full, unmasked tile.
    # Zero input never spikes, so padding cannot leak into the valid region.
    # x is streamed as bf16: spikes and 0/1 values are exact, and bf16 halves
    # the read traffic of the (fused) input projection.
    x_pad = jnp.pad(x_btf.astype(jnp.bfloat16),
                    ((0, B_pad - B), (0, T_pad - T), (0, H - F_in)))
    x_tbf = jnp.transpose(x_pad, (1, 0, 2))             # [T_pad, B_pad, H] bf16

    w_in_pad = jnp.pad(w_in.astype(jnp.bfloat16),
                       ((0, H - F_in), (0, H - F_in)))  # (H, H) bf16, VMEM-resident
    w_rec_pad = jnp.pad(w_rec.astype(jnp.bfloat16),
                        ((0, H - F_in), (0, H - F_in)))
    w_ro_pad = jnp.pad(w_ro.astype(jnp.bfloat16),
                       ((0, H - F_in), (0, O - F_out)))
    # Fuse the two serial matmuls: z @ [w_rec | w_ro].
    w_cat = jnp.concatenate([w_rec_pad, w_ro_pad], axis=1)   # (H, H + O) bf16

    spikes_pad, readout_pad = pl.pallas_call(
        _recurrent_kernel,
        out_shape=(
            jax.ShapeDtypeStruct((T_pad, B_pad, H), jnp.bfloat16),   # spikes (0/1)
            jax.ShapeDtypeStruct((T_pad, B_pad, O), jnp.float32),    # readout v
        ),
        grid_spec=pltpu.PrefetchScalarGridSpec(
            num_scalar_prefetch=0,
            grid=(n_b, n_t),                 # batch tiles (parallel), time chunks (serial)
            in_specs=[
                pl.BlockSpec((chunk, TB, H), lambda b, t: (t, b, 0)),   # x (bf16)
                # Constant-index resident weights (input projection and fused
                # recurrent/readout weights).
                pl.BlockSpec((H, H), lambda b, t: (0, 0)),
                pl.BlockSpec((H, H + O), lambda b, t: (0, 0)),
            ],
            out_specs=[
                pl.BlockSpec((chunk, TB, H), lambda b, t: (t, b, 0)),   # spikes
                pl.BlockSpec((chunk, TB, O), lambda b, t: (t, b, 0)),   # readout v
            ],
            scratch_shapes=[
                pltpu.VMEM((chunk, TB, H), jnp.float32),   # per-chunk currents x@w_in
                pltpu.VMEM((TB, H), jnp.float32),          # LIF v
                pltpu.VMEM((TB, H), jnp.float32),          # LIF i
                pltpu.VMEM((TB, H), jnp.float32),          # carried z_{t-1} @ w_rec
                pltpu.VMEM((TB, O), jnp.float32),          # LI readout v
                pltpu.VMEM((TB, O), jnp.float32),          # LI readout i
            ],
        ),
        compiler_params=pltpu.CompilerParams(
            dimension_semantics=("parallel", "arbitrary"),
            vmem_limit_bytes=64 * 1024 * 1024,
        ),
    )(x_tbf, w_in_pad, w_cat)

    # Trim padding.  Time padding (if any) is a contiguous leading-axis slice;
    # batch/feature unpadding is only materialized when padding was actually
    # applied — for production shapes (B % 16 == 0, F % 128 == 0) the kernel
    # outputs are returned as-is, avoiding an extra HBM pass.
    if T_pad != T:
        spikes_pad = spikes_pad[:T]
        readout_pad = readout_pad[:T]
    spikes = spikes_pad if (B_pad == B and H == F_in) else spikes_pad[:, :B, :F_in]
    ro = readout_pad if (B_pad == B and O == F_out) else readout_pad[:, :B, :F_out]

    # torch.cat(step_spikes)     -> [T, B, F_in]           (bf16, exact 0/1)
    # torch.stack(step_readouts) -> [T // seq_length, seq_length, B, F_out]
    readouts = ro.reshape(T // seq_length, seq_length, B if B_pad == B else B, F_out)
    return readouts, spikes


def _reference_forward(x_btf, w_in, w_rec, w_ro, seq_length):
    """Pure-JAX scan mirroring the PyTorch forward (eval-mode dropout).

    Matmuls use the same bf16-operand / f32-accumulate precision as the kernel
    so the check validates kernel structure rather than weight rounding.
    """
    B, T, F_in = x_btf.shape
    F_out = w_ro.shape[1]
    x_tbf = jnp.transpose(x_btf, (1, 0, 2)).astype(jnp.bfloat16)

    w_in_bf = w_in.astype(jnp.bfloat16)
    w_rec_bf = w_rec.astype(jnp.bfloat16)
    w_ro_bf = w_ro.astype(jnp.bfloat16)

    def step(carry, x_t):
        z, v, i, rv, ri = carry
        v_dec = v + DT * LIF_TAU_MEM_INV * ((LIF_V_LEAK - v) + i)
        i_dec = i + (-DT * LIF_TAU_SYN_INV) * i
        spiked = v_dec > LIF_V_TH
        z_new = spiked.astype(jnp.float32)
        v_new = jnp.where(spiked, LIF_V_RESET, v_dec)
        cur = jnp.dot(x_t, w_in_bf, preferred_element_type=jnp.float32)
        i_new = (i_dec + cur
                 + jnp.dot(z.astype(jnp.bfloat16), w_rec_bf,
                           preferred_element_type=jnp.float32))
        i_jump = ri + jnp.dot(z_new.astype(jnp.bfloat16), w_ro_bf,
                              preferred_element_type=jnp.float32)
        rv_new = rv + DT * LI_TAU_MEM_INV * ((LI_V_LEAK - rv) + i_jump)
        ri_new = i_jump + (-DT * LI_TAU_SYN_INV) * i_jump
        return (z_new, v_new, i_new, rv_new, ri_new), (z_new, rv_new)

    init = (jnp.zeros((B, F_in), jnp.float32),
            jnp.zeros((B, F_in), jnp.float32),
            jnp.zeros((B, F_in), jnp.float32),
            jnp.zeros((B, F_out), jnp.float32),
            jnp.zeros((B, F_out), jnp.float32))
    _, (spikes, readout_v) = lax.scan(step, init, x_tbf)
    readouts = readout_v.reshape(T // seq_length, seq_length, B, F_out)
    return readouts, spikes


if __name__ == "__main__":
    # x: [batch, time, input_features] — small shapes consistent with the module.
    # Batch 32 -> two 16-row batch tiles (exercises the "parallel" grid axis);
    # T 64 with chunk 32 -> two serial time chunks (exercises the state carry).
    B, T, F_in, F_out, SEQ_LEN = 32, 64, 32, 16, 8

    key = jax.random.PRNGKey(0)
    k_x, k_in, k_rec, k_ro = jax.random.split(key, 4)

    x = jax.random.normal(k_x, (B, T, F_in), dtype=jnp.float32)

    # Deterministic weight init mirroring norse cells (stored pre-transposed).
    scale = jnp.sqrt(2.0 / F_in)
    w_in = jax.random.normal(k_in, (F_in, F_in), dtype=jnp.float32) * scale
    w_rec = jax.random.normal(k_rec, (F_in, F_in), dtype=jnp.float32) * scale
    w_ro = jax.random.normal(k_ro, (F_in, F_out), dtype=jnp.float32) * scale

    readouts, spikes = memory_net_forward(x, w_in, w_rec, w_ro, seq_length=SEQ_LEN)
    jax.block_until_ready((readouts, spikes))

    # sanity check vs pure-JAX scan reference
    ref_readouts, ref_spikes = _reference_forward(x, w_in, w_rec, w_ro, SEQ_LEN)
    assert readouts.shape == (T // SEQ_LEN, SEQ_LEN, B, F_out)
    assert spikes.shape == (T, B, F_in)
    assert spikes.dtype == jnp.bfloat16            # lossless 0/1 spike storage
    assert bool(jnp.all(spikes.astype(jnp.float32) == ref_spikes))
    assert jnp.allclose(readouts, ref_readouts, atol=1e-4, rtol=1e-4)

    print("KERNEL_OK")
</pallas_src>

<mosaic_0001>
module attributes {stable_mosaic.version = 11 : i64} {
  func.func @_recurrent_kernel(%arg0: i32, %arg1: i32, %arg2: memref<32x16x128xbf16, #tpu.memory_space<vmem>>, %arg3: memref<128x128xbf16, #tpu.memory_space<vmem>>, %arg4: memref<128x256xbf16, #tpu.memory_space<vmem>>, %arg5: memref<32x16x128xbf16, #tpu.memory_space<vmem>>, %arg6: memref<32x16x128xf32, #tpu.memory_space<vmem>>, %arg7: memref<32x16x128xf32, #tpu.memory_space<vmem>>, %arg8: memref<16x128xf32, #tpu.memory_space<vmem>>, %arg9: memref<16x128xf32, #tpu.memory_space<vmem>>, %arg10: memref<16x128xf32, #tpu.memory_space<vmem>>, %arg11: memref<16x128xf32, #tpu.memory_space<vmem>>, %arg12: memref<16x128xf32, #tpu.memory_space<vmem>>) attributes {dimension_semantics = [#tpu.dimension_semantics<parallel>, #tpu.dimension_semantics<arbitrary>], iteration_bounds = array<i64: 2, 2>, scalar_prefetch = 0 : i64, scratch_operands = 6 : i64, tpu.core_type = #tpu.core_type<tc>, window_params = [{transform_indices = @transform_0, window_bounds = array<i64: 32, 16, 128>}, {pipeline_mode = #tpu.pipeline_mode<synchronous>, transform_indices = @transform_1, window_bounds = array<i64: 128, 128>}, {pipeline_mode = #tpu.pipeline_mode<synchronous>, transform_indices = @transform_2, window_bounds = array<i64: 128, 256>}, {transform_indices = @transform_3, window_bounds = array<i64: 32, 16, 128>}, {transform_indices = @transform_4, window_bounds = array<i64: 32, 16, 128>}]} {
    %c0_i32 = arith.constant 0 : i32
    %0 = arith.cmpi eq, %arg1, %c0_i32 : i32
    %1 = arith.extui %0 : i1 to i32
    %c0_i32_0 = arith.constant 0 : i32
    %2 = arith.cmpi ne, %1, %c0_i32_0 : i32
    scf.if %2 {
      %cst_575 = arith.constant 0.000000e+00 : f32
      %1268 = vector.broadcast %cst_575 : f32 to vector<16x128xf32>
      %c0_576 = arith.constant 0 : index
      %c0_577 = arith.constant 0 : index
      %1269 = vector.load %arg8[%c0_576, %c0_577] : memref<16x128xf32, #tpu.memory_space<vmem>>, vector<16x128xf32>
      tpu.vector_store %arg8[%c0_576, %c0_577], %1268 {strides = array<i32>} : memref<16x128xf32, #tpu.memory_space<vmem>>, vector<16x128xf32>,
      %cst_578 = arith.constant 0.000000e+00 : f32
      %1270 = vector.broadcast %cst_578 : f32 to vector<16x128xf32>
      %c0_579 = arith.constant 0 : index
      %c0_580 = arith.constant 0 : index
      %1271 = vector.load %arg9[%c0_579, %c0_580] : memref<16x128xf32, #tpu.memory_space<vmem>>, vector<16x128xf32>
      tpu.vector_store %arg9[%c0_579, %c0_580], %1270 {strides = array<i32>} : memref<16x128xf32, #tpu.memory_space<vmem>>, vector<16x128xf32>,
      %cst_581 = arith.constant 0.000000e+00 : f32
      %1272 = vector.broadcast %cst_581 : f32 to vector<16x128xf32>
      %c0_582 = arith.constant 0 : index
      %c0_583 = arith.constant 0 : index
      %1273 = vector.load %arg10[%c0_582, %c0_583] : memref<16x128xf32, #tpu.memory_space<vmem>>, vector<16x128xf32>
      tpu.vector_store %arg10[%c0_582, %c0_583], %1272 {strides = array<i32>} : memref<16x128xf32, #tpu.memory_space<vmem>>, vector<16x128xf32>,
      %cst_584 = arith.constant 0.000000e+00 : f32
      %1274 = vector.broadcast %cst_584 : f32 to vector<16x128xf32>
      %c0_585 = arith.constant 0 : index
      %c0_586 = arith.constant 0 : index
      %1275 = vector.load %arg11[%c0_585, %c0_586] : memref<16x128xf32, #tpu.memory_space<vmem>>, vector<16x128xf32>
      tpu.vector_store %arg11[%c0_585, %c0_586], %1274 {strides = array<i32>} : memref<16x128xf32, #tpu.memory_space<vmem>>, vector<16x128xf32>,
      %cst_587 = arith.constant 0.000000e+00 : f32
      %1276 = vector.broadcast %cst_587 : f32 to vector<16x128xf32>
      %c0_588 = arith.constant 0 : index
      %c0_589 = arith.constant 0 : index
      %1277 = vector.load %arg12[%c0_588, %c0_589] : memref<16x128xf32, #tpu.memory_space<vmem>>, vector<16x128xf32>
      tpu.vector_store %arg12[%c0_588, %c0_589], %1276 {strides = array<i32>} : memref<16x128xf32, #tpu.memory_space<vmem>>, vector<16x128xf32>,
    } else {
    }
    %c0 = arith.constant 0 : index
    %c0_1 = arith.constant 0 : index
    %c0_2 = arith.constant 0 : index
    %3 = vector.load %arg2[%c0, %c0_1, %c0_2] : memref<32x16x128xbf16, #tpu.memory_space<vmem>>, vector<32x16x128xbf16>
    %4 = vector.shape_cast %3 : vector<32x16x128xbf16> to vector<512x128xbf16>
    %c0_3 = arith.constant 0 : index
    %c0_4 = arith.constant 0 : index
    %5 = vector.load %arg3[%c0_3, %c0_4] : memref<128x128xbf16, #tpu.memory_space<vmem>>, vector<128x128xbf16>
    %cst = arith.constant dense<0.000000e+00> : vector<512x128xf32>
    %6 = tpu.matmul %4, %5, %cst {dimension_numbers = #tpu.dot_dimension_numbers<[1], [0], [0], [1], [0, 0, 1, 1], [], []>} : vector<512x128xbf16>, vector<128x128xbf16>, vector<512x128xf32> -> vector<512x128xf32>
    %7 = vector.shape_cast %6 : vector<512x128xf32> to vector<32x16x128xf32>
    %c0_5 = arith.constant 0 : index
    %c0_6 = arith.constant 0 : index
    %c0_7 = arith.constant 0 : index
    %8 = vector.load %arg7[%c0_5, %c0_6, %c0_7] : memref<32x16x128xf32, #tpu.memory_space<vmem>>, vector<32x16x128xf32>
    tpu.vector_store %arg7[%c0_5, %c0_6, %c0_7], %7 {strides = array<i32>} : memref<32x16x128xf32, #tpu.memory_space<vmem>>, vector<32x16x128xf32>,
    %c0_8 = arith.constant 0 : index
    %c0_9 = arith.constant 0 : index
    %9 = vector.load %arg4[%c0_8, %c0_9] : memref<128x256xbf16, #tpu.memory_space<vmem>>, vector<128x256xbf16>
    %c0_10 = arith.constant 0 : index
    %c0_11 = arith.constant 0 : index
    %10 = vector.load %arg8[%c0_10, %c0_11] : memref<16x128xf32, #tpu.memory_space<vmem>>, vector<16x128xf32>
    %c0_12 = arith.constant 0 : index
    %c0_13 = arith.constant 0 : index
    %11 = vector.load %arg9[%c0_12, %c0_13] : memref<16x128xf32, #tpu.memory_space<vmem>>, vector<16x128xf32>
    %c0_14 = arith.constant 0 : index
    %c0_15 = arith.constant 0 : index
    %12 = vector.load %arg10[%c0_14, %c0_15] : memref<16x128xf32, #tpu.memory_space<vmem>>, vector<16x128xf32>
    %c0_16 = arith.constant 0 : index
    %c0_17 = arith.constant 0 : index
    %13 = vector.load %arg11[%c0_16, %c0_17] : memref<16x128xf32, #tpu.memory_space<vmem>>, vector<16x128xf32>
    %c0_18 = arith.constant 0 : index
    %c0_19 = arith.constant 0 : index
    %14 = vector.load %arg12[%c0_18, %c0_19] : memref<16x128xf32, #tpu.memory_space<vmem>>, vector<16x128xf32>
    %c0_20 = arith.constant 0 : index
    %c0_21 = arith.constant 0 : index
    %c0_22 = arith.constant 0 : index
    %15 = vector.load %arg7[%c0_20, %c0_21, %c0_22] : memref<32x16x128xf32, #tpu.memory_space<vmem>>, vector<1x16x128xf32>
    %16 = vector.shape_cast %15 : vector<1x16x128xf32> to vector<16x128xf32>
    %cst_23 = arith.constant 0.000000e+00 : f32
    %17 = vector.broadcast %cst_23 : f32 to vector<16x128xf32>
    %18 = arith.subf %17, %10 : vector<16x128xf32>
    %19 = arith.addf %18, %11 : vector<16x128xf32>
    %cst_24 = arith.constant 1.000000e+00 : f32
    %20 = vector.broadcast %cst_24 : f32 to vector<16x128xf32>
    %21 = arith.mulf %20, %19 : vector<16x128xf32>
    %22 = arith.addf %10, %21 : vector<16x128xf32>
    %cst_25 = arith.constant -2.000000e+00 : f32
    %23 = vector.broadcast %cst_25 : f32 to vector<16x128xf32>
    %24 = arith.mulf %23, %11 : vector<16x128xf32>
    %25 = arith.addf %11, %24 : vector<16x128xf32>
    %cst_26 = arith.constant 1.000000e+00 : f32
    %26 = vector.broadcast %cst_26 : f32 to vector<16x128xf32>
    %27 = arith.cmpf ogt, %22, %26 : vector<16x128xf32>
    %28 = arith.extui %27 : vector<16x128xi1> to vector<16x128xi32>
    %29 = arith.sitofp %28 : vector<16x128xi32> to vector<16x128xf32>
    %30 = arith.truncf %29 : vector<16x128xf32> to vector<16x128xbf16>
    %cst_27 = arith.constant 0.000000e+00 : f32
    %31 = vector.broadcast %cst_27 : f32 to vector<16x128xf32>
    %32 = arith.select %27, %31, %22 : vector<16x128xi1>, vector<16x128xf32>
    %33 = arith.addf %25, %16 : vector<16x128xf32>
    %34 = arith.addf %33, %12 : vector<16x128xf32>
    %cst_28 = arith.constant dense<0.000000e+00> : vector<16x256xf32>
    %35 = tpu.matmul %30, %9, %cst_28 {dimension_numbers = #tpu.dot_dimension_numbers<[1], [0], [0], [1], [0, 0, 1, 1], [], []>} : vector<16x128xbf16>, vector<128x256xbf16>, vector<16x256xf32> -> vector<16x256xf32>
    %36 = vector.extract_strided_slice %35 {offsets = [0, 0], sizes = [16, 128], strides = [1, 1]} : vector<16x256xf32> to vector<16x128xf32>
    %37 = vector.extract_strided_slice %35 {offsets = [0, 128], sizes = [16, 128], strides = [1, 1]} : vector<16x256xf32> to vector<16x128xf32>
    %38 = arith.addf %14, %37 : vector<16x128xf32>
    %cst_29 = arith.constant 0.000000e+00 : f32
    %39 = vector.broadcast %cst_29 : f32 to vector<16x128xf32>
    %40 = arith.subf %39, %13 : vector<16x128xf32>
    %41 = arith.addf %40, %38 : vector<16x128xf32>
    %cst_30 = arith.constant 1.000000e+00 : f32
    %42 = vector.broadcast %cst_30 : f32 to vector<16x128xf32>
    %43 = arith.mulf %42, %41 : vector<16x128xf32>
    %44 = arith.addf %13, %43 : vector<16x128xf32>
    %cst_31 = arith.constant -2.000000e+00 : f32
    %45 = vector.broadcast %cst_31 : f32 to vector<16x128xf32>
    %46 = arith.mulf %45, %38 : vector<16x128xf32>
    %47 = arith.addf %38, %46 : vector<16x128xf32>
    %c0_32 = arith.constant 0 : index
    %c0_33 = arith.constant 0 : index
    %c0_34 = arith.constant 0 : index
    %48 = vector.load %arg5[%c0_32, %c0_33, %c0_34] : memref<32x16x128xbf16, #tpu.memory_space<vmem>>, vector<1x16x128xbf16>
    %49 = vector.shape_cast %48 : vector<1x16x128xbf16> to vector<16x128xbf16>
    %50 = vector.shape_cast %30 : vector<16x128xbf16> to vector<1x16x128xbf16>
    tpu.vector_store %arg5[%c0_32, %c0_33, %c0_34], %50 {strides = array<i32>} : memref<32x16x128xbf16, #tpu.memory_space<vmem>>, vector<1x16x128xbf16>,
    %c0_35 = arith.constant 0 : index
    %c0_36 = arith.constant 0 : index
    %c0_37 = arith.constant 0 : index
    %51 = vector.load %arg6[%c0_35, %c0_36, %c0_37] : memref<32x16x128xf32, #tpu.memory_space<vmem>>, vector<1x16x128xf32>
    %52 = vector.shape_cast %51 : vector<1x16x128xf32> to vector<16x128xf32>
    %53 = vector.shape_cast %44 : vector<16x128xf32> to vector<1x16x128xf32>
    tpu.vector_store %arg6[%c0_35, %c0_36, %c0_37], %53 {strides = array<i32>} : memref<32x16x128xf32, #tpu.memory_space<vmem>>, vector<1x16x128xf32>,
    %c1 = arith.constant 1 : index
    %c0_38 = arith.constant 0 : index
    %c0_39 = arith.constant 0 : index
    %54 = vector.load %arg7[%c1, %c0_38, %c0_39] : memref<32x16x128xf32, #tpu.memory_space<vmem>>, vector<1x16x128xf32>
    %55 = vector.shape_cast %54 : vector<1x16x128xf32> to vector<16x128xf32>
    %cst_40 = arith.constant 0.000000e+00 : f32
    %56 = vector.broadcast %cst_40 : f32 to vector<16x128xf32>
    %57 = arith.subf %56, %32 : vector<16x128xf32>
    %58 = arith.addf %57, %34 : vector<16x128xf32>
    %cst_41 = arith.constant 1.000000e+00 : f32
    %59 = vector.broadcast %cst_41 : f32 to vector<16x128xf32>
    %60 = arith.mulf %59, %58 : vector<16x128xf32>
    %61 = arith.addf %32, %60 : vector<16x128xf32>
    %cst_42 = arith.constant -2.000000e+00 : f32
    %62 = vector.broadcast %cst_42 : f32 to vector<16x128xf32>
    %63 = arith.mulf %62, %34 : vector<16x128xf32>
    %64 = arith.addf %34, %63 : vector<16x128xf32>
    %cst_43 = arith.constant 1.000000e+00 : f32
    %65 = vector.broadcast %cst_43 : f32 to vector<16x128xf32>
    %66 = arith.cmpf ogt, %61, %65 : vector<16x128xf32>
    %67 = arith.extui %66 : vector<16x128xi1> to vector<16x128xi32>
    %68 = arith.sitofp %67 : vector<16x128xi32> to vector<16x128xf32>
    %69 = arith.truncf %68 : vector<16x128xf32> to vector<16x128xbf16>
    %cst_44 = arith.constant 0.000000e+00 : f32
    %70 = vector.broadcast %cst_44 : f32 to vector<16x128xf32>
    %71 = arith.select %66, %70, %61 : vector<16x128xi1>, vector<16x128xf32>
    %72 = arith.addf %64, %55 : vector<16x128xf32>
    %73 = arith.addf %72, %36 : vector<16x128xf32>
    %cst_45 = arith.constant dense<0.000000e+00> : vector<16x256xf32>
    %74 = tpu.matmul %69, %9, %cst_45 {dimension_numbers = #tpu.dot_dimension_numbers<[1], [0], [0], [1], [0, 0, 1, 1], [], []>} : vector<16x128xbf16>, vector<128x256xbf16>, vector<16x256xf32> -> vector<16x256xf32>
    %75 = vector.extract_strided_slice %74 {offsets = [0, 0], sizes = [16, 128], strides = [1, 1]} : vector<16x256xf32> to vector<16x128xf32>
    %76 = vector.extract_strided_slice %74 {offsets = [0, 128], sizes = [16, 128], strides = [1, 1]} : vector<16x256xf32> to vector<16x128xf32>
    %77 = arith.addf %47, %76 : vector<16x128xf32>
    %cst_46 = arith.constant 0.000000e+00 : f32
    %78 = vector.broadcast %cst_46 : f32 to vector<16x128xf32>
    %79 = arith.subf %78, %44 : vector<16x128xf32>
    %80 = arith.addf %79, %77 : vector<16x128xf32>
    %cst_47 = arith.constant 1.000000e+00 : f32
    %81 = vector.broadcast %cst_47 : f32 to vector<16x128xf32>
    %82 = arith.mulf %81, %80 : vector<16x128xf32>
    %83 = arith.addf %44, %82 : vector<16x128xf32>
    %cst_48 = arith.constant -2.000000e+00 : f32
    %84 = vector.broadcast %cst_48 : f32 to vector<16x128xf32>
    %85 = arith.mulf %84, %77 : vector<16x128xf32>
    %86 = arith.addf %77, %85 : vector<16x128xf32>
    %c1_49 = arith.constant 1 : index
    %c0_50 = arith.constant 0 : index
    %c0_51 = arith.constant 0 : index
    %87 = vector.load %arg5[%c1_49, %c0_50, %c0_51] : memref<32x16x128xbf16, #tpu.memory_space<vmem>>, vector<1x16x128xbf16>
    %88 = vector.shape_cast %87 : vector<1x16x128xbf16> to vector<16x128xbf16>
    %89 = vector.shape_cast %69 : vector<16x128xbf16> to vector<1x16x128xbf16>
    tpu.vector_store %arg5[%c1_49, %c0_50, %c0_51], %89 {strides = array<i32>} : memref<32x16x128xbf16, #tpu.memory_space<vmem>>, vector<1x16x128xbf16>,
    %c1_52 = arith.constant 1 : index
    %c0_53 = arith.constant 0 : index
    %c0_54 = arith.constant 0 : index
    %90 = vector.load %arg6[%c1_52, %c0_53, %c0_54] : memref<32x16x128xf32, #tpu.memory_space<vmem>>, vector<1x16x128xf32>
    %91 = vector.shape_cast %90 : vector<1x16x128xf32> to vector<16x128xf32>
    %92 = vector.shape_cast %83 : vector<16x128xf32> to vector<1x16x128xf32>
    tpu.vector_store %arg6[%c1_52, %c0_53, %c0_54], %92 {strides = array<i32>} : memref<32x16x128xf32, #tpu.memory_space<vmem>>, vector<1x16x128xf32>,
    %c2 = arith.constant 2 : index
    %c0_55 = arith.constant 0 : index
    %c0_56 = arith.constant 0 : index
    %93 = vector.load %arg7[%c2, %c0_55, %c0_56] : memref<32x16x128xf32, #tpu.memory_space<vmem>>, vector<1x16x128xf32>
    %94 = vector.shape_cast %93 : vector<1x16x128xf32> to vector<16x128xf32>
    %cst_57 = arith.constant 0.000000e+00 : f32
    %95 = vector.broadcast %cst_57 : f32 to vector<16x128xf32>
    %96 = arith.subf %95, %71 : vector<16x128xf32>
    %97 = arith.addf %96, %73 : vector<16x128xf32>
    %cst_58 = arith.constant 1.000000e+00 : f32
    %98 = vector.broadcast %cst_58 : f32 to vector<16x128xf32>
    %99 = arith.mulf %98, %97 : vector<16x128xf32>
    %100 = arith.addf %71, %99 : vector<16x128xf32>
    %cst_59 = arith.constant -2.000000e+00 : f32
    %101 = vector.broadcast %cst_59 : f32 to vector<16x128xf32>
    %102 = arith.mulf %101, %73 : vector<16x128xf32>
    %103 = arith.addf %73, %102 : vector<16x128xf32>
    %cst_60 = arith.constant 1.000000e+00 : f32
    %104 = vector.broadcast %cst_60 : f32 to vector<16x128xf32>
    %105 = arith.cmpf ogt, %100, %104 : vector<16x128xf32>
    %106 = arith.extui %105 : vector<16x128xi1> to vector<16x128xi32>
    %107 = arith.sitofp %106 : vector<16x128xi32> to vector<16x128xf32>
    %108 = arith.truncf %107 : vector<16x128xf32> to vector<16x128xbf16>
    %cst_61 = arith.constant 0.000000e+00 : f32
    %109 = vector.broadcast %cst_61 : f32 to vector<16x128xf32>
    %110 = arith.select %105, %109, %100 : vector<16x128xi1>, vector<16x128xf32>
    %111 = arith.addf %103, %94 : vector<16x128xf32>
    %112 = arith.addf %111, %75 : vector<16x128xf32>
    %cst_62 = arith.constant dense<0.000000e+00> : vector<16x256xf32>
    %113 = tpu.matmul %108, %9, %cst_62 {dimension_numbers = #tpu.dot_dimension_numbers<[1], [0], [0], [1], [0, 0, 1, 1], [], []>} : vector<16x128xbf16>, vector<128x256xbf16>, vector<16x256xf32> -> vector<16x256xf32>
    %114 = vector.extract_strided_slice %113 {offsets = [0, 0], sizes = [16, 128], strides = [1, 1]} : vector<16x256xf32> to vector<16x128xf32>
    %115 = vector.extract_strided_slice %113 {offsets = [0, 128], sizes = [16, 128], strides = [1, 1]} : vector<16x256xf32> to vector<16x128xf32>
    %116 = arith.addf %86, %115 : vector<16x128xf32>
    %cst_63 = arith.constant 0.000000e+00 : f32
    %117 = vector.broadcast %cst_63 : f32 to vector<16x128xf32>
    %118 = arith.subf %117, %83 : vector<16x128xf32>
    %119 = arith.addf %118, %116 : vector<16x128xf32>
    %cst_64 = arith.constant 1.000000e+00 : f32
    %120 = vector.broadcast %cst_64 : f32 to vector<16x128xf32>
    %121 = arith.mulf %120, %119 : vector<16x128xf32>
    %122 = arith.addf %83, %121 : vector<16x128xf32>
    %cst_65 = arith.constant -2.000000e+00 : f32
    %123 = vector.broadcast %cst_65 : f32 to vector<16x128xf32>
    %124 = arith.mulf %123, %116 : vector<16x128xf32>
    %125 = arith.addf %116, %124 : vector<16x128xf32>
    %c2_66 = arith.constant 2 : index
    %c0_67 = arith.constant 0 : index
    %c0_68 = arith.constant 0 : index
    %126 = vector.load %arg5[%c2_66, %c0_67, %c0_68] : memref<32x16x128xbf16, #tpu.memory_space<vmem>>, vector<1x16x128xbf16>
    %127 = vector.shape_cast %126 : vector<1x16x128xbf16> to vector<16x128xbf16>
    %128 = vector.shape_cast %108 : vector<16x128xbf16> to vector<1x16x128xbf16>
    tpu.vector_store %arg5[%c2_66, %c0_67, %c0_68], %128 {strides = array<i32>} : memref<32x16x128xbf16, #tpu.memory_space<vmem>>, vector<1x16x128xbf16>,
    %c2_69 = arith.constant 2 : index
    %c0_70 = arith.constant 0 : index
    %c0_71 = arith.constant 0 : index
    %129 = vector.load %arg6[%c2_69, %c0_70, %c0_71] : memref<32x16x128xf32, #tpu.memory_space<vmem>>, vector<1x16x128xf32>
    %130 = vector.shape_cast %129 : vector<1x16x128xf32> to vector<16x128xf32>
    %131 = vector.shape_cast %122 : vector<16x128xf32> to vector<1x16x128xf32>
    tpu.vector_store %arg6[%c2_69, %c0_70, %c0_71], %131 {strides = array<i32>} : memref<32x16x128xf32, #tpu.memory_space<vmem>>, vector<1x16x128xf32>,
    %c3 = arith.constant 3 : index
    %c0_72 = arith.constant 0 : index
    %c0_73 = arith.constant 0 : index
    %132 = vector.load %arg7[%c3, %c0_72, %c0_73] : memref<32x16x128xf32, #tpu.memory_space<vmem>>, vector<1x16x128xf32>
    %133 = vector.shape_cast %132 : vector<1x16x128xf32> to vector<16x128xf32>
    %cst_74 = arith.constant 0.000000e+00 : f32
    %134 = vector.broadcast %cst_74 : f32 to vector<16x128xf32>
    %135 = arith.subf %134, %110 : vector<16x128xf32>
    %136 = arith.addf %135, %112 : vector<16x128xf32>
    %cst_75 = arith.constant 1.000000e+00 : f32
    %137 = vector.broadcast %cst_75 : f32 to vector<16x128xf32>
    %138 = arith.mulf %137, %136 : vector<16x128xf32>
    %139 = arith.addf %110, %138 : vector<16x128xf32>
    %cst_76 = arith.constant -2.000000e+00 : f32
    %140 = vector.broadcast %cst_76 : f32 to vector<16x128xf32>
    %141 = arith.mulf %140, %112 : vector<16x128xf32>
    %142 = arith.addf %112, %141 : vector<16x128xf32>
    %cst_77 = arith.constant 1.000000e+00 : f32
    %143 = vector.broadcast %cst_77 : f32 to vector<16x128xf32>
    %144 = arith.cmpf ogt, %139, %143 : vector<16x128xf32>
    %145 = arith.extui %144 : vector<16x128xi1> to vector<16x128xi32>
    %146 = arith.sitofp %145 : vector<16x128xi32> to vector<16x128xf32>
    %147 = arith.truncf %146 : vector<16x128xf32> to vector<16x128xbf16>
    %cst_78 = arith.constant 0.000000e+00 : f32
    %148 = vector.broadcast %cst_78 : f32 to vector<16x128xf32>
    %149 = arith.select %144, %148, %139 : vector<16x128xi1>, vector<16x128xf32>
    %150 = arith.addf %142, %133 : vector<16x128xf32>
    %151 = arith.addf %150, %114 : vector<16x128xf32>
    %cst_79 = arith.constant dense<0.000000e+00> : vector<16x256xf32>
    %152 = tpu.matmul %147, %9, %cst_79 {dimension_numbers = #tpu.dot_dimension_numbers<[1], [0], [0], [1], [0, 0, 1, 1], [], []>} : vector<16x128xbf16>, vector<128x256xbf16>, vector<16x256xf32> -> vector<16x256xf32>
    %153 = vector.extract_strided_slice %152 {offsets = [0, 0], sizes = [16, 128], strides = [1, 1]} : vector<16x256xf32> to vector<16x128xf32>
    %154 = vector.extract_strided_slice %152 {offsets = [0, 128], sizes = [16, 128], strides = [1, 1]} : vector<16x256xf32> to vector<16x128xf32>
    %155 = arith.addf %125, %154 : vector<16x128xf32>
    %cst_80 = arith.constant 0.000000e+00 : f32
    %156 = vector.broadcast %cst_80 : f32 to vector<16x128xf32>
    %157 = arith.subf %156, %122 : vector<16x128xf32>
    %158 = arith.addf %157, %155 : vector<16x128xf32>
    %cst_81 = arith.constant 1.000000e+00 : f32
    %159 = vector.broadcast %cst_81 : f32 to vector<16x128xf32>
    %160 = arith.mulf %159, %158 : vector<16x128xf32>
    %161 = arith.addf %122, %160 : vector<16x128xf32>
    %cst_82 = arith.constant -2.000000e+00 : f32
    %162 = vector.broadcast %cst_82 : f32 to vector<16x128xf32>
    %163 = arith.mulf %162, %155 : vector<16x128xf32>
    %164 = arith.addf %155, %163 : vector<16x128xf32>
    %c3_83 = arith.constant 3 : index
    %c0_84 = arith.constant 0 : index
    %c0_85 = arith.constant 0 : index
    %165 = vector.load %arg5[%c3_83, %c0_84, %c0_85] : memref<32x16x128xbf16, #tpu.memory_space<vmem>>, vector<1x16x128xbf16>
    %166 = vector.shape_cast %165 : vector<1x16x128xbf16> to vector<16x128xbf16>
    %167 = vector.shape_cast %147 : vector<16x128xbf16> to vector<1x16x128xbf16>
    tpu.vector_store %arg5[%c3_83, %c0_84, %c0_85], %167 {strides = array<i32>} : memref<32x16x128xbf16, #tpu.memory_space<vmem>>, vector<1x16x128xbf16>,
    %c3_86 = arith.constant 3 : index
    %c0_87 = arith.constant 0 : index
    %c0_88 = arith.constant 0 : index
    %168 = vector.load %arg6[%c3_86, %c0_87, %c0_88] : memref<32x16x128xf32, #tpu.memory_space<vmem>>, vector<1x16x128xf32>
    %169 = vector.shape_cast %168 : vector<1x16x128xf32> to vector<16x128xf32>
    %170 = vector.shape_cast %161 : vector<16x128xf32> to vector<1x16x128xf32>
    tpu.vector_store %arg6[%c3_86, %c0_87, %c0_88], %170 {strides = array<i32>} : memref<32x16x128xf32, #tpu.memory_space<vmem>>, vector<1x16x128xf32>,
    %c4 = arith.constant 4 : index
    %c0_89 = arith.constant 0 : index
    %c0_90 = arith.constant 0 : index
    %171 = vector.load %arg7[%c4, %c0_89, %c0_90] : memref<32x16x128xf32, #tpu.memory_space<vmem>>, vector<1x16x128xf32>
    %172 = vector.shape_cast %171 : vector<1x16x128xf32> to vector<16x128xf32>
    %cst_91 = arith.constant 0.000000e+00 : f32
    %173 = vector.broadcast %cst_91 : f32 to vector<16x128xf32>
    %174 = arith.subf %173, %149 : vector<16x128xf32>
    %175 = arith.addf %174, %151 : vector<16x128xf32>
    %cst_92 = arith.constant 1.000000e+00 : f32
    %176 = vector.broadcast %cst_92 : f32 to vector<16x128xf32>
    %177 = arith.mulf %176, %175 : vector<16x128xf32>
    %178 = arith.addf %149, %177 : vector<16x128xf32>
    %cst_93 = arith.constant -2.000000e+00 : f32
    %179 = vector.broadcast %cst_93 : f32 to vector<16x128xf32>
    %180 = arith.mulf %179, %151 : vector<16x128xf32>
    %181 = arith.addf %151, %180 : vector<16x128xf32>
    %cst_94 = arith.constant 1.000000e+00 : f32
    %182 = vector.broadcast %cst_94 : f32 to vector<16x128xf32>
    %183 = arith.cmpf ogt, %178, %182 : vector<16x128xf32>
    %184 = arith.extui %183 : vector<16x128xi1> to vector<16x128xi32>
    %185 = arith.sitofp %184 : vector<16x128xi32> to vector<16x128xf32>
    %186 = arith.truncf %185 : vector<16x128xf32> to vector<16x128xbf16>
    %cst_95 = arith.constant 0.000000e+00 : f32
    %187 = vector.broadcast %cst_95 : f32 to vector<16x128xf32>
    %188 = arith.select %183, %187, %178 : vector<16x128xi1>, vector<16x128xf32>
    %189 = arith.addf %181, %172 : vector<16x128xf32>
    %190 = arith.addf %189, %153 : vector<16x128xf32>
    %cst_96 = arith.constant dense<0.000000e+00> : vector<16x256xf32>
    %191 = tpu.matmul %186, %9, %cst_96 {dimension_numbers = #tpu.dot_dimension_numbers<[1], [0], [0], [1], [0, 0, 1, 1], [], []>} : vector<16x128xbf16>, vector<128x256xbf16>, vector<16x256xf32> -> vector<16x256xf32>
    %192 = vector.extract_strided_slice %191 {offsets = [0, 0], sizes = [16, 128], strides = [1, 1]} : vector<16x256xf32> to vector<16x128xf32>
    %193 = vector.extract_strided_slice %191 {offsets = [0, 128], sizes = [16, 128], strides = [1, 1]} : vector<16x256xf32> to vector<16x128xf32>
    %194 = arith.addf %164, %193 : vector<16x128xf32>
    %cst_97 = arith.constant 0.000000e+00 : f32
    %195 = vector.broadcast %cst_97 : f32 to vector<16x128xf32>
    %196 = arith.subf %195, %161 : vector<16x128xf32>
    %197 = arith.addf %196, %194 : vector<16x128xf32>
    %cst_98 = arith.constant 1.000000e+00 : f32
    %198 = vector.broadcast %cst_98 : f32 to vector<16x128xf32>
    %199 = arith.mulf %198, %197 : vector<16x128xf32>
    %200 = arith.addf %161, %199 : vector<16x128xf32>
    %cst_99 = arith.constant -2.000000e+00 : f32
    %201 = vector.broadcast %cst_99 : f32 to vector<16x128xf32>
    %202 = arith.mulf %201, %194 : vector<16x128xf32>
    %203 = arith.addf %194, %202 : vector<16x128xf32>
    %c4_100 = arith.constant 4 : index
    %c0_101 = arith.constant 0 : index
    %c0_102 = arith.constant 0 : index
    %204 = vector.load %arg5[%c4_100, %c0_101, %c0_102] : memref<32x16x128xbf16, #tpu.memory_space<vmem>>, vector<1x16x128xbf16>
    %205 = vector.shape_cast %204 : vector<1x16x128xbf16> to vector<16x128xbf16>
    %206 = vector.shape_cast %186 : vector<16x128xbf16> to vector<1x16x128xbf16>
    tpu.vector_store %arg5[%c4_100, %c0_101, %c0_102], %206 {strides = array<i32>} : memref<32x16x128xbf16, #tpu.memory_space<vmem>>, vector<1x16x128xbf16>,
    %c4_103 = arith.constant 4 : index
    %c0_104 = arith.constant 0 : index
    %c0_105 = arith.constant 0 : index
    %207 = vector.load %arg6[%c4_103, %c0_104, %c0_105] : memref<32x16x128xf32, #tpu.memory_space<vmem>>, vector<1x16x128xf32>
    %208 = vector.shape_cast %207 : vector<1x16x128xf32> to vector<16x128xf32>
    %209 = vector.shape_cast %200 : vector<16x128xf32> to vector<1x16x128xf32>
    tpu.vector_store %arg6[%c4_103, %c0_104, %c0_105], %209 {strides = array<i32>} : memref<32x16x128xf32, #tpu.memory_space<vmem>>, vector<1x16x128xf32>,
    %c5 = arith.constant 5 : index
    %c0_106 = arith.constant 0 : index
    %c0_107 = arith.constant 0 : index
    %210 = vector.load %arg7[%c5, %c0_106, %c0_107] : memref<32x16x128xf32, #tpu.memory_space<vmem>>, vector<1x16x128xf32>
    %211 = vector.shape_cast %210 : vector<1x16x128xf32> to vector<16x128xf32>
    %cst_108 = arith.constant 0.000000e+00 : f32
    %212 = vector.broadcast %cst_108 : f32 to vector<16x128xf32>
    %213 = arith.subf %212, %188 : vector<16x128xf32>
    %214 = arith.addf %213, %190 : vector<16x128xf32>
    %cst_109 = arith.constant 1.000000e+00 : f32
    %215 = vector.broadcast %cst_109 : f32 to vector<16x128xf32>
    %216 = arith.mulf %215, %214 : vector<16x128xf32>
    %217 = arith.addf %188, %216 : vector<16x128xf32>
    %cst_110 = arith.constant -2.000000e+00 : f32
    %218 = vector.broadcast %cst_110 : f32 to vector<16x128xf32>
    %219 = arith.mulf %218, %190 : vector<16x128xf32>
    %220 = arith.addf %190, %219 : vector<16x128xf32>
    %cst_111 = arith.constant 1.000000e+00 : f32
    %221 = vector.broadcast %cst_111 : f32 to vector<16x128xf32>
    %222 = arith.cmpf ogt, %217, %221 : vector<16x128xf32>
    %223 = arith.extui %222 : vector<16x128xi1> to vector<16x128xi32>
    %224 = arith.sitofp %223 : vector<16x128xi32> to vector<16x128xf32>
    %225 = arith.truncf %224 : vector<16x128xf32> to vector<16x128xbf16>
    %cst_112 = arith.constant 0.000000e+00 : f32
    %226 = vector.broadcast %cst_112 : f32 to vector<16x128xf32>
    %227 = arith.select %222, %226, %217 : vector<16x128xi1>, vector<16x128xf32>
    %228 = arith.addf %220, %211 : vector<16x128xf32>
    %229 = arith.addf %228, %192 : vector<16x128xf32>
    %cst_113 = arith.constant dense<0.000000e+00> : vector<16x256xf32>
    %230 = tpu.matmul %225, %9, %cst_113 {dimension_numbers = #tpu.dot_dimension_numbers<[1], [0], [0], [1], [0, 0, 1, 1], [], []>} : vector<16x128xbf16>, vector<128x256xbf16>, vector<16x256xf32> -> vector<16x256xf32>
    %231 = vector.extract_strided_slice %230 {offsets = [0, 0], sizes = [16, 128], strides = [1, 1]} : vector<16x256xf32> to vector<16x128xf32>
    %232 = vector.extract_strided_slice %230 {offsets = [0, 128], sizes = [16, 128], strides = [1, 1]} : vector<16x256xf32> to vector<16x128xf32>
    %233 = arith.addf %203, %232 : vector<16x128xf32>
    %cst_114 = arith.constant 0.000000e+00 : f32
    %234 = vector.broadcast %cst_114 : f32 to vector<16x128xf32>
    %235 = arith.subf %234, %200 : vector<16x128xf32>
    %236 = arith.addf %235, %233 : vector<16x128xf32>
    %cst_115 = arith.constant 1.000000e+00 : f32
    %237 = vector.broadcast %cst_115 : f32 to vector<16x128xf32>
    %238 = arith.mulf %237, %236 : vector<16x128xf32>
    %239 = arith.addf %200, %238 : vector<16x128xf32>
    %cst_116 = arith.constant -2.000000e+00 : f32
    %240 = vector.broadcast %cst_116 : f32 to vector<16x128xf32>
    %241 = arith.mulf %240, %233 : vector<16x128xf32>
    %242 = arith.addf %233, %241 : vector<16x128xf32>
    %c5_117 = arith.constant 5 : index
    %c0_118 = arith.constant 0 : index
    %c0_119 = arith.constant 0 : index
    %243 = vector.load %arg5[%c5_117, %c0_118, %c0_119] : memref<32x16x128xbf16, #tpu.memory_space<vmem>>, vector<1x16x128xbf16>
    %244 = vector.shape_cast %243 : vector<1x16x128xbf16> to vector<16x128xbf16>
    %245 = vector.shape_cast %225 : vector<16x128xbf16> to vector<1x16x128xbf16>
    tpu.vector_store %arg5[%c5_117, %c0_118, %c0_119], %245 {strides = array<i32>} : memref<32x16x128xbf16, #tpu.memory_space<vmem>>, vector<1x16x128xbf16>,
    %c5_120 = arith.constant 5 : index
    %c0_121 = arith.constant 0 : index
    %c0_122 = arith.constant 0 : index
    %246 = vector.load %arg6[%c5_120, %c0_121, %c0_122] : memref<32x16x128xf32, #tpu.memory_space<vmem>>, vector<1x16x128xf32>
    %247 = vector.shape_cast %246 : vector<1x16x128xf32> to vector<16x128xf32>
    %248 = vector.shape_cast %239 : vector<16x128xf32> to vector<1x16x128xf32>
    tpu.vector_store %arg6[%c5_120, %c0_121, %c0_122], %248 {strides = array<i32>} : memref<32x16x128xf32, #tpu.memory_space<vmem>>, vector<1x16x128xf32>,
    %c6 = arith.constant 6 : index
    %c0_123 = arith.constant 0 : index
    %c0_124 = arith.constant 0 : index
    %249 = vector.load %arg7[%c6, %c0_123, %c0_124] : memref<32x16x128xf32, #tpu.memory_space<vmem>>, vector<1x16x128xf32>
    %250 = vector.shape_cast %249 : vector<1x16x128xf32> to vector<16x128xf32>
    %cst_125 = arith.constant 0.000000e+00 : f32
    %251 = vector.broadcast %cst_125 : f32 to vector<16x128xf32>
    %252 = arith.subf %251, %227 : vector<16x128xf32>
    %253 = arith.addf %252, %229 : vector<16x128xf32>
    %cst_126 = arith.constant 1.000000e+00 : f32
    %254 = vector.broadcast %cst_126 : f32 to vector<16x128xf32>
    %255 = arith.mulf %254, %253 : vector<16x128xf32>
    %256 = arith.addf %227, %255 : vector<16x128xf32>
    %cst_127 = arith.constant -2.000000e+00 : f32
    %257 = vector.broadcast %cst_127 : f32 to vector<16x128xf32>
    %258 = arith.mulf %257, %229 : vector<16x128xf32>
    %259 = arith.addf %229, %258 : vector<16x128xf32>
    %cst_128 = arith.constant 1.000000e+00 : f32
    %260 = vector.broadcast %cst_128 : f32 to vector<16x128xf32>
    %261 = arith.cmpf ogt, %256, %260 : vector<16x128xf32>
    %262 = arith.extui %261 : vector<16x128xi1> to vector<16x128xi32>
    %263 = arith.sitofp %262 : vector<16x128xi32> to vector<16x128xf32>
    %264 = arith.truncf %263 : vector<16x128xf32> to vector<16x128xbf16>
    %cst_129 = arith.constant 0.000000e+00 : f32
    %265 = vector.broadcast %cst_129 : f32 to vector<16x128xf32>
    %266 = arith.select %261, %265, %256 : vector<16x128xi1>, vector<16x128xf32>
    %267 = arith.addf %259, %250 : vector<16x128xf32>
    %268 = arith.addf %267, %231 : vector<16x128xf32>
    %cst_130 = arith.constant dense<0.000000e+00> : vector<16x256xf32>
    %269 = tpu.matmul %264, %9, %cst_130 {dimension_numbers = #tpu.dot_dimension_numbers<[1], [0], [0], [1], [0, 0, 1, 1], [], []>} : vector<16x128xbf16>, vector<128x256xbf16>, vector<16x256xf32> -> vector<16x256xf32>
    %270 = vector.extract_strided_slice %269 {offsets = [0, 0], sizes = [16, 128], strides = [1, 1]} : vector<16x256xf32> to vector<16x128xf32>
    %271 = vector.extract_strided_slice %269 {offsets = [0, 128], sizes = [16, 128], strides = [1, 1]} : vector<16x256xf32> to vector<16x128xf32>
    %272 = arith.addf %242, %271 : vector<16x128xf32>
    %cst_131 = arith.constant 0.000000e+00 : f32
    %273 = vector.broadcast %cst_131 : f32 to vector<16x128xf32>
    %274 = arith.subf %273, %239 : vector<16x128xf32>
    %275 = arith.addf %274, %272 : vector<16x128xf32>
    %cst_132 = arith.constant 1.000000e+00 : f32
    %276 = vector.broadcast %cst_132 : f32 to vector<16x128xf32>
    %277 = arith.mulf %276, %275 : vector<16x128xf32>
    %278 = arith.addf %239, %277 : vector<16x128xf32>
    %cst_133 = arith.constant -2.000000e+00 : f32
    %279 = vector.broadcast %cst_133 : f32 to vector<16x128xf32>
    %280 = arith.mulf %279, %272 : vector<16x128xf32>
    %281 = arith.addf %272, %280 : vector<16x128xf32>
    %c6_134 = arith.constant 6 : index
    %c0_135 = arith.constant 0 : index
    %c0_136 = arith.constant 0 : index
    %282 = vector.load %arg5[%c6_134, %c0_135, %c0_136] : memref<32x16x128xbf16, #tpu.memory_space<vmem>>, vector<1x16x128xbf16>
    %283 = vector.shape_cast %282 : vector<1x16x128xbf16> to vector<16x128xbf16>
    %284 = vector.shape_cast %264 : vector<16x128xbf16> to vector<1x16x128xbf16>
    tpu.vector_store %arg5[%c6_134, %c0_135, %c0_136], %284 {strides = array<i32>} : memref<32x16x128xbf16, #tpu.memory_space<vmem>>, vector<1x16x128xbf16>,
    %c6_137 = arith.constant 6 : index
    %c0_138 = arith.constant 0 : index
    %c0_139 = arith.constant 0 : index
    %285 = vector.load %arg6[%c6_137, %c0_138, %c0_139] : memref<32x16x128xf32, #tpu.memory_space<vmem>>, vector<1x16x128xf32>
    %286 = vector.shape_cast %285 : vector<1x16x128xf32> to vector<16x128xf32>
    %287 = vector.shape_cast %278 : vector<16x128xf32> to vector<1x16x128xf32>
    tpu.vector_store %arg6[%c6_137, %c0_138, %c0_139], %287 {strides = array<i32>} : memref<32x16x128xf32, #tpu.memory_space<vmem>>, vector<1x16x128xf32>,
    %c7 = arith.constant 7 : index
    %c0_140 = arith.constant 0 : index
    %c0_141 = arith.constant 0 : index
    %288 = vector.load %arg7[%c7, %c0_140, %c0_141] : memref<32x16x128xf32, #tpu.memory_space<vmem>>, vector<1x16x128xf32>
    %289 = vector.shape_cast %288 : vector<1x16x128xf32> to vector<16x128xf32>
    %cst_142 = arith.constant 0.000000e+00 : f32
    %290 = vector.broadcast %cst_142 : f32 to vector<16x128xf32>
    %291 = arith.subf %290, %266 : vector<16x128xf32>
    %292 = arith.addf %291, %268 : vector<16x128xf32>
    %cst_143 = arith.constant 1.000000e+00 : f32
    %293 = vector.broadcast %cst_143 : f32 to vector<16x128xf32>
    %294 = arith.mulf %293, %292 : vector<16x128xf32>
    %295 = arith.addf %266, %294 : vector<16x128xf32>
    %cst_144 = arith.constant -2.000000e+00 : f32
    %296 = vector.broadcast %cst_144 : f32 to vector<16x128xf32>
    %297 = arith.mulf %296, %268 : vector<16x128xf32>
    %298 = arith.addf %268, %297 : vector<16x128xf32>
    %cst_145 = arith.constant 1.000000e+00 : f32
    %299 = vector.broadcast %cst_145 : f32 to vector<16x128xf32>
    %300 = arith.cmpf ogt, %295, %299 : vector<16x128xf32>
    %301 = arith.extui %300 : vector<16x128xi1> to vector<16x128xi32>
    %302 = arith.sitofp %301 : vector<16x128xi32> to vector<16x128xf32>
    %303 = arith.truncf %302 : vector<16x128xf32> to vector<16x128xbf16>
    %cst_146 = arith.constant 0.000000e+00 : f32
    %304 = vector.broadcast %cst_146 : f32 to vector<16x128xf32>
    %305 = arith.select %300, %304, %295 : vector<16x128xi1>, vector<16x128xf32>
    %306 = arith.addf %298, %289 : vector<16x128xf32>
    %307 = arith.addf %306, %270 : vector<16x128xf32>
    %cst_147 = arith.constant dense<0.000000e+00> : vector<16x256xf32>
    %308 = tpu.matmul %303, %9, %cst_147 {dimension_numbers = #tpu.dot_dimension_numbers<[1], [0], [0], [1], [0, 0, 1, 1], [], []>} : vector<16x128xbf16>, vector<128x256xbf16>, vector<16x256xf32> -> vector<16x256xf32>
    %309 = vector.extract_strided_slice %308 {offsets = [0, 0], sizes = [16, 128], strides = [1, 1]} : vector<16x256xf32> to vector<16x128xf32>
    %310 = vector.extract_strided_slice %308 {offsets = [0, 128], sizes = [16, 128], strides = [1, 1]} : vector<16x256xf32> to vector<16x128xf32>
    %311 = arith.addf %281, %310 : vector<16x128xf32>
    %cst_148 = arith.constant 0.000000e+00 : f32
    %312 = vector.broadcast %cst_148 : f32 to vector<16x128xf32>
    %313 = arith.subf %312, %278 : vector<16x128xf32>
    %314 = arith.addf %313, %311 : vector<16x128xf32>
    %cst_149 = arith.constant 1.000000e+00 : f32
    %315 = vector.broadcast %cst_149 : f32 to vector<16x128xf32>
    %316 = arith.mulf %315, %314 : vector<16x128xf32>
    %317 = arith.addf %278, %316 : vector<16x128xf32>
    %cst_150 = arith.constant -2.000000e+00 : f32
    %318 = vector.broadcast %cst_150 : f32 to vector<16x128xf32>
    %319 = arith.mulf %318, %311 : vector<16x128xf32>
    %320 = arith.addf %311, %319 : vector<16x128xf32>
    %c7_151 = arith.constant 7 : index
    %c0_152 = arith.constant 0 : index
    %c0_153 = arith.constant 0 : index
    %321 = vector.load %arg5[%c7_151, %c0_152, %c0_153] : memref<32x16x128xbf16, #tpu.memory_space<vmem>>, vector<1x16x128xbf16>
    %322 = vector.shape_cast %321 : vector<1x16x128xbf16> to vector<16x128xbf16>
    %323 = vector.shape_cast %303 : vector<16x128xbf16> to vector<1x16x128xbf16>
    tpu.vector_store %arg5[%c7_151, %c0_152, %c0_153], %323 {strides = array<i32>} : memref<32x16x128xbf16, #tpu.memory_space<vmem>>, vector<1x16x128xbf16>,
    %c7_154 = arith.constant 7 : index
    %c0_155 = arith.constant 0 : index
    %c0_156 = arith.constant 0 : index
    %324 = vector.load %arg6[%c7_154, %c0_155, %c0_156] : memref<32x16x128xf32, #tpu.memory_space<vmem>>, vector<1x16x128xf32>
    %325 = vector.shape_cast %324 : vector<1x16x128xf32> to vector<16x128xf32>
    %326 = vector.shape_cast %317 : vector<16x128xf32> to vector<1x16x128xf32>
    tpu.vector_store %arg6[%c7_154, %c0_155, %c0_156], %326 {strides = array<i32>} : memref<32x16x128xf32, #tpu.memory_space<vmem>>, vector<1x16x128xf32>,
    %c8 = arith.constant 8 : index
    %c0_157 = arith.constant 0 : index
    %c0_158 = arith.constant 0 : index
    %327 = vector.load %arg7[%c8, %c0_157, %c0_158] : memref<32x16x128xf32, #tpu.memory_space<vmem>>, vector<1x16x128xf32>
    %328 = vector.shape_cast %327 : vector<1x16x128xf32> to vector<16x128xf32>
    %cst_159 = arith.constant 0.000000e+00 : f32
    %329 = vector.broadcast %cst_159 : f32 to vector<16x128xf32>
    %330 = arith.subf %329, %305 : vector<16x128xf32>
    %331 = arith.addf %330, %307 : vector<16x128xf32>
    %cst_160 = arith.constant 1.000000e+00 : f32
    %332 = vector.broadcast %cst_160 : f32 to vector<16x128xf32>
    %333 = arith.mulf %332, %331 : vector<16x128xf32>
    %334 = arith.addf %305, %333 : vector<16x128xf32>
    %cst_161 = arith.constant -2.000000e+00 : f32
    %335 = vector.broadcast %cst_161 : f32 to vector<16x128xf32>
    %336 = arith.mulf %335, %307 : vector<16x128xf32>
    %337 = arith.addf %307, %336 : vector<16x128xf32>
    %cst_162 = arith.constant 1.000000e+00 : f32
    %338 = vector.broadcast %cst_162 : f32 to vector<16x128xf32>
    %339 = arith.cmpf ogt, %334, %338 : vector<16x128xf32>
    %340 = arith.extui %339 : vector<16x128xi1> to vector<16x128xi32>
    %341 = arith.sitofp %340 : vector<16x128xi32> to vector<16x128xf32>
    %342 = arith.truncf %341 : vector<16x128xf32> to vector<16x128xbf16>
    %cst_163 = arith.constant 0.000000e+00 : f32
    %343 = vector.broadcast %cst_163 : f32 to vector<16x128xf32>
    %344 = arith.select %339, %343, %334 : vector<16x128xi1>, vector<16x128xf32>
    %345 = arith.addf %337, %328 : vector<16x128xf32>
    %346 = arith.addf %345, %309 : vector<16x128xf32>
    %cst_164 = arith.constant dense<0.000000e+00> : vector<16x256xf32>
    %347 = tpu.matmul %342, %9, %cst_164 {dimension_numbers = #tpu.dot_dimension_numbers<[1], [0], [0], [1], [0, 0, 1, 1], [], []>} : vector<16x128xbf16>, vector<128x256xbf16>, vector<16x256xf32> -> vector<16x256xf32>
    %348 = vector.extract_strided_slice %347 {offsets = [0, 0], sizes = [16, 128], strides = [1, 1]} : vector<16x256xf32> to vector<16x128xf32>
    %349 = vector.extract_strided_slice %347 {offsets = [0, 128], sizes = [16, 128], strides = [1, 1]} : vector<16x256xf32> to vector<16x128xf32>
    %350 = arith.addf %320, %349 : vector<16x128xf32>
    %cst_165 = arith.constant 0.000000e+00 : f32
    %351 = vector.broadcast %cst_165 : f32 to vector<16x128xf32>
    %352 = arith.subf %351, %317 : vector<16x128xf32>
    %353 = arith.addf %352, %350 : vector<16x128xf32>
    %cst_166 = arith.constant 1.000000e+00 : f32
    %354 = vector.broadcast %cst_166 : f32 to vector<16x128xf32>
    %355 = arith.mulf %354, %353 : vector<16x128xf32>
    %356 = arith.addf %317, %355 : vector<16x128xf32>
    %cst_167 = arith.constant -2.000000e+00 : f32
    %357 = vector.broadcast %cst_167 : f32 to vector<16x128xf32>
    %358 = arith.mulf %357, %350 : vector<16x128xf32>
    %359 = arith.addf %350, %358 : vector<16x128xf32>
    %c8_168 = arith.constant 8 : index
    %c0_169 = arith.constant 0 : index
    %c0_170 = arith.constant 0 : index
    %360 = vector.load %arg5[%c8_168, %c0_169, %c0_170] : memref<32x16x128xbf16, #tpu.memory_space<vmem>>, vector<1x16x128xbf16>
    %361 = vector.shape_cast %360 : vector<1x16x128xbf16> to vector<16x128xbf16>
    %362 = vector.shape_cast %342 : vector<16x128xbf16> to vector<1x16x128xbf16>
    tpu.vector_store %arg5[%c8_168, %c0_169, %c0_170], %362 {strides = array<i32>} : memref<32x16x128xbf16, #tpu.memory_space<vmem>>, vector<1x16x128xbf16>,
    %c8_171 = arith.constant 8 : index
    %c0_172 = arith.constant 0 : index
    %c0_173 = arith.constant 0 : index
    %363 = vector.load %arg6[%c8_171, %c0_172, %c0_173] : memref<32x16x128xf32, #tpu.memory_space<vmem>>, vector<1x16x128xf32>
    %364 = vector.shape_cast %363 : vector<1x16x128xf32> to vector<16x128xf32>
    %365 = vector.shape_cast %356 : vector<16x128xf32> to vector<1x16x128xf32>
    tpu.vector_store %arg6[%c8_171, %c0_172, %c0_173], %365 {strides = array<i32>} : memref<32x16x128xf32, #tpu.memory_space<vmem>>, vector<1x16x128xf32>,
    %c9 = arith.constant 9 : index
    %c0_174 = arith.constant 0 : index
    %c0_175 = arith.constant 0 : index
    %366 = vector.load %arg7[%c9, %c0_174, %c0_175] : memref<32x16x128xf32, #tpu.memory_space<vmem>>, vector<1x16x128xf32>
    %367 = vector.shape_cast %366 : vector<1x16x128xf32> to vector<16x128xf32>
    %cst_176 = arith.constant 0.000000e+00 : f32
    %368 = vector.broadcast %cst_176 : f32 to vector<16x128xf32>
    %369 = arith.subf %368, %344 : vector<16x128xf32>
    %370 = arith.addf %369, %346 : vector<16x128xf32>
    %cst_177 = arith.constant 1.000000e+00 : f32
    %371 = vector.broadcast %cst_177 : f32 to vector<16x128xf32>
    %372 = arith.mulf %371, %370 : vector<16x128xf32>
    %373 = arith.addf %344, %372 : vector<16x128xf32>
    %cst_178 = arith.constant -2.000000e+00 : f32
    %374 = vector.broadcast %cst_178 : f32 to vector<16x128xf32>
    %375 = arith.mulf %374, %346 : vector<16x128xf32>
    %376 = arith.addf %346, %375 : vector<16x128xf32>
    %cst_179 = arith.constant 1.000000e+00 : f32
    %377 = vector.broadcast %cst_179 : f32 to vector<16x128xf32>
    %378 = arith.cmpf ogt, %373, %377 : vector<16x128xf32>
    %379 = arith.extui %378 : vector<16x128xi1> to vector<16x128xi32>
    %380 = arith.sitofp %379 : vector<16x128xi32> to vector<16x128xf32>
    %381 = arith.truncf %380 : vector<16x128xf32> to vector<16x128xbf16>
    %cst_180 = arith.constant 0.000000e+00 : f32
    %382 = vector.broadcast %cst_180 : f32 to vector<16x128xf32>
    %383 = arith.select %378, %382, %373 : vector<16x128xi1>, vector<16x128xf32>
    %384 = arith.addf %376, %367 : vector<16x128xf32>
    %385 = arith.addf %384, %348 : vector<16x128xf32>
    %cst_181 = arith.constant dense<0.000000e+00> : vector<16x256xf32>
    %386 = tpu.matmul %381, %9, %cst_181 {dimension_numbers = #tpu.dot_dimension_numbers<[1], [0], [0], [1], [0, 0, 1, 1], [], []>} : vector<16x128xbf16>, vector<128x256xbf16>, vector<16x256xf32> -> vector<16x256xf32>
    %387 = vector.extract_strided_slice %386 {offsets = [0, 0], sizes = [16, 128], strides = [1, 1]} : vector<16x256xf32> to vector<16x128xf32>
    %388 = vector.extract_strided_slice %386 {offsets = [0, 128], sizes = [16, 128], strides = [1, 1]} : vector<16x256xf32> to vector<16x128xf32>
    %389 = arith.addf %359, %388 : vector<16x128xf32>
    %cst_182 = arith.constant 0.000000e+00 : f32
    %390 = vector.broadcast %cst_182 : f32 to vector<16x128xf32>
    %391 = arith.subf %390, %356 : vector<16x128xf32>
    %392 = arith.addf %391, %389 : vector<16x128xf32>
    %cst_183 = arith.constant 1.000000e+00 : f32
    %393 = vector.broadcast %cst_183 : f32 to vector<16x128xf32>
    %394 = arith.mulf %393, %392 : vector<16x128xf32>
    %395 = arith.addf %356, %394 : vector<16x128xf32>
    %cst_184 = arith.constant -2.000000e+00 : f32
    %396 = vector.broadcast %cst_184 : f32 to vector<16x128xf32>
    %397 = arith.mulf %396, %389 : vector<16x128xf32>
    %398 = arith.addf %389, %397 : vector<16x128xf32>
    %c9_185 = arith.constant 9 : index
    %c0_186 = arith.constant 0 : index
    %c0_187 = arith.constant 0 : index
    %399 = vector.load %arg5[%c9_185, %c0_186, %c0_187] : memref<32x16x128xbf16, #tpu.memory_space<vmem>>, vector<1x16x128xbf16>
    %400 = vector.shape_cast %399 : vector<1x16x128xbf16> to vector<16x128xbf16>
    %401 = vector.shape_cast %381 : vector<16x128xbf16> to vector<1x16x128xbf16>
    tpu.vector_store %arg5[%c9_185, %c0_186, %c0_187], %401 {strides = array<i32>} : memref<32x16x128xbf16, #tpu.memory_space<vmem>>, vector<1x16x128xbf16>,
    %c9_188 = arith.constant 9 : index
    %c0_189 = arith.constant 0 : index
    %c0_190 = arith.constant 0 : index
    %402 = vector.load %arg6[%c9_188, %c0_189, %c0_190] : memref<32x16x128xf32, #tpu.memory_space<vmem>>, vector<1x16x128xf32>
    %403 = vector.shape_cast %402 : vector<1x16x128xf32> to vector<16x128xf32>
    %404 = vector.shape_cast %395 : vector<16x128xf32> to vector<1x16x128xf32>
    tpu.vector_store %arg6[%c9_188, %c0_189, %c0_190], %404 {strides = array<i32>} : memref<32x16x128xf32, #tpu.memory_space<vmem>>, vector<1x16x128xf32>,
    %c10 = arith.constant 10 : index
    %c0_191 = arith.constant 0 : index
    %c0_192 = arith.constant 0 : index
    %405 = vector.load %arg7[%c10, %c0_191, %c0_192] : memref<32x16x128xf32, #tpu.memory_space<vmem>>, vector<1x16x128xf32>
    %406 = vector.shape_cast %405 : vector<1x16x128xf32> to vector<16x128xf32>
    %cst_193 = arith.constant 0.000000e+00 : f32
    %407 = vector.broadcast %cst_193 : f32 to vector<16x128xf32>
    %408 = arith.subf %407, %383 : vector<16x128xf32>
    %409 = arith.addf %408, %385 : vector<16x128xf32>
    %cst_194 = arith.constant 1.000000e+00 : f32
    %410 = vector.broadcast %cst_194 : f32 to vector<16x128xf32>
    %411 = arith.mulf %410, %409 : vector<16x128xf32>
    %412 = arith.addf %383, %411 : vector<16x128xf32>
    %cst_195 = arith.constant -2.000000e+00 : f32
    %413 = vector.broadcast %cst_195 : f32 to vector<16x128xf32>
    %414 = arith.mulf %413, %385 : vector<16x128xf32>
    %415 = arith.addf %385, %414 : vector<16x128xf32>
    %cst_196 = arith.constant 1.000000e+00 : f32
    %416 = vector.broadcast %cst_196 : f32 to vector<16x128xf32>
    %417 = arith.cmpf ogt, %412, %416 : vector<16x128xf32>
    %418 = arith.extui %417 : vector<16x128xi1> to vector<16x128xi32>
    %419 = arith.sitofp %418 : vector<16x128xi32> to vector<16x128xf32>
    %420 = arith.truncf %419 : vector<16x128xf32> to vector<16x128xbf16>
    %cst_197 = arith.constant 0.000000e+00 : f32
    %421 = vector.broadcast %cst_197 : f32 to vector<16x128xf32>
    %422 = arith.select %417, %421, %412 : vector<16x128xi1>, vector<16x128xf32>
    %423 = arith.addf %415, %406 : vector<16x128xf32>
    %424 = arith.addf %423, %387 : vector<16x128xf32>
    %cst_198 = arith.constant dense<0.000000e+00> : vector<16x256xf32>
    %425 = tpu.matmul %420, %9, %cst_198 {dimension_numbers = #tpu.dot_dimension_numbers<[1], [0], [0], [1], [0, 0, 1, 1], [], []>} : vector<16x128xbf16>, vector<128x256xbf16>, vector<16x256xf32> -> vector<16x256xf32>
    %426 = vector.extract_strided_slice %425 {offsets = [0, 0], sizes = [16, 128], strides = [1, 1]} : vector<16x256xf32> to vector<16x128xf32>
    %427 = vector.extract_strided_slice %425 {offsets = [0, 128], sizes = [16, 128], strides = [1, 1]} : vector<16x256xf32> to vector<16x128xf32>
    %428 = arith.addf %398, %427 : vector<16x128xf32>
    %cst_199 = arith.constant 0.000000e+00 : f32
    %429 = vector.broadcast %cst_199 : f32 to vector<16x128xf32>
    %430 = arith.subf %429, %395 : vector<16x128xf32>
    %431 = arith.addf %430, %428 : vector<16x128xf32>
    %cst_200 = arith.constant 1.000000e+00 : f32
    %432 = vector.broadcast %cst_200 : f32 to vector<16x128xf32>
    %433 = arith.mulf %432, %431 : vector<16x128xf32>
    %434 = arith.addf %395, %433 : vector<16x128xf32>
    %cst_201 = arith.constant -2.000000e+00 : f32
    %435 = vector.broadcast %cst_201 : f32 to vector<16x128xf32>
    %436 = arith.mulf %435, %428 : vector<16x128xf32>
    %437 = arith.addf %428, %436 : vector<16x128xf32>
    %c10_202 = arith.constant 10 : index
    %c0_203 = arith.constant 0 : index
    %c0_204 = arith.constant 0 : index
    %438 = vector.load %arg5[%c10_202, %c0_203, %c0_204] : memref<32x16x128xbf16, #tpu.memory_space<vmem>>, vector<1x16x128xbf16>
    %439 = vector.shape_cast %438 : vector<1x16x128xbf16> to vector<16x128xbf16>
    %440 = vector.shape_cast %420 : vector<16x128xbf16> to vector<1x16x128xbf16>
    tpu.vector_store %arg5[%c10_202, %c0_203, %c0_204], %440 {strides = array<i32>} : memref<32x16x128xbf16, #tpu.memory_space<vmem>>, vector<1x16x128xbf16>,
    %c10_205 = arith.constant 10 : index
    %c0_206 = arith.constant 0 : index
    %c0_207 = arith.constant 0 : index
    %441 = vector.load %arg6[%c10_205, %c0_206, %c0_207] : memref<32x16x128xf32, #tpu.memory_space<vmem>>, vector<1x16x128xf32>
    %442 = vector.shape_cast %441 : vector<1x16x128xf32> to vector<16x128xf32>
    %443 = vector.shape_cast %434 : vector<16x128xf32> to vector<1x16x128xf32>
    tpu.vector_store %arg6[%c10_205, %c0_206, %c0_207], %443 {strides = array<i32>} : memref<32x16x128xf32, #tpu.memory_space<vmem>>, vector<1x16x128xf32>,
    %c11 = arith.constant 11 : index
    %c0_208 = arith.constant 0 : index
    %c0_209 = arith.constant 0 : index
    %444 = vector.load %arg7[%c11, %c0_208, %c0_209] : memref<32x16x128xf32, #tpu.memory_space<vmem>>, vector<1x16x128xf32>
    %445 = vector.shape_cast %444 : vector<1x16x128xf32> to vector<16x128xf32>
    %cst_210 = arith.constant 0.000000e+00 : f32
    %446 = vector.broadcast %cst_210 : f32 to vector<16x128xf32>
    %447 = arith.subf %446, %422 : vector<16x128xf32>
    %448 = arith.addf %447, %424 : vector<16x128xf32>
    %cst_211 = arith.constant 1.000000e+00 : f32
    %449 = vector.broadcast %cst_211 : f32 to vector<16x128xf32>
    %450 = arith.mulf %449, %448 : vector<16x128xf32>
    %451 = arith.addf %422, %450 : vector<16x128xf32>
    %cst_212 = arith.constant -2.000000e+00 : f32
    %452 = vector.broadcast %cst_212 : f32 to vector<16x128xf32>
    %453 = arith.mulf %452, %424 : vector<16x128xf32>
    %454 = arith.addf %424, %453 : vector<16x128xf32>
    %cst_213 = arith.constant 1.000000e+00 : f32
    %455 = vector.broadcast %cst_213 : f32 to vector<16x128xf32>
    %456 = arith.cmpf ogt, %451, %455 : vector<16x128xf32>
    %457 = arith.extui %456 : vector<16x128xi1> to vector<16x128xi32>
    %458 = arith.sitofp %457 : vector<16x128xi32> to vector<16x128xf32>
    %459 = arith.truncf %458 : vector<16x128xf32> to vector<16x128xbf16>
    %cst_214 = arith.constant 0.000000e+00 : f32
    %460 = vector.broadcast %cst_214 : f32 to vector<16x128xf32>
    %461 = arith.select %456, %460, %451 : vector<16x128xi1>, vector<16x128xf32>
    %462 = arith.addf %454, %445 : vector<16x128xf32>
    %463 = arith.addf %462, %426 : vector<16x128xf32>
    %cst_215 = arith.constant dense<0.000000e+00> : vector<16x256xf32>
    %464 = tpu.matmul %459, %9, %cst_215 {dimension_numbers = #tpu.dot_dimension_numbers<[1], [0], [0], [1], [0, 0, 1, 1], [], []>} : vector<16x128xbf16>, vector<128x256xbf16>, vector<16x256xf32> -> vector<16x256xf32>
    %465 = vector.extract_strided_slice %464 {offsets = [0, 0], sizes = [16, 128], strides = [1, 1]} : vector<16x256xf32> to vector<16x128xf32>
    %466 = vector.extract_strided_slice %464 {offsets = [0, 128], sizes = [16, 128], strides = [1, 1]} : vector<16x256xf32> to vector<16x128xf32>
    %467 = arith.addf %437, %466 : vector<16x128xf32>
    %cst_216 = arith.constant 0.000000e+00 : f32
    %468 = vector.broadcast %cst_216 : f32 to vector<16x128xf32>
    %469 = arith.subf %468, %434 : vector<16x128xf32>
    %470 = arith.addf %469, %467 : vector<16x128xf32>
    %cst_217 = arith.constant 1.000000e+00 : f32
    %471 = vector.broadcast %cst_217 : f32 to vector<16x128xf32>
    %472 = arith.mulf %471, %470 : vector<16x128xf32>
    %473 = arith.addf %434, %472 : vector<16x128xf32>
    %cst_218 = arith.constant -2.000000e+00 : f32
    %474 = vector.broadcast %cst_218 : f32 to vector<16x128xf32>
    %475 = arith.mulf %474, %467 : vector<16x128xf32>
    %476 = arith.addf %467, %475 : vector<16x128xf32>
    %c11_219 = arith.constant 11 : index
    %c0_220 = arith.constant 0 : index
    %c0_221 = arith.constant 0 : index
    %477 = vector.load %arg5[%c11_219, %c0_220, %c0_221] : memref<32x16x128xbf16, #tpu.memory_space<vmem>>, vector<1x16x128xbf16>
    %478 = vector.shape_cast %477 : vector<1x16x128xbf16> to vector<16x128xbf16>
    %479 = vector.shape_cast %459 : vector<16x128xbf16> to vector<1x16x128xbf16>
    tpu.vector_store %arg5[%c11_219, %c0_220, %c0_221], %479 {strides = array<i32>} : memref<32x16x128xbf16, #tpu.memory_space<vmem>>, vector<1x16x128xbf16>,
    %c11_222 = arith.constant 11 : index
    %c0_223 = arith.constant 0 : index
    %c0_224 = arith.constant 0 : index
    %480 = vector.load %arg6[%c11_222, %c0_223, %c0_224] : memref<32x16x128xf32, #tpu.memory_space<vmem>>, vector<1x16x128xf32>
    %481 = vector.shape_cast %480 : vector<1x16x128xf32> to vector<16x128xf32>
    %482 = vector.shape_cast %473 : vector<16x128xf32> to vector<1x16x128xf32>
    tpu.vector_store %arg6[%c11_222, %c0_223, %c0_224], %482 {strides = array<i32>} : memref<32x16x128xf32, #tpu.memory_space<vmem>>, vector<1x16x128xf32>,
    %c12 = arith.constant 12 : index
    %c0_225 = arith.constant 0 : index
    %c0_226 = arith.constant 0 : index
    %483 = vector.load %arg7[%c12, %c0_225, %c0_226] : memref<32x16x128xf32, #tpu.memory_space<vmem>>, vector<1x16x128xf32>
    %484 = vector.shape_cast %483 : vector<1x16x128xf32> to vector<16x128xf32>
    %cst_227 = arith.constant 0.000000e+00 : f32
    %485 = vector.broadcast %cst_227 : f32 to vector<16x128xf32>
    %486 = arith.subf %485, %461 : vector<16x128xf32>
    %487 = arith.addf %486, %463 : vector<16x128xf32>
    %cst_228 = arith.constant 1.000000e+00 : f32
    %488 = vector.broadcast %cst_228 : f32 to vector<16x128xf32>
    %489 = arith.mulf %488, %487 : vector<16x128xf32>
    %490 = arith.addf %461, %489 : vector<16x128xf32>
    %cst_229 = arith.constant -2.000000e+00 : f32
    %491 = vector.broadcast %cst_229 : f32 to vector<16x128xf32>
    %492 = arith.mulf %491, %463 : vector<16x128xf32>
    %493 = arith.addf %463, %492 : vector<16x128xf32>
    %cst_230 = arith.constant 1.000000e+00 : f32
    %494 = vector.broadcast %cst_230 : f32 to vector<16x128xf32>
    %495 = arith.cmpf ogt, %490, %494 : vector<16x128xf32>
    %496 = arith.extui %495 : vector<16x128xi1> to vector<16x128xi32>
    %497 = arith.sitofp %496 : vector<16x128xi32> to vector<16x128xf32>
    %498 = arith.truncf %497 : vector<16x128xf32> to vector<16x128xbf16>
    %cst_231 = arith.constant 0.000000e+00 : f32
    %499 = vector.broadcast %cst_231 : f32 to vector<16x128xf32>
    %500 = arith.select %495, %499, %490 : vector<16x128xi1>, vector<16x128xf32>
    %501 = arith.addf %493, %484 : vector<16x128xf32>
    %502 = arith.addf %501, %465 : vector<16x128xf32>
    %cst_232 = arith.constant dense<0.000000e+00> : vector<16x256xf32>
    %503 = tpu.matmul %498, %9, %cst_232 {dimension_numbers = #tpu.dot_dimension_numbers<[1], [0], [0], [1], [0, 0, 1, 1], [], []>} : vector<16x128xbf16>, vector<128x256xbf16>, vector<16x256xf32> -> vector<16x256xf32>
    %504 = vector.extract_strided_slice %503 {offsets = [0, 0], sizes = [16, 128], strides = [1, 1]} : vector<16x256xf32> to vector<16x128xf32>
    %505 = vector.extract_strided_slice %503 {offsets = [0, 128], sizes = [16, 128], strides = [1, 1]} : vector<16x256xf32> to vector<16x128xf32>
    %506 = arith.addf %476, %505 : vector<16x128xf32>
    %cst_233 = arith.constant 0.000000e+00 : f32
    %507 = vector.broadcast %cst_233 : f32 to vector<16x128xf32>
    %508 = arith.subf %507, %473 : vector<16x128xf32>
    %509 = arith.addf %508, %506 : vector<16x128xf32>
    %cst_234 = arith.constant 1.000000e+00 : f32
    %510 = vector.broadcast %cst_234 : f32 to vector<16x128xf32>
    %511 = arith.mulf %510, %509 : vector<16x128xf32>
    %512 = arith.addf %473, %511 : vector<16x128xf32>
    %cst_235 = arith.constant -2.000000e+00 : f32
    %513 = vector.broadcast %cst_235 : f32 to vector<16x128xf32>
    %514 = arith.mulf %513, %506 : vector<16x128xf32>
    %515 = arith.addf %506, %514 : vector<16x128xf32>
    %c12_236 = arith.constant 12 : index
    %c0_237 = arith.constant 0 : index
    %c0_238 = arith.constant 0 : index
    %516 = vector.load %arg5[%c12_236, %c0_237, %c0_238] : memref<32x16x128xbf16, #tpu.memory_space<vmem>>, vector<1x16x128xbf16>
    %517 = vector.shape_cast %516 : vector<1x16x128xbf16> to vector<16x128xbf16>
    %518 = vector.shape_cast %498 : vector<16x128xbf16> to vector<1x16x128xbf16>
    tpu.vector_store %arg5[%c12_236, %c0_237, %c0_238], %518 {strides = array<i32>} : memref<32x16x128xbf16, #tpu.memory_space<vmem>>, vector<1x16x128xbf16>,
    %c12_239 = arith.constant 12 : index
    %c0_240 = arith.constant 0 : index
    %c0_241 = arith.constant 0 : index
    %519 = vector.load %arg6[%c12_239, %c0_240, %c0_241] : memref<32x16x128xf32, #tpu.memory_space<vmem>>, vector<1x16x128xf32>
    %520 = vector.shape_cast %519 : vector<1x16x128xf32> to vector<16x128xf32>
    %521 = vector.shape_cast %512 : vector<16x128xf32> to vector<1x16x128xf32>
    tpu.vector_store %arg6[%c12_239, %c0_240, %c0_241], %521 {strides = array<i32>} : memref<32x16x128xf32, #tpu.memory_space<vmem>>, vector<1x16x128xf32>,
    %c13 = arith.constant 13 : index
    %c0_242 = arith.constant 0 : index
    %c0_243 = arith.constant 0 : index
    %522 = vector.load %arg7[%c13, %c0_242, %c0_243] : memref<32x16x128xf32, #tpu.memory_space<vmem>>, vector<1x16x128xf32>
    %523 = vector.shape_cast %522 : vector<1x16x128xf32> to vector<16x128xf32>
    %cst_244 = arith.constant 0.000000e+00 : f32
    %524 = vector.broadcast %cst_244 : f32 to vector<16x128xf32>
    %525 = arith.subf %524, %500 : vector<16x128xf32>
    %526 = arith.addf %525, %502 : vector<16x128xf32>
    %cst_245 = arith.constant 1.000000e+00 : f32
    %527 = vector.broadcast %cst_245 : f32 to vector<16x128xf32>
    %528 = arith.mulf %527, %526 : vector<16x128xf32>
    %529 = arith.addf %500, %528 : vector<16x128xf32>
    %cst_246 = arith.constant -2.000000e+00 : f32
    %530 = vector.broadcast %cst_246 : f32 to vector<16x128xf32>
    %531 = arith.mulf %530, %502 : vector<16x128xf32>
    %532 = arith.addf %502, %531 : vector<16x128xf32>
    %cst_247 = arith.constant 1.000000e+00 : f32
    %533 = vector.broadcast %cst_247 : f32 to vector<16x128xf32>
    %534 = arith.cmpf ogt, %529, %533 : vector<16x128xf32>
    %535 = arith.extui %534 : vector<16x128xi1> to vector<16x128xi32>
    %536 = arith.sitofp %535 : vector<16x128xi32> to vector<16x128xf32>
    %537 = arith.truncf %536 : vector<16x128xf32> to vector<16x128xbf16>
    %cst_248 = arith.constant 0.000000e+00 : f32
    %538 = vector.broadcast %cst_248 : f32 to vector<16x128xf32>
    %539 = arith.select %534, %538, %529 : vector<16x128xi1>, vector<16x128xf32>
    %540 = arith.addf %532, %523 : vector<16x128xf32>
    %541 = arith.addf %540, %504 : vector<16x128xf32>
    %cst_249 = arith.constant dense<0.000000e+00> : vector<16x256xf32>
    %542 = tpu.matmul %537, %9, %cst_249 {dimension_numbers = #tpu.dot_dimension_numbers<[1], [0], [0], [1], [0, 0, 1, 1], [], []>} : vector<16x128xbf16>, vector<128x256xbf16>, vector<16x256xf32> -> vector<16x256xf32>
    %543 = vector.extract_strided_slice %542 {offsets = [0, 0], sizes = [16, 128], strides = [1, 1]} : vector<16x256xf32> to vector<16x128xf32>
    %544 = vector.extract_strided_slice %542 {offsets = [0, 128], sizes = [16, 128], strides = [1, 1]} : vector<16x256xf32> to vector<16x128xf32>
    %545 = arith.addf %515, %544 : vector<16x128xf32>
    %cst_250 = arith.constant 0.000000e+00 : f32
    %546 = vector.broadcast %cst_250 : f32 to vector<16x128xf32>
    %547 = arith.subf %546, %512 : vector<16x128xf32>
    %548 = arith.addf %547, %545 : vector<16x128xf32>
    %cst_251 = arith.constant 1.000000e+00 : f32
    %549 = vector.broadcast %cst_251 : f32 to vector<16x128xf32>
    %550 = arith.mulf %549, %548 : vector<16x128xf32>
    %551 = arith.addf %512, %550 : vector<16x128xf32>
    %cst_252 = arith.constant -2.000000e+00 : f32
    %552 = vector.broadcast %cst_252 : f32 to vector<16x128xf32>
    %553 = arith.mulf %552, %545 : vector<16x128xf32>
    %554 = arith.addf %545, %553 : vector<16x128xf32>
    %c13_253 = arith.constant 13 : index
    %c0_254 = arith.constant 0 : index
    %c0_255 = arith.constant 0 : index
    %555 = vector.load %arg5[%c13_253, %c0_254, %c0_255] : memref<32x16x128xbf16, #tpu.memory_space<vmem>>, vector<1x16x128xbf16>
    %556 = vector.shape_cast %555 : vector<1x16x128xbf16> to vector<16x128xbf16>
    %557 = vector.shape_cast %537 : vector<16x128xbf16> to vector<1x16x128xbf16>
    tpu.vector_store %arg5[%c13_253, %c0_254, %c0_255], %557 {strides = array<i32>} : memref<32x16x128xbf16, #tpu.memory_space<vmem>>, vector<1x16x128xbf16>,
    %c13_256 = arith.constant 13 : index
    %c0_257 = arith.constant 0 : index
    %c0_258 = arith.constant 0 : index
    %558 = vector.load %arg6[%c13_256, %c0_257, %c0_258] : memref<32x16x128xf32, #tpu.memory_space<vmem>>, vector<1x16x128xf32>
    %559 = vector.shape_cast %558 : vector<1x16x128xf32> to vector<16x128xf32>
    %560 = vector.shape_cast %551 : vector<16x128xf32> to vector<1x16x128xf32>
    tpu.vector_store %arg6[%c13_256, %c0_257, %c0_258], %560 {strides = array<i32>} : memref<32x16x128xf32, #tpu.memory_space<vmem>>, vector<1x16x128xf32>,
    %c14 = arith.constant 14 : index
    %c0_259 = arith.constant 0 : index
    %c0_260 = arith.constant 0 : index
    %561 = vector.load %arg7[%c14, %c0_259, %c0_260] : memref<32x16x128xf32, #tpu.memory_space<vmem>>, vector<1x16x128xf32>
    %562 = vector.shape_cast %561 : vector<1x16x128xf32> to vector<16x128xf32>
    %cst_261 = arith.constant 0.000000e+00 : f32
    %563 = vector.broadcast %cst_261 : f32 to vector<16x128xf32>
    %564 = arith.subf %563, %539 : vector<16x128xf32>
    %565 = arith.addf %564, %541 : vector<16x128xf32>
    %cst_262 = arith.constant 1.000000e+00 : f32
    %566 = vector.broadcast %cst_262 : f32 to vector<16x128xf32>
    %567 = arith.mulf %566, %565 : vector<16x128xf32>
    %568 = arith.addf %539, %567 : vector<16x128xf32>
    %cst_263 = arith.constant -2.000000e+00 : f32
    %569 = vector.broadcast %cst_263 : f32 to vector<16x128xf32>
    %570 = arith.mulf %569, %541 : vector<16x128xf32>
    %571 = arith.addf %541, %570 : vector<16x128xf32>
    %cst_264 = arith.constant 1.000000e+00 : f32
    %572 = vector.broadcast %cst_264 : f32 to vector<16x128xf32>
    %573 = arith.cmpf ogt, %568, %572 : vector<16x128xf32>
    %574 = arith.extui %573 : vector<16x128xi1> to vector<16x128xi32>
    %575 = arith.sitofp %574 : vector<16x128xi32> to vector<16x128xf32>
    %576 = arith.truncf %575 : vector<16x128xf32> to vector<16x128xbf16>
    %cst_265 = arith.constant 0.000000e+00 : f32
    %577 = vector.broadcast %cst_265 : f32 to vector<16x128xf32>
    %578 = arith.select %573, %577, %568 : vector<16x128xi1>, vector<16x128xf32>
    %579 = arith.addf %571, %562 : vector<16x128xf32>
    %580 = arith.addf %579, %543 : vector<16x128xf32>
    %cst_266 = arith.constant dense<0.000000e+00> : vector<16x256xf32>
    %581 = tpu.matmul %576, %9, %cst_266 {dimension_numbers = #tpu.dot_dimension_numbers<[1], [0], [0], [1], [0, 0, 1, 1], [], []>} : vector<16x128xbf16>, vector<128x256xbf16>, vector<16x256xf32> -> vector<16x256xf32>
    %582 = vector.extract_strided_slice %581 {offsets = [0, 0], sizes = [16, 128], strides = [1, 1]} : vector<16x256xf32> to vector<16x128xf32>
    %583 = vector.extract_strided_slice %581 {offsets = [0, 128], sizes = [16, 128], strides = [1, 1]} : vector<16x256xf32> to vector<16x128xf32>
    %584 = arith.addf %554, %583 : vector<16x128xf32>
    %cst_267 = arith.constant 0.000000e+00 : f32
    %585 = vector.broadcast %cst_267 : f32 to vector<16x128xf32>
    %586 = arith.subf %585, %551 : vector<16x128xf32>
    %587 = arith.addf %586, %584 : vector<16x128xf32>
    %cst_268 = arith.constant 1.000000e+00 : f32
    %588 = vector.broadcast %cst_268 : f32 to vector<16x128xf32>
    %589 = arith.mulf %588, %587 : vector<16x128xf32>
    %590 = arith.addf %551, %589 : vector<16x128xf32>
    %cst_269 = arith.constant -2.000000e+00 : f32
    %591 = vector.broadcast %cst_269 : f32 to vector<16x128xf32>
    %592 = arith.mulf %591, %584 : vector<16x128xf32>
    %593 = arith.addf %584, %592 : vector<16x128xf32>
    %c14_270 = arith.constant 14 : index
    %c0_271 = arith.constant 0 : index
    %c0_272 = arith.constant 0 : index
    %594 = vector.load %arg5[%c14_270, %c0_271, %c0_272] : memref<32x16x128xbf16, #tpu.memory_space<vmem>>, vector<1x16x128xbf16>
    %595 = vector.shape_cast %594 : vector<1x16x128xbf16> to vector<16x128xbf16>
    %596 = vector.shape_cast %576 : vector<16x128xbf16> to vector<1x16x128xbf16>
    tpu.vector_store %arg5[%c14_270, %c0_271, %c0_272], %596 {strides = array<i32>} : memref<32x16x128xbf16, #tpu.memory_space<vmem>>, vector<1x16x128xbf16>,
    %c14_273 = arith.constant 14 : index
    %c0_274 = arith.constant 0 : index
    %c0_275 = arith.constant 0 : index
    %597 = vector.load %arg6[%c14_273, %c0_274, %c0_275] : memref<32x16x128xf32, #tpu.memory_space<vmem>>, vector<1x16x128xf32>
    %598 = vector.shape_cast %597 : vector<1x16x128xf32> to vector<16x128xf32>
    %599 = vector.shape_cast %590 : vector<16x128xf32> to vector<1x16x128xf32>
    tpu.vector_store %arg6[%c14_273, %c0_274, %c0_275], %599 {strides = array<i32>} : memref<32x16x128xf32, #tpu.memory_space<vmem>>, vector<1x16x128xf32>,
    %c15 = arith.constant 15 : index
    %c0_276 = arith.constant 0 : index
    %c0_277 = arith.constant 0 : index
    %600 = vector.load %arg7[%c15, %c0_276, %c0_277] : memref<32x16x128xf32, #tpu.memory_space<vmem>>, vector<1x16x128xf32>
    %601 = vector.shape_cast %600 : vector<1x16x128xf32> to vector<16x128xf32>
    %cst_278 = arith.constant 0.000000e+00 : f32
    %602 = vector.broadcast %cst_278 : f32 to vector<16x128xf32>
    %603 = arith.subf %602, %578 : vector<16x128xf32>
    %604 = arith.addf %603, %580 : vector<16x128xf32>
    %cst_279 = arith.constant 1.000000e+00 : f32
    %605 = vector.broadcast %cst_279 : f32 to vector<16x128xf32>
    %606 = arith.mulf %605, %604 : vector<16x128xf32>
    %607 = arith.addf %578, %606 : vector<16x128xf32>
    %cst_280 = arith.constant -2.000000e+00 : f32
    %608 = vector.broadcast %cst_280 : f32 to vector<16x128xf32>
    %609 = arith.mulf %608, %580 : vector<16x128xf32>
    %610 = arith.addf %580, %609 : vector<16x128xf32>
    %cst_281 = arith.constant 1.000000e+00 : f32
    %611 = vector.broadcast %cst_281 : f32 to vector<16x128xf32>
    %612 = arith.cmpf ogt, %607, %611 : vector<16x128xf32>
    %613 = arith.extui %612 : vector<16x128xi1> to vector<16x128xi32>
    %614 = arith.sitofp %613 : vector<16x128xi32> to vector<16x128xf32>
    %615 = arith.truncf %614 : vector<16x128xf32> to vector<16x128xbf16>
    %cst_282 = arith.constant 0.000000e+00 : f32
    %616 = vector.broadcast %cst_282 : f32 to vector<16x128xf32>
    %617 = arith.select %612, %616, %607 : vector<16x128xi1>, vector<16x128xf32>
    %618 = arith.addf %610, %601 : vector<16x128xf32>
    %619 = arith.addf %618, %582 : vector<16x128xf32>
    %cst_283 = arith.constant dense<0.000000e+00> : vector<16x256xf32>
    %620 = tpu.matmul %615, %9, %cst_283 {dimension_numbers = #tpu.dot_dimension_numbers<[1], [0], [0], [1], [0, 0, 1, 1], [], []>} : vector<16x128xbf16>, vector<128x256xbf16>, vector<16x256xf32> -> vector<16x256xf32>
    %621 = vector.extract_strided_slice %620 {offsets = [0, 0], sizes = [16, 128], strides = [1, 1]} : vector<16x256xf32> to vector<16x128xf32>
    %622 = vector.extract_strided_slice %620 {offsets = [0, 128], sizes = [16, 128], strides = [1, 1]} : vector<16x256xf32> to vector<16x128xf32>
    %623 = arith.addf %593, %622 : vector<16x128xf32>
    %cst_284 = arith.constant 0.000000e+00 : f32
    %624 = vector.broadcast %cst_284 : f32 to vector<16x128xf32>
    %625 = arith.subf %624, %590 : vector<16x128xf32>
    %626 = arith.addf %625, %623 : vector<16x128xf32>
    %cst_285 = arith.constant 1.000000e+00 : f32
    %627 = vector.broadcast %cst_285 : f32 to vector<16x128xf32>
    %628 = arith.mulf %627, %626 : vector<16x128xf32>
    %629 = arith.addf %590, %628 : vector<16x128xf32>
    %cst_286 = arith.constant -2.000000e+00 : f32
    %630 = vector.broadcast %cst_286 : f32 to vector<16x128xf32>
    %631 = arith.mulf %630, %623 : vector<16x128xf32>
    %632 = arith.addf %623, %631 : vector<16x128xf32>
    %c15_287 = arith.constant 15 : index
    %c0_288 = arith.constant 0 : index
    %c0_289 = arith.constant 0 : index
    %633 = vector.load %arg5[%c15_287, %c0_288, %c0_289] : memref<32x16x128xbf16, #tpu.memory_space<vmem>>, vector<1x16x128xbf16>
    %634 = vector.shape_cast %633 : vector<1x16x128xbf16> to vector<16x128xbf16>
    %635 = vector.shape_cast %615 : vector<16x128xbf16> to vector<1x16x128xbf16>
    tpu.vector_store %arg5[%c15_287, %c0_288, %c0_289], %635 {strides = array<i32>} : memref<32x16x128xbf16, #tpu.memory_space<vmem>>, vector<1x16x128xbf16>,
    %c15_290 = arith.constant 15 : index
    %c0_291 = arith.constant 0 : index
    %c0_292 = arith.constant 0 : index
    %636 = vector.load %arg6[%c15_290, %c0_291, %c0_292] : memref<32x16x128xf32, #tpu.memory_space<vmem>>, vector<1x16x128xf32>
    %637 = vector.shape_cast %636 : vector<1x16x128xf32> to vector<16x128xf32>
    %638 = vector.shape_cast %629 : vector<16x128xf32> to vector<1x16x128xf32>
    tpu.vector_store %arg6[%c15_290, %c0_291, %c0_292], %638 {strides = array<i32>} : memref<32x16x128xf32, #tpu.memory_space<vmem>>, vector<1x16x128xf32>,
    %c16 = arith.constant 16 : index
    %c0_293 = arith.constant 0 : index
    %c0_294 = arith.constant 0 : index
    %639 = vector.load %arg7[%c16, %c0_293, %c0_294] : memref<32x16x128xf32, #tpu.memory_space<vmem>>, vector<1x16x128xf32>
    %640 = vector.shape_cast %639 : vector<1x16x128xf32> to vector<16x128xf32>
    %cst_295 = arith.constant 0.000000e+00 : f32
    %641 = vector.broadcast %cst_295 : f32 to vector<16x128xf32>
    %642 = arith.subf %641, %617 : vector<16x128xf32>
    %643 = arith.addf %642, %619 : vector<16x128xf32>
    %cst_296 = arith.constant 1.000000e+00 : f32
    %644 = vector.broadcast %cst_296 : f32 to vector<16x128xf32>
    %645 = arith.mulf %644, %643 : vector<16x128xf32>
    %646 = arith.addf %617, %645 : vector<16x128xf32>
    %cst_297 = arith.constant -2.000000e+00 : f32
    %647 = vector.broadcast %cst_297 : f32 to vector<16x128xf32>
    %648 = arith.mulf %647, %619 : vector<16x128xf32>
    %649 = arith.addf %619, %648 : vector<16x128xf32>
    %cst_298 = arith.constant 1.000000e+00 : f32
    %650 = vector.broadcast %cst_298 : f32 to vector<16x128xf32>
    %651 = arith.cmpf ogt, %646, %650 : vector<16x128xf32>
    %652 = arith.extui %651 : vector<16x128xi1> to vector<16x128xi32>
    %653 = arith.sitofp %652 : vector<16x128xi32> to vector<16x128xf32>
    %654 = arith.truncf %653 : vector<16x128xf32> to vector<16x128xbf16>
    %cst_299 = arith.constant 0.000000e+00 : f32
    %655 = vector.broadcast %cst_299 : f32 to vector<16x128xf32>
    %656 = arith.select %651, %655, %646 : vector<16x128xi1>, vector<16x128xf32>
    %657 = arith.addf %649, %640 : vector<16x128xf32>
    %658 = arith.addf %657, %621 : vector<16x128xf32>
    %cst_300 = arith.constant dense<0.000000e+00> : vector<16x256xf32>
    %659 = tpu.matmul %654, %9, %cst_300 {dimension_numbers = #tpu.dot_dimension_numbers<[1], [0], [0], [1], [0, 0, 1, 1], [], []>} : vector<16x128xbf16>, vector<128x256xbf16>, vector<16x256xf32> -> vector<16x256xf32>
    %660 = vector.extract_strided_slice %659 {offsets = [0, 0], sizes = [16, 128], strides = [1, 1]} : vector<16x256xf32> to vector<16x128xf32>
    %661 = vector.extract_strided_slice %659 {offsets = [0, 128], sizes = [16, 128], strides = [1, 1]} : vector<16x256xf32> to vector<16x128xf32>
    %662 = arith.addf %632, %661 : vector<16x128xf32>
    %cst_301 = arith.constant 0.000000e+00 : f32
    %663 = vector.broadcast %cst_301 : f32 to vector<16x128xf32>
    %664 = arith.subf %663, %629 : vector<16x128xf32>
    %665 = arith.addf %664, %662 : vector<16x128xf32>
    %cst_302 = arith.constant 1.000000e+00 : f32
    %666 = vector.broadcast %cst_302 : f32 to vector<16x128xf32>
    %667 = arith.mulf %666, %665 : vector<16x128xf32>
    %668 = arith.addf %629, %667 : vector<16x128xf32>
    %cst_303 = arith.constant -2.000000e+00 : f32
    %669 = vector.broadcast %cst_303 : f32 to vector<16x128xf32>
    %670 = arith.mulf %669, %662 : vector<16x128xf32>
    %671 = arith.addf %662, %670 : vector<16x128xf32>
    %c16_304 = arith.constant 16 : index
    %c0_305 = arith.constant 0 : index
    %c0_306 = arith.constant 0 : index
    %672 = vector.load %arg5[%c16_304, %c0_305, %c0_306] : memref<32x16x128xbf16, #tpu.memory_space<vmem>>, vector<1x16x128xbf16>
    %673 = vector.shape_cast %672 : vector<1x16x128xbf16> to vector<16x128xbf16>
    %674 = vector.shape_cast %654 : vector<16x128xbf16> to vector<1x16x128xbf16>
    tpu.vector_store %arg5[%c16_304, %c0_305, %c0_306], %674 {strides = array<i32>} : memref<32x16x128xbf16, #tpu.memory_space<vmem>>, vector<1x16x128xbf16>,
    %c16_307 = arith.constant 16 : index
    %c0_308 = arith.constant 0 : index
    %c0_309 = arith.constant 0 : index
    %675 = vector.load %arg6[%c16_307, %c0_308, %c0_309] : memref<32x16x128xf32, #tpu.memory_space<vmem>>, vector<1x16x128xf32>
    %676 = vector.shape_cast %675 : vector<1x16x128xf32> to vector<16x128xf32>
    %677 = vector.shape_cast %668 : vector<16x128xf32> to vector<1x16x128xf32>
    tpu.vector_store %arg6[%c16_307, %c0_308, %c0_309], %677 {strides = array<i32>} : memref<32x16x128xf32, #tpu.memory_space<vmem>>, vector<1x16x128xf32>,
    %c17 = arith.constant 17 : index
    %c0_310 = arith.constant 0 : index
    %c0_311 = arith.constant 0 : index
    %678 = vector.load %arg7[%c17, %c0_310, %c0_311] : memref<32x16x128xf32, #tpu.memory_space<vmem>>, vector<1x16x128xf32>
    %679 = vector.shape_cast %678 : vector<1x16x128xf32> to vector<16x128xf32>
    %cst_312 = arith.constant 0.000000e+00 : f32
    %680 = vector.broadcast %cst_312 : f32 to vector<16x128xf32>
    %681 = arith.subf %680, %656 : vector<16x128xf32>
    %682 = arith.addf %681, %658 : vector<16x128xf32>
    %cst_313 = arith.constant 1.000000e+00 : f32
    %683 = vector.broadcast %cst_313 : f32 to vector<16x128xf32>
    %684 = arith.mulf %683, %682 : vector<16x128xf32>
    %685 = arith.addf %656, %684 : vector<16x128xf32>
    %cst_314 = arith.constant -2.000000e+00 : f32
    %686 = vector.broadcast %cst_314 : f32 to vector<16x128xf32>
    %687 = arith.mulf %686, %658 : vector<16x128xf32>
    %688 = arith.addf %658, %687 : vector<16x128xf32>
    %cst_315 = arith.constant 1.000000e+00 : f32
    %689 = vector.broadcast %cst_315 : f32 to vector<16x128xf32>
    %690 = arith.cmpf ogt, %685, %689 : vector<16x128xf32>
    %691 = arith.extui %690 : vector<16x128xi1> to vector<16x128xi32>
    %692 = arith.sitofp %691 : vector<16x128xi32> to vector<16x128xf32>
    %693 = arith.truncf %692 : vector<16x128xf32> to vector<16x128xbf16>
    %cst_316 = arith.constant 0.000000e+00 : f32
    %694 = vector.broadcast %cst_316 : f32 to vector<16x128xf32>
    %695 = arith.select %690, %694, %685 : vector<16x128xi1>, vector<16x128xf32>
    %696 = arith.addf %688, %679 : vector<16x128xf32>
    %697 = arith.addf %696, %660 : vector<16x128xf32>
    %cst_317 = arith.constant dense<0.000000e+00> : vector<16x256xf32>
    %698 = tpu.matmul %693, %9, %cst_317 {dimension_numbers = #tpu.dot_dimension_numbers<[1], [0], [0], [1], [0, 0, 1, 1], [], []>} : vector<16x128xbf16>, vector<128x256xbf16>, vector<16x256xf32> -> vector<16x256xf32>
    %699 = vector.extract_strided_slice %698 {offsets = [0, 0], sizes = [16, 128], strides = [1, 1]} : vector<16x256xf32> to vector<16x128xf32>
    %700 = vector.extract_strided_slice %698 {offsets = [0, 128], sizes = [16, 128], strides = [1, 1]} : vector<16x256xf32> to vector<16x128xf32>
    %701 = arith.addf %671, %700 : vector<16x128xf32>
    %cst_318 = arith.constant 0.000000e+00 : f32
    %702 = vector.broadcast %cst_318 : f32 to vector<16x128xf32>
    %703 = arith.subf %702, %668 : vector<16x128xf32>
    %704 = arith.addf %703, %701 : vector<16x128xf32>
    %cst_319 = arith.constant 1.000000e+00 : f32
    %705 = vector.broadcast %cst_319 : f32 to vector<16x128xf32>
    %706 = arith.mulf %705, %704 : vector<16x128xf32>
    %707 = arith.addf %668, %706 : vector<16x128xf32>
    %cst_320 = arith.constant -2.000000e+00 : f32
    %708 = vector.broadcast %cst_320 : f32 to vector<16x128xf32>
    %709 = arith.mulf %708, %701 : vector<16x128xf32>
    %710 = arith.addf %701, %709 : vector<16x128xf32>
    %c17_321 = arith.constant 17 : index
    %c0_322 = arith.constant 0 : index
    %c0_323 = arith.constant 0 : index
    %711 = vector.load %arg5[%c17_321, %c0_322, %c0_323] : memref<32x16x128xbf16, #tpu.memory_space<vmem>>, vector<1x16x128xbf16>
    %712 = vector.shape_cast %711 : vector<1x16x128xbf16> to vector<16x128xbf16>
    %713 = vector.shape_cast %693 : vector<16x128xbf16> to vector<1x16x128xbf16>
    tpu.vector_store %arg5[%c17_321, %c0_322, %c0_323], %713 {strides = array<i32>} : memref<32x16x128xbf16, #tpu.memory_space<vmem>>, vector<1x16x128xbf16>,
    %c17_324 = arith.constant 17 : index
    %c0_325 = arith.constant 0 : index
    %c0_326 = arith.constant 0 : index
    %714 = vector.load %arg6[%c17_324, %c0_325, %c0_326] : memref<32x16x128xf32, #tpu.memory_space<vmem>>, vector<1x16x128xf32>
    %715 = vector.shape_cast %714 : vector<1x16x128xf32> to vector<16x128xf32>
    %716 = vector.shape_cast %707 : vector<16x128xf32> to vector<1x16x128xf32>
    tpu.vector_store %arg6[%c17_324, %c0_325, %c0_326], %716 {strides = array<i32>} : memref<32x16x128xf32, #tpu.memory_space<vmem>>, vector<1x16x128xf32>,
    %c18 = arith.constant 18 : index
    %c0_327 = arith.constant 0 : index
    %c0_328 = arith.constant 0 : index
    %717 = vector.load %arg7[%c18, %c0_327, %c0_328] : memref<32x16x128xf32, #tpu.memory_space<vmem>>, vector<1x16x128xf32>
    %718 = vector.shape_cast %717 : vector<1x16x128xf32> to vector<16x128xf32>
    %cst_329 = arith.constant 0.000000e+00 : f32
    %719 = vector.broadcast %cst_329 : f32 to vector<16x128xf32>
    %720 = arith.subf %719, %695 : vector<16x128xf32>
    %721 = arith.addf %720, %697 : vector<16x128xf32>
    %cst_330 = arith.constant 1.000000e+00 : f32
    %722 = vector.broadcast %cst_330 : f32 to vector<16x128xf32>
    %723 = arith.mulf %722, %721 : vector<16x128xf32>
    %724 = arith.addf %695, %723 : vector<16x128xf32>
    %cst_331 = arith.constant -2.000000e+00 : f32
    %725 = vector.broadcast %cst_331 : f32 to vector<16x128xf32>
    %726 = arith.mulf %725, %697 : vector<16x128xf32>
    %727 = arith.addf %697, %726 : vector<16x128xf32>
    %cst_332 = arith.constant 1.000000e+00 : f32
    %728 = vector.broadcast %cst_332 : f32 to vector<16x128xf32>
    %729 = arith.cmpf ogt, %724, %728 : vector<16x128xf32>
    %730 = arith.extui %729 : vector<16x128xi1> to vector<16x128xi32>
    %731 = arith.sitofp %730 : vector<16x128xi32> to vector<16x128xf32>
    %732 = arith.truncf %731 : vector<16x128xf32> to vector<16x128xbf16>
    %cst_333 = arith.constant 0.000000e+00 : f32
    %733 = vector.broadcast %cst_333 : f32 to vector<16x128xf32>
    %734 = arith.select %729, %733, %724 : vector<16x128xi1>, vector<16x128xf32>
    %735 = arith.addf %727, %718 : vector<16x128xf32>
    %736 = arith.addf %735, %699 : vector<16x128xf32>
    %cst_334 = arith.constant dense<0.000000e+00> : vector<16x256xf32>
    %737 = tpu.matmul %732, %9, %cst_334 {dimension_numbers = #tpu.dot_dimension_numbers<[1], [0], [0], [1], [0, 0, 1, 1], [], []>} : vector<16x128xbf16>, vector<128x256xbf16>, vector<16x256xf32> -> vector<16x256xf32>
    %738 = vector.extract_strided_slice %737 {offsets = [0, 0], sizes = [16, 128], strides = [1, 1]} : vector<16x256xf32> to vector<16x128xf32>
    %739 = vector.extract_strided_slice %737 {offsets = [0, 128], sizes = [16, 128], strides = [1, 1]} : vector<16x256xf32> to vector<16x128xf32>
    %740 = arith.addf %710, %739 : vector<16x128xf32>
    %cst_335 = arith.constant 0.000000e+00 : f32
    %741 = vector.broadcast %cst_335 : f32 to vector<16x128xf32>
    %742 = arith.subf %741, %707 : vector<16x128xf32>
    %743 = arith.addf %742, %740 : vector<16x128xf32>
    %cst_336 = arith.constant 1.000000e+00 : f32
    %744 = vector.broadcast %cst_336 : f32 to vector<16x128xf32>
    %745 = arith.mulf %744, %743 : vector<16x128xf32>
    %746 = arith.addf %707, %745 : vector<16x128xf32>
    %cst_337 = arith.constant -2.000000e+00 : f32
    %747 = vector.broadcast %cst_337 : f32 to vector<16x128xf32>
    %748 = arith.mulf %747, %740 : vector<16x128xf32>
    %749 = arith.addf %740, %748 : vector<16x128xf32>
    %c18_338 = arith.constant 18 : index
    %c0_339 = arith.constant 0 : index
    %c0_340 = arith.constant 0 : index
    %750 = vector.load %arg5[%c18_338, %c0_339, %c0_340] : memref<32x16x128xbf16, #tpu.memory_space<vmem>>, vector<1x16x128xbf16>
    %751 = vector.shape_cast %750 : vector<1x16x128xbf16> to vector<16x128xbf16>
    %752 = vector.shape_cast %732 : vector<16x128xbf16> to vector<1x16x128xbf16>
    tpu.vector_store %arg5[%c18_338, %c0_339, %c0_340], %752 {strides = array<i32>} : memref<32x16x128xbf16, #tpu.memory_space<vmem>>, vector<1x16x128xbf16>,
    %c18_341 = arith.constant 18 : index
    %c0_342 = arith.constant 0 : index
    %c0_343 = arith.constant 0 : index
    %753 = vector.load %arg6[%c18_341, %c0_342, %c0_343] : memref<32x16x128xf32, #tpu.memory_space<vmem>>, vector<1x16x128xf32>
    %754 = vector.shape_cast %753 : vector<1x16x128xf32> to vector<16x128xf32>
    %755 = vector.shape_cast %746 : vector<16x128xf32> to vector<1x16x128xf32>
    tpu.vector_store %arg6[%c18_341, %c0_342, %c0_343], %755 {strides = array<i32>} : memref<32x16x128xf32, #tpu.memory_space<vmem>>, vector<1x16x128xf32>,
    %c19 = arith.constant 19 : index
    %c0_344 = arith.constant 0 : index
    %c0_345 = arith.constant 0 : index
    %756 = vector.load %arg7[%c19, %c0_344, %c0_345] : memref<32x16x128xf32, #tpu.memory_space<vmem>>, vector<1x16x128xf32>
    %757 = vector.shape_cast %756 : vector<1x16x128xf32> to vector<16x128xf32>
    %cst_346 = arith.constant 0.000000e+00 : f32
    %758 = vector.broadcast %cst_346 : f32 to vector<16x128xf32>
    %759 = arith.subf %758, %734 : vector<16x128xf32>
    %760 = arith.addf %759, %736 : vector<16x128xf32>
    %cst_347 = arith.constant 1.000000e+00 : f32
    %761 = vector.broadcast %cst_347 : f32 to vector<16x128xf32>
    %762 = arith.mulf %761, %760 : vector<16x128xf32>
    %763 = arith.addf %734, %762 : vector<16x128xf32>
    %cst_348 = arith.constant -2.000000e+00 : f32
    %764 = vector.broadcast %cst_348 : f32 to vector<16x128xf32>
    %765 = arith.mulf %764, %736 : vector<16x128xf32>
    %766 = arith.addf %736, %765 : vector<16x128xf32>
    %cst_349 = arith.constant 1.000000e+00 : f32
    %767 = vector.broadcast %cst_349 : f32 to vector<16x128xf32>
    %768 = arith.cmpf ogt, %763, %767 : vector<16x128xf32>
    %769 = arith.extui %768 : vector<16x128xi1> to vector<16x128xi32>
    %770 = arith.sitofp %769 : vector<16x128xi32> to vector<16x128xf32>
    %771 = arith.truncf %770 : vector<16x128xf32> to vector<16x128xbf16>
    %cst_350 = arith.constant 0.000000e+00 : f32
    %772 = vector.broadcast %cst_350 : f32 to vector<16x128xf32>
    %773 = arith.select %768, %772, %763 : vector<16x128xi1>, vector<16x128xf32>
    %774 = arith.addf %766, %757 : vector<16x128xf32>
    %775 = arith.addf %774, %738 : vector<16x128xf32>
    %cst_351 = arith.constant dense<0.000000e+00> : vector<16x256xf32>
    %776 = tpu.matmul %771, %9, %cst_351 {dimension_numbers = #tpu.dot_dimension_numbers<[1], [0], [0], [1], [0, 0, 1, 1], [], []>} : vector<16x128xbf16>, vector<128x256xbf16>, vector<16x256xf32> -> vector<16x256xf32>
    %777 = vector.extract_strided_slice %776 {offsets = [0, 0], sizes = [16, 128], strides = [1, 1]} : vector<16x256xf32> to vector<16x128xf32>
    %778 = vector.extract_strided_slice %776 {offsets = [0, 128], sizes = [16, 128], strides = [1, 1]} : vector<16x256xf32> to vector<16x128xf32>
    %779 = arith.addf %749, %778 : vector<16x128xf32>
    %cst_352 = arith.constant 0.000000e+00 : f32
    %780 = vector.broadcast %cst_352 : f32 to vector<16x128xf32>
    %781 = arith.subf %780, %746 : vector<16x128xf32>
    %782 = arith.addf %781, %779 : vector<16x128xf32>
    %cst_353 = arith.constant 1.000000e+00 : f32
    %783 = vector.broadcast %cst_353 : f32 to vector<16x128xf32>
    %784 = arith.mulf %783, %782 : vector<16x128xf32>
    %785 = arith.addf %746, %784 : vector<16x128xf32>
    %cst_354 = arith.constant -2.000000e+00 : f32
    %786 = vector.broadcast %cst_354 : f32 to vector<16x128xf32>
    %787 = arith.mulf %786, %779 : vector<16x128xf32>
    %788 = arith.addf %779, %787 : vector<16x128xf32>
    %c19_355 = arith.constant 19 : index
    %c0_356 = arith.constant 0 : index
    %c0_357 = arith.constant 0 : index
    %789 = vector.load %arg5[%c19_355, %c0_356, %c0_357] : memref<32x16x128xbf16, #tpu.memory_space<vmem>>, vector<1x16x128xbf16>
    %790 = vector.shape_cast %789 : vector<1x16x128xbf16> to vector<16x128xbf16>
    %791 = vector.shape_cast %771 : vector<16x128xbf16> to vector<1x16x128xbf16>
    tpu.vector_store %arg5[%c19_355, %c0_356, %c0_357], %791 {strides = array<i32>} : memref<32x16x128xbf16, #tpu.memory_space<vmem>>, vector<1x16x128xbf16>,
    %c19_358 = arith.constant 19 : index
    %c0_359 = arith.constant 0 : index
    %c0_360 = arith.constant 0 : index
    %792 = vector.load %arg6[%c19_358, %c0_359, %c0_360] : memref<32x16x128xf32, #tpu.memory_space<vmem>>, vector<1x16x128xf32>
    %793 = vector.shape_cast %792 : vector<1x16x128xf32> to vector<16x128xf32>
    %794 = vector.shape_cast %785 : vector<16x128xf32> to vector<1x16x128xf32>
    tpu.vector_store %arg6[%c19_358, %c0_359, %c0_360], %794 {strides = array<i32>} : memref<32x16x128xf32, #tpu.memory_space<vmem>>, vector<1x16x128xf32>,
    %c20 = arith.constant 20 : index
    %c0_361 = arith.constant 0 : index
    %c0_362 = arith.constant 0 : index
    %795 = vector.load %arg7[%c20, %c0_361, %c0_362] : memref<32x16x128xf32, #tpu.memory_space<vmem>>, vector<1x16x128xf32>
    %796 = vector.shape_cast %795 : vector<1x16x128xf32> to vector<16x128xf32>
    %cst_363 = arith.constant 0.000000e+00 : f32
    %797 = vector.broadcast %cst_363 : f32 to vector<16x128xf32>
    %798 = arith.subf %797, %773 : vector<16x128xf32>
    %799 = arith.addf %798, %775 : vector<16x128xf32>
    %cst_364 = arith.constant 1.000000e+00 : f32
    %800 = vector.broadcast %cst_364 : f32 to vector<16x128xf32>
    %801 = arith.mulf %800, %799 : vector<16x128xf32>
    %802 = arith.addf %773, %801 : vector<16x128xf32>
    %cst_365 = arith.constant -2.000000e+00 : f32
    %803 = vector.broadcast %cst_365 : f32 to vector<16x128xf32>
    %804 = arith.mulf %803, %775 : vector<16x128xf32>
    %805 = arith.addf %775, %804 : vector<16x128xf32>
    %cst_366 = arith.constant 1.000000e+00 : f32
    %806 = vector.broadcast %cst_366 : f32 to vector<16x128xf32>
    %807 = arith.cmpf ogt, %802, %806 : vector<16x128xf32>
    %808 = arith.extui %807 : vector<16x128xi1> to vector<16x128xi32>
    %809 = arith.sitofp %808 : vector<16x128xi32> to vector<16x128xf32>
    %810 = arith.truncf %809 : vector<16x128xf32> to vector<16x128xbf16>
    %cst_367 = arith.constant 0.000000e+00 : f32
    %811 = vector.broadcast %cst_367 : f32 to vector<16x128xf32>
    %812 = arith.select %807, %811, %802 : vector<16x128xi1>, vector<16x128xf32>
    %813 = arith.addf %805, %796 : vector<16x128xf32>
    %814 = arith.addf %813, %777 : vector<16x128xf32>
    %cst_368 = arith.constant dense<0.000000e+00> : vector<16x256xf32>
    %815 = tpu.matmul %810, %9, %cst_368 {dimension_numbers = #tpu.dot_dimension_numbers<[1], [0], [0], [1], [0, 0, 1, 1], [], []>} : vector<16x128xbf16>, vector<128x256xbf16>, vector<16x256xf32> -> vector<16x256xf32>
    %816 = vector.extract_strided_slice %815 {offsets = [0, 0], sizes = [16, 128], strides = [1, 1]} : vector<16x256xf32> to vector<16x128xf32>
    %817 = vector.extract_strided_slice %815 {offsets = [0, 128], sizes = [16, 128], strides = [1, 1]} : vector<16x256xf32> to vector<16x128xf32>
    %818 = arith.addf %788, %817 : vector<16x128xf32>
    %cst_369 = arith.constant 0.000000e+00 : f32
    %819 = vector.broadcast %cst_369 : f32 to vector<16x128xf32>
    %820 = arith.subf %819, %785 : vector<16x128xf32>
    %821 = arith.addf %820, %818 : vector<16x128xf32>
    %cst_370 = arith.constant 1.000000e+00 : f32
    %822 = vector.broadcast %cst_370 : f32 to vector<16x128xf32>
    %823 = arith.mulf %822, %821 : vector<16x128xf32>
    %824 = arith.addf %785, %823 : vector<16x128xf32>
    %cst_371 = arith.constant -2.000000e+00 : f32
    %825 = vector.broadcast %cst_371 : f32 to vector<16x128xf32>
    %826 = arith.mulf %825, %818 : vector<16x128xf32>
    %827 = arith.addf %818, %826 : vector<16x128xf32>
    %c20_372 = arith.constant 20 : index
    %c0_373 = arith.constant 0 : index
    %c0_374 = arith.constant 0 : index
    %828 = vector.load %arg5[%c20_372, %c0_373, %c0_374] : memref<32x16x128xbf16, #tpu.memory_space<vmem>>, vector<1x16x128xbf16>
    %829 = vector.shape_cast %828 : vector<1x16x128xbf16> to vector<16x128xbf16>
    %830 = vector.shape_cast %810 : vector<16x128xbf16> to vector<1x16x128xbf16>
    tpu.vector_store %arg5[%c20_372, %c0_373, %c0_374], %830 {strides = array<i32>} : memref<32x16x128xbf16, #tpu.memory_space<vmem>>, vector<1x16x128xbf16>,
    %c20_375 = arith.constant 20 : index
    %c0_376 = arith.constant 0 : index
    %c0_377 = arith.constant 0 : index
    %831 = vector.load %arg6[%c20_375, %c0_376, %c0_377] : memref<32x16x128xf32, #tpu.memory_space<vmem>>, vector<1x16x128xf32>
    %832 = vector.shape_cast %831 : vector<1x16x128xf32> to vector<16x128xf32>
    %833 = vector.shape_cast %824 : vector<16x128xf32> to vector<1x16x128xf32>
    tpu.vector_store %arg6[%c20_375, %c0_376, %c0_377], %833 {strides = array<i32>} : memref<32x16x128xf32, #tpu.memory_space<vmem>>, vector<1x16x128xf32>,
    %c21 = arith.constant 21 : index
    %c0_378 = arith.constant 0 : index
    %c0_379 = arith.constant 0 : index
    %834 = vector.load %arg7[%c21, %c0_378, %c0_379] : memref<32x16x128xf32, #tpu.memory_space<vmem>>, vector<1x16x128xf32>
    %835 = vector.shape_cast %834 : vector<1x16x128xf32> to vector<16x128xf32>
    %cst_380 = arith.constant 0.000000e+00 : f32
    %836 = vector.broadcast %cst_380 : f32 to vector<16x128xf32>
    %837 = arith.subf %836, %812 : vector<16x128xf32>
    %838 = arith.addf %837, %814 : vector<16x128xf32>
    %cst_381 = arith.constant 1.000000e+00 : f32
    %839 = vector.broadcast %cst_381 : f32 to vector<16x128xf32>
    %840 = arith.mulf %839, %838 : vector<16x128xf32>
    %841 = arith.addf %812, %840 : vector<16x128xf32>
    %cst_382 = arith.constant -2.000000e+00 : f32
    %842 = vector.broadcast %cst_382 : f32 to vector<16x128xf32>
    %843 = arith.mulf %842, %814 : vector<16x128xf32>
    %844 = arith.addf %814, %843 : vector<16x128xf32>
    %cst_383 = arith.constant 1.000000e+00 : f32
    %845 = vector.broadcast %cst_383 : f32 to vector<16x128xf32>
    %846 = arith.cmpf ogt, %841, %845 : vector<16x128xf32>
    %847 = arith.extui %846 : vector<16x128xi1> to vector<16x128xi32>
    %848 = arith.sitofp %847 : vector<16x128xi32> to vector<16x128xf32>
    %849 = arith.truncf %848 : vector<16x128xf32> to vector<16x128xbf16>
    %cst_384 = arith.constant 0.000000e+00 : f32
    %850 = vector.broadcast %cst_384 : f32 to vector<16x128xf32>
    %851 = arith.select %846, %850, %841 : vector<16x128xi1>, vector<16x128xf32>
    %852 = arith.addf %844, %835 : vector<16x128xf32>
    %853 = arith.addf %852, %816 : vector<16x128xf32>
    %cst_385 = arith.constant dense<0.000000e+00> : vector<16x256xf32>
    %854 = tpu.matmul %849, %9, %cst_385 {dimension_numbers = #tpu.dot_dimension_numbers<[1], [0], [0], [1], [0, 0, 1, 1], [], []>} : vector<16x128xbf16>, vector<128x256xbf16>, vector<16x256xf32> -> vector<16x256xf32>
    %855 = vector.extract_strided_slice %854 {offsets = [0, 0], sizes = [16, 128], strides = [1, 1]} : vector<16x256xf32> to vector<16x128xf32>
    %856 = vector.extract_strided_slice %854 {offsets = [0, 128], sizes = [16, 128], strides = [1, 1]} : vector<16x256xf32> to vector<16x128xf32>
    %857 = arith.addf %827, %856 : vector<16x128xf32>
    %cst_386 = arith.constant 0.000000e+00 : f32
    %858 = vector.broadcast %cst_386 : f32 to vector<16x128xf32>
    %859 = arith.subf %858, %824 : vector<16x128xf32>
    %860 = arith.addf %859, %857 : vector<16x128xf32>
    %cst_387 = arith.constant 1.000000e+00 : f32
    %861 = vector.broadcast %cst_387 : f32 to vector<16x128xf32>
    %862 = arith.mulf %861, %860 : vector<16x128xf32>
    %863 = arith.addf %824, %862 : vector<16x128xf32>
    %cst_388 = arith.constant -2.000000e+00 : f32
    %864 = vector.broadcast %cst_388 : f32 to vector<16x128xf32>
    %865 = arith.mulf %864, %857 : vector<16x128xf32>
    %866 = arith.addf %857, %865 : vector<16x128xf32>
    %c21_389 = arith.constant 21 : index
    %c0_390 = arith.constant 0 : index
    %c0_391 = arith.constant 0 : index
    %867 = vector.load %arg5[%c21_389, %c0_390, %c0_391] : memref<32x16x128xbf16, #tpu.memory_space<vmem>>, vector<1x16x128xbf16>
    %868 = vector.shape_cast %867 : vector<1x16x128xbf16> to vector<16x128xbf16>
    %869 = vector.shape_cast %849 : vector<16x128xbf16> to vector<1x16x128xbf16>
    tpu.vector_store %arg5[%c21_389, %c0_390, %c0_391], %869 {strides = array<i32>} : memref<32x16x128xbf16, #tpu.memory_space<vmem>>, vector<1x16x128xbf16>,
    %c21_392 = arith.constant 21 : index
    %c0_393 = arith.constant 0 : index
    %c0_394 = arith.constant 0 : index
    %870 = vector.load %arg6[%c21_392, %c0_393, %c0_394] : memref<32x16x128xf32, #tpu.memory_space<vmem>>, vector<1x16x128xf32>
    %871 = vector.shape_cast %870 : vector<1x16x128xf32> to vector<16x128xf32>
    %872 = vector.shape_cast %863 : vector<16x128xf32> to vector<1x16x128xf32>
    tpu.vector_store %arg6[%c21_392, %c0_393, %c0_394], %872 {strides = array<i32>} : memref<32x16x128xf32, #tpu.memory_space<vmem>>, vector<1x16x128xf32>,
    %c22 = arith.constant 22 : index
    %c0_395 = arith.constant 0 : index
    %c0_396 = arith.constant 0 : index
    %873 = vector.load %arg7[%c22, %c0_395, %c0_396] : memref<32x16x128xf32, #tpu.memory_space<vmem>>, vector<1x16x128xf32>
    %874 = vector.shape_cast %873 : vector<1x16x128xf32> to vector<16x128xf32>
    %cst_397 = arith.constant 0.000000e+00 : f32
    %875 = vector.broadcast %cst_397 : f32 to vector<16x128xf32>
    %876 = arith.subf %875, %851 : vector<16x128xf32>
    %877 = arith.addf %876, %853 : vector<16x128xf32>
    %cst_398 = arith.constant 1.000000e+00 : f32
    %878 = vector.broadcast %cst_398 : f32 to vector<16x128xf32>
    %879 = arith.mulf %878, %877 : vector<16x128xf32>
    %880 = arith.addf %851, %879 : vector<16x128xf32>
    %cst_399 = arith.constant -2.000000e+00 : f32
    %881 = vector.broadcast %cst_399 : f32 to vector<16x128xf32>
    %882 = arith.mulf %881, %853 : vector<16x128xf32>
    %883 = arith.addf %853, %882 : vector<16x128xf32>
    %cst_400 = arith.constant 1.000000e+00 : f32
    %884 = vector.broadcast %cst_400 : f32 to vector<16x128xf32>
    %885 = arith.cmpf ogt, %880, %884 : vector<16x128xf32>
    %886 = arith.extui %885 : vector<16x128xi1> to vector<16x128xi32>
    %887 = arith.sitofp %886 : vector<16x128xi32> to vector<16x128xf32>
    %888 = arith.truncf %887 : vector<16x128xf32> to vector<16x128xbf16>
    %cst_401 = arith.constant 0.000000e+00 : f32
    %889 = vector.broadcast %cst_401 : f32 to vector<16x128xf32>
    %890 = arith.select %885, %889, %880 : vector<16x128xi1>, vector<16x128xf32>
    %891 = arith.addf %883, %874 : vector<16x128xf32>
    %892 = arith.addf %891, %855 : vector<16x128xf32>
    %cst_402 = arith.constant dense<0.000000e+00> : vector<16x256xf32>
    %893 = tpu.matmul %888, %9, %cst_402 {dimension_numbers = #tpu.dot_dimension_numbers<[1], [0], [0], [1], [0, 0, 1, 1], [], []>} : vector<16x128xbf16>, vector<128x256xbf16>, vector<16x256xf32> -> vector<16x256xf32>
    %894 = vector.extract_strided_slice %893 {offsets = [0, 0], sizes = [16, 128], strides = [1, 1]} : vector<16x256xf32> to vector<16x128xf32>
    %895 = vector.extract_strided_slice %893 {offsets = [0, 128], sizes = [16, 128], strides = [1, 1]} : vector<16x256xf32> to vector<16x128xf32>
    %896 = arith.addf %866, %895 : vector<16x128xf32>
    %cst_403 = arith.constant 0.000000e+00 : f32
    %897 = vector.broadcast %cst_403 : f32 to vector<16x128xf32>
    %898 = arith.subf %897, %863 : vector<16x128xf32>
    %899 = arith.addf %898, %896 : vector<16x128xf32>
    %cst_404 = arith.constant 1.000000e+00 : f32
    %900 = vector.broadcast %cst_404 : f32 to vector<16x128xf32>
    %901 = arith.mulf %900, %899 : vector<16x128xf32>
    %902 = arith.addf %863, %901 : vector<16x128xf32>
    %cst_405 = arith.constant -2.000000e+00 : f32
    %903 = vector.broadcast %cst_405 : f32 to vector<16x128xf32>
    %904 = arith.mulf %903, %896 : vector<16x128xf32>
    %905 = arith.addf %896, %904 : vector<16x128xf32>
    %c22_406 = arith.constant 22 : index
    %c0_407 = arith.constant 0 : index
    %c0_408 = arith.constant 0 : index
    %906 = vector.load %arg5[%c22_406, %c0_407, %c0_408] : memref<32x16x128xbf16, #tpu.memory_space<vmem>>, vector<1x16x128xbf16>
    %907 = vector.shape_cast %906 : vector<1x16x128xbf16> to vector<16x128xbf16>
    %908 = vector.shape_cast %888 : vector<16x128xbf16> to vector<1x16x128xbf16>
    tpu.vector_store %arg5[%c22_406, %c0_407, %c0_408], %908 {strides = array<i32>} : memref<32x16x128xbf16, #tpu.memory_space<vmem>>, vector<1x16x128xbf16>,
    %c22_409 = arith.constant 22 : index
    %c0_410 = arith.constant 0 : index
    %c0_411 = arith.constant 0 : index
    %909 = vector.load %arg6[%c22_409, %c0_410, %c0_411] : memref<32x16x128xf32, #tpu.memory_space<vmem>>, vector<1x16x128xf32>
    %910 = vector.shape_cast %909 : vector<1x16x128xf32> to vector<16x128xf32>
    %911 = vector.shape_cast %902 : vector<16x128xf32> to vector<1x16x128xf32>
    tpu.vector_store %arg6[%c22_409, %c0_410, %c0_411], %911 {strides = array<i32>} : memref<32x16x128xf32, #tpu.memory_space<vmem>>, vector<1x16x128xf32>,
    %c23 = arith.constant 23 : index
    %c0_412 = arith.constant 0 : index
    %c0_413 = arith.constant 0 : index
    %912 = vector.load %arg7[%c23, %c0_412, %c0_413] : memref<32x16x128xf32, #tpu.memory_space<vmem>>, vector<1x16x128xf32>
    %913 = vector.shape_cast %912 : vector<1x16x128xf32> to vector<16x128xf32>
    %cst_414 = arith.constant 0.000000e+00 : f32
    %914 = vector.broadcast %cst_414 : f32 to vector<16x128xf32>
    %915 = arith.subf %914, %890 : vector<16x128xf32>
    %916 = arith.addf %915, %892 : vector<16x128xf32>
    %cst_415 = arith.constant 1.000000e+00 : f32
    %917 = vector.broadcast %cst_415 : f32 to vector<16x128xf32>
    %918 = arith.mulf %917, %916 : vector<16x128xf32>
    %919 = arith.addf %890, %918 : vector<16x128xf32>
    %cst_416 = arith.constant -2.000000e+00 : f32
    %920 = vector.broadcast %cst_416 : f32 to vector<16x128xf32>
    %921 = arith.mulf %920, %892 : vector<16x128xf32>
    %922 = arith.addf %892, %921 : vector<16x128xf32>
    %cst_417 = arith.constant 1.000000e+00 : f32
    %923 = vector.broadcast %cst_417 : f32 to vector<16x128xf32>
    %924 = arith.cmpf ogt, %919, %923 : vector<16x128xf32>
    %925 = arith.extui %924 : vector<16x128xi1> to vector<16x128xi32>
    %926 = arith.sitofp %925 : vector<16x128xi32> to vector<16x128xf32>
    %927 = arith.truncf %926 : vector<16x128xf32> to vector<16x128xbf16>
    %cst_418 = arith.constant 0.000000e+00 : f32
    %928 = vector.broadcast %cst_418 : f32 to vector<16x128xf32>
    %929 = arith.select %924, %928, %919 : vector<16x128xi1>, vector<16x128xf32>
    %930 = arith.addf %922, %913 : vector<16x128xf32>
    %931 = arith.addf %930, %894 : vector<16x128xf32>
    %cst_419 = arith.constant dense<0.000000e+00> : vector<16x256xf32>
    %932 = tpu.matmul %927, %9, %cst_419 {dimension_numbers = #tpu.dot_dimension_numbers<[1], [0], [0], [1], [0, 0, 1, 1], [], []>} : vector<16x128xbf16>, vector<128x256xbf16>, vector<16x256xf32> -> vector<16x256xf32>
    %933 = vector.extract_strided_slice %932 {offsets = [0, 0], sizes = [16, 128], strides = [1, 1]} : vector<16x256xf32> to vector<16x128xf32>
    %934 = vector.extract_strided_slice %932 {offsets = [0, 128], sizes = [16, 128], strides = [1, 1]} : vector<16x256xf32> to vector<16x128xf32>
    %935 = arith.addf %905, %934 : vector<16x128xf32>
    %cst_420 = arith.constant 0.000000e+00 : f32
    %936 = vector.broadcast %cst_420 : f32 to vector<16x128xf32>
    %937 = arith.subf %936, %902 : vector<16x128xf32>
    %938 = arith.addf %937, %935 : vector<16x128xf32>
    %cst_421 = arith.constant 1.000000e+00 : f32
    %939 = vector.broadcast %cst_421 : f32 to vector<16x128xf32>
    %940 = arith.mulf %939, %938 : vector<16x128xf32>
    %941 = arith.addf %902, %940 : vector<16x128xf32>
    %cst_422 = arith.constant -2.000000e+00 : f32
    %942 = vector.broadcast %cst_422 : f32 to vector<16x128xf32>
    %943 = arith.mulf %942, %935 : vector<16x128xf32>
    %944 = arith.addf %935, %943 : vector<16x128xf32>
    %c23_423 = arith.constant 23 : index
    %c0_424 = arith.constant 0 : index
    %c0_425 = arith.constant 0 : index
    %945 = vector.load %arg5[%c23_423, %c0_424, %c0_425] : memref<32x16x128xbf16, #tpu.memory_space<vmem>>, vector<1x16x128xbf16>
    %946 = vector.shape_cast %945 : vector<1x16x128xbf16> to vector<16x128xbf16>
    %947 = vector.shape_cast %927 : vector<16x128xbf16> to vector<1x16x128xbf16>
    tpu.vector_store %arg5[%c23_423, %c0_424, %c0_425], %947 {strides = array<i32>} : memref<32x16x128xbf16, #tpu.memory_space<vmem>>, vector<1x16x128xbf16>,
    %c23_426 = arith.constant 23 : index
    %c0_427 = arith.constant 0 : index
    %c0_428 = arith.constant 0 : index
    %948 = vector.load %arg6[%c23_426, %c0_427, %c0_428] : memref<32x16x128xf32, #tpu.memory_space<vmem>>, vector<1x16x128xf32>
    %949 = vector.shape_cast %948 : vector<1x16x128xf32> to vector<16x128xf32>
    %950 = vector.shape_cast %941 : vector<16x128xf32> to vector<1x16x128xf32>
    tpu.vector_store %arg6[%c23_426, %c0_427, %c0_428], %950 {strides = array<i32>} : memref<32x16x128xf32, #tpu.memory_space<vmem>>, vector<1x16x128xf32>,
    %c24 = arith.constant 24 : index
    %c0_429 = arith.constant 0 : index
    %c0_430 = arith.constant 0 : index
    %951 = vector.load %arg7[%c24, %c0_429, %c0_430] : memref<32x16x128xf32, #tpu.memory_space<vmem>>, vector<1x16x128xf32>
    %952 = vector.shape_cast %951 : vector<1x16x128xf32> to vector<16x128xf32>
    %cst_431 = arith.constant 0.000000e+00 : f32
    %953 = vector.broadcast %cst_431 : f32 to vector<16x128xf32>
    %954 = arith.subf %953, %929 : vector<16x128xf32>
    %955 = arith.addf %954, %931 : vector<16x128xf32>
    %cst_432 = arith.constant 1.000000e+00 : f32
    %956 = vector.broadcast %cst_432 : f32 to vector<16x128xf32>
    %957 = arith.mulf %956, %955 : vector<16x128xf32>
    %958 = arith.addf %929, %957 : vector<16x128xf32>
    %cst_433 = arith.constant -2.000000e+00 : f32
    %959 = vector.broadcast %cst_433 : f32 to vector<16x128xf32>
    %960 = arith.mulf %959, %931 : vector<16x128xf32>
    %961 = arith.addf %931, %960 : vector<16x128xf32>
    %cst_434 = arith.constant 1.000000e+00 : f32
    %962 = vector.broadcast %cst_434 : f32 to vector<16x128xf32>
    %963 = arith.cmpf ogt, %958, %962 : vector<16x128xf32>
    %964 = arith.extui %963 : vector<16x128xi1> to vector<16x128xi32>
    %965 = arith.sitofp %964 : vector<16x128xi32> to vector<16x128xf32>
    %966 = arith.truncf %965 : vector<16x128xf32> to vector<16x128xbf16>
    %cst_435 = arith.constant 0.000000e+00 : f32
    %967 = vector.broadcast %cst_435 : f32 to vector<16x128xf32>
    %968 = arith.select %963, %967, %958 : vector<16x128xi1>, vector<16x128xf32>
    %969 = arith.addf %961, %952 : vector<16x128xf32>
    %970 = arith.addf %969, %933 : vector<16x128xf32>
    %cst_436 = arith.constant dense<0.000000e+00> : vector<16x256xf32>
    %971 = tpu.matmul %966, %9, %cst_436 {dimension_numbers = #tpu.dot_dimension_numbers<[1], [0], [0], [1], [0, 0, 1, 1], [], []>} : vector<16x128xbf16>, vector<128x256xbf16>, vector<16x256xf32> -> vector<16x256xf32>
    %972 = vector.extract_strided_slice %971 {offsets = [0, 0], sizes = [16, 128], strides = [1, 1]} : vector<16x256xf32> to vector<16x128xf32>
    %973 = vector.extract_strided_slice %971 {offsets = [0, 128], sizes = [16, 128], strides = [1, 1]} : vector<16x256xf32> to vector<16x128xf32>
    %974 = arith.addf %944, %973 : vector<16x128xf32>
    %cst_437 = arith.constant 0.000000e+00 : f32
    %975 = vector.broadcast %cst_437 : f32 to vector<16x128xf32>
    %976 = arith.subf %975, %941 : vector<16x128xf32>
    %977 = arith.addf %976, %974 : vector<16x128xf32>
    %cst_438 = arith.constant 1.000000e+00 : f32
    %978 = vector.broadcast %cst_438 : f32 to vector<16x128xf32>
    %979 = arith.mulf %978, %977 : vector<16x128xf32>
    %980 = arith.addf %941, %979 : vector<16x128xf32>
    %cst_439 = arith.constant -2.000000e+00 : f32
    %981 = vector.broadcast %cst_439 : f32 to vector<16x128xf32>
    %982 = arith.mulf %981, %974 : vector<16x128xf32>
    %983 = arith.addf %974, %982 : vector<16x128xf32>
    %c24_440 = arith.constant 24 : index
    %c0_441 = arith.constant 0 : index
    %c0_442 = arith.constant 0 : index
    %984 = vector.load %arg5[%c24_440, %c0_441, %c0_442] : memref<32x16x128xbf16, #tpu.memory_space<vmem>>, vector<1x16x128xbf16>
    %985 = vector.shape_cast %984 : vector<1x16x128xbf16> to vector<16x128xbf16>
    %986 = vector.shape_cast %966 : vector<16x128xbf16> to vector<1x16x128xbf16>
    tpu.vector_store %arg5[%c24_440, %c0_441, %c0_442], %986 {strides = array<i32>} : memref<32x16x128xbf16, #tpu.memory_space<vmem>>, vector<1x16x128xbf16>,
    %c24_443 = arith.constant 24 : index
    %c0_444 = arith.constant 0 : index
    %c0_445 = arith.constant 0 : index
    %987 = vector.load %arg6[%c24_443, %c0_444, %c0_445] : memref<32x16x128xf32, #tpu.memory_space<vmem>>, vector<1x16x128xf32>
    %988 = vector.shape_cast %987 : vector<1x16x128xf32> to vector<16x128xf32>
    %989 = vector.shape_cast %980 : vector<16x128xf32> to vector<1x16x128xf32>
    tpu.vector_store %arg6[%c24_443, %c0_444, %c0_445], %989 {strides = array<i32>} : memref<32x16x128xf32, #tpu.memory_space<vmem>>, vector<1x16x128xf32>,
    %c25 = arith.constant 25 : index
    %c0_446 = arith.constant 0 : index
    %c0_447 = arith.constant 0 : index
    %990 = vector.load %arg7[%c25, %c0_446, %c0_447] : memref<32x16x128xf32, #tpu.memory_space<vmem>>, vector<1x16x128xf32>
    %991 = vector.shape_cast %990 : vector<1x16x128xf32> to vector<16x128xf32>
    %cst_448 = arith.constant 0.000000e+00 : f32
    %992 = vector.broadcast %cst_448 : f32 to vector<16x128xf32>
    %993 = arith.subf %992, %968 : vector<16x128xf32>
    %994 = arith.addf %993, %970 : vector<16x128xf32>
    %cst_449 = arith.constant 1.000000e+00 : f32
    %995 = vector.broadcast %cst_449 : f32 to vector<16x128xf32>
    %996 = arith.mulf %995, %994 : vector<16x128xf32>
    %997 = arith.addf %968, %996 : vector<16x128xf32>
    %cst_450 = arith.constant -2.000000e+00 : f32
    %998 = vector.broadcast %cst_450 : f32 to vector<16x128xf32>
    %999 = arith.mulf %998, %970 : vector<16x128xf32>
    %1000 = arith.addf %970, %999 : vector<16x128xf32>
    %cst_451 = arith.constant 1.000000e+00 : f32
    %1001 = vector.broadcast %cst_451 : f32 to vector<16x128xf32>
    %1002 = arith.cmpf ogt, %997, %1001 : vector<16x128xf32>
    %1003 = arith.extui %1002 : vector<16x128xi1> to vector<16x128xi32>
    %1004 = arith.sitofp %1003 : vector<16x128xi32> to vector<16x128xf32>
    %1005 = arith.truncf %1004 : vector<16x128xf32> to vector<16x128xbf16>
    %cst_452 = arith.constant 0.000000e+00 : f32
    %1006 = vector.broadcast %cst_452 : f32 to vector<16x128xf32>
    %1007 = arith.select %1002, %1006, %997 : vector<16x128xi1>, vector<16x128xf32>
    %1008 = arith.addf %1000, %991 : vector<16x128xf32>
    %1009 = arith.addf %1008, %972 : vector<16x128xf32>
    %cst_453 = arith.constant dense<0.000000e+00> : vector<16x256xf32>
    %1010 = tpu.matmul %1005, %9, %cst_453 {dimension_numbers = #tpu.dot_dimension_numbers<[1], [0], [0], [1], [0, 0, 1, 1], [], []>} : vector<16x128xbf16>, vector<128x256xbf16>, vector<16x256xf32> -> vector<16x256xf32>
    %1011 = vector.extract_strided_slice %1010 {offsets = [0, 0], sizes = [16, 128], strides = [1, 1]} : vector<16x256xf32> to vector<16x128xf32>
    %1012 = vector.extract_strided_slice %1010 {offsets = [0, 128], sizes = [16, 128], strides = [1, 1]} : vector<16x256xf32> to vector<16x128xf32>
    %1013 = arith.addf %983, %1012 : vector<16x128xf32>
    %cst_454 = arith.constant 0.000000e+00 : f32
    %1014 = vector.broadcast %cst_454 : f32 to vector<16x128xf32>
    %1015 = arith.subf %1014, %980 : vector<16x128xf32>
    %1016 = arith.addf %1015, %1013 : vector<16x128xf32>
    %cst_455 = arith.constant 1.000000e+00 : f32
    %1017 = vector.broadcast %cst_455 : f32 to vector<16x128xf32>
    %1018 = arith.mulf %1017, %1016 : vector<16x128xf32>
    %1019 = arith.addf %980, %1018 : vector<16x128xf32>
    %cst_456 = arith.constant -2.000000e+00 : f32
    %1020 = vector.broadcast %cst_456 : f32 to vector<16x128xf32>
    %1021 = arith.mulf %1020, %1013 : vector<16x128xf32>
    %1022 = arith.addf %1013, %1021 : vector<16x128xf32>
    %c25_457 = arith.constant 25 : index
    %c0_458 = arith.constant 0 : index
    %c0_459 = arith.constant 0 : index
    %1023 = vector.load %arg5[%c25_457, %c0_458, %c0_459] : memref<32x16x128xbf16, #tpu.memory_space<vmem>>, vector<1x16x128xbf16>
    %1024 = vector.shape_cast %1023 : vector<1x16x128xbf16> to vector<16x128xbf16>
    %1025 = vector.shape_cast %1005 : vector<16x128xbf16> to vector<1x16x128xbf16>
    tpu.vector_store %arg5[%c25_457, %c0_458, %c0_459], %1025 {strides = array<i32>} : memref<32x16x128xbf16, #tpu.memory_space<vmem>>, vector<1x16x128xbf16>,
    %c25_460 = arith.constant 25 : index
    %c0_461 = arith.constant 0 : index
    %c0_462 = arith.constant 0 : index
    %1026 = vector.load %arg6[%c25_460, %c0_461, %c0_462] : memref<32x16x128xf32, #tpu.memory_space<vmem>>, vector<1x16x128xf32>
    %1027 = vector.shape_cast %1026 : vector<1x16x128xf32> to vector<16x128xf32>
    %1028 = vector.shape_cast %1019 : vector<16x128xf32> to vector<1x16x128xf32>
    tpu.vector_store %arg6[%c25_460, %c0_461, %c0_462], %1028 {strides = array<i32>} : memref<32x16x128xf32, #tpu.memory_space<vmem>>, vector<1x16x128xf32>,
    %c26 = arith.constant 26 : index
    %c0_463 = arith.constant 0 : index
    %c0_464 = arith.constant 0 : index
    %1029 = vector.load %arg7[%c26, %c0_463, %c0_464] : memref<32x16x128xf32, #tpu.memory_space<vmem>>, vector<1x16x128xf32>
    %1030 = vector.shape_cast %1029 : vector<1x16x128xf32> to vector<16x128xf32>
    %cst_465 = arith.constant 0.000000e+00 : f32
    %1031 = vector.broadcast %cst_465 : f32 to vector<16x128xf32>
    %1032 = arith.subf %1031, %1007 : vector<16x128xf32>
    %1033 = arith.addf %1032, %1009 : vector<16x128xf32>
    %cst_466 = arith.constant 1.000000e+00 : f32
    %1034 = vector.broadcast %cst_466 : f32 to vector<16x128xf32>
    %1035 = arith.mulf %1034, %1033 : vector<16x128xf32>
    %1036 = arith.addf %1007, %1035 : vector<16x128xf32>
    %cst_467 = arith.constant -2.000000e+00 : f32
    %1037 = vector.broadcast %cst_467 : f32 to vector<16x128xf32>
    %1038 = arith.mulf %1037, %1009 : vector<16x128xf32>
    %1039 = arith.addf %1009, %1038 : vector<16x128xf32>
    %cst_468 = arith.constant 1.000000e+00 : f32
    %1040 = vector.broadcast %cst_468 : f32 to vector<16x128xf32>
    %1041 = arith.cmpf ogt, %1036, %1040 : vector<16x128xf32>
    %1042 = arith.extui %1041 : vector<16x128xi1> to vector<16x128xi32>
    %1043 = arith.sitofp %1042 : vector<16x128xi32> to vector<16x128xf32>
    %1044 = arith.truncf %1043 : vector<16x128xf32> to vector<16x128xbf16>
    %cst_469 = arith.constant 0.000000e+00 : f32
    %1045 = vector.broadcast %cst_469 : f32 to vector<16x128xf32>
    %1046 = arith.select %1041, %1045, %1036 : vector<16x128xi1>, vector<16x128xf32>
    %1047 = arith.addf %1039, %1030 : vector<16x128xf32>
    %1048 = arith.addf %1047, %1011 : vector<16x128xf32>
    %cst_470 = arith.constant dense<0.000000e+00> : vector<16x256xf32>
    %1049 = tpu.matmul %1044, %9, %cst_470 {dimension_numbers = #tpu.dot_dimension_numbers<[1], [0], [0], [1], [0, 0, 1, 1], [], []>} : vector<16x128xbf16>, vector<128x256xbf16>, vector<16x256xf32> -> vector<16x256xf32>
    %1050 = vector.extract_strided_slice %1049 {offsets = [0, 0], sizes = [16, 128], strides = [1, 1]} : vector<16x256xf32> to vector<16x128xf32>
    %1051 = vector.extract_strided_slice %1049 {offsets = [0, 128], sizes = [16, 128], strides = [1, 1]} : vector<16x256xf32> to vector<16x128xf32>
    %1052 = arith.addf %1022, %1051 : vector<16x128xf32>
    %cst_471 = arith.constant 0.000000e+00 : f32
    %1053 = vector.broadcast %cst_471 : f32 to vector<16x128xf32>
    %1054 = arith.subf %1053, %1019 : vector<16x128xf32>
    %1055 = arith.addf %1054, %1052 : vector<16x128xf32>
    %cst_472 = arith.constant 1.000000e+00 : f32
    %1056 = vector.broadcast %cst_472 : f32 to vector<16x128xf32>
    %1057 = arith.mulf %1056, %1055 : vector<16x128xf32>
    %1058 = arith.addf %1019, %1057 : vector<16x128xf32>
    %cst_473 = arith.constant -2.000000e+00 : f32
    %1059 = vector.broadcast %cst_473 : f32 to vector<16x128xf32>
    %1060 = arith.mulf %1059, %1052 : vector<16x128xf32>
    %1061 = arith.addf %1052, %1060 : vector<16x128xf32>
    %c26_474 = arith.constant 26 : index
    %c0_475 = arith.constant 0 : index
    %c0_476 = arith.constant 0 : index
    %1062 = vector.load %arg5[%c26_474, %c0_475, %c0_476] : memref<32x16x128xbf16, #tpu.memory_space<vmem>>, vector<1x16x128xbf16>
    %1063 = vector.shape_cast %1062 : vector<1x16x128xbf16> to vector<16x128xbf16>
    %1064 = vector.shape_cast %1044 : vector<16x128xbf16> to vector<1x16x128xbf16>
    tpu.vector_store %arg5[%c26_474, %c0_475, %c0_476], %1064 {strides = array<i32>} : memref<32x16x128xbf16, #tpu.memory_space<vmem>>, vector<1x16x128xbf16>,
    %c26_477 = arith.constant 26 : index
    %c0_478 = arith.constant 0 : index
    %c0_479 = arith.constant 0 : index
    %1065 = vector.load %arg6[%c26_477, %c0_478, %c0_479] : memref<32x16x128xf32, #tpu.memory_space<vmem>>, vector<1x16x128xf32>
    %1066 = vector.shape_cast %1065 : vector<1x16x128xf32> to vector<16x128xf32>
    %1067 = vector.shape_cast %1058 : vector<16x128xf32> to vector<1x16x128xf32>
    tpu.vector_store %arg6[%c26_477, %c0_478, %c0_479], %1067 {strides = array<i32>} : memref<32x16x128xf32, #tpu.memory_space<vmem>>, vector<1x16x128xf32>,
    %c27 = arith.constant 27 : index
    %c0_480 = arith.constant 0 : index
    %c0_481 = arith.constant 0 : index
    %1068 = vector.load %arg7[%c27, %c0_480, %c0_481] : memref<32x16x128xf32, #tpu.memory_space<vmem>>, vector<1x16x128xf32>
    %1069 = vector.shape_cast %1068 : vector<1x16x128xf32> to vector<16x128xf32>
    %cst_482 = arith.constant 0.000000e+00 : f32
    %1070 = vector.broadcast %cst_482 : f32 to vector<16x128xf32>
    %1071 = arith.subf %1070, %1046 : vector<16x128xf32>
    %1072 = arith.addf %1071, %1048 : vector<16x128xf32>
    %cst_483 = arith.constant 1.000000e+00 : f32
    %1073 = vector.broadcast %cst_483 : f32 to vector<16x128xf32>
    %1074 = arith.mulf %1073, %1072 : vector<16x128xf32>
    %1075 = arith.addf %1046, %1074 : vector<16x128xf32>
    %cst_484 = arith.constant -2.000000e+00 : f32
    %1076 = vector.broadcast %cst_484 : f32 to vector<16x128xf32>
    %1077 = arith.mulf %1076, %1048 : vector<16x128xf32>
    %1078 = arith.addf %1048, %1077 : vector<16x128xf32>
    %cst_485 = arith.constant 1.000000e+00 : f32
    %1079 = vector.broadcast %cst_485 : f32 to vector<16x128xf32>
    %1080 = arith.cmpf ogt, %1075, %1079 : vector<16x128xf32>
    %1081 = arith.extui %1080 : vector<16x128xi1> to vector<16x128xi32>
    %1082 = arith.sitofp %1081 : vector<16x128xi32> to vector<16x128xf32>
    %1083 = arith.truncf %1082 : vector<16x128xf32> to vector<16x128xbf16>
    %cst_486 = arith.constant 0.000000e+00 : f32
    %1084 = vector.broadcast %cst_486 : f32 to vector<16x128xf32>
    %1085 = arith.select %1080, %1084, %1075 : vector<16x128xi1>, vector<16x128xf32>
    %1086 = arith.addf %1078, %1069 : vector<16x128xf32>
    %1087 = arith.addf %1086, %1050 : vector<16x128xf32>
    %cst_487 = arith.constant dense<0.000000e+00> : vector<16x256xf32>
    %1088 = tpu.matmul %1083, %9, %cst_487 {dimension_numbers = #tpu.dot_dimension_numbers<[1], [0], [0], [1], [0, 0, 1, 1], [], []>} : vector<16x128xbf16>, vector<128x256xbf16>, vector<16x256xf32> -> vector<16x256xf32>
    %1089 = vector.extract_strided_slice %1088 {offsets = [0, 0], sizes = [16, 128], strides = [1, 1]} : vector<16x256xf32> to vector<16x128xf32>
    %1090 = vector.extract_strided_slice %1088 {offsets = [0, 128], sizes = [16, 128], strides = [1, 1]} : vector<16x256xf32> to vector<16x128xf32>
    %1091 = arith.addf %1061, %1090 : vector<16x128xf32>
    %cst_488 = arith.constant 0.000000e+00 : f32
    %1092 = vector.broadcast %cst_488 : f32 to vector<16x128xf32>
    %1093 = arith.subf %1092, %1058 : vector<16x128xf32>
    %1094 = arith.addf %1093, %1091 : vector<16x128xf32>
    %cst_489 = arith.constant 1.000000e+00 : f32
    %1095 = vector.broadcast %cst_489 : f32 to vector<16x128xf32>
    %1096 = arith.mulf %1095, %1094 : vector<16x128xf32>
    %1097 = arith.addf %1058, %1096 : vector<16x128xf32>
    %cst_490 = arith.constant -2.000000e+00 : f32
    %1098 = vector.broadcast %cst_490 : f32 to vector<16x128xf32>
    %1099 = arith.mulf %1098, %1091 : vector<16x128xf32>
    %1100 = arith.addf %1091, %1099 : vector<16x128xf32>
    %c27_491 = arith.constant 27 : index
    %c0_492 = arith.constant 0 : index
    %c0_493 = arith.constant 0 : index
    %1101 = vector.load %arg5[%c27_491, %c0_492, %c0_493] : memref<32x16x128xbf16, #tpu.memory_space<vmem>>, vector<1x16x128xbf16>
    %1102 = vector.shape_cast %1101 : vector<1x16x128xbf16> to vector<16x128xbf16>
    %1103 = vector.shape_cast %1083 : vector<16x128xbf16> to vector<1x16x128xbf16>
    tpu.vector_store %arg5[%c27_491, %c0_492, %c0_493], %1103 {strides = array<i32>} : memref<32x16x128xbf16, #tpu.memory_space<vmem>>, vector<1x16x128xbf16>,
    %c27_494 = arith.constant 27 : index
    %c0_495 = arith.constant 0 : index
    %c0_496 = arith.constant 0 : index
    %1104 = vector.load %arg6[%c27_494, %c0_495, %c0_496] : memref<32x16x128xf32, #tpu.memory_space<vmem>>, vector<1x16x128xf32>
    %1105 = vector.shape_cast %1104 : vector<1x16x128xf32> to vector<16x128xf32>
    %1106 = vector.shape_cast %1097 : vector<16x128xf32> to vector<1x16x128xf32>
    tpu.vector_store %arg6[%c27_494, %c0_495, %c0_496], %1106 {strides = array<i32>} : memref<32x16x128xf32, #tpu.memory_space<vmem>>, vector<1x16x128xf32>,
    %c28 = arith.constant 28 : index
    %c0_497 = arith.constant 0 : index
    %c0_498 = arith.constant 0 : index
    %1107 = vector.load %arg7[%c28, %c0_497, %c0_498] : memref<32x16x128xf32, #tpu.memory_space<vmem>>, vector<1x16x128xf32>
    %1108 = vector.shape_cast %1107 : vector<1x16x128xf32> to vector<16x128xf32>
    %cst_499 = arith.constant 0.000000e+00 : f32
    %1109 = vector.broadcast %cst_499 : f32 to vector<16x128xf32>
    %1110 = arith.subf %1109, %1085 : vector<16x128xf32>
    %1111 = arith.addf %1110, %1087 : vector<16x128xf32>
    %cst_500 = arith.constant 1.000000e+00 : f32
    %1112 = vector.broadcast %cst_500 : f32 to vector<16x128xf32>
    %1113 = arith.mulf %1112, %1111 : vector<16x128xf32>
    %1114 = arith.addf %1085, %1113 : vector<16x128xf32>
    %cst_501 = arith.constant -2.000000e+00 : f32
    %1115 = vector.broadcast %cst_501 : f32 to vector<16x128xf32>
    %1116 = arith.mulf %1115, %1087 : vector<16x128xf32>
    %1117 = arith.addf %1087, %1116 : vector<16x128xf32>
    %cst_502 = arith.constant 1.000000e+00 : f32
    %1118 = vector.broadcast %cst_502 : f32 to vector<16x128xf32>
    %1119 = arith.cmpf ogt, %1114, %1118 : vector<16x128xf32>
    %1120 = arith.extui %1119 : vector<16x128xi1> to vector<16x128xi32>
    %1121 = arith.sitofp %1120 : vector<16x128xi32> to vector<16x128xf32>
    %1122 = arith.truncf %1121 : vector<16x128xf32> to vector<16x128xbf16>
    %cst_503 = arith.constant 0.000000e+00 : f32
    %1123 = vector.broadcast %cst_503 : f32 to vector<16x128xf32>
    %1124 = arith.select %1119, %1123, %1114 : vector<16x128xi1>, vector<16x128xf32>
    %1125 = arith.addf %1117, %1108 : vector<16x128xf32>
    %1126 = arith.addf %1125, %1089 : vector<16x128xf32>
    %cst_504 = arith.constant dense<0.000000e+00> : vector<16x256xf32>
    %1127 = tpu.matmul %1122, %9, %cst_504 {dimension_numbers = #tpu.dot_dimension_numbers<[1], [0], [0], [1], [0, 0, 1, 1], [], []>} : vector<16x128xbf16>, vector<128x256xbf16>, vector<16x256xf32> -> vector<16x256xf32>
    %1128 = vector.extract_strided_slice %1127 {offsets = [0, 0], sizes = [16, 128], strides = [1, 1]} : vector<16x256xf32> to vector<16x128xf32>
    %1129 = vector.extract_strided_slice %1127 {offsets = [0, 128], sizes = [16, 128], strides = [1, 1]} : vector<16x256xf32> to vector<16x128xf32>
    %1130 = arith.addf %1100, %1129 : vector<16x128xf32>
    %cst_505 = arith.constant 0.000000e+00 : f32
    %1131 = vector.broadcast %cst_505 : f32 to vector<16x128xf32>
    %1132 = arith.subf %1131, %1097 : vector<16x128xf32>
    %1133 = arith.addf %1132, %1130 : vector<16x128xf32>
    %cst_506 = arith.constant 1.000000e+00 : f32
    %1134 = vector.broadcast %cst_506 : f32 to vector<16x128xf32>
    %1135 = arith.mulf %1134, %1133 : vector<16x128xf32>
    %1136 = arith.addf %1097, %1135 : vector<16x128xf32>
    %cst_507 = arith.constant -2.000000e+00 : f32
    %1137 = vector.broadcast %cst_507 : f32 to vector<16x128xf32>
    %1138 = arith.mulf %1137, %1130 : vector<16x128xf32>
    %1139 = arith.addf %1130, %1138 : vector<16x128xf32>
    %c28_508 = arith.constant 28 : index
    %c0_509 = arith.constant 0 : index
    %c0_510 = arith.constant 0 : index
    %1140 = vector.load %arg5[%c28_508, %c0_509, %c0_510] : memref<32x16x128xbf16, #tpu.memory_space<vmem>>, vector<1x16x128xbf16>
    %1141 = vector.shape_cast %1140 : vector<1x16x128xbf16> to vector<16x128xbf16>
    %1142 = vector.shape_cast %1122 : vector<16x128xbf16> to vector<1x16x128xbf16>
    tpu.vector_store %arg5[%c28_508, %c0_509, %c0_510], %1142 {strides = array<i32>} : memref<32x16x128xbf16, #tpu.memory_space<vmem>>, vector<1x16x128xbf16>,
    %c28_511 = arith.constant 28 : index
    %c0_512 = arith.constant 0 : index
    %c0_513 = arith.constant 0 : index
    %1143 = vector.load %arg6[%c28_511, %c0_512, %c0_513] : memref<32x16x128xf32, #tpu.memory_space<vmem>>, vector<1x16x128xf32>
    %1144 = vector.shape_cast %1143 : vector<1x16x128xf32> to vector<16x128xf32>
    %1145 = vector.shape_cast %1136 : vector<16x128xf32> to vector<1x16x128xf32>
    tpu.vector_store %arg6[%c28_511, %c0_512, %c0_513], %1145 {strides = array<i32>} : memref<32x16x128xf32, #tpu.memory_space<vmem>>, vector<1x16x128xf32>,
    %c29 = arith.constant 29 : index
    %c0_514 = arith.constant 0 : index
    %c0_515 = arith.constant 0 : index
    %1146 = vector.load %arg7[%c29, %c0_514, %c0_515] : memref<32x16x128xf32, #tpu.memory_space<vmem>>, vector<1x16x128xf32>
    %1147 = vector.shape_cast %1146 : vector<1x16x128xf32> to vector<16x128xf32>
    %cst_516 = arith.constant 0.000000e+00 : f32
    %1148 = vector.broadcast %cst_516 : f32 to vector<16x128xf32>
    %1149 = arith.subf %1148, %1124 : vector<16x128xf32>
    %1150 = arith.addf %1149, %1126 : vector<16x128xf32>
    %cst_517 = arith.constant 1.000000e+00 : f32
    %1151 = vector.broadcast %cst_517 : f32 to vector<16x128xf32>
    %1152 = arith.mulf %1151, %1150 : vector<16x128xf32>
    %1153 = arith.addf %1124, %1152 : vector<16x128xf32>
    %cst_518 = arith.constant -2.000000e+00 : f32
    %1154 = vector.broadcast %cst_518 : f32 to vector<16x128xf32>
    %1155 = arith.mulf %1154, %1126 : vector<16x128xf32>
    %1156 = arith.addf %1126, %1155 : vector<16x128xf32>
    %cst_519 = arith.constant 1.000000e+00 : f32
    %1157 = vector.broadcast %cst_519 : f32 to vector<16x128xf32>
    %1158 = arith.cmpf ogt, %1153, %1157 : vector<16x128xf32>
    %1159 = arith.extui %1158 : vector<16x128xi1> to vector<16x128xi32>
    %1160 = arith.sitofp %1159 : vector<16x128xi32> to vector<16x128xf32>
    %1161 = arith.truncf %1160 : vector<16x128xf32> to vector<16x128xbf16>
    %cst_520 = arith.constant 0.000000e+00 : f32
    %1162 = vector.broadcast %cst_520 : f32 to vector<16x128xf32>
    %1163 = arith.select %1158, %1162, %1153 : vector<16x128xi1>, vector<16x128xf32>
    %1164 = arith.addf %1156, %1147 : vector<16x128xf32>
    %1165 = arith.addf %1164, %1128 : vector<16x128xf32>
    %cst_521 = arith.constant dense<0.000000e+00> : vector<16x256xf32>
    %1166 = tpu.matmul %1161, %9, %cst_521 {dimension_numbers = #tpu.dot_dimension_numbers<[1], [0], [0], [1], [0, 0, 1, 1], [], []>} : vector<16x128xbf16>, vector<128x256xbf16>, vector<16x256xf32> -> vector<16x256xf32>
    %1167 = vector.extract_strided_slice %1166 {offsets = [0, 0], sizes = [16, 128], strides = [1, 1]} : vector<16x256xf32> to vector<16x128xf32>
    %1168 = vector.extract_strided_slice %1166 {offsets = [0, 128], sizes = [16, 128], strides = [1, 1]} : vector<16x256xf32> to vector<16x128xf32>
    %1169 = arith.addf %1139, %1168 : vector<16x128xf32>
    %cst_522 = arith.constant 0.000000e+00 : f32
    %1170 = vector.broadcast %cst_522 : f32 to vector<16x128xf32>
    %1171 = arith.subf %1170, %1136 : vector<16x128xf32>
    %1172 = arith.addf %1171, %1169 : vector<16x128xf32>
    %cst_523 = arith.constant 1.000000e+00 : f32
    %1173 = vector.broadcast %cst_523 : f32 to vector<16x128xf32>
    %1174 = arith.mulf %1173, %1172 : vector<16x128xf32>
    %1175 = arith.addf %1136, %1174 : vector<16x128xf32>
    %cst_524 = arith.constant -2.000000e+00 : f32
    %1176 = vector.broadcast %cst_524 : f32 to vector<16x128xf32>
    %1177 = arith.mulf %1176, %1169 : vector<16x128xf32>
    %1178 = arith.addf %1169, %1177 : vector<16x128xf32>
    %c29_525 = arith.constant 29 : index
    %c0_526 = arith.constant 0 : index
    %c0_527 = arith.constant 0 : index
    %1179 = vector.load %arg5[%c29_525, %c0_526, %c0_527] : memref<32x16x128xbf16, #tpu.memory_space<vmem>>, vector<1x16x128xbf16>
    %1180 = vector.shape_cast %1179 : vector<1x16x128xbf16> to vector<16x128xbf16>
    %1181 = vector.shape_cast %1161 : vector<16x128xbf16> to vector<1x16x128xbf16>
    tpu.vector_store %arg5[%c29_525, %c0_526, %c0_527], %1181 {strides = array<i32>} : memref<32x16x128xbf16, #tpu.memory_space<vmem>>, vector<1x16x128xbf16>,
    %c29_528 = arith.constant 29 : index
    %c0_529 = arith.constant 0 : index
    %c0_530 = arith.constant 0 : index
    %1182 = vector.load %arg6[%c29_528, %c0_529, %c0_530] : memref<32x16x128xf32, #tpu.memory_space<vmem>>, vector<1x16x128xf32>
    %1183 = vector.shape_cast %1182 : vector<1x16x128xf32> to vector<16x128xf32>
    %1184 = vector.shape_cast %1175 : vector<16x128xf32> to vector<1x16x128xf32>
    tpu.vector_store %arg6[%c29_528, %c0_529, %c0_530], %1184 {strides = array<i32>} : memref<32x16x128xf32, #tpu.memory_space<vmem>>, vector<1x16x128xf32>,
    %c30 = arith.constant 30 : index
    %c0_531 = arith.constant 0 : index
    %c0_532 = arith.constant 0 : index
    %1185 = vector.load %arg7[%c30, %c0_531, %c0_532] : memref<32x16x128xf32, #tpu.memory_space<vmem>>, vector<1x16x128xf32>
    %1186 = vector.shape_cast %1185 : vector<1x16x128xf32> to vector<16x128xf32>
    %cst_533 = arith.constant 0.000000e+00 : f32
    %1187 = vector.broadcast %cst_533 : f32 to vector<16x128xf32>
    %1188 = arith.subf %1187, %1163 : vector<16x128xf32>
    %1189 = arith.addf %1188, %1165 : vector<16x128xf32>
    %cst_534 = arith.constant 1.000000e+00 : f32
    %1190 = vector.broadcast %cst_534 : f32 to vector<16x128xf32>
    %1191 = arith.mulf %1190, %1189 : vector<16x128xf32>
    %1192 = arith.addf %1163, %1191 : vector<16x128xf32>
    %cst_535 = arith.constant -2.000000e+00 : f32
    %1193 = vector.broadcast %cst_535 : f32 to vector<16x128xf32>
    %1194 = arith.mulf %1193, %1165 : vector<16x128xf32>
    %1195 = arith.addf %1165, %1194 : vector<16x128xf32>
    %cst_536 = arith.constant 1.000000e+00 : f32
    %1196 = vector.broadcast %cst_536 : f32 to vector<16x128xf32>
    %1197 = arith.cmpf ogt, %1192, %1196 : vector<16x128xf32>
    %1198 = arith.extui %1197 : vector<16x128xi1> to vector<16x128xi32>
    %1199 = arith.sitofp %1198 : vector<16x128xi32> to vector<16x128xf32>
    %1200 = arith.truncf %1199 : vector<16x128xf32> to vector<16x128xbf16>
    %cst_537 = arith.constant 0.000000e+00 : f32
    %1201 = vector.broadcast %cst_537 : f32 to vector<16x128xf32>
    %1202 = arith.select %1197, %1201, %1192 : vector<16x128xi1>, vector<16x128xf32>
    %1203 = arith.addf %1195, %1186 : vector<16x128xf32>
    %1204 = arith.addf %1203, %1167 : vector<16x128xf32>
    %cst_538 = arith.constant dense<0.000000e+00> : vector<16x256xf32>
    %1205 = tpu.matmul %1200, %9, %cst_538 {dimension_numbers = #tpu.dot_dimension_numbers<[1], [0], [0], [1], [0, 0, 1, 1], [], []>} : vector<16x128xbf16>, vector<128x256xbf16>, vector<16x256xf32> -> vector<16x256xf32>
    %1206 = vector.extract_strided_slice %1205 {offsets = [0, 0], sizes = [16, 128], strides = [1, 1]} : vector<16x256xf32> to vector<16x128xf32>
    %1207 = vector.extract_strided_slice %1205 {offsets = [0, 128], sizes = [16, 128], strides = [1, 1]} : vector<16x256xf32> to vector<16x128xf32>
    %1208 = arith.addf %1178, %1207 : vector<16x128xf32>
    %cst_539 = arith.constant 0.000000e+00 : f32
    %1209 = vector.broadcast %cst_539 : f32 to vector<16x128xf32>
    %1210 = arith.subf %1209, %1175 : vector<16x128xf32>
    %1211 = arith.addf %1210, %1208 : vector<16x128xf32>
    %cst_540 = arith.constant 1.000000e+00 : f32
    %1212 = vector.broadcast %cst_540 : f32 to vector<16x128xf32>
    %1213 = arith.mulf %1212, %1211 : vector<16x128xf32>
    %1214 = arith.addf %1175, %1213 : vector<16x128xf32>
    %cst_541 = arith.constant -2.000000e+00 : f32
    %1215 = vector.broadcast %cst_541 : f32 to vector<16x128xf32>
    %1216 = arith.mulf %1215, %1208 : vector<16x128xf32>
    %1217 = arith.addf %1208, %1216 : vector<16x128xf32>
    %c30_542 = arith.constant 30 : index
    %c0_543 = arith.constant 0 : index
    %c0_544 = arith.constant 0 : index
    %1218 = vector.load %arg5[%c30_542, %c0_543, %c0_544] : memref<32x16x128xbf16, #tpu.memory_space<vmem>>, vector<1x16x128xbf16>
    %1219 = vector.shape_cast %1218 : vector<1x16x128xbf16> to vector<16x128xbf16>
    %1220 = vector.shape_cast %1200 : vector<16x128xbf16> to vector<1x16x128xbf16>
    tpu.vector_store %arg5[%c30_542, %c0_543, %c0_544], %1220 {strides = array<i32>} : memref<32x16x128xbf16, #tpu.memory_space<vmem>>, vector<1x16x128xbf16>,
    %c30_545 = arith.constant 30 : index
    %c0_546 = arith.constant 0 : index
    %c0_547 = arith.constant 0 : index
    %1221 = vector.load %arg6[%c30_545, %c0_546, %c0_547] : memref<32x16x128xf32, #tpu.memory_space<vmem>>, vector<1x16x128xf32>
    %1222 = vector.shape_cast %1221 : vector<1x16x128xf32> to vector<16x128xf32>
    %1223 = vector.shape_cast %1214 : vector<16x128xf32> to vector<1x16x128xf32>
    tpu.vector_store %arg6[%c30_545, %c0_546, %c0_547], %1223 {strides = array<i32>} : memref<32x16x128xf32, #tpu.memory_space<vmem>>, vector<1x16x128xf32>,
    %c31 = arith.constant 31 : index
    %c0_548 = arith.constant 0 : index
    %c0_549 = arith.constant 0 : index
    %1224 = vector.load %arg7[%c31, %c0_548, %c0_549] : memref<32x16x128xf32, #tpu.memory_space<vmem>>, vector<1x16x128xf32>
    %1225 = vector.shape_cast %1224 : vector<1x16x128xf32> to vector<16x128xf32>
    %cst_550 = arith.constant 0.000000e+00 : f32
    %1226 = vector.broadcast %cst_550 : f32 to vector<16x128xf32>
    %1227 = arith.subf %1226, %1202 : vector<16x128xf32>
    %1228 = arith.addf %1227, %1204 : vector<16x128xf32>
    %cst_551 = arith.constant 1.000000e+00 : f32
    %1229 = vector.broadcast %cst_551 : f32 to vector<16x128xf32>
    %1230 = arith.mulf %1229, %1228 : vector<16x128xf32>
    %1231 = arith.addf %1202, %1230 : vector<16x128xf32>
    %cst_552 = arith.constant -2.000000e+00 : f32
    %1232 = vector.broadcast %cst_552 : f32 to vector<16x128xf32>
    %1233 = arith.mulf %1232, %1204 : vector<16x128xf32>
    %1234 = arith.addf %1204, %1233 : vector<16x128xf32>
    %cst_553 = arith.constant 1.000000e+00 : f32
    %1235 = vector.broadcast %cst_553 : f32 to vector<16x128xf32>
    %1236 = arith.cmpf ogt, %1231, %1235 : vector<16x128xf32>
    %1237 = arith.extui %1236 : vector<16x128xi1> to vector<16x128xi32>
    %1238 = arith.sitofp %1237 : vector<16x128xi32> to vector<16x128xf32>
    %1239 = arith.truncf %1238 : vector<16x128xf32> to vector<16x128xbf16>
    %cst_554 = arith.constant 0.000000e+00 : f32
    %1240 = vector.broadcast %cst_554 : f32 to vector<16x128xf32>
    %1241 = arith.select %1236, %1240, %1231 : vector<16x128xi1>, vector<16x128xf32>
    %1242 = arith.addf %1234, %1225 : vector<16x128xf32>
    %1243 = arith.addf %1242, %1206 : vector<16x128xf32>
    %cst_555 = arith.constant dense<0.000000e+00> : vector<16x256xf32>
    %1244 = tpu.matmul %1239, %9, %cst_555 {dimension_numbers = #tpu.dot_dimension_numbers<[1], [0], [0], [1], [0, 0, 1, 1], [], []>} : vector<16x128xbf16>, vector<128x256xbf16>, vector<16x256xf32> -> vector<16x256xf32>
    %1245 = vector.extract_strided_slice %1244 {offsets = [0, 0], sizes = [16, 128], strides = [1, 1]} : vector<16x256xf32> to vector<16x128xf32>
    %1246 = vector.extract_strided_slice %1244 {offsets = [0, 128], sizes = [16, 128], strides = [1, 1]} : vector<16x256xf32> to vector<16x128xf32>
    %1247 = arith.addf %1217, %1246 : vector<16x128xf32>
    %cst_556 = arith.constant 0.000000e+00 : f32
    %1248 = vector.broadcast %cst_556 : f32 to vector<16x128xf32>
    %1249 = arith.subf %1248, %1214 : vector<16x128xf32>
    %1250 = arith.addf %1249, %1247 : vector<16x128xf32>
    %cst_557 = arith.constant 1.000000e+00 : f32
    %1251 = vector.broadcast %cst_557 : f32 to vector<16x128xf32>
    %1252 = arith.mulf %1251, %1250 : vector<16x128xf32>
    %1253 = arith.addf %1214, %1252 : vector<16x128xf32>
    %cst_558 = arith.constant -2.000000e+00 : f32
    %1254 = vector.broadcast %cst_558 : f32 to vector<16x128xf32>
    %1255 = arith.mulf %1254, %1247 : vector<16x128xf32>
    %1256 = arith.addf %1247, %1255 : vector<16x128xf32>
    %c31_559 = arith.constant 31 : index
    %c0_560 = arith.constant 0 : index
    %c0_561 = arith.constant 0 : index
    %1257 = vector.load %arg5[%c31_559, %c0_560, %c0_561] : memref<32x16x128xbf16, #tpu.memory_space<vmem>>, vector<1x16x128xbf16>
    %1258 = vector.shape_cast %1257 : vector<1x16x128xbf16> to vector<16x128xbf16>
    %1259 = vector.shape_cast %1239 : vector<16x128xbf16> to vector<1x16x128xbf16>
    tpu.vector_store %arg5[%c31_559, %c0_560, %c0_561], %1259 {strides = array<i32>} : memref<32x16x128xbf16, #tpu.memory_space<vmem>>, vector<1x16x128xbf16>,
    %c31_562 = arith.constant 31 : index
    %c0_563 = arith.constant 0 : index
    %c0_564 = arith.constant 0 : index
    %1260 = vector.load %arg6[%c31_562, %c0_563, %c0_564] : memref<32x16x128xf32, #tpu.memory_space<vmem>>, vector<1x16x128xf32>
    %1261 = vector.shape_cast %1260 : vector<1x16x128xf32> to vector<16x128xf32>
    %1262 = vector.shape_cast %1253 : vector<16x128xf32> to vector<1x16x128xf32>
    tpu.vector_store %arg6[%c31_562, %c0_563, %c0_564], %1262 {strides = array<i32>} : memref<32x16x128xf32, #tpu.memory_space<vmem>>, vector<1x16x128xf32>,
    %c0_565 = arith.constant 0 : index
    %c0_566 = arith.constant 0 : index
    %1263 = vector.load %arg8[%c0_565, %c0_566] : memref<16x128xf32, #tpu.memory_space<vmem>>, vector<16x128xf32>
    tpu.vector_store %arg8[%c0_565, %c0_566], %1241 {strides = array<i32>} : memref<16x128xf32, #tpu.memory_space<vmem>>, vector<16x128xf32>,
    %c0_567 = arith.constant 0 : index
    %c0_568 = arith.constant 0 : index
    %1264 = vector.load %arg9[%c0_567, %c0_568] : memref<16x128xf32, #tpu.memory_space<vmem>>, vector<16x128xf32>
    tpu.vector_store %arg9[%c0_567, %c0_568], %1243 {strides = array<i32>} : memref<16x128xf32, #tpu.memory_space<vmem>>, vector<16x128xf32>,
    %c0_569 = arith.constant 0 : index
    %c0_570 = arith.constant 0 : index
    %1265 = vector.load %arg10[%c0_569, %c0_570] : memref<16x128xf32, #tpu.memory_space<vmem>>, vector<16x128xf32>
    tpu.vector_store %arg10[%c0_569, %c0_570], %1245 {strides = array<i32>} : memref<16x128xf32, #tpu.memory_space<vmem>>, vector<16x128xf32>,
    %c0_571 = arith.constant 0 : index
    %c0_572 = arith.constant 0 : index
    %1266 = vector.load %arg11[%c0_571, %c0_572] : memref<16x128xf32, #tpu.memory_space<vmem>>, vector<16x128xf32>
    tpu.vector_store %arg11[%c0_571, %c0_572], %1253 {strides = array<i32>} : memref<16x128xf32, #tpu.memory_space<vmem>>, vector<16x128xf32>,
    %c0_573 = arith.constant 0 : index
    %c0_574 = arith.constant 0 : index
    %1267 = vector.load %arg12[%c0_573, %c0_574] : memref<16x128xf32, #tpu.memory_space<vmem>>, vector<16x128xf32>
    tpu.vector_store %arg12[%c0_573, %c0_574], %1256 {strides = array<i32>} : memref<16x128xf32, #tpu.memory_space<vmem>>, vector<16x128xf32>,
    return
  }
  func.func @transform_0(%arg0: i32, %arg1: i32) -> (i32, i32, i32) {
    %c0_i32 = arith.constant 0 : i32
    %c0_i32_0 = arith.constant 0 : i32
    return %arg1, %arg0, %c0_i32 : i32, i32, i32
  }
  func.func @transform_1(%arg0: i32, %arg1: i32) -> (i32, i32) {
    %c0_i32 = arith.constant 0 : i32
    %c0_i32_0 = arith.constant 0 : i32
    %c0_i32_1 = arith.constant 0 : i32
    return %c0_i32, %c0_i32_0 : i32, i32
  }
  func.func @transform_2(%arg0: i32, %arg1: i32) -> (i32, i32) {
    %c0_i32 = arith.constant 0 : i32
    %c0_i32_0 = arith.constant 0 : i32
    %c0_i32_1 = arith.constant 0 : i32
    return %c0_i32, %c0_i32_0 : i32, i32
  }
  func.func @transform_3(%arg0: i32, %arg1: i32) -> (i32, i32, i32) {
    %c0_i32 = arith.constant 0 : i32
    %c0_i32_0 = arith.constant 0 : i32
    return %arg1, %arg0, %c0_i32 : i32, i32, i32
  }
  func.func @transform_4(%arg0: i32, %arg1: i32) -> (i32, i32, i32) {
    %c0_i32 = arith.constant 0 : i32
    %c0_i32_0 = arith.constant 0 : i32
    return %arg1, %arg0, %c0_i32 : i32, i32, i32
  }
}

</mosaic_0001>

<llo_original>
// kernel: memory_net_forward.1
$region0: #{memory_net_forward.1}
  #allocation0 [shape = 'u32[]', space=smem, size = 0x4, offset = 0x4, fixed_abs, tag = 'smem constant byte address 0x4 - core index']
  #allocation1 [shape = 'u32[144,128]{1,0:T(1,128)}', space=vmem, size = 0x12000, scoped, tag = 'internal scratch']
  #allocation2 [shape = 'f32[32,16,128]{2,1,0:T(8,128)}', space=vmem, size = 0x40000, scoped, tag = 'scratch operand']
  #allocation3 [shape = 'f32[16,128]{1,0:T(8,128)}', space=vmem, size = 0x2000, scoped, tag = 'scratch operand']
  #allocation4 [shape = 'f32[16,128]{1,0:T(8,128)}', space=vmem, size = 0x2000, scoped, tag = 'scratch operand']
  #allocation5 [shape = 'f32[16,128]{1,0:T(8,128)}', space=vmem, size = 0x2000, scoped, tag = 'scratch operand']
  #allocation6 [shape = 'f32[16,128]{1,0:T(8,128)}', space=vmem, size = 0x2000, scoped, tag = 'scratch operand']
  #allocation7 [shape = 'f32[16,128]{1,0:T(8,128)}', space=vmem, size = 0x2000, scoped, tag = 'scratch operand']
  #allocation17 [shape = 's32[]', space=sflag, size = 0x4, offset = 0, fixed_abs, tag = 'sflag constant byte address 0x0 - dummy sync flag']
  #allocation19 [shape = 's32[]', space=sflag, size = 0x4, offset = 0, fixed_abs, tag = 'sflag constant byte address 0x0 - dummy sync flag']
  #allocation21 [shape = 's32[]', space=sflag, size = 0x4, offset = 0, fixed_abs, tag = 'sflag constant byte address 0x0 - dummy sync flag']
  %s0 = inlined_call_operand.hbm [shape: bf16[64,32,128], index: 0, kind: input, shape index: {}]
  %s1 = inlined_call_operand.hbm [shape: bf16[128,128], index: 1, kind: input, shape index: {}]
  %s2 = inlined_call_operand.hbm [shape: bf16[128,256], index: 2, kind: input, shape index: {}]
  %s3 = inlined_call_operand.hbm [shape: bf16[64,32,128], index: 3, kind: output, shape index: {0}]
  %s4 = inlined_call_operand.hbm [shape: f32[64,32,128], index: 4, kind: output, shape index: {1}]
  %5 = xla_tuple %s3, %s4
  %s6 = sld [smem:[#allocation0]]
  $region69: #{memory_net_forward.1} parent=0
    _
  %s8 = ssub.s32 1, %s6
  %s9 = scalar_select 0, %s8, %s6
  $region1: #{memory_net_forward.1} parent=0
    #allocation8 [shape = 'u8[262144]{0}', space=vmem, size = 0x40000, scoped, tag = 'input window, operand 0']
    #allocation9 [shape = 's32[2]{0}', space=sflag, size = 0x8, scoped, tag = 'scoped memory for memory_net_forward.1']
    #allocation10 [shape = 's32[2]{0}', space=sflag, size = 0x8, scoped, tag = 'scoped memory for memory_net_forward.1']
    #allocation11 [shape = 'u8[32768]{0}', space=vmem, size = 0x8000, scoped, tag = 'input window, operand 1, single buffered']
    #allocation12 [shape = 's32[1]{0}', space=sflag, size = 0x4, scoped, tag = 'scoped memory for memory_net_forward.1']
    #allocation13 [shape = 'u8[65536]{0}', space=vmem, size = 0x10000, scoped, tag = 'input window, operand 2, single buffered']
    #allocation14 [shape = 'u8[262144]{0}', space=vmem, size = 0x40000, scoped, tag = 'output window, operand 0']
    #allocation15 [shape = 'u8[524288]{0}', space=vmem, size = 0x80000, scoped, tag = 'output window, operand 1']
    #allocation16 [shape = 's32[2]{0}', space=sflag, size = 0x8, scoped, tag = 'scoped memory for memory_net_forward.1']
    %10 = vsyncpa [#allocation9], 0
    %s11 = scalar_lea.sflag [#allocation9], 1
    %12 = vsyncpa %s11, 0
    %13 = vsyncpa [#allocation12], 0
    %14 = vsyncpa [#allocation10], 0
    %s15 = scalar_lea.sflag [#allocation10], 1
    %16 = vsyncpa %s15, 0
    %17 = vsyncpa [#allocation16], 0
    %s18 = scalar_lea.sflag [#allocation16], 1
    %19 = vsyncpa %s18, 0
    loop: start=0, step=1, limit=6
    $region2: #{memory_net_forward.1} parent=1 // loop_pre_header
      _
    $region3: #{memory_net_forward.1} parent=1 // loop_header
      %s21 = sphi 0, %s25
      %p22 = scmp.ge.s32.totalorder %s21, 6
      %s28 = sphi 0, %s40
      %s29 = sphi 0, %s36
      %s30 = sphi 0, %s28
      %s31 = sphi 0, %s29
      %s32 = sphi 0, %s30
      %s33 = sphi 0, %s31
      %s45 = sphi 0, %s47
      %s48 = sphi 0, %s45
      %s49 = sphi 0, %s48
      %s65 = sphi 0, %s49
      %s69 = sphi 0, %s69
      %s71 = sphi 0, %s69
      %s72 = sphi 0, %s71
      %s86 = sphi 0, %s72
      %s90 = sphi 0, %s90
      %s92 = sphi 0, %s90
      %s93 = sphi 0, %s92
      %s107 = sphi 0, %s93
      %s115 = sphi 0, %s117
      %s118 = sphi 0, %s115
      %s119 = sphi 0, %s118
      %s135 = sphi 0, %s119
      %s143 = sphi 0, %s145
      %s146 = sphi 0, %s143
      %s147 = sphi 0, %s146
      %s163 = sphi 0, %s147
    $region4: #{memory_net_forward.1} parent=1 // loop_header_branch
      %24 = sbr.rel (%p22) target = $region8
    $region5: #{memory_net_forward.1} parent=1 // loop_body
      %s26 = ssub.s32 %s21, 1
      %s27 = ssub.s32 %s21, 2
      %s34 = sadd.s32 1, %s29
      %p35 = scmp.ge.s32.totalorder %s34, 2
      %s36 = scalar_select %p35, 0, %s34
      %s37 = sadd.s32 1, %s28
      %s38 = scalar_select %p35, %s37, %s28
      %p39 = scmp.ge.s32.totalorder %s38, 2
      %s40 = scalar_select %p39, 0, %s38
      %s41 = ssub.s32 %s29, %s36
      %s42 = ssub.s32 %s28, %s40
      %s43 = sor.u32 %s41, %s42
      %p44 = scmp.eq.s32.totalorder %s43, 0
      %s46 = sadd.s32 %s45, 1
      %s47 = scalar_select %p44, %s45, %s46
      %p50 = pneg %p44
      %p51 = scmp.eq.s32.totalorder %s21, 3
      %p52 = por %p50, %p51
      %p53 = scmp.ne.s32.totalorder %s45, %s48
      %p54 = scmp.eq.s32.totalorder %s21, 0
      %p55 = por %p53, %p54
      %p56 = scmp.ne.s32.totalorder %s45, %s48
      %p57 = scmp.eq.s32.totalorder %s26, 3
      %p58 = por %p56, %p57
      %p59 = scmp.ne.s32.totalorder %s48, %s49
      %p60 = scmp.eq.s32.totalorder %s26, 0
      %p61 = por %p59, %p60
      %p62 = scmp.ne.s32.totalorder %s48, %s49
      %p63 = scmp.eq.s32.totalorder %s27, 3
      %p64 = por %p62, %p63
      %p66 = scmp.ne.s32.totalorder %s49, %s65
      %p67 = scmp.eq.s32.totalorder %s27, 0
      %p68 = por %p66, %p67
      %s70 = sadd.s32 %s69, 1
      %p73 = scmp.eq.s32.totalorder %s21, 3
      %p74 = scmp.ne.s32.totalorder %s69, %s71
      %p75 = scmp.eq.s32.totalorder %s21, 0
      %p76 = por %p74, %p75
      %p77 = scmp.ne.s32.totalorder %s69, %s71
      %p78 = scmp.eq.s32.totalorder %s26, 3
      %p79 = por %p77, %p78
      %p80 = scmp.ne.s32.totalorder %s71, %s72
      %p81 = scmp.eq.s32.totalorder %s26, 0
      %p82 = por %p80, %p81
      %p83 = scmp.ne.s32.totalorder %s71, %s72
      %p84 = scmp.eq.s32.totalorder %s27, 3
      %p85 = por %p83, %p84
      %p87 = scmp.ne.s32.totalorder %s72, %s86
      %p88 = scmp.eq.s32.totalorder %s27, 0
      %p89 = por %p87, %p88
      %s91 = sadd.s32 %s90, 1
      %p94 = scmp.eq.s32.totalorder %s21, 3
      %p95 = scmp.ne.s32.totalorder %s90, %s92
      %p96 = scmp.eq.s32.totalorder %s21, 0
      %p97 = por %p95, %p96
      %p98 = scmp.ne.s32.totalorder %s90, %s92
      %p99 = scmp.eq.s32.totalorder %s26, 3
      %p100 = por %p98, %p99
      %p101 = scmp.ne.s32.totalorder %s92, %s93
      %p102 = scmp.eq.s32.totalorder %s26, 0
      %p103 = por %p101, %p102
      %p104 = scmp.ne.s32.totalorder %s92, %s93
      %p105 = scmp.eq.s32.totalorder %s27, 3
      %p106 = por %p104, %p105
      %p108 = scmp.ne.s32.totalorder %s93, %s107
      %p109 = scmp.eq.s32.totalorder %s27, 0
      %p110 = por %p108, %p109
      %s111 = ssub.s32 %s29, %s36
      %s112 = ssub.s32 %s28, %s40
      %s113 = sor.u32 %s111, %s112
      %p114 = scmp.eq.s32.totalorder %s113, 0
      %s116 = sadd.s32 %s115, 1
      %s117 = scalar_select %p114, %s115, %s116
      %p120 = pneg %p114
      %p121 = scmp.eq.s32.totalorder %s21, 3
      %p122 = por %p120, %p121
      %p123 = scmp.ne.s32.totalorder %s115, %s118
      %p124 = scmp.eq.s32.totalorder %s21, 0
      %p125 = por %p123, %p124
      %p126 = scmp.ne.s32.totalorder %s115, %s118
      %p127 = scmp.eq.s32.totalorder %s26, 3
      %p128 = por %p126, %p127
      %p129 = scmp.ne.s32.totalorder %s118, %s119
      %p130 = scmp.eq.s32.totalorder %s26, 0
      %p131 = por %p129, %p130
      %p132 = scmp.ne.s32.totalorder %s118, %s119
      %p133 = scmp.eq.s32.totalorder %s27, 3
      %p134 = por %p132, %p133
      %p136 = scmp.ne.s32.totalorder %s119, %s135
      %p137 = scmp.eq.s32.totalorder %s27, 0
      %p138 = por %p136, %p137
      %s139 = ssub.s32 %s29, %s36
      %s140 = ssub.s32 %s28, %s40
      %s141 = sor.u32 %s139, %s140
      %p142 = scmp.eq.s32.totalorder %s141, 0
      %s144 = sadd.s32 %s143, 1
      %s145 = scalar_select %p142, %s143, %s144
      %p148 = pneg %p142
      %p149 = scmp.eq.s32.totalorder %s21, 3
      %p150 = por %p148, %p149
      %p151 = scmp.ne.s32.totalorder %s143, %s146
      %p152 = scmp.eq.s32.totalorder %s21, 0
      %p153 = por %p151, %p152
      %p154 = scmp.ne.s32.totalorder %s143, %s146
      %p155 = scmp.eq.s32.totalorder %s26, 3
      %p156 = por %p154, %p155
      %p157 = scmp.ne.s32.totalorder %s146, %s147
      %p158 = scmp.eq.s32.totalorder %s26, 0
      %p159 = por %p157, %p158
      %p160 = scmp.ne.s32.totalorder %s146, %s147
      %p161 = scmp.eq.s32.totalorder %s27, 3
      %p162 = por %p160, %p161
      %p164 = scmp.ne.s32.totalorder %s147, %s163
      %p165 = scmp.eq.s32.totalorder %s27, 0
      %p166 = por %p164, %p165
      %p167 = scmp.le.s32.totalorder 1, %s21
      %p168 = scmp.lt.s32.totalorder %s21, 5
      %p169 = pnand %p167, %p168
      %p170 = pneg %p169
      // Predicated region
      $region9: #{memory_net_forward.1} parent=5 // pred_check
        _
      $region10: #{memory_net_forward.1} parent=5 // pred_check_branch
        %172 = sbr.rel (%p169) target = $region12
      $region11: #{memory_net_forward.1} parent=5 // pred_region
        %s173 = ssub.s32 %s21, 1
        // Predicated region
        $region13: #{memory_net_forward.1} parent=11 // pred_check
          %p174 = pneg %p82
        $region14: #{memory_net_forward.1} parent=11 // pred_check_branch
          %176 = sbr.rel (%p174) target = $region16
        $region15: #{memory_net_forward.1} parent=11 // pred_region
          %s178 = ssub.s32 1024, 1024
          %179 = vsyncadd [#allocation12], %s178
          %s180 = sshll.u32 [#allocation11], 4
          %s181 = int_to_ptr.vmem [resolvable:$true] %s180
          %186 = dma.hbm_to_vmem [thread:$0]  %s1, 1024, %s181, [#allocation12], 64, 64, 4
        $region16: #{memory_net_forward.1} parent=11 // pred_fallthru
          _
        // Predicated region
        $region17: #{memory_net_forward.1} parent=11 // pred_check
          %p187 = pneg %p103
        $region18: #{memory_net_forward.1} parent=11 // pred_check_branch
          %189 = sbr.rel (%p187) target = $region20
        $region19: #{memory_net_forward.1} parent=11 // pred_region
          %s191 = ssub.s32 2048, 2048
          %192 = vsyncadd [#allocation12], %s191
          %s193 = sshll.u32 [#allocation13], 4
          %s194 = int_to_ptr.vmem [resolvable:$true] %s193
          %199 = dma.hbm_to_vmem [thread:$0]  %s2, 2048, %s194, [#allocation12], 128, 128, 8
        $region20: #{memory_net_forward.1} parent=11 // pred_fallthru
          _
      $region12: #{memory_net_forward.1} parent=5 // pred_fallthru
        _
      %p200 = scmp.lt.s32.totalorder %s21, 4
      // Predicated region
      $region21: #{memory_net_forward.1} parent=5 // pred_check
        %p201 = pneg %p200
      $region22: #{memory_net_forward.1} parent=5 // pred_check_branch
        %203 = sbr.rel (%p201) target = $region24
      $region23: #{memory_net_forward.1} parent=5 // pred_region
        // Predicated region
        $region25: #{memory_net_forward.1} parent=23 // pred_check
          %p204 = pneg %p55
        $region26: #{memory_net_forward.1} parent=23 // pred_check_branch
          %206 = sbr.rel (%p204) target = $region28
        $region27: #{memory_net_forward.1} parent=23 // pred_region
          #allocation18 [shape = 'u32[6]{0}', space=smem, size = 0x18, scoped, tag = 'DMA stride descriptor']
          %s207 = sand.u32 %s45, 1
          %s208 = scalar_lea.sflag [#allocation9], %s207
          %s209 = sand.u32 %s45, 1
          %s210 = smul.addr %s209, 256
          %s211 = scalar_lea.vmem [#allocation8], %s210
          %s212 = smul.u32 32, %s29
          %s213 = smul.u32 2, %s28
          %s215 = ssub.s32 4096, 4096
          %216 = vsyncadd %s208, %s215
          %s217 = smul.addr %s212, 4
          %s218 = sadd.s32 %s213, %s217
          %s219 = smul.addr %s218, 64
          %s220 = scalar_lea.hbm %s0, %s219
          %s222 = sshll.u32 1, 14
          %s223 = sxor.u32 4294967295, %s222
          %s225 = sld [smem:[#allocation0]]
          %s226 = sadd.s32 2, %s225
          %s228 = sshll.u32 7, 26
          %s229 = sxor.u32 4294967295, %s228
          %s230 = sand.u32 0, %s229
          %s231 = sshll.u32 %s226, 26
          %s232 = sor.u32 %s230, %s231
          %s233 = sshll.u32 %s211, 4
          %s234 = int_to_ptr.vmem [resolvable:$true] %s233
          %240 = sst [smem:[#allocation18]] 256
          %s241 = scalar_lea.smem [#allocation18], 1
          %242 = sst [smem:[%s241]] 128
          %s243 = scalar_lea.smem [#allocation18], 2
          %244 = sst [smem:[%s243]] 2
          %s245 = scalar_lea.smem [#allocation18], 3
          %246 = sst [smem:[%s245]] 64
          %s247 = scalar_lea.smem [#allocation18], 4
          %248 = sst [smem:[%s247]] 64
          %s249 = scalar_lea.smem [#allocation18], 5
          %250 = sst [smem:[%s249]] 4
          %252 = dma.general %s220, 4096, %s234, %s208, [#allocation17], [#allocation18], %s232, 0
        $region28: #{memory_net_forward.1} parent=23 // pred_fallthru
          _
      $region24: #{memory_net_forward.1} parent=5 // pred_fallthru
        _
      %p253 = scmp.le.s32.totalorder 1, %s21
      %p254 = scmp.lt.s32.totalorder %s21, 5
      %p255 = pnand %p253, %p254
      %p256 = pneg %p255
      // Predicated region
      $region29: #{memory_net_forward.1} parent=5 // pred_check
        _
      $region30: #{memory_net_forward.1} parent=5 // pred_check_branch
        %258 = sbr.rel (%p255) target = $region32
      $region31: #{memory_net_forward.1} parent=5 // pred_region
        %s259 = ssub.s32 %s21, 1
        %s260 = sand.u32 %s48, 1
        %s261 = scalar_lea.sflag [#allocation9], %s260
        %s262 = sand.u32 %s48, 1
        %s263 = smul.addr %s262, 256
        %s264 = scalar_lea.vmem [#allocation8], %s263
        // Predicated region
        $region33: #{memory_net_forward.1} parent=31 // pred_check
          %p265 = pneg %p61
        $region34: #{memory_net_forward.1} parent=31 // pred_check_branch
          %267 = sbr.rel (%p265) target = $region36
        $region35: #{memory_net_forward.1} parent=31 // pred_region
          %268 = dma.done %s261, 4096
        $region36: #{memory_net_forward.1} parent=31 // pred_fallthru
          _
        // Predicated region
        $region37: #{memory_net_forward.1} parent=31 // pred_check
          %p269 = pneg %p82
        $region38: #{memory_net_forward.1} parent=31 // pred_check_branch
          %271 = sbr.rel (%p269) target = $region40
        $region39: #{memory_net_forward.1} parent=31 // pred_region
          %272 = dma.done [#allocation12], 1024
        $region40: #{memory_net_forward.1} parent=31 // pred_fallthru
          _
        // Predicated region
        $region41: #{memory_net_forward.1} parent=31 // pred_check
          %p273 = pneg %p103
        $region42: #{memory_net_forward.1} parent=31 // pred_check_branch
          %275 = sbr.rel (%p273) target = $region44
        $region43: #{memory_net_forward.1} parent=31 // pred_region
          %276 = dma.done [#allocation12], 2048
        $region44: #{memory_net_forward.1} parent=31 // pred_fallthru
          _
        %s277 = sand.u32 %s48, 1
        %s278 = scalar_lea.sflag [#allocation9], %s277
        %s279 = sand.u32 %s48, 1
        %s280 = smul.addr %s279, 256
        %s281 = scalar_lea.vmem [#allocation8], %s280
        %p282 = pneg %p61
        %p283 = pneg %p58
        %p284 = pneg %p82
        %p285 = pneg %p79
        %p286 = pneg %p103
        %p287 = pneg %p100
        %p288 = pneg %p131
        %p289 = pneg %p128
        %s290 = sand.u32 %s118, 1
        %s291 = scalar_lea.sflag [#allocation10], %s290
        %s292 = sand.u32 %s118, 1
        %s293 = smul.addr %s292, 256
        %s294 = scalar_lea.vmem [#allocation14], %s293
        %p295 = pneg %p159
        %p296 = pneg %p156
        %s297 = sand.u32 %s146, 1
        %s298 = scalar_lea.sflag [#allocation16], %s297
        %s299 = sand.u32 %s146, 1
        %s300 = smul.addr %s299, 512
        %s301 = scalar_lea.vmem [#allocation15], %s300
        %s302 = smul.u32 32, %s31
        %s303 = smul.u32 2, %s30
        %s304 = smul.u32 32, %s31
        %s305 = smul.u32 2, %s30
        %s306 = smul.u32 32, %s31
        %s307 = smul.u32 2, %s30
        %p309 = scmp.eq.s32.totalorder %s31, 0
        // Predicated region
        $region45: #{memory_net_forward.1} parent=31 // pred_check
          %p310 = pneg %p309
        $region46: #{memory_net_forward.1} parent=31 // pred_check_branch
          %312 = sbr.rel (%p310) target = $region48
        $region47: #{memory_net_forward.1} parent=31 // pred_region
          %313 = vst [vmem:[#allocation3] sm:$0xff] 0.0
          %314 = vst [vmem:[#allocation3 + $0x8] sm:$0xff] 0.0
          %315 = vst [vmem:[#allocation4] sm:$0xff] 0.0
          %316 = vst [vmem:[#allocation4 + $0x8] sm:$0xff] 0.0
          %317 = vst [vmem:[#allocation5] sm:$0xff] 0.0
          %318 = vst [vmem:[#allocation5 + $0x8] sm:$0xff] 0.0
          %319 = vst [vmem:[#allocation6] sm:$0xff] 0.0
          %320 = vst [vmem:[#allocation6 + $0x8] sm:$0xff] 0.0
          %321 = vst [vmem:[#allocation7] sm:$0xff] 0.0
          %322 = vst [vmem:[#allocation7 + $0x8] sm:$0xff] 0.0
        $region48: #{memory_net_forward.1} parent=31 // pred_fallthru
          _
        %v323 = vld [vmem:[%s264] sm:$0xf]
        %v324 = vld [vmem:[%s264 + $0x4] sm:$0xf]
        %v325 = vld [vmem:[%s264 + $0x8] sm:$0xf]
        %v326 = vld [vmem:[%s264 + $0xc] sm:$0xf]
        %v327 = vld [vmem:[%s264 + $0x10] sm:$0xf]
        %v328 = vld [vmem:[%s264 + $0x14] sm:$0xf]
        %v329 = vld [vmem:[%s264 + $0x18] sm:$0xf]
        %v330 = vld [vmem:[%s264 + $0x1c] sm:$0xf]
        %v331 = vld [vmem:[%s264 + $0x20] sm:$0xf]
        %v332 = vld [vmem:[%s264 + $0x24] sm:$0xf]
        %v333 = vld [vmem:[%s264 + $0x28] sm:$0xf]
        %v334 = vld [vmem:[%s264 + $0x2c] sm:$0xf]
        %v335 = vld [vmem:[%s264 + $0x30] sm:$0xf]
        %v336 = vld [vmem:[%s264 + $0x34] sm:$0xf]
        %v337 = vld [vmem:[%s264 + $0x38] sm:$0xf]
        %v338 = vld [vmem:[%s264 + $0x3c] sm:$0xf]
        %v339 = vld [vmem:[%s264 + $0x40] sm:$0xf]
        %v340 = vld [vmem:[%s264 + $0x44] sm:$0xf]
        %v341 = vld [vmem:[%s264 + $0x48] sm:$0xf]
        %v342 = vld [vmem:[%s264 + $0x4c] sm:$0xf]
        %v343 = vld [vmem:[%s264 + $0x50] sm:$0xf]
        %v344 = vld [vmem:[%s264 + $0x54] sm:$0xf]
        %v345 = vld [vmem:[%s264 + $0x58] sm:$0xf]
        %v346 = vld [vmem:[%s264 + $0x5c] sm:$0xf]
        %v347 = vld [vmem:[%s264 + $0x60] sm:$0xf]
        %v348 = vld [vmem:[%s264 + $0x64] sm:$0xf]
        %v349 = vld [vmem:[%s264 + $0x68] sm:$0xf]
        %v350 = vld [vmem:[%s264 + $0x6c] sm:$0xf]
        %v351 = vld [vmem:[%s264 + $0x70] sm:$0xf]
        %v352 = vld [vmem:[%s264 + $0x74] sm:$0xf]
        %v353 = vld [vmem:[%s264 + $0x78] sm:$0xf]
        %v354 = vld [vmem:[%s264 + $0x7c] sm:$0xf]
        %v355 = vld [vmem:[%s264 + $0x80] sm:$0xf]
        %v356 = vld [vmem:[%s264 + $0x84] sm:$0xf]
        %v357 = vld [vmem:[%s264 + $0x88] sm:$0xf]
        %v358 = vld [vmem:[%s264 + $0x8c] sm:$0xf]
        %v359 = vld [vmem:[%s264 + $0x90] sm:$0xf]
        %v360 = vld [vmem:[%s264 + $0x94] sm:$0xf]
        %v361 = vld [vmem:[%s264 + $0x98] sm:$0xf]
        %v362 = vld [vmem:[%s264 + $0x9c] sm:$0xf]
        %v363 = vld [vmem:[%s264 + $0xa0] sm:$0xf]
        %v364 = vld [vmem:[%s264 + $0xa4] sm:$0xf]
        %v365 = vld [vmem:[%s264 + $0xa8] sm:$0xf]
        %v366 = vld [vmem:[%s264 + $0xac] sm:$0xf]
        %v367 = vld [vmem:[%s264 + $0xb0] sm:$0xf]
        %v368 = vld [vmem:[%s264 + $0xb4] sm:$0xf]
        %v369 = vld [vmem:[%s264 + $0xb8] sm:$0xf]
        %v370 = vld [vmem:[%s264 + $0xbc] sm:$0xf]
        %v371 = vld [vmem:[%s264 + $0xc0] sm:$0xf]
        %v372 = vld [vmem:[%s264 + $0xc4] sm:$0xf]
        %v373 = vld [vmem:[%s264 + $0xc8] sm:$0xf]
        %v374 = vld [vmem:[%s264 + $0xcc] sm:$0xf]
        %v375 = vld [vmem:[%s264 + $0xd0] sm:$0xf]
        %v376 = vld [vmem:[%s264 + $0xd4] sm:$0xf]
        %v377 = vld [vmem:[%s264 + $0xd8] sm:$0xf]
        %v378 = vld [vmem:[%s264 + $0xdc] sm:$0xf]
        %v379 = vld [vmem:[%s264 + $0xe0] sm:$0xf]
        %v380 = vld [vmem:[%s264 + $0xe4] sm:$0xf]
        %v381 = vld [vmem:[%s264 + $0xe8] sm:$0xf]
        %v382 = vld [vmem:[%s264 + $0xec] sm:$0xf]
        %v383 = vld [vmem:[%s264 + $0xf0] sm:$0xf]
        %v384 = vld [vmem:[%s264 + $0xf4] sm:$0xf]
        %v385 = vld [vmem:[%s264 + $0xf8] sm:$0xf]
        %v386 = vld [vmem:[%s264 + $0xfc] sm:$0xf]
        %v387 = vld [vmem:[#allocation11] sm:$0xf]
        %v388 = vld [vmem:[#allocation11 + $0x4] sm:$0xf]
        %v389 = vld [vmem:[#allocation11 + $0x8] sm:$0xf]
        %v390 = vld [vmem:[#allocation11 + $0xc] sm:$0xf]
        %v391 = vld [vmem:[#allocation11 + $0x10] sm:$0xf]
        %v392 = vld [vmem:[#allocation11 + $0x14] sm:$0xf]
        %v393 = vld [vmem:[#allocation11 + $0x18] sm:$0xf]
        %v394 = vld [vmem:[#allocation11 + $0x1c] sm:$0xf]
        %v395 = vld [vmem:[#allocation11 + $0x20] sm:$0xf]
        %v396 = vld [vmem:[#allocation11 + $0x24] sm:$0xf]
        %v397 = vld [vmem:[#allocation11 + $0x28] sm:$0xf]
        %v398 = vld [vmem:[#allocation11 + $0x2c] sm:$0xf]
        %v399 = vld [vmem:[#allocation11 + $0x30] sm:$0xf]
        %v400 = vld [vmem:[#allocation11 + $0x34] sm:$0xf]
        %v401 = vld [vmem:[#allocation11 + $0x38] sm:$0xf]
        %v402 = vld [vmem:[#allocation11 + $0x3c] sm:$0xf]
        %v467 = vunpack.c.l.b16 %v323
        %v468 = vunpack.c.l.b16 %v324
        %v469 = vunpack.c.l.b16 %v325
        %v470 = vunpack.c.l.b16 %v326
        %v471 = vunpack.c.l.b16 %v327
        %v472 = vunpack.c.l.b16 %v328
        %v473 = vunpack.c.l.b16 %v329
        %v474 = vunpack.c.l.b16 %v330
        %v475 = vunpack.c.l.b16 %v331
        %v476 = vunpack.c.l.b16 %v332
        %v477 = vunpack.c.l.b16 %v333
        %v478 = vunpack.c.l.b16 %v334
        %v479 = vunpack.c.l.b16 %v335
        %v480 = vunpack.c.l.b16 %v336
        %v481 = vunpack.c.l.b16 %v337
        %v482 = vunpack.c.l.b16 %v338
        %v483 = vunpack.c.l.b16 %v339
        %v484 = vunpack.c.l.b16 %v340
        %v485 = vunpack.c.l.b16 %v341
        %v486 = vunpack.c.l.b16 %v342
        %v487 = vunpack.c.l.b16 %v343
        %v488 = vunpack.c.l.b16 %v344
        %v489 = vunpack.c.l.b16 %v345
        %v490 = vunpack.c.l.b16 %v346
        %v491 = vunpack.c.l.b16 %v347
        %v492 = vunpack.c.l.b16 %v348
        %v493 = vunpack.c.l.b16 %v349
        %v494 = vunpack.c.l.b16 %v350
        %v495 = vunpack.c.l.b16 %v351
        %v496 = vunpack.c.l.b16 %v352
        %v497 = vunpack.c.l.b16 %v353
        %v498 = vunpack.c.l.b16 %v354
        %v499 = vunpack.c.l.b16 %v355
        %v500 = vunpack.c.l.b16 %v356
        %v501 = vunpack.c.l.b16 %v357
        %v502 = vunpack.c.l.b16 %v358
        %v503 = vunpack.c.l.b16 %v359
        %v504 = vunpack.c.l.b16 %v360
        %v505 = vunpack.c.l.b16 %v361
        %v506 = vunpack.c.l.b16 %v362
        %v507 = vunpack.c.l.b16 %v363
        %v508 = vunpack.c.l.b16 %v364
        %v509 = vunpack.c.l.b16 %v365
        %v510 = vunpack.c.l.b16 %v366
        %v511 = vunpack.c.l.b16 %v367
        %v512 = vunpack.c.l.b16 %v368
        %v513 = vunpack.c.l.b16 %v369
        %v514 = vunpack.c.l.b16 %v370
        %v515 = vunpack.c.l.b16 %v371
        %v516 = vunpack.c.l.b16 %v372
        %v517 = vunpack.c.l.b16 %v373
        %v518 = vunpack.c.l.b16 %v374
        %v519 = vunpack.c.l.b16 %v375
        %v520 = vunpack.c.l.b16 %v376
        %v521 = vunpack.c.l.b16 %v377
        %v522 = vunpack.c.l.b16 %v378
        %v523 = vunpack.c.l.b16 %v379
        %v524 = vunpack.c.l.b16 %v380
        %v525 = vunpack.c.l.b16 %v381
        %v526 = vunpack.c.l.b16 %v382
        %v527 = vunpack.c.l.b16 %v383
        %v528 = vunpack.c.l.b16 %v384
        %v529 = vunpack.c.l.b16 %v385
        %v530 = vunpack.c.l.b16 %v386
        %v531 = vpack.c.b16 %v468, %v467
        %v532 = vpack.c.b16 %v470, %v469
        %v533 = vpack.c.b16 %v472, %v471
        %v534 = vpack.c.b16 %v474, %v473
        %v535 = vpack.c.b16 %v476, %v475
        %v536 = vpack.c.b16 %v478, %v477
        %v537 = vpack.c.b16 %v480, %v479
        %v538 = vpack.c.b16 %v482, %v481
        %v539 = vpack.c.b16 %v484, %v483
        %v540 = vpack.c.b16 %v486, %v485
        %v541 = vpack.c.b16 %v488, %v487
        %v542 = vpack.c.b16 %v490, %v489
        %v543 = vpack.c.b16 %v492, %v491
        %v544 = vpack.c.b16 %v494, %v493
        %v545 = vpack.c.b16 %v496, %v495
        %v546 = vpack.c.b16 %v498, %v497
        %v547 = vpack.c.b16 %v500, %v499
        %v548 = vpack.c.b16 %v502, %v501
        %v549 = vpack.c.b16 %v504, %v503
        %v550 = vpack.c.b16 %v506, %v505
        %v551 = vpack.c.b16 %v508, %v507
        %v552 = vpack.c.b16 %v510, %v509
        %v553 = vpack.c.b16 %v512, %v511
        %v554 = vpack.c.b16 %v514, %v513
        %v555 = vpack.c.b16 %v516, %v515
        %v556 = vpack.c.b16 %v518, %v517
        %v557 = vpack.c.b16 %v520, %v519
        %v558 = vpack.c.b16 %v522, %v521
        %v559 = vpack.c.b16 %v524, %v523
        %v560 = vpack.c.b16 %v526, %v525
        %v561 = vpack.c.b16 %v528, %v527
        %v562 = vpack.c.b16 %v530, %v529
        %v611 = vunpack.c.l.b16 %v387
        %v612 = vunpack.c.l.b16 %v388
        %v613 = vunpack.c.l.b16 %v389
        %v614 = vunpack.c.l.b16 %v390
        %v615 = vunpack.c.l.b16 %v391
        %v616 = vunpack.c.l.b16 %v392
        %v617 = vunpack.c.l.b16 %v393
        %v618 = vunpack.c.l.b16 %v394
        %v619 = vunpack.c.l.b16 %v395
        %v620 = vunpack.c.l.b16 %v396
        %v621 = vunpack.c.l.b16 %v397
        %v622 = vunpack.c.l.b16 %v398
        %v623 = vunpack.c.l.b16 %v399
        %v624 = vunpack.c.l.b16 %v400
        %v625 = vunpack.c.l.b16 %v401
        %v626 = vunpack.c.l.b16 %v402
        %v627 = vpack.c.b16 %v612, %v611
        %v628 = vpack.c.b16 %v614, %v613
        %v629 = vpack.c.b16 %v616, %v615
        %v630 = vpack.c.b16 %v618, %v617
        %v631 = vpack.c.b16 %v620, %v619
        %v632 = vpack.c.b16 %v622, %v621
        %v633 = vpack.c.b16 %v624, %v623
        %v634 = vpack.c.b16 %v626, %v625
        %643 = vmatprep.subr.bf16.mxu0 0
        %644 = vmatpush1.bf16.msra.mxu0 %v627
        %645 = vmatprep.subr.bf16.mxu0 0
        %646 = vmatpush1.bf16.msra.mxu0 %v628
        %647 = vmatprep.subr.bf16.mxu0 0
        %648 = vmatpush1.bf16.msra.mxu0 %v629
        %649 = vmatprep.subr.bf16.mxu0 0
        %650 = vmatpush1.bf16.msra.mxu0 %v630
        %651 = vmatprep.subr.bf16.mxu0 0
        %652 = vmatpush1.bf16.msra.mxu0 %v631
        %653 = vmatprep.subr.bf16.mxu0 0
        %654 = vmatpush1.bf16.msra.mxu0 %v632
        %655 = vmatprep.subr.bf16.mxu0 0
        %656 = vmatpush1.bf16.msra.mxu0 %v633
        %657 = vmatprep.subr.bf16.mxu0 0
        %658 = vmatpush1.bf16.msra.mxu0 %v634
        %659 = vmatprep.subr.bf16.mxu0 0
        %660 = vmatpush1.bf16.msra.mxu0 0
        %661 = vmatprep.subr.bf16.mxu0 0
        %662 = vmatpush1.bf16.msra.mxu0 0
        %663 = vmatprep.subr.bf16.mxu0 0
        %664 = vmatpush1.bf16.msra.mxu0 0
        %665 = vmatprep.subr.bf16.mxu0 0
        %666 = vmatpush1.bf16.msra.mxu0 0
        %667 = vmatprep.subr.bf16.mxu0 0
        %668 = vmatpush1.bf16.msra.mxu0 0
        %669 = vmatprep.subr.bf16.mxu0 0
        %670 = vmatpush1.bf16.msra.mxu0 0
        %671 = vmatprep.subr.bf16.mxu0 0
        %672 = vmatpush1.bf16.msra.mxu0 0
        %673 = vmatprep.subr.bf16.mxu0 0
        %674 = vmatpush1.bf16.msra.mxu0 0
        %675 = vmatprep.mubr.bf16.mxu0 0
        %676 = vmatmul.mubr.bf16.gmra.mrb[0].mxu0 %v531
        %v677 = vpop.f32.mrb[0].mxu0
        %v678 = vadd.f32 0.0, %v677
        %v679 = vpop.f32.mrb[0].mxu0
        %v680 = vpop.f32.mrb[0].mxu0
        %v681 = vadd.f32 0.0, %v680
        %v682 = vpop.f32.mrb[0].mxu0
        %683 = vmatprep.mubr.bf16.mxu0 0
        %684 = vmatmul.mubr.bf16.gmra.mrb[0].mxu0 %v532
        %v685 = vpop.f32.mrb[0].mxu0
        %v686 = vadd.f32 0.0, %v685
        %v687 = vpop.f32.mrb[0].mxu0
        %v688 = vpop.f32.mrb[0].mxu0
        %v689 = vadd.f32 0.0, %v688
        %v690 = vpop.f32.mrb[0].mxu0
        %691 = vmatprep.mubr.bf16.mxu0 0
        %692 = vmatmul.mubr.bf16.gmra.mrb[0].mxu0 %v533
        %v693 = vpop.f32.mrb[0].mxu0
        %v694 = vadd.f32 0.0, %v693
        %v695 = vpop.f32.mrb[0].mxu0
        %v696 = vpop.f32.mrb[0].mxu0
        %v697 = vadd.f32 0.0, %v696
        %v698 = vpop.f32.mrb[0].mxu0
        %699 = vmatprep.mubr.bf16.mxu0 0
        %700 = vmatmul.mubr.bf16.gmra.mrb[0].mxu0 %v534
        %v701 = vpop.f32.mrb[0].mxu0
        %v702 = vadd.f32 0.0, %v701
        %v703 = vpop.f32.mrb[0].mxu0
        %v704 = vpop.f32.mrb[0].mxu0
        %v705 = vadd.f32 0.0, %v704
        %v706 = vpop.f32.mrb[0].mxu0
        %707 = vmatprep.mubr.bf16.mxu0 0
        %708 = vmatmul.mubr.bf16.gmra.mrb[0].mxu0 %v535
        %v709 = vpop.f32.mrb[0].mxu0
        %v710 = vadd.f32 0.0, %v709
        %v711 = vpop.f32.mrb[0].mxu0
        %v712 = vpop.f32.mrb[0].mxu0
        %v713 = vadd.f32 0.0, %v712
        %v714 = vpop.f32.mrb[0].mxu0
        %715 = vmatprep.mubr.bf16.mxu0 0
        %716 = vmatmul.mubr.bf16.gmra.mrb[0].mxu0 %v536
        %v717 = vpop.f32.mrb[0].mxu0
        %v718 = vadd.f32 0.0, %v717
        %v719 = vpop.f32.mrb[0].mxu0
        %v720 = vpop.f32.mrb[0].mxu0
        %v721 = vadd.f32 0.0, %v720
        %v722 = vpop.f32.mrb[0].mxu0
        %723 = vmatprep.mubr.bf16.mxu0 0
        %724 = vmatmul.mubr.bf16.gmra.mrb[0].mxu0 %v537
        %v725 = vpop.f32.mrb[0].mxu0
        %v726 = vadd.f32 0.0, %v725
        %v727 = vpop.f32.mrb[0].mxu0
        %v728 = vpop.f32.mrb[0].mxu0
        %v729 = vadd.f32 0.0, %v728
        %v730 = vpop.f32.mrb[0].mxu0
        %731 = vmatprep.mubr.bf16.mxu0 0
        %732 = vmatmul.mubr.bf16.gmra.mrb[0].mxu0 %v538
        %v733 = vpop.f32.mrb[0].mxu0
        %v734 = vadd.f32 0.0, %v733
        %v735 = vpop.f32.mrb[0].mxu0
        %v736 = vpop.f32.mrb[0].mxu0
        %v737 = vadd.f32 0.0, %v736
        %v738 = vpop.f32.mrb[0].mxu0
        %739 = vmatprep.mubr.bf16.mxu0 0
        %740 = vmatmul.mubr.bf16.gmra.mrb[0].mxu0 %v539
        %v741 = vpop.f32.mrb[0].mxu0
        %v742 = vadd.f32 0.0, %v741
        %v743 = vpop.f32.mrb[0].mxu0
        %v744 = vpop.f32.mrb[0].mxu0
        %v745 = vadd.f32 0.0, %v744
        %v746 = vpop.f32.mrb[0].mxu0
        %747 = vmatprep.mubr.bf16.mxu0 0
        %748 = vmatmul.mubr.bf16.gmra.mrb[0].mxu0 %v540
        %v749 = vpop.f32.mrb[0].mxu0
        %v750 = vadd.f32 0.0, %v749
        %v751 = vpop.f32.mrb[0].mxu0
        %v752 = vpop.f32.mrb[0].mxu0
        %v753 = vadd.f32 0.0, %v752
        %v754 = vpop.f32.mrb[0].mxu0
        %755 = vmatprep.mubr.bf16.mxu0 0
        %756 = vmatmul.mubr.bf16.gmra.mrb[0].mxu0 %v541
        %v757 = vpop.f32.mrb[0].mxu0
        %v758 = vadd.f32 0.0, %v757
        %v759 = vpop.f32.mrb[0].mxu0
        %v760 = vpop.f32.mrb[0].mxu0
        %v761 = vadd.f32 0.0, %v760
        %v762 = vpop.f32.mrb[0].mxu0
        %763 = vmatprep.mubr.bf16.mxu0 0
        %764 = vmatmul.mubr.bf16.gmra.mrb[0].mxu0 %v542
        %v765 = vpop.f32.mrb[0].mxu0
        %v766 = vadd.f32 0.0, %v765
        %v767 = vpop.f32.mrb[0].mxu0
        %v768 = vpop.f32.mrb[0].mxu0
        %v769 = vadd.f32 0.0, %v768
        %v770 = vpop.f32.mrb[0].mxu0
        %771 = vmatprep.mubr.bf16.mxu0 0
        %772 = vmatmul.mubr.bf16.gmra.mrb[0].mxu0 %v543
        %v773 = vpop.f32.mrb[0].mxu0
        %v774 = vadd.f32 0.0, %v773
        %v775 = vpop.f32.mrb[0].mxu0
        %v776 = vpop.f32.mrb[0].mxu0
        %v777 = vadd.f32 0.0, %v776
        %v778 = vpop.f32.mrb[0].mxu0
        %779 = vmatprep.mubr.bf16.mxu0 0
        %780 = vmatmul.mubr.bf16.gmra.mrb[0].mxu0 %v544
        %v781 = vpop.f32.mrb[0].mxu0
        %v782 = vadd.f32 0.0, %v781
        %v783 = vpop.f32.mrb[0].mxu0
        %v784 = vpop.f32.mrb[0].mxu0
        %v785 = vadd.f32 0.0, %v784
        %v786 = vpop.f32.mrb[0].mxu0
        %787 = vmatprep.mubr.bf16.mxu0 0
        %788 = vmatmul.mubr.bf16.gmra.mrb[0].mxu0 %v545
        %v789 = vpop.f32.mrb[0].mxu0
        %v790 = vadd.f32 0.0, %v789
        %v791 = vpop.f32.mrb[0].mxu0
        %v792 = vpop.f32.mrb[0].mxu0
        %v793 = vadd.f32 0.0, %v792
        %v794 = vpop.f32.mrb[0].mxu0
        %795 = vmatprep.mubr.bf16.mxu0 0
        %796 = vmatmul.mubr.bf16.gmra.mrb[0].mxu0 %v546
        %v797 = vpop.f32.mrb[0].mxu0
        %v798 = vadd.f32 0.0, %v797
        %v799 = vpop.f32.mrb[0].mxu0
        %v800 = vpop.f32.mrb[0].mxu0
        %v801 = vadd.f32 0.0, %v800
        %v802 = vpop.f32.mrb[0].mxu0
        %803 = vmatprep.mubr.bf16.mxu0 0
        %804 = vmatmul.mubr.bf16.gmra.mrb[0].mxu0 %v547
        %v805 = vpop.f32.mrb[0].mxu0
        %v806 = vadd.f32 0.0, %v805
        %v807 = vpop.f32.mrb[0].mxu0
        %v808 = vpop.f32.mrb[0].mxu0
        %v809 = vadd.f32 0.0, %v808
        %v810 = vpop.f32.mrb[0].mxu0
        %811 = vmatprep.mubr.bf16.mxu0 0
        %812 = vmatmul.mubr.bf16.gmra.mrb[0].mxu0 %v548
        %v813 = vpop.f32.mrb[0].mxu0
        %v814 = vadd.f32 0.0, %v813
        %v815 = vpop.f32.mrb[0].mxu0
        %v816 = vpop.f32.mrb[0].mxu0
        %v817 = vadd.f32 0.0, %v816
        %v818 = vpop.f32.mrb[0].mxu0
        %819 = vmatprep.mubr.bf16.mxu0 0
        %820 = vmatmul.mubr.bf16.gmra.mrb[0].mxu0 %v549
        %v821 = vpop.f32.mrb[0].mxu0
        %v822 = vadd.f32 0.0, %v821
        %v823 = vpop.f32.mrb[0].mxu0
        %v824 = vpop.f32.mrb[0].mxu0
        %v825 = vadd.f32 0.0, %v824
        %v826 = vpop.f32.mrb[0].mxu0
        %827 = vmatprep.mubr.bf16.mxu0 0
        %828 = vmatmul.mubr.bf16.gmra.mrb[0].mxu0 %v550
        %v829 = vpop.f32.mrb[0].mxu0
        %v830 = vadd.f32 0.0, %v829
        %v831 = vpop.f32.mrb[0].mxu0
        %v832 = vpop.f32.mrb[0].mxu0
        %v833 = vadd.f32 0.0, %v832
        %v834 = vpop.f32.mrb[0].mxu0
        %835 = vmatprep.mubr.bf16.mxu0 0
        %836 = vmatmul.mubr.bf16.gmra.mrb[0].mxu0 %v551
        %v837 = vpop.f32.mrb[0].mxu0
        %v838 = vadd.f32 0.0, %v837
        %v839 = vpop.f32.mrb[0].mxu0
        %v840 = vpop.f32.mrb[0].mxu0
        %v841 = vadd.f32 0.0, %v840
        %v842 = vpop.f32.mrb[0].mxu0
        %843 = vmatprep.mubr.bf16.mxu0 0
        %844 = vmatmul.mubr.bf16.gmra.mrb[0].mxu0 %v552
        %v845 = vpop.f32.mrb[0].mxu0
        %v846 = vadd.f32 0.0, %v845
        %v847 = vpop.f32.mrb[0].mxu0
        %v848 = vpop.f32.mrb[0].mxu0
        %v849 = vadd.f32 0.0, %v848
        %v850 = vpop.f32.mrb[0].mxu0
        %851 = vmatprep.mubr.bf16.mxu0 0
        %852 = vmatmul.mubr.bf16.gmra.mrb[0].mxu0 %v553
        %v853 = vpop.f32.mrb[0].mxu0
        %v854 = vadd.f32 0.0, %v853
        %v855 = vpop.f32.mrb[0].mxu0
        %v856 = vpop.f32.mrb[0].mxu0
        %v857 = vadd.f32 0.0, %v856
        %v858 = vpop.f32.mrb[0].mxu0
        %859 = vmatprep.mubr.bf16.mxu0 0
        %860 = vmatmul.mubr.bf16.gmra.mrb[0].mxu0 %v554
        %v861 = vpop.f32.mrb[0].mxu0
        %v862 = vadd.f32 0.0, %v861
        %v863 = vpop.f32.mrb[0].mxu0
        %v864 = vpop.f32.mrb[0].mxu0
        %v865 = vadd.f32 0.0, %v864
        %v866 = vpop.f32.mrb[0].mxu0
        %867 = vmatprep.mubr.bf16.mxu0 0
        %868 = vmatmul.mubr.bf16.gmra.mrb[0].mxu0 %v555
        %v869 = vpop.f32.mrb[0].mxu0
        %v870 = vadd.f32 0.0, %v869
        %v871 = vpop.f32.mrb[0].mxu0
        %v872 = vpop.f32.mrb[0].mxu0
        %v873 = vadd.f32 0.0, %v872
        %v874 = vpop.f32.mrb[0].mxu0
        %875 = vmatprep.mubr.bf16.mxu0 0
        %876 = vmatmul.mubr.bf16.gmra.mrb[0].mxu0 %v556
        %v877 = vpop.f32.mrb[0].mxu0
        %v878 = vadd.f32 0.0, %v877
        %v879 = vpop.f32.mrb[0].mxu0
        %v880 = vpop.f32.mrb[0].mxu0
        %v881 = vadd.f32 0.0, %v880
        %v882 = vpop.f32.mrb[0].mxu0
        %883 = vmatprep.mubr.bf16.mxu0 0
        %884 = vmatmul.mubr.bf16.gmra.mrb[0].mxu0 %v557
        %v885 = vpop.f32.mrb[0].mxu0
        %v886 = vadd.f32 0.0, %v885
        %v887 = vpop.f32.mrb[0].mxu0
        %v888 = vpop.f32.mrb[0].mxu0
        %v889 = vadd.f32 0.0, %v888
        %v890 = vpop.f32.mrb[0].mxu0
        %891 = vmatprep.mubr.bf16.mxu0 0
        %892 = vmatmul.mubr.bf16.gmra.mrb[0].mxu0 %v558
        %v893 = vpop.f32.mrb[0].mxu0
        %v894 = vadd.f32 0.0, %v893
        %v895 = vpop.f32.mrb[0].mxu0
        %v896 = vpop.f32.mrb[0].mxu0
        %v897 = vadd.f32 0.0, %v896
        %v898 = vpop.f32.mrb[0].mxu0
        %899 = vmatprep.mubr.bf16.mxu0 0
        %900 = vmatmul.mubr.bf16.gmra.mrb[0].mxu0 %v559
        %v901 = vpop.f32.mrb[0].mxu0
        %v902 = vadd.f32 0.0, %v901
        %v903 = vpop.f32.mrb[0].mxu0
        %v904 = vpop.f32.mrb[0].mxu0
        %v905 = vadd.f32 0.0, %v904
        %v906 = vpop.f32.mrb[0].mxu0
        %907 = vmatprep.mubr.bf16.mxu0 0
        %908 = vmatmul.mubr.bf16.gmra.mrb[0].mxu0 %v560
        %v909 = vpop.f32.mrb[0].mxu0
        %v910 = vadd.f32 0.0, %v909
        %v911 = vpop.f32.mrb[0].mxu0
        %v912 = vpop.f32.mrb[0].mxu0
        %v913 = vadd.f32 0.0, %v912
        %v914 = vpop.f32.mrb[0].mxu0
        %915 = vmatprep.mubr.bf16.mxu0 0
        %916 = vmatmul.mubr.bf16.gmra.mrb[0].mxu0 %v561
        %v917 = vpop.f32.mrb[0].mxu0
        %v918 = vadd.f32 0.0, %v917
        %v919 = vpop.f32.mrb[0].mxu0
        %v920 = vpop.f32.mrb[0].mxu0
        %v921 = vadd.f32 0.0, %v920
        %v922 = vpop.f32.mrb[0].mxu0
        %923 = vmatprep.mubr.bf16.mxu0 0
        %924 = vmatmul.mubr.bf16.gmra.mrb[0].mxu0 %v562
        %v925 = vpop.f32.mrb[0].mxu0
        %v926 = vadd.f32 0.0, %v925
        %v927 = vpop.f32.mrb[0].mxu0
        %v928 = vpop.f32.mrb[0].mxu0
        %v929 = vadd.f32 0.0, %v928
        %v930 = vpop.f32.mrb[0].mxu0
        %931 = vdwg.mxu0
        %932 = vst [vmem:[#allocation2] sm:$0xff] %v678
        %933 = vst [vmem:[#allocation2 + $0x8] sm:$0xff] %v681
        %934 = vst [vmem:[#allocation2 + $0x10] sm:$0xff] %v686
        %935 = vst [vmem:[#allocation2 + $0x18] sm:$0xff] %v689
        %936 = vst [vmem:[#allocation2 + $0x20] sm:$0xff] %v694
        %937 = vst [vmem:[#allocation2 + $0x28] sm:$0xff] %v697
        %938 = vst [vmem:[#allocation2 + $0x30] sm:$0xff] %v702
        %939 = vst [vmem:[#allocation2 + $0x38] sm:$0xff] %v705
        %940 = vst [vmem:[#allocation2 + $0x40] sm:$0xff] %v710
        %941 = vst [vmem:[#allocation2 + $0x48] sm:$0xff] %v713
        %942 = vst [vmem:[#allocation2 + $0x50] sm:$0xff] %v718
        %943 = vst [vmem:[#allocation2 + $0x58] sm:$0xff] %v721
        %944 = vst [vmem:[#allocation2 + $0x60] sm:$0xff] %v726
        %945 = vst [vmem:[#allocation2 + $0x68] sm:$0xff] %v729
        %946 = vst [vmem:[#allocation2 + $0x70] sm:$0xff] %v734
        %947 = vst [vmem:[#allocation2 + $0x78] sm:$0xff] %v737
        %948 = vst [vmem:[#allocation2 + $0x80] sm:$0xff] %v742
        %949 = vst [vmem:[#allocation2 + $0x88] sm:$0xff] %v745
        %950 = vst [vmem:[#allocation2 + $0x90] sm:$0xff] %v750
        %951 = vst [vmem:[#allocation2 + $0x98] sm:$0xff] %v753
        %952 = vst [vmem:[#allocation2 + $0xa0] sm:$0xff] %v758
        %953 = vst [vmem:[#allocation2 + $0xa8] sm:$0xff] %v761
        %954 = vst [vmem:[#allocation2 + $0xb0] sm:$0xff] %v766
        %955 = vst [vmem:[#allocation2 + $0xb8] sm:$0xff] %v769
        %956 = vst [vmem:[#allocation2 + $0xc0] sm:$0xff] %v774
        %957 = vst [vmem:[#allocation2 + $0xc8] sm:$0xff] %v777
        %958 = vst [vmem:[#allocation2 + $0xd0] sm:$0xff] %v782
        %959 = vst [vmem:[#allocation2 + $0xd8] sm:$0xff] %v785
        %960 = vst [vmem:[#allocation2 + $0xe0] sm:$0xff] %v790
        %961 = vst [vmem:[#allocation2 + $0xe8] sm:$0xff] %v793
        %962 = vst [vmem:[#allocation2 + $0xf0] sm:$0xff] %v798
        %963 = vst [vmem:[#allocation2 + $0xf8] sm:$0xff] %v801
        %964 = vst [vmem:[#allocation2 + $0x100] sm:$0xff] %v806
        %965 = vst [vmem:[#allocation2 + $0x108] sm:$0xff] %v809
        %966 = vst [vmem:[#allocation2 + $0x110] sm:$0xff] %v814
        %967 = vst [vmem:[#allocation2 + $0x118] sm:$0xff] %v817
        %968 = vst [vmem:[#allocation2 + $0x120] sm:$0xff] %v822
        %969 = vst [vmem:[#allocation2 + $0x128] sm:$0xff] %v825
        %970 = vst [vmem:[#allocation2 + $0x130] sm:$0xff] %v830
        %971 = vst [vmem:[#allocation2 + $0x138] sm:$0xff] %v833
        %972 = vst [vmem:[#allocation2 + $0x140] sm:$0xff] %v838
        %973 = vst [vmem:[#allocation2 + $0x148] sm:$0xff] %v841
        %974 = vst [vmem:[#allocation2 + $0x150] sm:$0xff] %v846
        %975 = vst [vmem:[#allocation2 + $0x158] sm:$0xff] %v849
        %976 = vst [vmem:[#allocation2 + $0x160] sm:$0xff] %v854
        %977 = vst [vmem:[#allocation2 + $0x168] sm:$0xff] %v857
        %978 = vst [vmem:[#allocation2 + $0x170] sm:$0xff] %v862
        %979 = vst [vmem:[#allocation2 + $0x178] sm:$0xff] %v865
        %980 = vst [vmem:[#allocation2 + $0x180] sm:$0xff] %v870
        %981 = vst [vmem:[#allocation2 + $0x188] sm:$0xff] %v873
        %982 = vst [vmem:[#allocation2 + $0x190] sm:$0xff] %v878
        %983 = vst [vmem:[#allocation2 + $0x198] sm:$0xff] %v881
        %984 = vst [vmem:[#allocation2 + $0x1a0] sm:$0xff] %v886
        %985 = vst [vmem:[#allocation2 + $0x1a8] sm:$0xff] %v889
        %986 = vst [vmem:[#allocation2 + $0x1b0] sm:$0xff] %v894
        %987 = vst [vmem:[#allocation2 + $0x1b8] sm:$0xff] %v897
        %988 = vst [vmem:[#allocation2 + $0x1c0] sm:$0xff] %v902
        %989 = vst [vmem:[#allocation2 + $0x1c8] sm:$0xff] %v905
        %990 = vst [vmem:[#allocation2 + $0x1d0] sm:$0xff] %v910
        %991 = vst [vmem:[#allocation2 + $0x1d8] sm:$0xff] %v913
        %992 = vst [vmem:[#allocation2 + $0x1e0] sm:$0xff] %v918
        %993 = vst [vmem:[#allocation2 + $0x1e8] sm:$0xff] %v921
        %994 = vst [vmem:[#allocation2 + $0x1f0] sm:$0xff] %v926
        %995 = vst [vmem:[#allocation2 + $0x1f8] sm:$0xff] %v929
        %v996 = vld [vmem:[#allocation13] sm:$0xff]
        %v997 = vld [vmem:[#allocation13 + $0x8] sm:$0xff]
        %v998 = vld [vmem:[#allocation13 + $0x10] sm:$0xff]
        %v999 = vld [vmem:[#allocation13 + $0x18] sm:$0xff]
        %v1000 = vld [vmem:[#allocation13 + $0x20] sm:$0xff]
        %v1001 = vld [vmem:[#allocation13 + $0x28] sm:$0xff]
        %v1002 = vld [vmem:[#allocation13 + $0x30] sm:$0xff]
        %v1003 = vld [vmem:[#allocation13 + $0x38] sm:$0xff]
        %v1004 = vld [vmem:[#allocation13 + $0x40] sm:$0xff]
        %v1005 = vld [vmem:[#allocation13 + $0x48] sm:$0xff]
        %v1006 = vld [vmem:[#allocation13 + $0x50] sm:$0xff]
        %v1007 = vld [vmem:[#allocation13 + $0x58] sm:$0xff]
        %v1008 = vld [vmem:[#allocation13 + $0x60] sm:$0xff]
        %v1009 = vld [vmem:[#allocation13 + $0x68] sm:$0xff]
        %v1010 = vld [vmem:[#allocation13 + $0x70] sm:$0xff]
        %v1011 = vld [vmem:[#allocation13 + $0x78] sm:$0xff]
        %v1012 = vld [vmem:[#allocation3] sm:$0xff]
        %v1013 = vld [vmem:[#allocation3 + $0x8] sm:$0xff]
        %v1014 = vld [vmem:[#allocation4] sm:$0xff]
        %v1015 = vld [vmem:[#allocation4 + $0x8] sm:$0xff]
        %v1016 = vld [vmem:[#allocation5] sm:$0xff]
        %v1017 = vld [vmem:[#allocation5 + $0x8] sm:$0xff]
        %v1018 = vld [vmem:[#allocation6] sm:$0xff]
        %v1019 = vld [vmem:[#allocation6 + $0x8] sm:$0xff]
        %v1020 = vld [vmem:[#allocation7] sm:$0xff]
        %v1021 = vld [vmem:[#allocation7 + $0x8] sm:$0xff]
        %v1022 = vld [vmem:[#allocation2] sm:$0xff]
        %v1023 = vld [vmem:[#allocation2 + $0x8] sm:$0xff]
        %v1024 = vsub.f32 0.0, %v1012
        %v1025 = vsub.f32 0.0, %v1013
        %v1026 = vadd.f32 %v1024, %v1014
        %v1027 = vadd.f32 %v1025, %v1015
        %v1028 = vadd.f32 %v1012, %v1026
        %v1029 = vadd.f32 %v1013, %v1027
        %v1030 = vmul.f32 %v1014, -2.0
        %v1031 = vmul.f32 %v1015, -2.0
        %v1032 = vadd.f32 %v1014, %v1030
        %v1033 = vadd.f32 %v1015, %v1031
        %vm1034 = vcmp.gt.f32.partialorder %v1028, 1.0
        %vm1035 = vcmp.gt.f32.partialorder %v1029, 1.0
        %v1036 = vsel %vm1034, 1, 0
        %v1037 = vsel %vm1035, 1, 0
        %v1038 = vcvt.s32.f32 %v1036
        %v1039 = vcvt.s32.f32 %v1037
        %v1040 = vpack.c.bf16 %v1039, %v1038
        %v1041 = vsel %vm1034, 0.0, %v1028
        %v1042 = vsel %vm1035, 0.0, %v1029
        %v1043 = vadd.f32 %v1032, %v1022
        %v1044 = vadd.f32 %v1033, %v1023
        %v1045 = vadd.f32 %v1043, %v1016
        %v1046 = vadd.f32 %v1044, %v1017
        %v1063 = vunpack.c.l.b16 %v996
        %v1064 = vunpack.c.h.b16 %v996
        %v1065 = vunpack.c.l.b16 %v997
        %v1066 = vunpack.c.h.b16 %v997
        %v1067 = vunpack.c.l.b16 %v998
        %v1068 = vunpack.c.h.b16 %v998
        %v1069 = vunpack.c.l.b16 %v999
        %v1070 = vunpack.c.h.b16 %v999
        %v1071 = vunpack.c.l.b16 %v1000
        %v1072 = vunpack.c.h.b16 %v1000
        %v1073 = vunpack.c.l.b16 %v1001
        %v1074 = vunpack.c.h.b16 %v1001
        %v1075 = vunpack.c.l.b16 %v1002
        %v1076 = vunpack.c.h.b16 %v1002
        %v1077 = vunpack.c.l.b16 %v1003
        %v1078 = vunpack.c.h.b16 %v1003
        %v1079 = vunpack.c.l.b16 %v1004
        %v1080 = vunpack.c.h.b16 %v1004
        %v1081 = vunpack.c.l.b16 %v1005
        %v1082 = vunpack.c.h.b16 %v1005
        %v1083 = vunpack.c.l.b16 %v1006
        %v1084 = vunpack.c.h.b16 %v1006
        %v1085 = vunpack.c.l.b16 %v1007
        %v1086 = vunpack.c.h.b16 %v1007
        %v1087 = vunpack.c.l.b16 %v1008
        %v1088 = vunpack.c.h.b16 %v1008
        %v1089 = vunpack.c.l.b16 %v1009
        %v1090 = vunpack.c.h.b16 %v1009
        %v1091 = vunpack.c.l.b16 %v1010
        %v1092 = vunpack.c.h.b16 %v1010
        %v1093 = vunpack.c.l.b16 %v1011
        %v1094 = vunpack.c.h.b16 %v1011
        %v1095 = vpack.c.b16 %v1065, %v1063
        %v1096 = vpack.c.b16 %v1066, %v1064
        %v1097 = vpack.c.b16 %v1069, %v1067
        %v1098 = vpack.c.b16 %v1070, %v1068
        %v1099 = vpack.c.b16 %v1073, %v1071
        %v1100 = vpack.c.b16 %v1074, %v1072
        %v1101 = vpack.c.b16 %v1077, %v1075
        %v1102 = vpack.c.b16 %v1078, %v1076
        %v1103 = vpack.c.b16 %v1081, %v1079
        %v1104 = vpack.c.b16 %v1082, %v1080
        %v1105 = vpack.c.b16 %v1085, %v1083
        %v1106 = vpack.c.b16 %v1086, %v1084
        %v1107 = vpack.c.b16 %v1089, %v1087
        %v1108 = vpack.c.b16 %v1090, %v1088
        %v1109 = vpack.c.b16 %v1093, %v1091
        %v1110 = vpack.c.b16 %v1094, %v1092
        %1127 = vmatprep.subr.bf16.mxu0 %v1096
        %1128 = vmatpush1.bf16.msra.mxu0 %v1095
        %1129 = vmatprep.subr.bf16.mxu0 %v1098
        %1130 = vmatpush1.bf16.msra.mxu0 %v1097
        %1131 = vmatprep.subr.bf16.mxu0 %v1100
        %1132 = vmatpush1.bf16.msra.mxu0 %v1099
        %1133 = vmatprep.subr.bf16.mxu0 %v1102
        %1134 = vmatpush1.bf16.msra.mxu0 %v1101
        %1135 = vmatprep.subr.bf16.mxu0 %v1104
        %1136 = vmatpush1.bf16.msra.mxu0 %v1103
        %1137 = vmatprep.subr.bf16.mxu0 %v1106
        %1138 = vmatpush1.bf16.msra.mxu0 %v1105
        %1139 = vmatprep.subr.bf16.mxu0 %v1108
        %1140 = vmatpush1.bf16.msra.mxu0 %v1107
        %1141 = vmatprep.subr.bf16.mxu0 %v1110
        %1142 = vmatpush1.bf16.msra.mxu0 %v1109
        %1143 = vmatprep.subr.bf16.mxu0 0
        %1144 = vmatpush1.bf16.msra.mxu0 0
        %1145 = vmatprep.subr.bf16.mxu0 0
        %1146 = vmatpush1.bf16.msra.mxu0 0
        %1147 = vmatprep.subr.bf16.mxu0 0
        %1148 = vmatpush1.bf16.msra.mxu0 0
        %1149 = vmatprep.subr.bf16.mxu0 0
        %1150 = vmatpush1.bf16.msra.mxu0 0
        %1151 = vmatprep.subr.bf16.mxu0 0
        %1152 = vmatpush1.bf16.msra.mxu0 0
        %1153 = vmatprep.subr.bf16.mxu0 0
        %1154 = vmatpush1.bf16.msra.mxu0 0
        %1155 = vmatprep.subr.bf16.mxu0 0
        %1156 = vmatpush1.bf16.msra.mxu0 0
        %1157 = vmatprep.subr.bf16.mxu0 0
        %1158 = vmatpush1.bf16.msra.mxu0 0
        %1159 = vmatprep.mubr.bf16.mxu0 0
        %1160 = vmatmul.mubr.bf16.gmra.mrb[0].mxu0 %v1040
        %v1161 = vpop.f32.mrb[0].mxu0
        %v1162 = vadd.f32 0.0, %v1161
        %v1163 = vpop.f32.mrb[0].mxu0
        %v1164 = vadd.f32 0.0, %v1163
        %v1165 = vpop.f32.mrb[0].mxu0
        %v1166 = vadd.f32 0.0, %v1165
        %v1167 = vpop.f32.mrb[0].mxu0
        %v1168 = vadd.f32 0.0, %v1167
        %1169 = vdwg.mxu0
        %v1170 = vadd.f32 %v1020, %v1164
        %v1171 = vadd.f32 %v1021, %v1168
        %v1172 = vsub.f32 0.0, %v1018
        %v1173 = vsub.f32 0.0, %v1019
        %v1174 = vadd.f32 %v1172, %v1170
        %v1175 = vadd.f32 %v1173, %v1171
        %v1176 = vadd.f32 %v1018, %v1174
        %v1177 = vadd.f32 %v1019, %v1175
        %v1178 = vmul.f32 %v1170, -2.0
        %v1179 = vmul.f32 %v1171, -2.0
        %v1180 = vadd.f32 %v1170, %v1178
        %v1181 = vadd.f32 %v1171, %v1179
        %v1183 = vunpack.c.l.b16 %v1040
        %v1184 = vunpack.c.h.b16 %v1040
        %v1185 = vpack.c.b16 %v1183, %v1183
        %v1186 = vpack.c.b16 %v1184, %v1184
        %1189 = vst [vmem:[%s294] sm:$0xf] %v1185
        %1190 = vst [vmem:[%s294 + $0x4] sm:$0xf] %v1186
        %1191 = vst [vmem:[%s301] sm:$0xff] %v1176
        %1192 = vst [vmem:[%s301 + $0x8] sm:$0xff] %v1177
        %s1193 = scalar_lea.vmem [#allocation2], 16
        %v1194 = vld [vmem:[%s1193] sm:$0xff]
        %v1195 = vld [vmem:[%s1193 + $0x8] sm:$0xff]
        %v1196 = vsub.f32 0.0, %v1041
        %v1197 = vsub.f32 0.0, %v1042
        %v1198 = vadd.f32 %v1196, %v1045
        %v1199 = vadd.f32 %v1197, %v1046
        %v1200 = vadd.f32 %v1041, %v1198
        %v1201 = vadd.f32 %v1042, %v1199
        %v1202 = vmul.f32 %v1045, -2.0
        %v1203 = vmul.f32 %v1046, -2.0
        %v1204 = vadd.f32 %v1045, %v1202
        %v1205 = vadd.f32 %v1046, %v1203
        %vm1206 = vcmp.gt.f32.partialorder %v1200, 1.0
        %vm1207 = vcmp.gt.f32.partialorder %v1201, 1.0
        %v1208 = vsel %vm1206, 1, 0
        %v1209 = vsel %vm1207, 1, 0
        %v1210 = vcvt.s32.f32 %v1208
        %v1211 = vcvt.s32.f32 %v1209
        %v1212 = vpack.c.bf16 %v1211, %v1210
        %v1213 = vsel %vm1206, 0.0, %v1200
        %v1214 = vsel %vm1207, 0.0, %v1201
        %v1215 = vadd.f32 %v1204, %v1194
        %v1216 = vadd.f32 %v1205, %v1195
        %v1217 = vadd.f32 %v1215, %v1162
        %v1218 = vadd.f32 %v1216, %v1166
        %1219 = vmatprep.subr.bf16.mxu0 %v1096
        %1220 = vmatpush1.bf16.msra.mxu0 %v1095
        %1221 = vmatprep.subr.bf16.mxu0 %v1098
        %1222 = vmatpush1.bf16.msra.mxu0 %v1097
        %1223 = vmatprep.subr.bf16.mxu0 %v1100
        %1224 = vmatpush1.bf16.msra.mxu0 %v1099
        %1225 = vmatprep.subr.bf16.mxu0 %v1102
        %1226 = vmatpush1.bf16.msra.mxu0 %v1101
        %1227 = vmatprep.subr.bf16.mxu0 %v1104
        %1228 = vmatpush1.bf16.msra.mxu0 %v1103
        %1229 = vmatprep.subr.bf16.mxu0 %v1106
        %1230 = vmatpush1.bf16.msra.mxu0 %v1105
        %1231 = vmatprep.subr.bf16.mxu0 %v1108
        %1232 = vmatpush1.bf16.msra.mxu0 %v1107
        %1233 = vmatprep.subr.bf16.mxu0 %v1110
        %1234 = vmatpush1.bf16.msra.mxu0 %v1109
        %1235 = vmatprep.subr.bf16.mxu0 0
        %1236 = vmatpush1.bf16.msra.mxu0 0
        %1237 = vmatprep.subr.bf16.mxu0 0
        %1238 = vmatpush1.bf16.msra.mxu0 0
        %1239 = vmatprep.subr.bf16.mxu0 0
        %1240 = vmatpush1.bf16.msra.mxu0 0
        %1241 = vmatprep.subr.bf16.mxu0 0
        %1242 = vmatpush1.bf16.msra.mxu0 0
        %1243 = vmatprep.subr.bf16.mxu0 0
        %1244 = vmatpush1.bf16.msra.mxu0 0
        %1245 = vmatprep.subr.bf16.mxu0 0
        %1246 = vmatpush1.bf16.msra.mxu0 0
        %1247 = vmatprep.subr.bf16.mxu0 0
        %1248 = vmatpush1.bf16.msra.mxu0 0
        %1249 = vmatprep.subr.bf16.mxu0 0
        %1250 = vmatpush1.bf16.msra.mxu0 0
        %1251 = vmatprep.mubr.bf16.mxu0 0
        %1252 = vmatmul.mubr.bf16.gmra.mrb[0].mxu0 %v1212
        %v1253 = vpop.f32.mrb[0].mxu0
        %v1254 = vadd.f32 0.0, %v1253
        %v1255 = vpop.f32.mrb[0].mxu0
        %v1256 = vadd.f32 0.0, %v1255
        %v1257 = vpop.f32.mrb[0].mxu0
        %v1258 = vadd.f32 0.0, %v1257
        %v1259 = vpop.f32.mrb[0].mxu0
        %v1260 = vadd.f32 0.0, %v1259
        %1261 = vdwg.mxu0
        %v1262 = vadd.f32 %v1180, %v1256
        %v1263 = vadd.f32 %v1181, %v1260
        %v1264 = vsub.f32 0.0, %v1176
        %v1265 = vsub.f32 0.0, %v1177
        %v1266 = vadd.f32 %v1264, %v1262
        %v1267 = vadd.f32 %v1265, %v1263
        %v1268 = vadd.f32 %v1176, %v1266
        %v1269 = vadd.f32 %v1177, %v1267
        %v1270 = vmul.f32 %v1262, -2.0
        %v1271 = vmul.f32 %v1263, -2.0
        %v1272 = vadd.f32 %v1262, %v1270
        %v1273 = vadd.f32 %v1263, %v1271
        %v1275 = vunpack.c.l.b16 %v1212
        %v1276 = vunpack.c.h.b16 %v1212
        %v1277 = vpack.c.b16 %v1275, %v1275
        %v1278 = vpack.c.b16 %v1276, %v1276
        %s1281 = scalar_lea.vmem %s294, 8 [#allocation14]
        %1282 = vst [vmem:[%s1281] sm:$0xf] %v1277
        %1283 = vst [vmem:[%s1281 + $0x4] sm:$0xf] %v1278
        %s1284 = scalar_lea.vmem %s301, 16 [#allocation15]
        %1285 = vst [vmem:[%s1284] sm:$0xff] %v1268
        %1286 = vst [vmem:[%s1284 + $0x8] sm:$0xff] %v1269
        %s1287 = scalar_lea.vmem [#allocation2], 32
        %v1288 = vld [vmem:[%s1287] sm:$0xff]
        %v1289 = vld [vmem:[%s1287 + $0x8] sm:$0xff]
        %v1290 = vsub.f32 0.0, %v1213
        %v1291 = vsub.f32 0.0, %v1214
        %v1292 = vadd.f32 %v1290, %v1217
        %v1293 = vadd.f32 %v1291, %v1218
        %v1294 = vadd.f32 %v1213, %v1292
        %v1295 = vadd.f32 %v1214, %v1293
        %v1296 = vmul.f32 %v1217, -2.0
        %v1297 = vmul.f32 %v1218, -2.0
        %v1298 = vadd.f32 %v1217, %v1296
        %v1299 = vadd.f32 %v1218, %v1297
        %vm1300 = vcmp.gt.f32.partialorder %v1294, 1.0
        %vm1301 = vcmp.gt.f32.partialorder %v1295, 1.0
        %v1302 = vsel %vm1300, 1, 0
        %v1303 = vsel %vm1301, 1, 0
        %v1304 = vcvt.s32.f32 %v1302
        %v1305 = vcvt.s32.f32 %v1303
        %v1306 = vpack.c.bf16 %v1305, %v1304
        %v1307 = vsel %vm1300, 0.0, %v1294
        %v1308 = vsel %vm1301, 0.0, %v1295
        %v1309 = vadd.f32 %v1298, %v1288
        %v1310 = vadd.f32 %v1299, %v1289
        %v1311 = vadd.f32 %v1309, %v1254
        %v1312 = vadd.f32 %v1310, %v1258
        %1313 = vmatprep.subr.bf16.mxu0 %v1096
        %1314 = vmatpush1.bf16.msra.mxu0 %v1095
        %1315 = vmatprep.subr.bf16.mxu0 %v1098
        %1316 = vmatpush1.bf16.msra.mxu0 %v1097
        %1317 = vmatprep.subr.bf16.mxu0 %v1100
        %1318 = vmatpush1.bf16.msra.mxu0 %v1099
        %1319 = vmatprep.subr.bf16.mxu0 %v1102
        %1320 = vmatpush1.bf16.msra.mxu0 %v1101
        %1321 = vmatprep.subr.bf16.mxu0 %v1104
        %1322 = vmatpush1.bf16.msra.mxu0 %v1103
        %1323 = vmatprep.subr.bf16.mxu0 %v1106
        %1324 = vmatpush1.bf16.msra.mxu0 %v1105
        %1325 = vmatprep.subr.bf16.mxu0 %v1108
        %1326 = vmatpush1.bf16.msra.mxu0 %v1107
        %1327 = vmatprep.subr.bf16.mxu0 %v1110
        %1328 = vmatpush1.bf16.msra.mxu0 %v1109
        %1329 = vmatprep.subr.bf16.mxu0 0
        %1330 = vmatpush1.bf16.msra.mxu0 0
        %1331 = vmatprep.subr.bf16.mxu0 0
        %1332 = vmatpush1.bf16.msra.mxu0 0
        %1333 = vmatprep.subr.bf16.mxu0 0
        %1334 = vmatpush1.bf16.msra.mxu0 0
        %1335 = vmatprep.subr.bf16.mxu0 0
        %1336 = vmatpush1.bf16.msra.mxu0 0
        %1337 = vmatprep.subr.bf16.mxu0 0
        %1338 = vmatpush1.bf16.msra.mxu0 0
        %1339 = vmatprep.subr.bf16.mxu0 0
        %1340 = vmatpush1.bf16.msra.mxu0 0
        %1341 = vmatprep.subr.bf16.mxu0 0
        %1342 = vmatpush1.bf16.msra.mxu0 0
        %1343 = vmatprep.subr.bf16.mxu0 0
        %1344 = vmatpush1.bf16.msra.mxu0 0
        %1345 = vmatprep.mubr.bf16.mxu0 0
        %1346 = vmatmul.mubr.bf16.gmra.mrb[0].mxu0 %v1306
        %v1347 = vpop.f32.mrb[0].mxu0
        %v1348 = vadd.f32 0.0, %v1347
        %v1349 = vpop.f32.mrb[0].mxu0
        %v1350 = vadd.f32 0.0, %v1349
        %v1351 = vpop.f32.mrb[0].mxu0
        %v1352 = vadd.f32 0.0, %v1351
        %v1353 = vpop.f32.mrb[0].mxu0
        %v1354 = vadd.f32 0.0, %v1353
        %1355 = vdwg.mxu0
        %v1356 = vadd.f32 %v1272, %v1350
        %v1357 = vadd.f32 %v1273, %v1354
        %v1358 = vsub.f32 0.0, %v1268
        %v1359 = vsub.f32 0.0, %v1269
        %v1360 = vadd.f32 %v1358, %v1356
        %v1361 = vadd.f32 %v1359, %v1357
        %v1362 = vadd.f32 %v1268, %v1360
        %v1363 = vadd.f32 %v1269, %v1361
        %v1364 = vmul.f32 %v1356, -2.0
        %v1365 = vmul.f32 %v1357, -2.0
        %v1366 = vadd.f32 %v1356, %v1364
        %v1367 = vadd.f32 %v1357, %v1365
        %v1369 = vunpack.c.l.b16 %v1306
        %v1370 = vunpack.c.h.b16 %v1306
        %v1371 = vpack.c.b16 %v1369, %v1369
        %v1372 = vpack.c.b16 %v1370, %v1370
        %s1375 = scalar_lea.vmem %s294, 16 [#allocation14]
        %1376 = vst [vmem:[%s1375] sm:$0xf] %v1371
        %1377 = vst [vmem:[%s1375 + $0x4] sm:$0xf] %v1372
        %s1378 = scalar_lea.vmem %s301, 32 [#allocation15]
        %1379 = vst [vmem:[%s1378] sm:$0xff] %v1362
        %1380 = vst [vmem:[%s1378 + $0x8] sm:$0xff] %v1363
        %s1381 = scalar_lea.vmem [#allocation2], 48
        %v1382 = vld [vmem:[%s1381] sm:$0xff]
        %v1383 = vld [vmem:[%s1381 + $0x8] sm:$0xff]
        %v1384 = vsub.f32 0.0, %v1307
        %v1385 = vsub.f32 0.0, %v1308
        %v1386 = vadd.f32 %v1384, %v1311
        %v1387 = vadd.f32 %v1385, %v1312
        %v1388 = vadd.f32 %v1307, %v1386
        %v1389 = vadd.f32 %v1308, %v1387
        %v1390 = vmul.f32 %v1311, -2.0
        %v1391 = vmul.f32 %v1312, -2.0
        %v1392 = vadd.f32 %v1311, %v1390
        %v1393 = vadd.f32 %v1312, %v1391
        %vm1394 = vcmp.gt.f32.partialorder %v1388, 1.0
        %vm1395 = vcmp.gt.f32.partialorder %v1389, 1.0
        %v1396 = vsel %vm1394, 1, 0
        %v1397 = vsel %vm1395, 1, 0
        %v1398 = vcvt.s32.f32 %v1396
        %v1399 = vcvt.s32.f32 %v1397
        %v1400 = vpack.c.bf16 %v1399, %v1398
        %v1401 = vsel %vm1394, 0.0, %v1388
        %v1402 = vsel %vm1395, 0.0, %v1389
        %v1403 = vadd.f32 %v1392, %v1382
        %v1404 = vadd.f32 %v1393, %v1383
        %v1405 = vadd.f32 %v1403, %v1348
        %v1406 = vadd.f32 %v1404, %v1352
        %1407 = vmatprep.subr.bf16.mxu0 %v1096
        %1408 = vmatpush1.bf16.msra.mxu0 %v1095
        %1409 = vmatprep.subr.bf16.mxu0 %v1098
        %1410 = vmatpush1.bf16.msra.mxu0 %v1097
        %1411 = vmatprep.subr.bf16.mxu0 %v1100
        %1412 = vmatpush1.bf16.msra.mxu0 %v1099
        %1413 = vmatprep.subr.bf16.mxu0 %v1102
        %1414 = vmatpush1.bf16.msra.mxu0 %v1101
        %1415 = vmatprep.subr.bf16.mxu0 %v1104
        %1416 = vmatpush1.bf16.msra.mxu0 %v1103
        %1417 = vmatprep.subr.bf16.mxu0 %v1106
        %1418 = vmatpush1.bf16.msra.mxu0 %v1105
        %1419 = vmatprep.subr.bf16.mxu0 %v1108
        %1420 = vmatpush1.bf16.msra.mxu0 %v1107
        %1421 = vmatprep.subr.bf16.mxu0 %v1110
        %1422 = vmatpush1.bf16.msra.mxu0 %v1109
        %1423 = vmatprep.subr.bf16.mxu0 0
        %1424 = vmatpush1.bf16.msra.mxu0 0
        %1425 = vmatprep.subr.bf16.mxu0 0
        %1426 = vmatpush1.bf16.msra.mxu0 0
        %1427 = vmatprep.subr.bf16.mxu0 0
        %1428 = vmatpush1.bf16.msra.mxu0 0
        %1429 = vmatprep.subr.bf16.mxu0 0
        %1430 = vmatpush1.bf16.msra.mxu0 0
        %1431 = vmatprep.subr.bf16.mxu0 0
        %1432 = vmatpush1.bf16.msra.mxu0 0
        %1433 = vmatprep.subr.bf16.mxu0 0
        %1434 = vmatpush1.bf16.msra.mxu0 0
        %1435 = vmatprep.subr.bf16.mxu0 0
        %1436 = vmatpush1.bf16.msra.mxu0 0
        %1437 = vmatprep.subr.bf16.mxu0 0
        %1438 = vmatpush1.bf16.msra.mxu0 0
        %1439 = vmatprep.mubr.bf16.mxu0 0
        %1440 = vmatmul.mubr.bf16.gmra.mrb[0].mxu0 %v1400
        %v1441 = vpop.f32.mrb[0].mxu0
        %v1442 = vadd.f32 0.0, %v1441
        %v1443 = vpop.f32.mrb[0].mxu0
        %v1444 = vadd.f32 0.0, %v1443
        %v1445 = vpop.f32.mrb[0].mxu0
        %v1446 = vadd.f32 0.0, %v1445
        %v1447 = vpop.f32.mrb[0].mxu0
        %v1448 = vadd.f32 0.0, %v1447
        %1449 = vdwg.mxu0
        %v1450 = vadd.f32 %v1366, %v1444
        %v1451 = vadd.f32 %v1367, %v1448
        %v1452 = vsub.f32 0.0, %v1362
        %v1453 = vsub.f32 0.0, %v1363
        %v1454 = vadd.f32 %v1452, %v1450
        %v1455 = vadd.f32 %v1453, %v1451
        %v1456 = vadd.f32 %v1362, %v1454
        %v1457 = vadd.f32 %v1363, %v1455
        %v1458 = vmul.f32 %v1450, -2.0
        %v1459 = vmul.f32 %v1451, -2.0
        %v1460 = vadd.f32 %v1450, %v1458
        %v1461 = vadd.f32 %v1451, %v1459
        %v1463 = vunpack.c.l.b16 %v1400
        %v1464 = vunpack.c.h.b16 %v1400
        %v1465 = vpack.c.b16 %v1463, %v1463
        %v1466 = vpack.c.b16 %v1464, %v1464
        %s1469 = scalar_lea.vmem %s294, 24 [#allocation14]
        %1470 = vst [vmem:[%s1469] sm:$0xf] %v1465
        %1471 = vst [vmem:[%s1469 + $0x4] sm:$0xf] %v1466
        %s1472 = scalar_lea.vmem %s301, 48 [#allocation15]
        %1473 = vst [vmem:[%s1472] sm:$0xff] %v1456
        %1474 = vst [vmem:[%s1472 + $0x8] sm:$0xff] %v1457
        %s1475 = scalar_lea.vmem [#allocation2], 64
        %v1476 = vld [vmem:[%s1475] sm:$0xff]
        %v1477 = vld [vmem:[%s1475 + $0x8] sm:$0xff]
        %v1478 = vsub.f32 0.0, %v1401
        %v1479 = vsub.f32 0.0, %v1402
        %v1480 = vadd.f32 %v1478, %v1405
        %v1481 = vadd.f32 %v1479, %v1406
        %v1482 = vadd.f32 %v1401, %v1480
        %v1483 = vadd.f32 %v1402, %v1481
        %v1484 = vmul.f32 %v1405, -2.0
        %v1485 = vmul.f32 %v1406, -2.0
        %v1486 = vadd.f32 %v1405, %v1484
        %v1487 = vadd.f32 %v1406, %v1485
        %vm1488 = vcmp.gt.f32.partialorder %v1482, 1.0
        %vm1489 = vcmp.gt.f32.partialorder %v1483, 1.0
        %v1490 = vsel %vm1488, 1, 0
        %v1491 = vsel %vm1489, 1, 0
        %v1492 = vcvt.s32.f32 %v1490
        %v1493 = vcvt.s32.f32 %v1491
        %v1494 = vpack.c.bf16 %v1493, %v1492
        %v1495 = vsel %vm1488, 0.0, %v1482
        %v1496 = vsel %vm1489, 0.0, %v1483
        %v1497 = vadd.f32 %v1486, %v1476
        %v1498 = vadd.f32 %v1487, %v1477
        %v1499 = vadd.f32 %v1497, %v1442
        %v1500 = vadd.f32 %v1498, %v1446
        %1501 = vmatprep.subr.bf16.mxu0 %v1096
        %1502 = vmatpush1.bf16.msra.mxu0 %v1095
        %1503 = vmatprep.subr.bf16.mxu0 %v1098
        %1504 = vmatpush1.bf16.msra.mxu0 %v1097
        %1505 = vmatprep.subr.bf16.mxu0 %v1100
        %1506 = vmatpush1.bf16.msra.mxu0 %v1099
        %1507 = vmatprep.subr.bf16.mxu0 %v1102
        %1508 = vmatpush1.bf16.msra.mxu0 %v1101
        %1509 = vmatprep.subr.bf16.mxu0 %v1104
        %1510 = vmatpush1.bf16.msra.mxu0 %v1103
        %1511 = vmatprep.subr.bf16.mxu0 %v1106
        %1512 = vmatpush1.bf16.msra.mxu0 %v1105
        %1513 = vmatprep.subr.bf16.mxu0 %v1108
        %1514 = vmatpush1.bf16.msra.mxu0 %v1107
        %1515 = vmatprep.subr.bf16.mxu0 %v1110
        %1516 = vmatpush1.bf16.msra.mxu0 %v1109
        %1517 = vmatprep.subr.bf16.mxu0 0
        %1518 = vmatpush1.bf16.msra.mxu0 0
        %1519 = vmatprep.subr.bf16.mxu0 0
        %1520 = vmatpush1.bf16.msra.mxu0 0
        %1521 = vmatprep.subr.bf16.mxu0 0
        %1522 = vmatpush1.bf16.msra.mxu0 0
        %1523 = vmatprep.subr.bf16.mxu0 0
        %1524 = vmatpush1.bf16.msra.mxu0 0
        %1525 = vmatprep.subr.bf16.mxu0 0
        %1526 = vmatpush1.bf16.msra.mxu0 0
        %1527 = vmatprep.subr.bf16.mxu0 0
        %1528 = vmatpush1.bf16.msra.mxu0 0
        %1529 = vmatprep.subr.bf16.mxu0 0
        %1530 = vmatpush1.bf16.msra.mxu0 0
        %1531 = vmatprep.subr.bf16.mxu0 0
        %1532 = vmatpush1.bf16.msra.mxu0 0
        %1533 = vmatprep.mubr.bf16.mxu0 0
        %1534 = vmatmul.mubr.bf16.gmra.mrb[0].mxu0 %v1494
        %v1535 = vpop.f32.mrb[0].mxu0
        %v1536 = vadd.f32 0.0, %v1535
        %v1537 = vpop.f32.mrb[0].mxu0
        %v1538 = vadd.f32 0.0, %v1537
        %v1539 = vpop.f32.mrb[0].mxu0
        %v1540 = vadd.f32 0.0, %v1539
        %v1541 = vpop.f32.mrb[0].mxu0
        %v1542 = vadd.f32 0.0, %v1541
        %1543 = vdwg.mxu0
        %v1544 = vadd.f32 %v1460, %v1538
        %v1545 = vadd.f32 %v1461, %v1542
        %v1546 = vsub.f32 0.0, %v1456
        %v1547 = vsub.f32 0.0, %v1457
        %v1548 = vadd.f32 %v1546, %v1544
        %v1549 = vadd.f32 %v1547, %v1545
        %v1550 = vadd.f32 %v1456, %v1548
        %v1551 = vadd.f32 %v1457, %v1549
        %v1552 = vmul.f32 %v1544, -2.0
        %v1553 = vmul.f32 %v1545, -2.0
        %v1554 = vadd.f32 %v1544, %v1552
        %v1555 = vadd.f32 %v1545, %v1553
        %v1557 = vunpack.c.l.b16 %v1494
        %v1558 = vunpack.c.h.b16 %v1494
        %v1559 = vpack.c.b16 %v1557, %v1557
        %v1560 = vpack.c.b16 %v1558, %v1558
        %s1563 = scalar_lea.vmem %s294, 32 [#allocation14]
        %1564 = vst [vmem:[%s1563] sm:$0xf] %v1559
        %1565 = vst [vmem:[%s1563 + $0x4] sm:$0xf] %v1560
        %s1566 = scalar_lea.vmem %s301, 64 [#allocation15]
        %1567 = vst [vmem:[%s1566] sm:$0xff] %v1550
        %1568 = vst [vmem:[%s1566 + $0x8] sm:$0xff] %v1551
        %s1569 = scalar_lea.vmem [#allocation2], 80
        %v1570 = vld [vmem:[%s1569] sm:$0xff]
        %v1571 = vld [vmem:[%s1569 + $0x8] sm:$0xff]
        %v1572 = vsub.f32 0.0, %v1495
        %v1573 = vsub.f32 0.0, %v1496
        %v1574 = vadd.f32 %v1572, %v1499
        %v1575 = vadd.f32 %v1573, %v1500
        %v1576 = vadd.f32 %v1495, %v1574
        %v1577 = vadd.f32 %v1496, %v1575
        %v1578 = vmul.f32 %v1499, -2.0
        %v1579 = vmul.f32 %v1500, -2.0
        %v1580 = vadd.f32 %v1499, %v1578
        %v1581 = vadd.f32 %v1500, %v1579
        %vm1582 = vcmp.gt.f32.partialorder %v1576, 1.0
        %vm1583 = vcmp.gt.f32.partialorder %v1577, 1.0
        %v1584 = vsel %vm1582, 1, 0
        %v1585 = vsel %vm1583, 1, 0
        %v1586 = vcvt.s32.f32 %v1584
        %v1587 = vcvt.s32.f32 %v1585
        %v1588 = vpack.c.bf16 %v1587, %v1586
        %v1589 = vsel %vm1582, 0.0, %v1576
        %v1590 = vsel %vm1583, 0.0, %v1577
        %v1591 = vadd.f32 %v1580, %v1570
        %v1592 = vadd.f32 %v1581, %v1571
        %v1593 = vadd.f32 %v1591, %v1536
        %v1594 = vadd.f32 %v1592, %v1540
        %1595 = vmatprep.subr.bf16.mxu0 %v1096
        %1596 = vmatpush1.bf16.msra.mxu0 %v1095
        %1597 = vmatprep.subr.bf16.mxu0 %v1098
        %1598 = vmatpush1.bf16.msra.mxu0 %v1097
        %1599 = vmatprep.subr.bf16.mxu0 %v1100
        %1600 = vmatpush1.bf16.msra.mxu0 %v1099
        %1601 = vmatprep.subr.bf16.mxu0 %v1102
        %1602 = vmatpush1.bf16.msra.mxu0 %v1101
        %1603 = vmatprep.subr.bf16.mxu0 %v1104
        %1604 = vmatpush1.bf16.msra.mxu0 %v1103
        %1605 = vmatprep.subr.bf16.mxu0 %v1106
        %1606 = vmatpush1.bf16.msra.mxu0 %v1105
        %1607 = vmatprep.subr.bf16.mxu0 %v1108
        %1608 = vmatpush1.bf16.msra.mxu0 %v1107
        %1609 = vmatprep.subr.bf16.mxu0 %v1110
        %1610 = vmatpush1.bf16.msra.mxu0 %v1109
        %1611 = vmatprep.subr.bf16.mxu0 0
        %1612 = vmatpush1.bf16.msra.mxu0 0
        %1613 = vmatprep.subr.bf16.mxu0 0
        %1614 = vmatpush1.bf16.msra.mxu0 0
        %1615 = vmatprep.subr.bf16.mxu0 0
        %1616 = vmatpush1.bf16.msra.mxu0 0
        %1617 = vmatprep.subr.bf16.mxu0 0
        %1618 = vmatpush1.bf16.msra.mxu0 0
        %1619 = vmatprep.subr.bf16.mxu0 0
        %1620 = vmatpush1.bf16.msra.mxu0 0
        %1621 = vmatprep.subr.bf16.mxu0 0
        %1622 = vmatpush1.bf16.msra.mxu0 0
        %1623 = vmatprep.subr.bf16.mxu0 0
        %1624 = vmatpush1.bf16.msra.mxu0 0
        %1625 = vmatprep.subr.bf16.mxu0 0
        %1626 = vmatpush1.bf16.msra.mxu0 0
        %1627 = vmatprep.mubr.bf16.mxu0 0
        %1628 = vmatmul.mubr.bf16.gmra.mrb[0].mxu0 %v1588
        %v1629 = vpop.f32.mrb[0].mxu0
        %v1630 = vadd.f32 0.0, %v1629
        %v1631 = vpop.f32.mrb[0].mxu0
        %v1632 = vadd.f32 0.0, %v1631
        %v1633 = vpop.f32.mrb[0].mxu0
        %v1634 = vadd.f32 0.0, %v1633
        %v1635 = vpop.f32.mrb[0].mxu0
        %v1636 = vadd.f32 0.0, %v1635
        %1637 = vdwg.mxu0
        %v1638 = vadd.f32 %v1554, %v1632
        %v1639 = vadd.f32 %v1555, %v1636
        %v1640 = vsub.f32 0.0, %v1550
        %v1641 = vsub.f32 0.0, %v1551
        %v1642 = vadd.f32 %v1640, %v1638
        %v1643 = vadd.f32 %v1641, %v1639
        %v1644 = vadd.f32 %v1550, %v1642
        %v1645 = vadd.f32 %v1551, %v1643
        %v1646 = vmul.f32 %v1638, -2.0
        %v1647 = vmul.f32 %v1639, -2.0
        %v1648 = vadd.f32 %v1638, %v1646
        %v1649 = vadd.f32 %v1639, %v1647
        %v1651 = vunpack.c.l.b16 %v1588
        %v1652 = vunpack.c.h.b16 %v1588
        %v1653 = vpack.c.b16 %v1651, %v1651
        %v1654 = vpack.c.b16 %v1652, %v1652
        %s1657 = scalar_lea.vmem %s294, 40 [#allocation14]
        %1658 = vst [vmem:[%s1657] sm:$0xf] %v1653
        %1659 = vst [vmem:[%s1657 + $0x4] sm:$0xf] %v1654
        %s1660 = scalar_lea.vmem %s301, 80 [#allocation15]
        %1661 = vst [vmem:[%s1660] sm:$0xff] %v1644
        %1662 = vst [vmem:[%s1660 + $0x8] sm:$0xff] %v1645
        %s1663 = scalar_lea.vmem [#allocation2], 96
        %v1664 = vld [vmem:[%s1663] sm:$0xff]
        %v1665 = vld [vmem:[%s1663 + $0x8] sm:$0xff]
        %v1666 = vsub.f32 0.0, %v1589
        %v1667 = vsub.f32 0.0, %v1590
        %v1668 = vadd.f32 %v1666, %v1593
        %v1669 = vadd.f32 %v1667, %v1594
        %v1670 = vadd.f32 %v1589, %v1668
        %v1671 = vadd.f32 %v1590, %v1669
        %v1672 = vmul.f32 %v1593, -2.0
        %v1673 = vmul.f32 %v1594, -2.0
        %v1674 = vadd.f32 %v1593, %v1672
        %v1675 = vadd.f32 %v1594, %v1673
        %vm1676 = vcmp.gt.f32.partialorder %v1670, 1.0
        %vm1677 = vcmp.gt.f32.partialorder %v1671, 1.0
        %v1678 = vsel %vm1676, 1, 0
        %v1679 = vsel %vm1677, 1, 0
        %v1680 = vcvt.s32.f32 %v1678
        %v1681 = vcvt.s32.f32 %v1679
        %v1682 = vpack.c.bf16 %v1681, %v1680
        %v1683 = vsel %vm1676, 0.0, %v1670
        %v1684 = vsel %vm1677, 0.0, %v1671
        %v1685 = vadd.f32 %v1674, %v1664
        %v1686 = vadd.f32 %v1675, %v1665
        %v1687 = vadd.f32 %v1685, %v1630
        %v1688 = vadd.f32 %v1686, %v1634
        %1689 = vmatprep.subr.bf16.mxu0 %v1096
        %1690 = vmatpush1.bf16.msra.mxu0 %v1095
        %1691 = vmatprep.subr.bf16.mxu0 %v1098
        %1692 = vmatpush1.bf16.msra.mxu0 %v1097
        %1693 = vmatprep.subr.bf16.mxu0 %v1100
        %1694 = vmatpush1.bf16.msra.mxu0 %v1099
        %1695 = vmatprep.subr.bf16.mxu0 %v1102
        %1696 = vmatpush1.bf16.msra.mxu0 %v1101
        %1697 = vmatprep.subr.bf16.mxu0 %v1104
        %1698 = vmatpush1.bf16.msra.mxu0 %v1103
        %1699 = vmatprep.subr.bf16.mxu0 %v1106
        %1700 = vmatpush1.bf16.msra.mxu0 %v1105
        %1701 = vmatprep.subr.bf16.mxu0 %v1108
        %1702 = vmatpush1.bf16.msra.mxu0 %v1107
        %1703 = vmatprep.subr.bf16.mxu0 %v1110
        %1704 = vmatpush1.bf16.msra.mxu0 %v1109
        %1705 = vmatprep.subr.bf16.mxu0 0
        %1706 = vmatpush1.bf16.msra.mxu0 0
        %1707 = vmatprep.subr.bf16.mxu0 0
        %1708 = vmatpush1.bf16.msra.mxu0 0
        %1709 = vmatprep.subr.bf16.mxu0 0
        %1710 = vmatpush1.bf16.msra.mxu0 0
        %1711 = vmatprep.subr.bf16.mxu0 0
        %1712 = vmatpush1.bf16.msra.mxu0 0
        %1713 = vmatprep.subr.bf16.mxu0 0
        %1714 = vmatpush1.bf16.msra.mxu0 0
        %1715 = vmatprep.subr.bf16.mxu0 0
        %1716 = vmatpush1.bf16.msra.mxu0 0
        %1717 = vmatprep.subr.bf16.mxu0 0
        %1718 = vmatpush1.bf16.msra.mxu0 0
        %1719 = vmatprep.subr.bf16.mxu0 0
        %1720 = vmatpush1.bf16.msra.mxu0 0
        %1721 = vmatprep.mubr.bf16.mxu0 0
        %1722 = vmatmul.mubr.bf16.gmra.mrb[0].mxu0 %v1682
        %v1723 = vpop.f32.mrb[0].mxu0
        %v1724 = vadd.f32 0.0, %v1723
        %v1725 = vpop.f32.mrb[0].mxu0
        %v1726 = vadd.f32 0.0, %v1725
        %v1727 = vpop.f32.mrb[0].mxu0
        %v1728 = vadd.f32 0.0, %v1727
        %v1729 = vpop.f32.mrb[0].mxu0
        %v1730 = vadd.f32 0.0, %v1729
        %1731 = vdwg.mxu0
        %v1732 = vadd.f32 %v1648, %v1726
        %v1733 = vadd.f32 %v1649, %v1730
        %v1734 = vsub.f32 0.0, %v1644
        %v1735 = vsub.f32 0.0, %v1645
        %v1736 = vadd.f32 %v1734, %v1732
        %v1737 = vadd.f32 %v1735, %v1733
        %v1738 = vadd.f32 %v1644, %v1736
        %v1739 = vadd.f32 %v1645, %v1737
        %v1740 = vmul.f32 %v1732, -2.0
        %v1741 = vmul.f32 %v1733, -2.0
        %v1742 = vadd.f32 %v1732, %v1740
        %v1743 = vadd.f32 %v1733, %v1741
        %v1745 = vunpack.c.l.b16 %v1682
        %v1746 = vunpack.c.h.b16 %v1682
        %v1747 = vpack.c.b16 %v1745, %v1745
        %v1748 = vpack.c.b16 %v1746, %v1746
        %s1751 = scalar_lea.vmem %s294, 48 [#allocation14]
        %1752 = vst [vmem:[%s1751] sm:$0xf] %v1747
        %1753 = vst [vmem:[%s1751 + $0x4] sm:$0xf] %v1748
        %s1754 = scalar_lea.vmem %s301, 96 [#allocation15]
        %1755 = vst [vmem:[%s1754] sm:$0xff] %v1738
        %1756 = vst [vmem:[%s1754 + $0x8] sm:$0xff] %v1739
        %s1757 = scalar_lea.vmem [#allocation2], 112
        %v1758 = vld [vmem:[%s1757] sm:$0xff]
        %v1759 = vld [vmem:[%s1757 + $0x8] sm:$0xff]
        %v1760 = vsub.f32 0.0, %v1683
        %v1761 = vsub.f32 0.0, %v1684
        %v1762 = vadd.f32 %v1760, %v1687
        %v1763 = vadd.f32 %v1761, %v1688
        %v1764 = vadd.f32 %v1683, %v1762
        %v1765 = vadd.f32 %v1684, %v1763
        %v1766 = vmul.f32 %v1687, -2.0
        %v1767 = vmul.f32 %v1688, -2.0
        %v1768 = vadd.f32 %v1687, %v1766
        %v1769 = vadd.f32 %v1688, %v1767
        %vm1770 = vcmp.gt.f32.partialorder %v1764, 1.0
        %vm1771 = vcmp.gt.f32.partialorder %v1765, 1.0
        %v1772 = vsel %vm1770, 1, 0
        %v1773 = vsel %vm1771, 1, 0
        %v1774 = vcvt.s32.f32 %v1772
        %v1775 = vcvt.s32.f32 %v1773
        %v1776 = vpack.c.bf16 %v1775, %v1774
        %v1777 = vsel %vm1770, 0.0, %v1764
        %v1778 = vsel %vm1771, 0.0, %v1765
        %v1779 = vadd.f32 %v1768, %v1758
        %v1780 = vadd.f32 %v1769, %v1759
        %v1781 = vadd.f32 %v1779, %v1724
        %v1782 = vadd.f32 %v1780, %v1728
        %1783 = vmatprep.subr.bf16.mxu0 %v1096
        %1784 = vmatpush1.bf16.msra.mxu0 %v1095
        %1785 = vmatprep.subr.bf16.mxu0 %v1098
        %1786 = vmatpush1.bf16.msra.mxu0 %v1097
        %1787 = vmatprep.subr.bf16.mxu0 %v1100
        %1788 = vmatpush1.bf16.msra.mxu0 %v1099
        %1789 = vmatprep.subr.bf16.mxu0 %v1102
        %1790 = vmatpush1.bf16.msra.mxu0 %v1101
        %1791 = vmatprep.subr.bf16.mxu0 %v1104
        %1792 = vmatpush1.bf16.msra.mxu0 %v1103
        %1793 = vmatprep.subr.bf16.mxu0 %v1106
        %1794 = vmatpush1.bf16.msra.mxu0 %v1105
        %1795 = vmatprep.subr.bf16.mxu0 %v1108
        %1796 = vmatpush1.bf16.msra.mxu0 %v1107
        %1797 = vmatprep.subr.bf16.mxu0 %v1110
        %1798 = vmatpush1.bf16.msra.mxu0 %v1109
        %1799 = vmatprep.subr.bf16.mxu0 0
        %1800 = vmatpush1.bf16.msra.mxu0 0
        %1801 = vmatprep.subr.bf16.mxu0 0
        %1802 = vmatpush1.bf16.msra.mxu0 0
        %1803 = vmatprep.subr.bf16.mxu0 0
        %1804 = vmatpush1.bf16.msra.mxu0 0
        %1805 = vmatprep.subr.bf16.mxu0 0
        %1806 = vmatpush1.bf16.msra.mxu0 0
        %1807 = vmatprep.subr.bf16.mxu0 0
        %1808 = vmatpush1.bf16.msra.mxu0 0
        %1809 = vmatprep.subr.bf16.mxu0 0
        %1810 = vmatpush1.bf16.msra.mxu0 0
        %1811 = vmatprep.subr.bf16.mxu0 0
        %1812 = vmatpush1.bf16.msra.mxu0 0
        %1813 = vmatprep.subr.bf16.mxu0 0
        %1814 = vmatpush1.bf16.msra.mxu0 0
        %1815 = vmatprep.mubr.bf16.mxu0 0
        %1816 = vmatmul.mubr.bf16.gmra.mrb[0].mxu0 %v1776
        %v1817 = vpop.f32.mrb[0].mxu0
        %v1818 = vadd.f32 0.0, %v1817
        %v1819 = vpop.f32.mrb[0].mxu0
        %v1820 = vadd.f32 0.0, %v1819
        %v1821 = vpop.f32.mrb[0].mxu0
        %v1822 = vadd.f32 0.0, %v1821
        %v1823 = vpop.f32.mrb[0].mxu0
        %v1824 = vadd.f32 0.0, %v1823
        %1825 = vdwg.mxu0
        %v1826 = vadd.f32 %v1742, %v1820
        %v1827 = vadd.f32 %v1743, %v1824
        %v1828 = vsub.f32 0.0, %v1738
        %v1829 = vsub.f32 0.0, %v1739
        %v1830 = vadd.f32 %v1828, %v1826
        %v1831 = vadd.f32 %v1829, %v1827
        %v1832 = vadd.f32 %v1738, %v1830
        %v1833 = vadd.f32 %v1739, %v1831
        %v1834 = vmul.f32 %v1826, -2.0
        %v1835 = vmul.f32 %v1827, -2.0
        %v1836 = vadd.f32 %v1826, %v1834
        %v1837 = vadd.f32 %v1827, %v1835
        %v1839 = vunpack.c.l.b16 %v1776
        %v1840 = vunpack.c.h.b16 %v1776
        %v1841 = vpack.c.b16 %v1839, %v1839
        %v1842 = vpack.c.b16 %v1840, %v1840
        %s1845 = scalar_lea.vmem %s294, 56 [#allocation14]
        %1846 = vst [vmem:[%s1845] sm:$0xf] %v1841
        %1847 = vst [vmem:[%s1845 + $0x4] sm:$0xf] %v1842
        %s1848 = scalar_lea.vmem %s301, 112 [#allocation15]
        %1849 = vst [vmem:[%s1848] sm:$0xff] %v1832
        %1850 = vst [vmem:[%s1848 + $0x8] sm:$0xff] %v1833
        %s1851 = scalar_lea.vmem [#allocation2], 128
        %v1852 = vld [vmem:[%s1851] sm:$0xff]
        %v1853 = vld [vmem:[%s1851 + $0x8] sm:$0xff]
        %v1854 = vsub.f32 0.0, %v1777
        %v1855 = vsub.f32 0.0, %v1778
        %v1856 = vadd.f32 %v1854, %v1781
        %v1857 = vadd.f32 %v1855, %v1782
        %v1858 = vadd.f32 %v1777, %v1856
        %v1859 = vadd.f32 %v1778, %v1857
        %v1860 = vmul.f32 %v1781, -2.0
        %v1861 = vmul.f32 %v1782, -2.0
        %v1862 = vadd.f32 %v1781, %v1860
        %v1863 = vadd.f32 %v1782, %v1861
        %vm1864 = vcmp.gt.f32.partialorder %v1858, 1.0
        %vm1865 = vcmp.gt.f32.partialorder %v1859, 1.0
        %v1866 = vsel %vm1864, 1, 0
        %v1867 = vsel %vm1865, 1, 0
        %v1868 = vcvt.s32.f32 %v1866
        %v1869 = vcvt.s32.f32 %v1867
        %v1870 = vpack.c.bf16 %v1869, %v1868
        %v1871 = vsel %vm1864, 0.0, %v1858
        %v1872 = vsel %vm1865, 0.0, %v1859
        %v1873 = vadd.f32 %v1862, %v1852
        %v1874 = vadd.f32 %v1863, %v1853
        %v1875 = vadd.f32 %v1873, %v1818
        %v1876 = vadd.f32 %v1874, %v1822
        %1877 = vmatprep.subr.bf16.mxu0 %v1096
        %1878 = vmatpush1.bf16.msra.mxu0 %v1095
        %1879 = vmatprep.subr.bf16.mxu0 %v1098
        %1880 = vmatpush1.bf16.msra.mxu0 %v1097
        %1881 = vmatprep.subr.bf16.mxu0 %v1100
        %1882 = vmatpush1.bf16.msra.mxu0 %v1099
        %1883 = vmatprep.subr.bf16.mxu0 %v1102
        %1884 = vmatpush1.bf16.msra.mxu0 %v1101
        %1885 = vmatprep.subr.bf16.mxu0 %v1104
        %1886 = vmatpush1.bf16.msra.mxu0 %v1103
        %1887 = vmatprep.subr.bf16.mxu0 %v1106
        %1888 = vmatpush1.bf16.msra.mxu0 %v1105
        %1889 = vmatprep.subr.bf16.mxu0 %v1108
        %1890 = vmatpush1.bf16.msra.mxu0 %v1107
        %1891 = vmatprep.subr.bf16.mxu0 %v1110
        %1892 = vmatpush1.bf16.msra.mxu0 %v1109
        %1893 = vmatprep.subr.bf16.mxu0 0
        %1894 = vmatpush1.bf16.msra.mxu0 0
        %1895 = vmatprep.subr.bf16.mxu0 0
        %1896 = vmatpush1.bf16.msra.mxu0 0
        %1897 = vmatprep.subr.bf16.mxu0 0
        %1898 = vmatpush1.bf16.msra.mxu0 0
        %1899 = vmatprep.subr.bf16.mxu0 0
        %1900 = vmatpush1.bf16.msra.mxu0 0
        %1901 = vmatprep.subr.bf16.mxu0 0
        %1902 = vmatpush1.bf16.msra.mxu0 0
        %1903 = vmatprep.subr.bf16.mxu0 0
        %1904 = vmatpush1.bf16.msra.mxu0 0
        %1905 = vmatprep.subr.bf16.mxu0 0
        %1906 = vmatpush1.bf16.msra.mxu0 0
        %1907 = vmatprep.subr.bf16.mxu0 0
        %1908 = vmatpush1.bf16.msra.mxu0 0
        %1909 = vmatprep.mubr.bf16.mxu0 0
        %1910 = vmatmul.mubr.bf16.gmra.mrb[0].mxu0 %v1870
        %v1911 = vpop.f32.mrb[0].mxu0
        %v1912 = vadd.f32 0.0, %v1911
        %v1913 = vpop.f32.mrb[0].mxu0
        %v1914 = vadd.f32 0.0, %v1913
        %v1915 = vpop.f32.mrb[0].mxu0
        %v1916 = vadd.f32 0.0, %v1915
        %v1917 = vpop.f32.mrb[0].mxu0
        %v1918 = vadd.f32 0.0, %v1917
        %1919 = vdwg.mxu0
        %v1920 = vadd.f32 %v1836, %v1914
        %v1921 = vadd.f32 %v1837, %v1918
        %v1922 = vsub.f32 0.0, %v1832
        %v1923 = vsub.f32 0.0, %v1833
        %v1924 = vadd.f32 %v1922, %v1920
        %v1925 = vadd.f32 %v1923, %v1921
        %v1926 = vadd.f32 %v1832, %v1924
        %v1927 = vadd.f32 %v1833, %v1925
        %v1928 = vmul.f32 %v1920, -2.0
        %v1929 = vmul.f32 %v1921, -2.0
        %v1930 = vadd.f32 %v1920, %v1928
        %v1931 = vadd.f32 %v1921, %v1929
        %v1933 = vunpack.c.l.b16 %v1870
        %v1934 = vunpack.c.h.b16 %v1870
        %v1935 = vpack.c.b16 %v1933, %v1933
        %v1936 = vpack.c.b16 %v1934, %v1934
        %s1939 = scalar_lea.vmem %s294, 64 [#allocation14]
        %1940 = vst [vmem:[%s1939] sm:$0xf] %v1935
        %1941 = vst [vmem:[%s1939 + $0x4] sm:$0xf] %v1936
        %s1942 = scalar_lea.vmem %s301, 128 [#allocation15]
        %1943 = vst [vmem:[%s1942] sm:$0xff] %v1926
        %1944 = vst [vmem:[%s1942 + $0x8] sm:$0xff] %v1927
        %s1945 = scalar_lea.vmem [#allocation2], 144
        %v1946 = vld [vmem:[%s1945] sm:$0xff]
        %v1947 = vld [vmem:[%s1945 + $0x8] sm:$0xff]
        %v1948 = vsub.f32 0.0, %v1871
        %v1949 = vsub.f32 0.0, %v1872
        %v1950 = vadd.f32 %v1948, %v1875
        %v1951 = vadd.f32 %v1949, %v1876
        %v1952 = vadd.f32 %v1871, %v1950
        %v1953 = vadd.f32 %v1872, %v1951
        %v1954 = vmul.f32 %v1875, -2.0
        %v1955 = vmul.f32 %v1876, -2.0
        %v1956 = vadd.f32 %v1875, %v1954
        %v1957 = vadd.f32 %v1876, %v1955
        %vm1958 = vcmp.gt.f32.partialorder %v1952, 1.0
        %vm1959 = vcmp.gt.f32.partialorder %v1953, 1.0
        %v1960 = vsel %vm1958, 1, 0
        %v1961 = vsel %vm1959, 1, 0
        %v1962 = vcvt.s32.f32 %v1960
        %v1963 = vcvt.s32.f32 %v1961
        %v1964 = vpack.c.bf16 %v1963, %v1962
        %v1965 = vsel %vm1958, 0.0, %v1952
        %v1966 = vsel %vm1959, 0.0, %v1953
        %v1967 = vadd.f32 %v1956, %v1946
        %v1968 = vadd.f32 %v1957, %v1947
        %v1969 = vadd.f32 %v1967, %v1912
        %v1970 = vadd.f32 %v1968, %v1916
        %1971 = vmatprep.subr.bf16.mxu0 %v1096
        %1972 = vmatpush1.bf16.msra.mxu0 %v1095
        %1973 = vmatprep.subr.bf16.mxu0 %v1098
        %1974 = vmatpush1.bf16.msra.mxu0 %v1097
        %1975 = vmatprep.subr.bf16.mxu0 %v1100
        %1976 = vmatpush1.bf16.msra.mxu0 %v1099
        %1977 = vmatprep.subr.bf16.mxu0 %v1102
        %1978 = vmatpush1.bf16.msra.mxu0 %v1101
        %1979 = vmatprep.subr.bf16.mxu0 %v1104
        %1980 = vmatpush1.bf16.msra.mxu0 %v1103
        %1981 = vmatprep.subr.bf16.mxu0 %v1106
        %1982 = vmatpush1.bf16.msra.mxu0 %v1105
        %1983 = vmatprep.subr.bf16.mxu0 %v1108
        %1984 = vmatpush1.bf16.msra.mxu0 %v1107
        %1985 = vmatprep.subr.bf16.mxu0 %v1110
        %1986 = vmatpush1.bf16.msra.mxu0 %v1109
        %1987 = vmatprep.subr.bf16.mxu0 0
        %1988 = vmatpush1.bf16.msra.mxu0 0
        %1989 = vmatprep.subr.bf16.mxu0 0
        %1990 = vmatpush1.bf16.msra.mxu0 0
        %1991 = vmatprep.subr.bf16.mxu0 0
        %1992 = vmatpush1.bf16.msra.mxu0 0
        %1993 = vmatprep.subr.bf16.mxu0 0
        %1994 = vmatpush1.bf16.msra.mxu0 0
        %1995 = vmatprep.subr.bf16.mxu0 0
        %1996 = vmatpush1.bf16.msra.mxu0 0
        %1997 = vmatprep.subr.bf16.mxu0 0
        %1998 = vmatpush1.bf16.msra.mxu0 0
        %1999 = vmatprep.subr.bf16.mxu0 0
        %2000 = vmatpush1.bf16.msra.mxu0 0
        %2001 = vmatprep.subr.bf16.mxu0 0
        %2002 = vmatpush1.bf16.msra.mxu0 0
        %2003 = vmatprep.mubr.bf16.mxu0 0
        %2004 = vmatmul.mubr.bf16.gmra.mrb[0].mxu0 %v1964
        %v2005 = vpop.f32.mrb[0].mxu0
        %v2006 = vadd.f32 0.0, %v2005
        %v2007 = vpop.f32.mrb[0].mxu0
        %v2008 = vadd.f32 0.0, %v2007
        %v2009 = vpop.f32.mrb[0].mxu0
        %v2010 = vadd.f32 0.0, %v2009
        %v2011 = vpop.f32.mrb[0].mxu0
        %v2012 = vadd.f32 0.0, %v2011
        %2013 = vdwg.mxu0
        %v2014 = vadd.f32 %v1930, %v2008
        %v2015 = vadd.f32 %v1931, %v2012
        %v2016 = vsub.f32 0.0, %v1926
        %v2017 = vsub.f32 0.0, %v1927
        %v2018 = vadd.f32 %v2016, %v2014
        %v2019 = vadd.f32 %v2017, %v2015
        %v2020 = vadd.f32 %v1926, %v2018
        %v2021 = vadd.f32 %v1927, %v2019
        %v2022 = vmul.f32 %v2014, -2.0
        %v2023 = vmul.f32 %v2015, -2.0
        %v2024 = vadd.f32 %v2014, %v2022
        %v2025 = vadd.f32 %v2015, %v2023
        %v2027 = vunpack.c.l.b16 %v1964
        %v2028 = vunpack.c.h.b16 %v1964
        %v2029 = vpack.c.b16 %v2027, %v2027
        %v2030 = vpack.c.b16 %v2028, %v2028
        %s2033 = scalar_lea.vmem %s294, 72 [#allocation14]
        %2034 = vst [vmem:[%s2033] sm:$0xf] %v2029
        %2035 = vst [vmem:[%s2033 + $0x4] sm:$0xf] %v2030
        %s2036 = scalar_lea.vmem %s301, 144 [#allocation15]
        %2037 = vst [vmem:[%s2036] sm:$0xff] %v2020
        %2038 = vst [vmem:[%s2036 + $0x8] sm:$0xff] %v2021
        %s2039 = scalar_lea.vmem [#allocation2], 160
        %v2040 = vld [vmem:[%s2039] sm:$0xff]
        %v2041 = vld [vmem:[%s2039 + $0x8] sm:$0xff]
        %v2042 = vsub.f32 0.0, %v1965
        %v2043 = vsub.f32 0.0, %v1966
        %v2044 = vadd.f32 %v2042, %v1969
        %v2045 = vadd.f32 %v2043, %v1970
        %v2046 = vadd.f32 %v1965, %v2044
        %v2047 = vadd.f32 %v1966, %v2045
        %v2048 = vmul.f32 %v1969, -2.0
        %v2049 = vmul.f32 %v1970, -2.0
        %v2050 = vadd.f32 %v1969, %v2048
        %v2051 = vadd.f32 %v1970, %v2049
        %vm2052 = vcmp.gt.f32.partialorder %v2046, 1.0
        %vm2053 = vcmp.gt.f32.partialorder %v2047, 1.0
        %v2054 = vsel %vm2052, 1, 0
        %v2055 = vsel %vm2053, 1, 0
        %v2056 = vcvt.s32.f32 %v2054
        %v2057 = vcvt.s32.f32 %v2055
        %v2058 = vpack.c.bf16 %v2057, %v2056
        %v2059 = vsel %vm2052, 0.0, %v2046
        %v2060 = vsel %vm2053, 0.0, %v2047
        %v2061 = vadd.f32 %v2050, %v2040
        %v2062 = vadd.f32 %v2051, %v2041
        %v2063 = vadd.f32 %v2061, %v2006
        %v2064 = vadd.f32 %v2062, %v2010
        %2065 = vmatprep.subr.bf16.mxu0 %v1096
        %2066 = vmatpush1.bf16.msra.mxu0 %v1095
        %2067 = vmatprep.subr.bf16.mxu0 %v1098
        %2068 = vmatpush1.bf16.msra.mxu0 %v1097
        %2069 = vmatprep.subr.bf16.mxu0 %v1100
        %2070 = vmatpush1.bf16.msra.mxu0 %v1099
        %2071 = vmatprep.subr.bf16.mxu0 %v1102
        %2072 = vmatpush1.bf16.msra.mxu0 %v1101
        %2073 = vmatprep.subr.bf16.mxu0 %v1104
        %2074 = vmatpush1.bf16.msra.mxu0 %v1103
        %2075 = vmatprep.subr.bf16.mxu0 %v1106
        %2076 = vmatpush1.bf16.msra.mxu0 %v1105
        %2077 = vmatprep.subr.bf16.mxu0 %v1108
        %2078 = vmatpush1.bf16.msra.mxu0 %v1107
        %2079 = vmatprep.subr.bf16.mxu0 %v1110
        %2080 = vmatpush1.bf16.msra.mxu0 %v1109
        %2081 = vmatprep.subr.bf16.mxu0 0
        %2082 = vmatpush1.bf16.msra.mxu0 0
        %2083 = vmatprep.subr.bf16.mxu0 0
        %2084 = vmatpush1.bf16.msra.mxu0 0
        %2085 = vmatprep.subr.bf16.mxu0 0
        %2086 = vmatpush1.bf16.msra.mxu0 0
        %2087 = vmatprep.subr.bf16.mxu0 0
        %2088 = vmatpush1.bf16.msra.mxu0 0
        %2089 = vmatprep.subr.bf16.mxu0 0
        %2090 = vmatpush1.bf16.msra.mxu0 0
        %2091 = vmatprep.subr.bf16.mxu0 0
        %2092 = vmatpush1.bf16.msra.mxu0 0
        %2093 = vmatprep.subr.bf16.mxu0 0
        %2094 = vmatpush1.bf16.msra.mxu0 0
        %2095 = vmatprep.subr.bf16.mxu0 0
        %2096 = vmatpush1.bf16.msra.mxu0 0
        %2097 = vmatprep.mubr.bf16.mxu0 0
        %2098 = vmatmul.mubr.bf16.gmra.mrb[0].mxu0 %v2058
        %v2099 = vpop.f32.mrb[0].mxu0
        %v2100 = vadd.f32 0.0, %v2099
        %v2101 = vpop.f32.mrb[0].mxu0
        %v2102 = vadd.f32 0.0, %v2101
        %v2103 = vpop.f32.mrb[0].mxu0
        %v2104 = vadd.f32 0.0, %v2103
        %v2105 = vpop.f32.mrb[0].mxu0
        %v2106 = vadd.f32 0.0, %v2105
        %2107 = vdwg.mxu0
        %v2108 = vadd.f32 %v2024, %v2102
        %v2109 = vadd.f32 %v2025, %v2106
        %v2110 = vsub.f32 0.0, %v2020
        %v2111 = vsub.f32 0.0, %v2021
        %v2112 = vadd.f32 %v2110, %v2108
        %v2113 = vadd.f32 %v2111, %v2109
        %v2114 = vadd.f32 %v2020, %v2112
        %v2115 = vadd.f32 %v2021, %v2113
        %v2116 = vmul.f32 %v2108, -2.0
        %v2117 = vmul.f32 %v2109, -2.0
        %v2118 = vadd.f32 %v2108, %v2116
        %v2119 = vadd.f32 %v2109, %v2117
        %v2121 = vunpack.c.l.b16 %v2058
        %v2122 = vunpack.c.h.b16 %v2058
        %v2123 = vpack.c.b16 %v2121, %v2121
        %v2124 = vpack.c.b16 %v2122, %v2122
        %s2127 = scalar_lea.vmem %s294, 80 [#allocation14]
        %2128 = vst [vmem:[%s2127] sm:$0xf] %v2123
        %2129 = vst [vmem:[%s2127 + $0x4] sm:$0xf] %v2124
        %s2130 = scalar_lea.vmem %s301, 160 [#allocation15]
        %2131 = vst [vmem:[%s2130] sm:$0xff] %v2114
        %2132 = vst [vmem:[%s2130 + $0x8] sm:$0xff] %v2115
        %s2133 = scalar_lea.vmem [#allocation2], 176
        %v2134 = vld [vmem:[%s2133] sm:$0xff]
        %v2135 = vld [vmem:[%s2133 + $0x8] sm:$0xff]
        %v2136 = vsub.f32 0.0, %v2059
        %v2137 = vsub.f32 0.0, %v2060
        %v2138 = vadd.f32 %v2136, %v2063
        %v2139 = vadd.f32 %v2137, %v2064
        %v2140 = vadd.f32 %v2059, %v2138
        %v2141 = vadd.f32 %v2060, %v2139
        %v2142 = vmul.f32 %v2063, -2.0
        %v2143 = vmul.f32 %v2064, -2.0
        %v2144 = vadd.f32 %v2063, %v2142
        %v2145 = vadd.f32 %v2064, %v2143
        %vm2146 = vcmp.gt.f32.partialorder %v2140, 1.0
        %vm2147 = vcmp.gt.f32.partialorder %v2141, 1.0
        %v2148 = vsel %vm2146, 1, 0
        %v2149 = vsel %vm2147, 1, 0
        %v2150 = vcvt.s32.f32 %v2148
        %v2151 = vcvt.s32.f32 %v2149
        %v2152 = vpack.c.bf16 %v2151, %v2150
        %v2153 = vsel %vm2146, 0.0, %v2140
        %v2154 = vsel %vm2147, 0.0, %v2141
        %v2155 = vadd.f32 %v2144, %v2134
        %v2156 = vadd.f32 %v2145, %v2135
        %v2157 = vadd.f32 %v2155, %v2100
        %v2158 = vadd.f32 %v2156, %v2104
        %2159 = vmatprep.subr.bf16.mxu0 %v1096
        %2160 = vmatpush1.bf16.msra.mxu0 %v1095
        %2161 = vmatprep.subr.bf16.mxu0 %v1098
        %2162 = vmatpush1.bf16.msra.mxu0 %v1097
        %2163 = vmatprep.subr.bf16.mxu0 %v1100
        %2164 = vmatpush1.bf16.msra.mxu0 %v1099
        %2165 = vmatprep.subr.bf16.mxu0 %v1102
        %2166 = vmatpush1.bf16.msra.mxu0 %v1101
        %2167 = vmatprep.subr.bf16.mxu0 %v1104
        %2168 = vmatpush1.bf16.msra.mxu0 %v1103
        %2169 = vmatprep.subr.bf16.mxu0 %v1106
        %2170 = vmatpush1.bf16.msra.mxu0 %v1105
        %2171 = vmatprep.subr.bf16.mxu0 %v1108
        %2172 = vmatpush1.bf16.msra.mxu0 %v1107
        %2173 = vmatprep.subr.bf16.mxu0 %v1110
        %2174 = vmatpush1.bf16.msra.mxu0 %v1109
        %2175 = vmatprep.subr.bf16.mxu0 0
        %2176 = vmatpush1.bf16.msra.mxu0 0
        %2177 = vmatprep.subr.bf16.mxu0 0
        %2178 = vmatpush1.bf16.msra.mxu0 0
        %2179 = vmatprep.subr.bf16.mxu0 0
        %2180 = vmatpush1.bf16.msra.mxu0 0
        %2181 = vmatprep.subr.bf16.mxu0 0
        %2182 = vmatpush1.bf16.msra.mxu0 0
        %2183 = vmatprep.subr.bf16.mxu0 0
        %2184 = vmatpush1.bf16.msra.mxu0 0
        %2185 = vmatprep.subr.bf16.mxu0 0
        %2186 = vmatpush1.bf16.msra.mxu0 0
        %2187 = vmatprep.subr.bf16.mxu0 0
        %2188 = vmatpush1.bf16.msra.mxu0 0
        %2189 = vmatprep.subr.bf16.mxu0 0
        %2190 = vmatpush1.bf16.msra.mxu0 0
        %2191 = vmatprep.mubr.bf16.mxu0 0
        %2192 = vmatmul.mubr.bf16.gmra.mrb[0].mxu0 %v2152
        %v2193 = vpop.f32.mrb[0].mxu0
        %v2194 = vadd.f32 0.0, %v2193
        %v2195 = vpop.f32.mrb[0].mxu0
        %v2196 = vadd.f32 0.0, %v2195
        %v2197 = vpop.f32.mrb[0].mxu0
        %v2198 = vadd.f32 0.0, %v2197
        %v2199 = vpop.f32.mrb[0].mxu0
        %v2200 = vadd.f32 0.0, %v2199
        %2201 = vdwg.mxu0
        %v2202 = vadd.f32 %v2118, %v2196
        %v2203 = vadd.f32 %v2119, %v2200
        %v2204 = vsub.f32 0.0, %v2114
        %v2205 = vsub.f32 0.0, %v2115
        %v2206 = vadd.f32 %v2204, %v2202
        %v2207 = vadd.f32 %v2205, %v2203
        %v2208 = vadd.f32 %v2114, %v2206
        %v2209 = vadd.f32 %v2115, %v2207
        %v2210 = vmul.f32 %v2202, -2.0
        %v2211 = vmul.f32 %v2203, -2.0
        %v2212 = vadd.f32 %v2202, %v2210
        %v2213 = vadd.f32 %v2203, %v2211
        %v2215 = vunpack.c.l.b16 %v2152
        %v2216 = vunpack.c.h.b16 %v2152
        %v2217 = vpack.c.b16 %v2215, %v2215
        %v2218 = vpack.c.b16 %v2216, %v2216
        %s2221 = scalar_lea.vmem %s294, 88 [#allocation14]
        %2222 = vst [vmem:[%s2221] sm:$0xf] %v2217
        %2223 = vst [vmem:[%s2221 + $0x4] sm:$0xf] %v2218
        %s2224 = scalar_lea.vmem %s301, 176 [#allocation15]
        %2225 = vst [vmem:[%s2224] sm:$0xff] %v2208
        %2226 = vst [vmem:[%s2224 + $0x8] sm:$0xff] %v2209
        %s2227 = scalar_lea.vmem [#allocation2], 192
        %v2228 = vld [vmem:[%s2227] sm:$0xff]
        %v2229 = vld [vmem:[%s2227 + $0x8] sm:$0xff]
        %v2230 = vsub.f32 0.0, %v2153
        %v2231 = vsub.f32 0.0, %v2154
        %v2232 = vadd.f32 %v2230, %v2157
        %v2233 = vadd.f32 %v2231, %v2158
        %v2234 = vadd.f32 %v2153, %v2232
        %v2235 = vadd.f32 %v2154, %v2233
        %v2236 = vmul.f32 %v2157, -2.0
        %v2237 = vmul.f32 %v2158, -2.0
        %v2238 = vadd.f32 %v2157, %v2236
        %v2239 = vadd.f32 %v2158, %v2237
        %vm2240 = vcmp.gt.f32.partialorder %v2234, 1.0
        %vm2241 = vcmp.gt.f32.partialorder %v2235, 1.0
        %v2242 = vsel %vm2240, 1, 0
        %v2243 = vsel %vm2241, 1, 0
        %v2244 = vcvt.s32.f32 %v2242
        %v2245 = vcvt.s32.f32 %v2243
        %v2246 = vpack.c.bf16 %v2245, %v2244
        %v2247 = vsel %vm2240, 0.0, %v2234
        %v2248 = vsel %vm2241, 0.0, %v2235
        %v2249 = vadd.f32 %v2238, %v2228
        %v2250 = vadd.f32 %v2239, %v2229
        %v2251 = vadd.f32 %v2249, %v2194
        %v2252 = vadd.f32 %v2250, %v2198
        %2253 = vmatprep.subr.bf16.mxu0 %v1096
        %2254 = vmatpush1.bf16.msra.mxu0 %v1095
        %2255 = vmatprep.subr.bf16.mxu0 %v1098
        %2256 = vmatpush1.bf16.msra.mxu0 %v1097
        %2257 = vmatprep.subr.bf16.mxu0 %v1100
        %2258 = vmatpush1.bf16.msra.mxu0 %v1099
        %2259 = vmatprep.subr.bf16.mxu0 %v1102
        %2260 = vmatpush1.bf16.msra.mxu0 %v1101
        %2261 = vmatprep.subr.bf16.mxu0 %v1104
        %2262 = vmatpush1.bf16.msra.mxu0 %v1103
        %2263 = vmatprep.subr.bf16.mxu0 %v1106
        %2264 = vmatpush1.bf16.msra.mxu0 %v1105
        %2265 = vmatprep.subr.bf16.mxu0 %v1108
        %2266 = vmatpush1.bf16.msra.mxu0 %v1107
        %2267 = vmatprep.subr.bf16.mxu0 %v1110
        %2268 = vmatpush1.bf16.msra.mxu0 %v1109
        %2269 = vmatprep.subr.bf16.mxu0 0
        %2270 = vmatpush1.bf16.msra.mxu0 0
        %2271 = vmatprep.subr.bf16.mxu0 0
        %2272 = vmatpush1.bf16.msra.mxu0 0
        %2273 = vmatprep.subr.bf16.mxu0 0
        %2274 = vmatpush1.bf16.msra.mxu0 0
        %2275 = vmatprep.subr.bf16.mxu0 0
        %2276 = vmatpush1.bf16.msra.mxu0 0
        %2277 = vmatprep.subr.bf16.mxu0 0
        %2278 = vmatpush1.bf16.msra.mxu0 0
        %2279 = vmatprep.subr.bf16.mxu0 0
        %2280 = vmatpush1.bf16.msra.mxu0 0
        %2281 = vmatprep.subr.bf16.mxu0 0
        %2282 = vmatpush1.bf16.msra.mxu0 0
        %2283 = vmatprep.subr.bf16.mxu0 0
        %2284 = vmatpush1.bf16.msra.mxu0 0
        %2285 = vmatprep.mubr.bf16.mxu0 0
        %2286 = vmatmul.mubr.bf16.gmra.mrb[0].mxu0 %v2246
        %v2287 = vpop.f32.mrb[0].mxu0
        %v2288 = vadd.f32 0.0, %v2287
        %v2289 = vpop.f32.mrb[0].mxu0
        %v2290 = vadd.f32 0.0, %v2289
        %v2291 = vpop.f32.mrb[0].mxu0
        %v2292 = vadd.f32 0.0, %v2291
        %v2293 = vpop.f32.mrb[0].mxu0
        %v2294 = vadd.f32 0.0, %v2293
        %2295 = vdwg.mxu0
        %v2296 = vadd.f32 %v2212, %v2290
        %v2297 = vadd.f32 %v2213, %v2294
        %v2298 = vsub.f32 0.0, %v2208
        %v2299 = vsub.f32 0.0, %v2209
        %v2300 = vadd.f32 %v2298, %v2296
        %v2301 = vadd.f32 %v2299, %v2297
        %v2302 = vadd.f32 %v2208, %v2300
        %v2303 = vadd.f32 %v2209, %v2301
        %v2304 = vmul.f32 %v2296, -2.0
        %v2305 = vmul.f32 %v2297, -2.0
        %v2306 = vadd.f32 %v2296, %v2304
        %v2307 = vadd.f32 %v2297, %v2305
        %v2309 = vunpack.c.l.b16 %v2246
        %v2310 = vunpack.c.h.b16 %v2246
        %v2311 = vpack.c.b16 %v2309, %v2309
        %v2312 = vpack.c.b16 %v2310, %v2310
        %s2315 = scalar_lea.vmem %s294, 96 [#allocation14]
        %2316 = vst [vmem:[%s2315] sm:$0xf] %v2311
        %2317 = vst [vmem:[%s2315 + $0x4] sm:$0xf] %v2312
        %s2318 = scalar_lea.vmem %s301, 192 [#allocation15]
        %2319 = vst [vmem:[%s2318] sm:$0xff] %v2302
        %2320 = vst [vmem:[%s2318 + $0x8] sm:$0xff] %v2303
        %s2321 = scalar_lea.vmem [#allocation2], 208
        %v2322 = vld [vmem:[%s2321] sm:$0xff]
        %v2323 = vld [vmem:[%s2321 + $0x8] sm:$0xff]
        %v2324 = vsub.f32 0.0, %v2247
        %v2325 = vsub.f32 0.0, %v2248
        %v2326 = vadd.f32 %v2324, %v2251
        %v2327 = vadd.f32 %v2325, %v2252
        %v2328 = vadd.f32 %v2247, %v2326
        %v2329 = vadd.f32 %v2248, %v2327
        %v2330 = vmul.f32 %v2251, -2.0
        %v2331 = vmul.f32 %v2252, -2.0
        %v2332 = vadd.f32 %v2251, %v2330
        %v2333 = vadd.f32 %v2252, %v2331
        %vm2334 = vcmp.gt.f32.partialorder %v2328, 1.0
        %vm2335 = vcmp.gt.f32.partialorder %v2329, 1.0
        %v2336 = vsel %vm2334, 1, 0
        %v2337 = vsel %vm2335, 1, 0
        %v2338 = vcvt.s32.f32 %v2336
        %v2339 = vcvt.s32.f32 %v2337
        %v2340 = vpack.c.bf16 %v2339, %v2338
        %v2341 = vsel %vm2334, 0.0, %v2328
        %v2342 = vsel %vm2335, 0.0, %v2329
        %v2343 = vadd.f32 %v2332, %v2322
        %v2344 = vadd.f32 %v2333, %v2323
        %v2345 = vadd.f32 %v2343, %v2288
        %v2346 = vadd.f32 %v2344, %v2292
        %2347 = vmatprep.subr.bf16.mxu0 %v1096
        %2348 = vmatpush1.bf16.msra.mxu0 %v1095
        %2349 = vmatprep.subr.bf16.mxu0 %v1098
        %2350 = vmatpush1.bf16.msra.mxu0 %v1097
        %2351 = vmatprep.subr.bf16.mxu0 %v1100
        %2352 = vmatpush1.bf16.msra.mxu0 %v1099
        %2353 = vmatprep.subr.bf16.mxu0 %v1102
        %2354 = vmatpush1.bf16.msra.mxu0 %v1101
        %2355 = vmatprep.subr.bf16.mxu0 %v1104
        %2356 = vmatpush1.bf16.msra.mxu0 %v1103
        %2357 = vmatprep.subr.bf16.mxu0 %v1106
        %2358 = vmatpush1.bf16.msra.mxu0 %v1105
        %2359 = vmatprep.subr.bf16.mxu0 %v1108
        %2360 = vmatpush1.bf16.msra.mxu0 %v1107
        %2361 = vmatprep.subr.bf16.mxu0 %v1110
        %2362 = vmatpush1.bf16.msra.mxu0 %v1109
        %2363 = vmatprep.subr.bf16.mxu0 0
        %2364 = vmatpush1.bf16.msra.mxu0 0
        %2365 = vmatprep.subr.bf16.mxu0 0
        %2366 = vmatpush1.bf16.msra.mxu0 0
        %2367 = vmatprep.subr.bf16.mxu0 0
        %2368 = vmatpush1.bf16.msra.mxu0 0
        %2369 = vmatprep.subr.bf16.mxu0 0
        %2370 = vmatpush1.bf16.msra.mxu0 0
        %2371 = vmatprep.subr.bf16.mxu0 0
        %2372 = vmatpush1.bf16.msra.mxu0 0
        %2373 = vmatprep.subr.bf16.mxu0 0
        %2374 = vmatpush1.bf16.msra.mxu0 0
        %2375 = vmatprep.subr.bf16.mxu0 0
        %2376 = vmatpush1.bf16.msra.mxu0 0
        %2377 = vmatprep.subr.bf16.mxu0 0
        %2378 = vmatpush1.bf16.msra.mxu0 0
        %2379 = vmatprep.mubr.bf16.mxu0 0
        %2380 = vmatmul.mubr.bf16.gmra.mrb[0].mxu0 %v2340
        %v2381 = vpop.f32.mrb[0].mxu0
        %v2382 = vadd.f32 0.0, %v2381
        %v2383 = vpop.f32.mrb[0].mxu0
        %v2384 = vadd.f32 0.0, %v2383
        %v2385 = vpop.f32.mrb[0].mxu0
        %v2386 = vadd.f32 0.0, %v2385
        %v2387 = vpop.f32.mrb[0].mxu0
        %v2388 = vadd.f32 0.0, %v2387
        %2389 = vdwg.mxu0
        %v2390 = vadd.f32 %v2306, %v2384
        %v2391 = vadd.f32 %v2307, %v2388
        %v2392 = vsub.f32 0.0, %v2302
        %v2393 = vsub.f32 0.0, %v2303
        %v2394 = vadd.f32 %v2392, %v2390
        %v2395 = vadd.f32 %v2393, %v2391
        %v2396 = vadd.f32 %v2302, %v2394
        %v2397 = vadd.f32 %v2303, %v2395
        %v2398 = vmul.f32 %v2390, -2.0
        %v2399 = vmul.f32 %v2391, -2.0
        %v2400 = vadd.f32 %v2390, %v2398
        %v2401 = vadd.f32 %v2391, %v2399
        %v2403 = vunpack.c.l.b16 %v2340
        %v2404 = vunpack.c.h.b16 %v2340
        %v2405 = vpack.c.b16 %v2403, %v2403
        %v2406 = vpack.c.b16 %v2404, %v2404
        %s2409 = scalar_lea.vmem %s294, 104 [#allocation14]
        %2410 = vst [vmem:[%s2409] sm:$0xf] %v2405
        %2411 = vst [vmem:[%s2409 + $0x4] sm:$0xf] %v2406
        %s2412 = scalar_lea.vmem %s301, 208 [#allocation15]
        %2413 = vst [vmem:[%s2412] sm:$0xff] %v2396
        %2414 = vst [vmem:[%s2412 + $0x8] sm:$0xff] %v2397
        %s2415 = scalar_lea.vmem [#allocation2], 224
        %v2416 = vld [vmem:[%s2415] sm:$0xff]
        %v2417 = vld [vmem:[%s2415 + $0x8] sm:$0xff]
        %v2418 = vsub.f32 0.0, %v2341
        %v2419 = vsub.f32 0.0, %v2342
        %v2420 = vadd.f32 %v2418, %v2345
        %v2421 = vadd.f32 %v2419, %v2346
        %v2422 = vadd.f32 %v2341, %v2420
        %v2423 = vadd.f32 %v2342, %v2421
        %v2424 = vmul.f32 %v2345, -2.0
        %v2425 = vmul.f32 %v2346, -2.0
        %v2426 = vadd.f32 %v2345, %v2424
        %v2427 = vadd.f32 %v2346, %v2425
        %vm2428 = vcmp.gt.f32.partialorder %v2422, 1.0
        %vm2429 = vcmp.gt.f32.partialorder %v2423, 1.0
        %v2430 = vsel %vm2428, 1, 0
        %v2431 = vsel %vm2429, 1, 0
        %v2432 = vcvt.s32.f32 %v2430
        %v2433 = vcvt.s32.f32 %v2431
        %v2434 = vpack.c.bf16 %v2433, %v2432
        %v2435 = vsel %vm2428, 0.0, %v2422
        %v2436 = vsel %vm2429, 0.0, %v2423
        %v2437 = vadd.f32 %v2426, %v2416
        %v2438 = vadd.f32 %v2427, %v2417
        %v2439 = vadd.f32 %v2437, %v2382
        %v2440 = vadd.f32 %v2438, %v2386
        %2441 = vmatprep.subr.bf16.mxu0 %v1096
        %2442 = vmatpush1.bf16.msra.mxu0 %v1095
        %2443 = vmatprep.subr.bf16.mxu0 %v1098
        %2444 = vmatpush1.bf16.msra.mxu0 %v1097
        %2445 = vmatprep.subr.bf16.mxu0 %v1100
        %2446 = vmatpush1.bf16.msra.mxu0 %v1099
        %2447 = vmatprep.subr.bf16.mxu0 %v1102
        %2448 = vmatpush1.bf16.msra.mxu0 %v1101
        %2449 = vmatprep.subr.bf16.mxu0 %v1104
        %2450 = vmatpush1.bf16.msra.mxu0 %v1103
        %2451 = vmatprep.subr.bf16.mxu0 %v1106
        %2452 = vmatpush1.bf16.msra.mxu0 %v1105
        %2453 = vmatprep.subr.bf16.mxu0 %v1108
        %2454 = vmatpush1.bf16.msra.mxu0 %v1107
        %2455 = vmatprep.subr.bf16.mxu0 %v1110
        %2456 = vmatpush1.bf16.msra.mxu0 %v1109
        %2457 = vmatprep.subr.bf16.mxu0 0
        %2458 = vmatpush1.bf16.msra.mxu0 0
        %2459 = vmatprep.subr.bf16.mxu0 0
        %2460 = vmatpush1.bf16.msra.mxu0 0
        %2461 = vmatprep.subr.bf16.mxu0 0
        %2462 = vmatpush1.bf16.msra.mxu0 0
        %2463 = vmatprep.subr.bf16.mxu0 0
        %2464 = vmatpush1.bf16.msra.mxu0 0
        %2465 = vmatprep.subr.bf16.mxu0 0
        %2466 = vmatpush1.bf16.msra.mxu0 0
        %2467 = vmatprep.subr.bf16.mxu0 0
        %2468 = vmatpush1.bf16.msra.mxu0 0
        %2469 = vmatprep.subr.bf16.mxu0 0
        %2470 = vmatpush1.bf16.msra.mxu0 0
        %2471 = vmatprep.subr.bf16.mxu0 0
        %2472 = vmatpush1.bf16.msra.mxu0 0
        %2473 = vmatprep.mubr.bf16.mxu0 0
        %2474 = vmatmul.mubr.bf16.gmra.mrb[0].mxu0 %v2434
        %v2475 = vpop.f32.mrb[0].mxu0
        %v2476 = vadd.f32 0.0, %v2475
        %v2477 = vpop.f32.mrb[0].mxu0
        %v2478 = vadd.f32 0.0, %v2477
        %v2479 = vpop.f32.mrb[0].mxu0
        %v2480 = vadd.f32 0.0, %v2479
        %v2481 = vpop.f32.mrb[0].mxu0
        %v2482 = vadd.f32 0.0, %v2481
        %2483 = vdwg.mxu0
        %v2484 = vadd.f32 %v2400, %v2478
        %v2485 = vadd.f32 %v2401, %v2482
        %v2486 = vsub.f32 0.0, %v2396
        %v2487 = vsub.f32 0.0, %v2397
        %v2488 = vadd.f32 %v2486, %v2484
        %v2489 = vadd.f32 %v2487, %v2485
        %v2490 = vadd.f32 %v2396, %v2488
        %v2491 = vadd.f32 %v2397, %v2489
        %v2492 = vmul.f32 %v2484, -2.0
        %v2493 = vmul.f32 %v2485, -2.0
        %v2494 = vadd.f32 %v2484, %v2492
        %v2495 = vadd.f32 %v2485, %v2493
        %v2497 = vunpack.c.l.b16 %v2434
        %v2498 = vunpack.c.h.b16 %v2434
        %v2499 = vpack.c.b16 %v2497, %v2497
        %v2500 = vpack.c.b16 %v2498, %v2498
        %s2503 = scalar_lea.vmem %s294, 112 [#allocation14]
        %2504 = vst [vmem:[%s2503] sm:$0xf] %v2499
        %2505 = vst [vmem:[%s2503 + $0x4] sm:$0xf] %v2500
        %s2506 = scalar_lea.vmem %s301, 224 [#allocation15]
        %2507 = vst [vmem:[%s2506] sm:$0xff] %v2490
        %2508 = vst [vmem:[%s2506 + $0x8] sm:$0xff] %v2491
        %s2509 = scalar_lea.vmem [#allocation2], 240
        %v2510 = vld [vmem:[%s2509] sm:$0xff]
        %v2511 = vld [vmem:[%s2509 + $0x8] sm:$0xff]
        %v2512 = vsub.f32 0.0, %v2435
        %v2513 = vsub.f32 0.0, %v2436
        %v2514 = vadd.f32 %v2512, %v2439
        %v2515 = vadd.f32 %v2513, %v2440
        %v2516 = vadd.f32 %v2435, %v2514
        %v2517 = vadd.f32 %v2436, %v2515
        %v2518 = vmul.f32 %v2439, -2.0
        %v2519 = vmul.f32 %v2440, -2.0
        %v2520 = vadd.f32 %v2439, %v2518
        %v2521 = vadd.f32 %v2440, %v2519
        %vm2522 = vcmp.gt.f32.partialorder %v2516, 1.0
        %vm2523 = vcmp.gt.f32.partialorder %v2517, 1.0
        %v2524 = vsel %vm2522, 1, 0
        %v2525 = vsel %vm2523, 1, 0
        %v2526 = vcvt.s32.f32 %v2524
        %v2527 = vcvt.s32.f32 %v2525
        %v2528 = vpack.c.bf16 %v2527, %v2526
        %v2529 = vsel %vm2522, 0.0, %v2516
        %v2530 = vsel %vm2523, 0.0, %v2517
        %v2531 = vadd.f32 %v2520, %v2510
        %v2532 = vadd.f32 %v2521, %v2511
        %v2533 = vadd.f32 %v2531, %v2476
        %v2534 = vadd.f32 %v2532, %v2480
        %2535 = vmatprep.subr.bf16.mxu0 %v1096
        %2536 = vmatpush1.bf16.msra.mxu0 %v1095
        %2537 = vmatprep.subr.bf16.mxu0 %v1098
        %2538 = vmatpush1.bf16.msra.mxu0 %v1097
        %2539 = vmatprep.subr.bf16.mxu0 %v1100
        %2540 = vmatpush1.bf16.msra.mxu0 %v1099
        %2541 = vmatprep.subr.bf16.mxu0 %v1102
        %2542 = vmatpush1.bf16.msra.mxu0 %v1101
        %2543 = vmatprep.subr.bf16.mxu0 %v1104
        %2544 = vmatpush1.bf16.msra.mxu0 %v1103
        %2545 = vmatprep.subr.bf16.mxu0 %v1106
        %2546 = vmatpush1.bf16.msra.mxu0 %v1105
        %2547 = vmatprep.subr.bf16.mxu0 %v1108
        %2548 = vmatpush1.bf16.msra.mxu0 %v1107
        %2549 = vmatprep.subr.bf16.mxu0 %v1110
        %2550 = vmatpush1.bf16.msra.mxu0 %v1109
        %2551 = vmatprep.subr.bf16.mxu0 0
        %2552 = vmatpush1.bf16.msra.mxu0 0
        %2553 = vmatprep.subr.bf16.mxu0 0
        %2554 = vmatpush1.bf16.msra.mxu0 0
        %2555 = vmatprep.subr.bf16.mxu0 0
        %2556 = vmatpush1.bf16.msra.mxu0 0
        %2557 = vmatprep.subr.bf16.mxu0 0
        %2558 = vmatpush1.bf16.msra.mxu0 0
        %2559 = vmatprep.subr.bf16.mxu0 0
        %2560 = vmatpush1.bf16.msra.mxu0 0
        %2561 = vmatprep.subr.bf16.mxu0 0
        %2562 = vmatpush1.bf16.msra.mxu0 0
        %2563 = vmatprep.subr.bf16.mxu0 0
        %2564 = vmatpush1.bf16.msra.mxu0 0
        %2565 = vmatprep.subr.bf16.mxu0 0
        %2566 = vmatpush1.bf16.msra.mxu0 0
        %2567 = vmatprep.mubr.bf16.mxu0 0
        %2568 = vmatmul.mubr.bf16.gmra.mrb[0].mxu0 %v2528
        %v2569 = vpop.f32.mrb[0].mxu0
        %v2570 = vadd.f32 0.0, %v2569
        %v2571 = vpop.f32.mrb[0].mxu0
        %v2572 = vadd.f32 0.0, %v2571
        %v2573 = vpop.f32.mrb[0].mxu0
        %v2574 = vadd.f32 0.0, %v2573
        %v2575 = vpop.f32.mrb[0].mxu0
        %v2576 = vadd.f32 0.0, %v2575
        %2577 = vdwg.mxu0
        %v2578 = vadd.f32 %v2494, %v2572
        %v2579 = vadd.f32 %v2495, %v2576
        %v2580 = vsub.f32 0.0, %v2490
        %v2581 = vsub.f32 0.0, %v2491
        %v2582 = vadd.f32 %v2580, %v2578
        %v2583 = vadd.f32 %v2581, %v2579
        %v2584 = vadd.f32 %v2490, %v2582
        %v2585 = vadd.f32 %v2491, %v2583
        %v2586 = vmul.f32 %v2578, -2.0
        %v2587 = vmul.f32 %v2579, -2.0
        %v2588 = vadd.f32 %v2578, %v2586
        %v2589 = vadd.f32 %v2579, %v2587
        %v2591 = vunpack.c.l.b16 %v2528
        %v2592 = vunpack.c.h.b16 %v2528
        %v2593 = vpack.c.b16 %v2591, %v2591
        %v2594 = vpack.c.b16 %v2592, %v2592
        %s2597 = scalar_lea.vmem %s294, 120 [#allocation14]
        %2598 = vst [vmem:[%s2597] sm:$0xf] %v2593
        %2599 = vst [vmem:[%s2597 + $0x4] sm:$0xf] %v2594
        %s2600 = scalar_lea.vmem %s301, 240 [#allocation15]
        %2601 = vst [vmem:[%s2600] sm:$0xff] %v2584
        %2602 = vst [vmem:[%s2600 + $0x8] sm:$0xff] %v2585
        %s2603 = scalar_lea.vmem [#allocation2], 256
        %v2604 = vld [vmem:[%s2603] sm:$0xff]
        %v2605 = vld [vmem:[%s2603 + $0x8] sm:$0xff]
        %v2606 = vsub.f32 0.0, %v2529
        %v2607 = vsub.f32 0.0, %v2530
        %v2608 = vadd.f32 %v2606, %v2533
        %v2609 = vadd.f32 %v2607, %v2534
        %v2610 = vadd.f32 %v2529, %v2608
        %v2611 = vadd.f32 %v2530, %v2609
        %v2612 = vmul.f32 %v2533, -2.0
        %v2613 = vmul.f32 %v2534, -2.0
        %v2614 = vadd.f32 %v2533, %v2612
        %v2615 = vadd.f32 %v2534, %v2613
        %vm2616 = vcmp.gt.f32.partialorder %v2610, 1.0
        %vm2617 = vcmp.gt.f32.partialorder %v2611, 1.0
        %v2618 = vsel %vm2616, 1, 0
        %v2619 = vsel %vm2617, 1, 0
        %v2620 = vcvt.s32.f32 %v2618
        %v2621 = vcvt.s32.f32 %v2619
        %v2622 = vpack.c.bf16 %v2621, %v2620
        %v2623 = vsel %vm2616, 0.0, %v2610
        %v2624 = vsel %vm2617, 0.0, %v2611
        %v2625 = vadd.f32 %v2614, %v2604
        %v2626 = vadd.f32 %v2615, %v2605
        %v2627 = vadd.f32 %v2625, %v2570
        %v2628 = vadd.f32 %v2626, %v2574
        %2629 = vmatprep.subr.bf16.mxu0 %v1096
        %2630 = vmatpush1.bf16.msra.mxu0 %v1095
        %2631 = vmatprep.subr.bf16.mxu0 %v1098
        %2632 = vmatpush1.bf16.msra.mxu0 %v1097
        %2633 = vmatprep.subr.bf16.mxu0 %v1100
        %2634 = vmatpush1.bf16.msra.mxu0 %v1099
        %2635 = vmatprep.subr.bf16.mxu0 %v1102
        %2636 = vmatpush1.bf16.msra.mxu0 %v1101
        %2637 = vmatprep.subr.bf16.mxu0 %v1104
        %2638 = vmatpush1.bf16.msra.mxu0 %v1103
        %2639 = vmatprep.subr.bf16.mxu0 %v1106
        %2640 = vmatpush1.bf16.msra.mxu0 %v1105
        %2641 = vmatprep.subr.bf16.mxu0 %v1108
        %2642 = vmatpush1.bf16.msra.mxu0 %v1107
        %2643 = vmatprep.subr.bf16.mxu0 %v1110
        %2644 = vmatpush1.bf16.msra.mxu0 %v1109
        %2645 = vmatprep.subr.bf16.mxu0 0
        %2646 = vmatpush1.bf16.msra.mxu0 0
        %2647 = vmatprep.subr.bf16.mxu0 0
        %2648 = vmatpush1.bf16.msra.mxu0 0
        %2649 = vmatprep.subr.bf16.mxu0 0
        %2650 = vmatpush1.bf16.msra.mxu0 0
        %2651 = vmatprep.subr.bf16.mxu0 0
        %2652 = vmatpush1.bf16.msra.mxu0 0
        %2653 = vmatprep.subr.bf16.mxu0 0
        %2654 = vmatpush1.bf16.msra.mxu0 0
        %2655 = vmatprep.subr.bf16.mxu0 0
        %2656 = vmatpush1.bf16.msra.mxu0 0
        %2657 = vmatprep.subr.bf16.mxu0 0
        %2658 = vmatpush1.bf16.msra.mxu0 0
        %2659 = vmatprep.subr.bf16.mxu0 0
        %2660 = vmatpush1.bf16.msra.mxu0 0
        %2661 = vmatprep.mubr.bf16.mxu0 0
        %2662 = vmatmul.mubr.bf16.gmra.mrb[0].mxu0 %v2622
        %v2663 = vpop.f32.mrb[0].mxu0
        %v2664 = vadd.f32 0.0, %v2663
        %v2665 = vpop.f32.mrb[0].mxu0
        %v2666 = vadd.f32 0.0, %v2665
        %v2667 = vpop.f32.mrb[0].mxu0
        %v2668 = vadd.f32 0.0, %v2667
        %v2669 = vpop.f32.mrb[0].mxu0
        %v2670 = vadd.f32 0.0, %v2669
        %2671 = vdwg.mxu0
        %v2672 = vadd.f32 %v2588, %v2666
        %v2673 = vadd.f32 %v2589, %v2670
        %v2674 = vsub.f32 0.0, %v2584
        %v2675 = vsub.f32 0.0, %v2585
        %v2676 = vadd.f32 %v2674, %v2672
        %v2677 = vadd.f32 %v2675, %v2673
        %v2678 = vadd.f32 %v2584, %v2676
        %v2679 = vadd.f32 %v2585, %v2677
        %v2680 = vmul.f32 %v2672, -2.0
        %v2681 = vmul.f32 %v2673, -2.0
        %v2682 = vadd.f32 %v2672, %v2680
        %v2683 = vadd.f32 %v2673, %v2681
        %v2685 = vunpack.c.l.b16 %v2622
        %v2686 = vunpack.c.h.b16 %v2622
        %v2687 = vpack.c.b16 %v2685, %v2685
        %v2688 = vpack.c.b16 %v2686, %v2686
        %s2691 = scalar_lea.vmem %s294, 128 [#allocation14]
        %2692 = vst [vmem:[%s2691] sm:$0xf] %v2687
        %2693 = vst [vmem:[%s2691 + $0x4] sm:$0xf] %v2688
        %s2694 = scalar_lea.vmem %s301, 256 [#allocation15]
        %2695 = vst [vmem:[%s2694] sm:$0xff] %v2678
        %2696 = vst [vmem:[%s2694 + $0x8] sm:$0xff] %v2679
        %s2697 = scalar_lea.vmem [#allocation2], 272
        %v2698 = vld [vmem:[%s2697] sm:$0xff]
        %v2699 = vld [vmem:[%s2697 + $0x8] sm:$0xff]
        %v2700 = vsub.f32 0.0, %v2623
        %v2701 = vsub.f32 0.0, %v2624
        %v2702 = vadd.f32 %v2700, %v2627
        %v2703 = vadd.f32 %v2701, %v2628
        %v2704 = vadd.f32 %v2623, %v2702
        %v2705 = vadd.f32 %v2624, %v2703
        %v2706 = vmul.f32 %v2627, -2.0
        %v2707 = vmul.f32 %v2628, -2.0
        %v2708 = vadd.f32 %v2627, %v2706
        %v2709 = vadd.f32 %v2628, %v2707
        %vm2710 = vcmp.gt.f32.partialorder %v2704, 1.0
        %vm2711 = vcmp.gt.f32.partialorder %v2705, 1.0
        %v2712 = vsel %vm2710, 1, 0
        %v2713 = vsel %vm2711, 1, 0
        %v2714 = vcvt.s32.f32 %v2712
        %v2715 = vcvt.s32.f32 %v2713
        %v2716 = vpack.c.bf16 %v2715, %v2714
        %v2717 = vsel %vm2710, 0.0, %v2704
        %v2718 = vsel %vm2711, 0.0, %v2705
        %v2719 = vadd.f32 %v2708, %v2698
        %v2720 = vadd.f32 %v2709, %v2699
        %v2721 = vadd.f32 %v2719, %v2664
        %v2722 = vadd.f32 %v2720, %v2668
        %2723 = vmatprep.subr.bf16.mxu0 %v1096
        %2724 = vmatpush1.bf16.msra.mxu0 %v1095
        %2725 = vmatprep.subr.bf16.mxu0 %v1098
        %2726 = vmatpush1.bf16.msra.mxu0 %v1097
        %2727 = vmatprep.subr.bf16.mxu0 %v1100
        %2728 = vmatpush1.bf16.msra.mxu0 %v1099
        %2729 = vmatprep.subr.bf16.mxu0 %v1102
        %2730 = vmatpush1.bf16.msra.mxu0 %v1101
        %2731 = vmatprep.subr.bf16.mxu0 %v1104
        %2732 = vmatpush1.bf16.msra.mxu0 %v1103
        %2733 = vmatprep.subr.bf16.mxu0 %v1106
        %2734 = vmatpush1.bf16.msra.mxu0 %v1105
        %2735 = vmatprep.subr.bf16.mxu0 %v1108
        %2736 = vmatpush1.bf16.msra.mxu0 %v1107
        %2737 = vmatprep.subr.bf16.mxu0 %v1110
        %2738 = vmatpush1.bf16.msra.mxu0 %v1109
        %2739 = vmatprep.subr.bf16.mxu0 0
        %2740 = vmatpush1.bf16.msra.mxu0 0
        %2741 = vmatprep.subr.bf16.mxu0 0
        %2742 = vmatpush1.bf16.msra.mxu0 0
        %2743 = vmatprep.subr.bf16.mxu0 0
        %2744 = vmatpush1.bf16.msra.mxu0 0
        %2745 = vmatprep.subr.bf16.mxu0 0
        %2746 = vmatpush1.bf16.msra.mxu0 0
        %2747 = vmatprep.subr.bf16.mxu0 0
        %2748 = vmatpush1.bf16.msra.mxu0 0
        %2749 = vmatprep.subr.bf16.mxu0 0
        %2750 = vmatpush1.bf16.msra.mxu0 0
        %2751 = vmatprep.subr.bf16.mxu0 0
        %2752 = vmatpush1.bf16.msra.mxu0 0
        %2753 = vmatprep.subr.bf16.mxu0 0
        %2754 = vmatpush1.bf16.msra.mxu0 0
        %2755 = vmatprep.mubr.bf16.mxu0 0
        %2756 = vmatmul.mubr.bf16.gmra.mrb[0].mxu0 %v2716
        %v2757 = vpop.f32.mrb[0].mxu0
        %v2758 = vadd.f32 0.0, %v2757
        %v2759 = vpop.f32.mrb[0].mxu0
        %v2760 = vadd.f32 0.0, %v2759
        %v2761 = vpop.f32.mrb[0].mxu0
        %v2762 = vadd.f32 0.0, %v2761
        %v2763 = vpop.f32.mrb[0].mxu0
        %v2764 = vadd.f32 0.0, %v2763
        %2765 = vdwg.mxu0
        %v2766 = vadd.f32 %v2682, %v2760
        %v2767 = vadd.f32 %v2683, %v2764
        %v2768 = vsub.f32 0.0, %v2678
        %v2769 = vsub.f32 0.0, %v2679
        %v2770 = vadd.f32 %v2768, %v2766
        %v2771 = vadd.f32 %v2769, %v2767
        %v2772 = vadd.f32 %v2678, %v2770
        %v2773 = vadd.f32 %v2679, %v2771
        %v2774 = vmul.f32 %v2766, -2.0
        %v2775 = vmul.f32 %v2767, -2.0
        %v2776 = vadd.f32 %v2766, %v2774
        %v2777 = vadd.f32 %v2767, %v2775
        %v2779 = vunpack.c.l.b16 %v2716
        %v2780 = vunpack.c.h.b16 %v2716
        %v2781 = vpack.c.b16 %v2779, %v2779
        %v2782 = vpack.c.b16 %v2780, %v2780
        %s2785 = scalar_lea.vmem %s294, 136 [#allocation14]
        %2786 = vst [vmem:[%s2785] sm:$0xf] %v2781
        %2787 = vst [vmem:[%s2785 + $0x4] sm:$0xf] %v2782
        %s2788 = scalar_lea.vmem %s301, 272 [#allocation15]
        %2789 = vst [vmem:[%s2788] sm:$0xff] %v2772
        %2790 = vst [vmem:[%s2788 + $0x8] sm:$0xff] %v2773
        %s2791 = scalar_lea.vmem [#allocation2], 288
        %v2792 = vld [vmem:[%s2791] sm:$0xff]
        %v2793 = vld [vmem:[%s2791 + $0x8] sm:$0xff]
        %v2794 = vsub.f32 0.0, %v2717
        %v2795 = vsub.f32 0.0, %v2718
        %v2796 = vadd.f32 %v2794, %v2721
        %v2797 = vadd.f32 %v2795, %v2722
        %v2798 = vadd.f32 %v2717, %v2796
        %v2799 = vadd.f32 %v2718, %v2797
        %v2800 = vmul.f32 %v2721, -2.0
        %v2801 = vmul.f32 %v2722, -2.0
        %v2802 = vadd.f32 %v2721, %v2800
        %v2803 = vadd.f32 %v2722, %v2801
        %vm2804 = vcmp.gt.f32.partialorder %v2798, 1.0
        %vm2805 = vcmp.gt.f32.partialorder %v2799, 1.0
        %v2806 = vsel %vm2804, 1, 0
        %v2807 = vsel %vm2805, 1, 0
        %v2808 = vcvt.s32.f32 %v2806
        %v2809 = vcvt.s32.f32 %v2807
        %v2810 = vpack.c.bf16 %v2809, %v2808
        %v2811 = vsel %vm2804, 0.0, %v2798
        %v2812 = vsel %vm2805, 0.0, %v2799
        %v2813 = vadd.f32 %v2802, %v2792
        %v2814 = vadd.f32 %v2803, %v2793
        %v2815 = vadd.f32 %v2813, %v2758
        %v2816 = vadd.f32 %v2814, %v2762
        %2817 = vmatprep.subr.bf16.mxu0 %v1096
        %2818 = vmatpush1.bf16.msra.mxu0 %v1095
        %2819 = vmatprep.subr.bf16.mxu0 %v1098
        %2820 = vmatpush1.bf16.msra.mxu0 %v1097
        %2821 = vmatprep.subr.bf16.mxu0 %v1100
        %2822 = vmatpush1.bf16.msra.mxu0 %v1099
        %2823 = vmatprep.subr.bf16.mxu0 %v1102
        %2824 = vmatpush1.bf16.msra.mxu0 %v1101
        %2825 = vmatprep.subr.bf16.mxu0 %v1104
        %2826 = vmatpush1.bf16.msra.mxu0 %v1103
        %2827 = vmatprep.subr.bf16.mxu0 %v1106
        %2828 = vmatpush1.bf16.msra.mxu0 %v1105
        %2829 = vmatprep.subr.bf16.mxu0 %v1108
        %2830 = vmatpush1.bf16.msra.mxu0 %v1107
        %2831 = vmatprep.subr.bf16.mxu0 %v1110
        %2832 = vmatpush1.bf16.msra.mxu0 %v1109
        %2833 = vmatprep.subr.bf16.mxu0 0
        %2834 = vmatpush1.bf16.msra.mxu0 0
        %2835 = vmatprep.subr.bf16.mxu0 0
        %2836 = vmatpush1.bf16.msra.mxu0 0
        %2837 = vmatprep.subr.bf16.mxu0 0
        %2838 = vmatpush1.bf16.msra.mxu0 0
        %2839 = vmatprep.subr.bf16.mxu0 0
        %2840 = vmatpush1.bf16.msra.mxu0 0
        %2841 = vmatprep.subr.bf16.mxu0 0
        %2842 = vmatpush1.bf16.msra.mxu0 0
        %2843 = vmatprep.subr.bf16.mxu0 0
        %2844 = vmatpush1.bf16.msra.mxu0 0
        %2845 = vmatprep.subr.bf16.mxu0 0
        %2846 = vmatpush1.bf16.msra.mxu0 0
        %2847 = vmatprep.subr.bf16.mxu0 0
        %2848 = vmatpush1.bf16.msra.mxu0 0
        %2849 = vmatprep.mubr.bf16.mxu0 0
        %2850 = vmatmul.mubr.bf16.gmra.mrb[0].mxu0 %v2810
        %v2851 = vpop.f32.mrb[0].mxu0
        %v2852 = vadd.f32 0.0, %v2851
        %v2853 = vpop.f32.mrb[0].mxu0
        %v2854 = vadd.f32 0.0, %v2853
        %v2855 = vpop.f32.mrb[0].mxu0
        %v2856 = vadd.f32 0.0, %v2855
        %v2857 = vpop.f32.mrb[0].mxu0
        %v2858 = vadd.f32 0.0, %v2857
        %2859 = vdwg.mxu0
        %v2860 = vadd.f32 %v2776, %v2854
        %v2861 = vadd.f32 %v2777, %v2858
        %v2862 = vsub.f32 0.0, %v2772
        %v2863 = vsub.f32 0.0, %v2773
        %v2864 = vadd.f32 %v2862, %v2860
        %v2865 = vadd.f32 %v2863, %v2861
        %v2866 = vadd.f32 %v2772, %v2864
        %v2867 = vadd.f32 %v2773, %v2865
        %v2868 = vmul.f32 %v2860, -2.0
        %v2869 = vmul.f32 %v2861, -2.0
        %v2870 = vadd.f32 %v2860, %v2868
        %v2871 = vadd.f32 %v2861, %v2869
        %v2873 = vunpack.c.l.b16 %v2810
        %v2874 = vunpack.c.h.b16 %v2810
        %v2875 = vpack.c.b16 %v2873, %v2873
        %v2876 = vpack.c.b16 %v2874, %v2874
        %s2879 = scalar_lea.vmem %s294, 144 [#allocation14]
        %2880 = vst [vmem:[%s2879] sm:$0xf] %v2875
        %2881 = vst [vmem:[%s2879 + $0x4] sm:$0xf] %v2876
        %s2882 = scalar_lea.vmem %s301, 288 [#allocation15]
        %2883 = vst [vmem:[%s2882] sm:$0xff] %v2866
        %2884 = vst [vmem:[%s2882 + $0x8] sm:$0xff] %v2867
        %s2885 = scalar_lea.vmem [#allocation2], 304
        %v2886 = vld [vmem:[%s2885] sm:$0xff]
        %v2887 = vld [vmem:[%s2885 + $0x8] sm:$0xff]
        %v2888 = vsub.f32 0.0, %v2811
        %v2889 = vsub.f32 0.0, %v2812
        %v2890 = vadd.f32 %v2888, %v2815
        %v2891 = vadd.f32 %v2889, %v2816
        %v2892 = vadd.f32 %v2811, %v2890
        %v2893 = vadd.f32 %v2812, %v2891
        %v2894 = vmul.f32 %v2815, -2.0
        %v2895 = vmul.f32 %v2816, -2.0
        %v2896 = vadd.f32 %v2815, %v2894
        %v2897 = vadd.f32 %v2816, %v2895
        %vm2898 = vcmp.gt.f32.partialorder %v2892, 1.0
        %vm2899 = vcmp.gt.f32.partialorder %v2893, 1.0
        %v2900 = vsel %vm2898, 1, 0
        %v2901 = vsel %vm2899, 1, 0
        %v2902 = vcvt.s32.f32 %v2900
        %v2903 = vcvt.s32.f32 %v2901
        %v2904 = vpack.c.bf16 %v2903, %v2902
        %v2905 = vsel %vm2898, 0.0, %v2892
        %v2906 = vsel %vm2899, 0.0, %v2893
        %v2907 = vadd.f32 %v2896, %v2886
        %v2908 = vadd.f32 %v2897, %v2887
        %v2909 = vadd.f32 %v2907, %v2852
        %v2910 = vadd.f32 %v2908, %v2856
        %2911 = vmatprep.subr.bf16.mxu0 %v1096
        %2912 = vmatpush1.bf16.msra.mxu0 %v1095
        %2913 = vmatprep.subr.bf16.mxu0 %v1098
        %2914 = vmatpush1.bf16.msra.mxu0 %v1097
        %2915 = vmatprep.subr.bf16.mxu0 %v1100
        %2916 = vmatpush1.bf16.msra.mxu0 %v1099
        %2917 = vmatprep.subr.bf16.mxu0 %v1102
        %2918 = vmatpush1.bf16.msra.mxu0 %v1101
        %2919 = vmatprep.subr.bf16.mxu0 %v1104
        %2920 = vmatpush1.bf16.msra.mxu0 %v1103
        %2921 = vmatprep.subr.bf16.mxu0 %v1106
        %2922 = vmatpush1.bf16.msra.mxu0 %v1105
        %2923 = vmatprep.subr.bf16.mxu0 %v1108
        %2924 = vmatpush1.bf16.msra.mxu0 %v1107
        %2925 = vmatprep.subr.bf16.mxu0 %v1110
        %2926 = vmatpush1.bf16.msra.mxu0 %v1109
        %2927 = vmatprep.subr.bf16.mxu0 0
        %2928 = vmatpush1.bf16.msra.mxu0 0
        %2929 = vmatprep.subr.bf16.mxu0 0
        %2930 = vmatpush1.bf16.msra.mxu0 0
        %2931 = vmatprep.subr.bf16.mxu0 0
        %2932 = vmatpush1.bf16.msra.mxu0 0
        %2933 = vmatprep.subr.bf16.mxu0 0
        %2934 = vmatpush1.bf16.msra.mxu0 0
        %2935 = vmatprep.subr.bf16.mxu0 0
        %2936 = vmatpush1.bf16.msra.mxu0 0
        %2937 = vmatprep.subr.bf16.mxu0 0
        %2938 = vmatpush1.bf16.msra.mxu0 0
        %2939 = vmatprep.subr.bf16.mxu0 0
        %2940 = vmatpush1.bf16.msra.mxu0 0
        %2941 = vmatprep.subr.bf16.mxu0 0
        %2942 = vmatpush1.bf16.msra.mxu0 0
        %2943 = vmatprep.mubr.bf16.mxu0 0
        %2944 = vmatmul.mubr.bf16.gmra.mrb[0].mxu0 %v2904
        %v2945 = vpop.f32.mrb[0].mxu0
        %v2946 = vadd.f32 0.0, %v2945
        %v2947 = vpop.f32.mrb[0].mxu0
        %v2948 = vadd.f32 0.0, %v2947
        %v2949 = vpop.f32.mrb[0].mxu0
        %v2950 = vadd.f32 0.0, %v2949
        %v2951 = vpop.f32.mrb[0].mxu0
        %v2952 = vadd.f32 0.0, %v2951
        %2953 = vdwg.mxu0
        %v2954 = vadd.f32 %v2870, %v2948
        %v2955 = vadd.f32 %v2871, %v2952
        %v2956 = vsub.f32 0.0, %v2866
        %v2957 = vsub.f32 0.0, %v2867
        %v2958 = vadd.f32 %v2956, %v2954
        %v2959 = vadd.f32 %v2957, %v2955
        %v2960 = vadd.f32 %v2866, %v2958
        %v2961 = vadd.f32 %v2867, %v2959
        %v2962 = vmul.f32 %v2954, -2.0
        %v2963 = vmul.f32 %v2955, -2.0
        %v2964 = vadd.f32 %v2954, %v2962
        %v2965 = vadd.f32 %v2955, %v2963
        %v2967 = vunpack.c.l.b16 %v2904
        %v2968 = vunpack.c.h.b16 %v2904
        %v2969 = vpack.c.b16 %v2967, %v2967
        %v2970 = vpack.c.b16 %v2968, %v2968
        %s2973 = scalar_lea.vmem %s294, 152 [#allocation14]
        %2974 = vst [vmem:[%s2973] sm:$0xf] %v2969
        %2975 = vst [vmem:[%s2973 + $0x4] sm:$0xf] %v2970
        %s2976 = scalar_lea.vmem %s301, 304 [#allocation15]
        %2977 = vst [vmem:[%s2976] sm:$0xff] %v2960
        %2978 = vst [vmem:[%s2976 + $0x8] sm:$0xff] %v2961
        %s2979 = scalar_lea.vmem [#allocation2], 320
        %v2980 = vld [vmem:[%s2979] sm:$0xff]
        %v2981 = vld [vmem:[%s2979 + $0x8] sm:$0xff]
        %v2982 = vsub.f32 0.0, %v2905
        %v2983 = vsub.f32 0.0, %v2906
        %v2984 = vadd.f32 %v2982, %v2909
        %v2985 = vadd.f32 %v2983, %v2910
        %v2986 = vadd.f32 %v2905, %v2984
        %v2987 = vadd.f32 %v2906, %v2985
        %v2988 = vmul.f32 %v2909, -2.0
        %v2989 = vmul.f32 %v2910, -2.0
        %v2990 = vadd.f32 %v2909, %v2988
        %v2991 = vadd.f32 %v2910, %v2989
        %vm2992 = vcmp.gt.f32.partialorder %v2986, 1.0
        %vm2993 = vcmp.gt.f32.partialorder %v2987, 1.0
        %v2994 = vsel %vm2992, 1, 0
        %v2995 = vsel %vm2993, 1, 0
        %v2996 = vcvt.s32.f32 %v2994
        %v2997 = vcvt.s32.f32 %v2995
        %v2998 = vpack.c.bf16 %v2997, %v2996
        %v2999 = vsel %vm2992, 0.0, %v2986
        %v3000 = vsel %vm2993, 0.0, %v2987
        %v3001 = vadd.f32 %v2990, %v2980
        %v3002 = vadd.f32 %v2991, %v2981
        %v3003 = vadd.f32 %v3001, %v2946
        %v3004 = vadd.f32 %v3002, %v2950
        %3005 = vmatprep.subr.bf16.mxu0 %v1096
        %3006 = vmatpush1.bf16.msra.mxu0 %v1095
        %3007 = vmatprep.subr.bf16.mxu0 %v1098
        %3008 = vmatpush1.bf16.msra.mxu0 %v1097
        %3009 = vmatprep.subr.bf16.mxu0 %v1100
        %3010 = vmatpush1.bf16.msra.mxu0 %v1099
        %3011 = vmatprep.subr.bf16.mxu0 %v1102
        %3012 = vmatpush1.bf16.msra.mxu0 %v1101
        %3013 = vmatprep.subr.bf16.mxu0 %v1104
        %3014 = vmatpush1.bf16.msra.mxu0 %v1103
        %3015 = vmatprep.subr.bf16.mxu0 %v1106
        %3016 = vmatpush1.bf16.msra.mxu0 %v1105
        %3017 = vmatprep.subr.bf16.mxu0 %v1108
        %3018 = vmatpush1.bf16.msra.mxu0 %v1107
        %3019 = vmatprep.subr.bf16.mxu0 %v1110
        %3020 = vmatpush1.bf16.msra.mxu0 %v1109
        %3021 = vmatprep.subr.bf16.mxu0 0
        %3022 = vmatpush1.bf16.msra.mxu0 0
        %3023 = vmatprep.subr.bf16.mxu0 0
        %3024 = vmatpush1.bf16.msra.mxu0 0
        %3025 = vmatprep.subr.bf16.mxu0 0
        %3026 = vmatpush1.bf16.msra.mxu0 0
        %3027 = vmatprep.subr.bf16.mxu0 0
        %3028 = vmatpush1.bf16.msra.mxu0 0
        %3029 = vmatprep.subr.bf16.mxu0 0
        %3030 = vmatpush1.bf16.msra.mxu0 0
        %3031 = vmatprep.subr.bf16.mxu0 0
        %3032 = vmatpush1.bf16.msra.mxu0 0
        %3033 = vmatprep.subr.bf16.mxu0 0
        %3034 = vmatpush1.bf16.msra.mxu0 0
        %3035 = vmatprep.subr.bf16.mxu0 0
        %3036 = vmatpush1.bf16.msra.mxu0 0
        %3037 = vmatprep.mubr.bf16.mxu0 0
        %3038 = vmatmul.mubr.bf16.gmra.mrb[0].mxu0 %v2998
        %v3039 = vpop.f32.mrb[0].mxu0
        %v3040 = vadd.f32 0.0, %v3039
        %v3041 = vpop.f32.mrb[0].mxu0
        %v3042 = vadd.f32 0.0, %v3041
        %v3043 = vpop.f32.mrb[0].mxu0
        %v3044 = vadd.f32 0.0, %v3043
        %v3045 = vpop.f32.mrb[0].mxu0
        %v3046 = vadd.f32 0.0, %v3045
        %3047 = vdwg.mxu0
        %v3048 = vadd.f32 %v2964, %v3042
        %v3049 = vadd.f32 %v2965, %v3046
        %v3050 = vsub.f32 0.0, %v2960
        %v3051 = vsub.f32 0.0, %v2961
        %v3052 = vadd.f32 %v3050, %v3048
        %v3053 = vadd.f32 %v3051, %v3049
        %v3054 = vadd.f32 %v2960, %v3052
        %v3055 = vadd.f32 %v2961, %v3053
        %v3056 = vmul.f32 %v3048, -2.0
        %v3057 = vmul.f32 %v3049, -2.0
        %v3058 = vadd.f32 %v3048, %v3056
        %v3059 = vadd.f32 %v3049, %v3057
        %v3061 = vunpack.c.l.b16 %v2998
        %v3062 = vunpack.c.h.b16 %v2998
        %v3063 = vpack.c.b16 %v3061, %v3061
        %v3064 = vpack.c.b16 %v3062, %v3062
        %s3067 = scalar_lea.vmem %s294, 160 [#allocation14]
        %3068 = vst [vmem:[%s3067] sm:$0xf] %v3063
        %3069 = vst [vmem:[%s3067 + $0x4] sm:$0xf] %v3064
        %s3070 = scalar_lea.vmem %s301, 320 [#allocation15]
        %3071 = vst [vmem:[%s3070] sm:$0xff] %v3054
        %3072 = vst [vmem:[%s3070 + $0x8] sm:$0xff] %v3055
        %s3073 = scalar_lea.vmem [#allocation2], 336
        %v3074 = vld [vmem:[%s3073] sm:$0xff]
        %v3075 = vld [vmem:[%s3073 + $0x8] sm:$0xff]
        %v3076 = vsub.f32 0.0, %v2999
        %v3077 = vsub.f32 0.0, %v3000
        %v3078 = vadd.f32 %v3076, %v3003
        %v3079 = vadd.f32 %v3077, %v3004
        %v3080 = vadd.f32 %v2999, %v3078
        %v3081 = vadd.f32 %v3000, %v3079
        %v3082 = vmul.f32 %v3003, -2.0
        %v3083 = vmul.f32 %v3004, -2.0
        %v3084 = vadd.f32 %v3003, %v3082
        %v3085 = vadd.f32 %v3004, %v3083
        %vm3086 = vcmp.gt.f32.partialorder %v3080, 1.0
        %vm3087 = vcmp.gt.f32.partialorder %v3081, 1.0
        %v3088 = vsel %vm3086, 1, 0
        %v3089 = vsel %vm3087, 1, 0
        %v3090 = vcvt.s32.f32 %v3088
        %v3091 = vcvt.s32.f32 %v3089
        %v3092 = vpack.c.bf16 %v3091, %v3090
        %v3093 = vsel %vm3086, 0.0, %v3080
        %v3094 = vsel %vm3087, 0.0, %v3081
        %v3095 = vadd.f32 %v3084, %v3074
        %v3096 = vadd.f32 %v3085, %v3075
        %v3097 = vadd.f32 %v3095, %v3040
        %v3098 = vadd.f32 %v3096, %v3044
        %3099 = vmatprep.subr.bf16.mxu0 %v1096
        %3100 = vmatpush1.bf16.msra.mxu0 %v1095
        %3101 = vmatprep.subr.bf16.mxu0 %v1098
        %3102 = vmatpush1.bf16.msra.mxu0 %v1097
        %3103 = vmatprep.subr.bf16.mxu0 %v1100
        %3104 = vmatpush1.bf16.msra.mxu0 %v1099
        %3105 = vmatprep.subr.bf16.mxu0 %v1102
        %3106 = vmatpush1.bf16.msra.mxu0 %v1101
        %3107 = vmatprep.subr.bf16.mxu0 %v1104
        %3108 = vmatpush1.bf16.msra.mxu0 %v1103
        %3109 = vmatprep.subr.bf16.mxu0 %v1106
        %3110 = vmatpush1.bf16.msra.mxu0 %v1105
        %3111 = vmatprep.subr.bf16.mxu0 %v1108
        %3112 = vmatpush1.bf16.msra.mxu0 %v1107
        %3113 = vmatprep.subr.bf16.mxu0 %v1110
        %3114 = vmatpush1.bf16.msra.mxu0 %v1109
        %3115 = vmatprep.subr.bf16.mxu0 0
        %3116 = vmatpush1.bf16.msra.mxu0 0
        %3117 = vmatprep.subr.bf16.mxu0 0
        %3118 = vmatpush1.bf16.msra.mxu0 0
        %3119 = vmatprep.subr.bf16.mxu0 0
        %3120 = vmatpush1.bf16.msra.mxu0 0
        %3121 = vmatprep.subr.bf16.mxu0 0
        %3122 = vmatpush1.bf16.msra.mxu0 0
        %3123 = vmatprep.subr.bf16.mxu0 0
        %3124 = vmatpush1.bf16.msra.mxu0 0
        %3125 = vmatprep.subr.bf16.mxu0 0
        %3126 = vmatpush1.bf16.msra.mxu0 0
        %3127 = vmatprep.subr.bf16.mxu0 0
        %3128 = vmatpush1.bf16.msra.mxu0 0
        %3129 = vmatprep.subr.bf16.mxu0 0
        %3130 = vmatpush1.bf16.msra.mxu0 0
        %3131 = vmatprep.mubr.bf16.mxu0 0
        %3132 = vmatmul.mubr.bf16.gmra.mrb[0].mxu0 %v3092
        %v3133 = vpop.f32.mrb[0].mxu0
        %v3134 = vadd.f32 0.0, %v3133
        %v3135 = vpop.f32.mrb[0].mxu0
        %v3136 = vadd.f32 0.0, %v3135
        %v3137 = vpop.f32.mrb[0].mxu0
        %v3138 = vadd.f32 0.0, %v3137
        %v3139 = vpop.f32.mrb[0].mxu0
        %v3140 = vadd.f32 0.0, %v3139
        %3141 = vdwg.mxu0
        %v3142 = vadd.f32 %v3058, %v3136
        %v3143 = vadd.f32 %v3059, %v3140
        %v3144 = vsub.f32 0.0, %v3054
        %v3145 = vsub.f32 0.0, %v3055
        %v3146 = vadd.f32 %v3144, %v3142
        %v3147 = vadd.f32 %v3145, %v3143
        %v3148 = vadd.f32 %v3054, %v3146
        %v3149 = vadd.f32 %v3055, %v3147
        %v3150 = vmul.f32 %v3142, -2.0
        %v3151 = vmul.f32 %v3143, -2.0
        %v3152 = vadd.f32 %v3142, %v3150
        %v3153 = vadd.f32 %v3143, %v3151
        %v3155 = vunpack.c.l.b16 %v3092
        %v3156 = vunpack.c.h.b16 %v3092
        %v3157 = vpack.c.b16 %v3155, %v3155
        %v3158 = vpack.c.b16 %v3156, %v3156
        %s3161 = scalar_lea.vmem %s294, 168 [#allocation14]
        %3162 = vst [vmem:[%s3161] sm:$0xf] %v3157
        %3163 = vst [vmem:[%s3161 + $0x4] sm:$0xf] %v3158
        %s3164 = scalar_lea.vmem %s301, 336 [#allocation15]
        %3165 = vst [vmem:[%s3164] sm:$0xff] %v3148
        %3166 = vst [vmem:[%s3164 + $0x8] sm:$0xff] %v3149
        %s3167 = scalar_lea.vmem [#allocation2], 352
        %v3168 = vld [vmem:[%s3167] sm:$0xff]
        %v3169 = vld [vmem:[%s3167 + $0x8] sm:$0xff]
        %v3170 = vsub.f32 0.0, %v3093
        %v3171 = vsub.f32 0.0, %v3094
        %v3172 = vadd.f32 %v3170, %v3097
        %v3173 = vadd.f32 %v3171, %v3098
        %v3174 = vadd.f32 %v3093, %v3172
        %v3175 = vadd.f32 %v3094, %v3173
        %v3176 = vmul.f32 %v3097, -2.0
        %v3177 = vmul.f32 %v3098, -2.0
        %v3178 = vadd.f32 %v3097, %v3176
        %v3179 = vadd.f32 %v3098, %v3177
        %vm3180 = vcmp.gt.f32.partialorder %v3174, 1.0
        %vm3181 = vcmp.gt.f32.partialorder %v3175, 1.0
        %v3182 = vsel %vm3180, 1, 0
        %v3183 = vsel %vm3181, 1, 0
        %v3184 = vcvt.s32.f32 %v3182
        %v3185 = vcvt.s32.f32 %v3183
        %v3186 = vpack.c.bf16 %v3185, %v3184
        %v3187 = vsel %vm3180, 0.0, %v3174
        %v3188 = vsel %vm3181, 0.0, %v3175
        %v3189 = vadd.f32 %v3178, %v3168
        %v3190 = vadd.f32 %v3179, %v3169
        %v3191 = vadd.f32 %v3189, %v3134
        %v3192 = vadd.f32 %v3190, %v3138
        %3193 = vmatprep.subr.bf16.mxu0 %v1096
        %3194 = vmatpush1.bf16.msra.mxu0 %v1095
        %3195 = vmatprep.subr.bf16.mxu0 %v1098
        %3196 = vmatpush1.bf16.msra.mxu0 %v1097
        %3197 = vmatprep.subr.bf16.mxu0 %v1100
        %3198 = vmatpush1.bf16.msra.mxu0 %v1099
        %3199 = vmatprep.subr.bf16.mxu0 %v1102
        %3200 = vmatpush1.bf16.msra.mxu0 %v1101
        %3201 = vmatprep.subr.bf16.mxu0 %v1104
        %3202 = vmatpush1.bf16.msra.mxu0 %v1103
        %3203 = vmatprep.subr.bf16.mxu0 %v1106
        %3204 = vmatpush1.bf16.msra.mxu0 %v1105
        %3205 = vmatprep.subr.bf16.mxu0 %v1108
        %3206 = vmatpush1.bf16.msra.mxu0 %v1107
        %3207 = vmatprep.subr.bf16.mxu0 %v1110
        %3208 = vmatpush1.bf16.msra.mxu0 %v1109
        %3209 = vmatprep.subr.bf16.mxu0 0
        %3210 = vmatpush1.bf16.msra.mxu0 0
        %3211 = vmatprep.subr.bf16.mxu0 0
        %3212 = vmatpush1.bf16.msra.mxu0 0
        %3213 = vmatprep.subr.bf16.mxu0 0
        %3214 = vmatpush1.bf16.msra.mxu0 0
        %3215 = vmatprep.subr.bf16.mxu0 0
        %3216 = vmatpush1.bf16.msra.mxu0 0
        %3217 = vmatprep.subr.bf16.mxu0 0
        %3218 = vmatpush1.bf16.msra.mxu0 0
        %3219 = vmatprep.subr.bf16.mxu0 0
        %3220 = vmatpush1.bf16.msra.mxu0 0
        %3221 = vmatprep.subr.bf16.mxu0 0
        %3222 = vmatpush1.bf16.msra.mxu0 0
        %3223 = vmatprep.subr.bf16.mxu0 0
        %3224 = vmatpush1.bf16.msra.mxu0 0
        %3225 = vmatprep.mubr.bf16.mxu0 0
        %3226 = vmatmul.mubr.bf16.gmra.mrb[0].mxu0 %v3186
        %v3227 = vpop.f32.mrb[0].mxu0
        %v3228 = vadd.f32 0.0, %v3227
        %v3229 = vpop.f32.mrb[0].mxu0
        %v3230 = vadd.f32 0.0, %v3229
        %v3231 = vpop.f32.mrb[0].mxu0
        %v3232 = vadd.f32 0.0, %v3231
        %v3233 = vpop.f32.mrb[0].mxu0
        %v3234 = vadd.f32 0.0, %v3233
        %3235 = vdwg.mxu0
        %v3236 = vadd.f32 %v3152, %v3230
        %v3237 = vadd.f32 %v3153, %v3234
        %v3238 = vsub.f32 0.0, %v3148
        %v3239 = vsub.f32 0.0, %v3149
        %v3240 = vadd.f32 %v3238, %v3236
        %v3241 = vadd.f32 %v3239, %v3237
        %v3242 = vadd.f32 %v3148, %v3240
        %v3243 = vadd.f32 %v3149, %v3241
        %v3244 = vmul.f32 %v3236, -2.0
        %v3245 = vmul.f32 %v3237, -2.0
        %v3246 = vadd.f32 %v3236, %v3244
        %v3247 = vadd.f32 %v3237, %v3245
        %v3249 = vunpack.c.l.b16 %v3186
        %v3250 = vunpack.c.h.b16 %v3186
        %v3251 = vpack.c.b16 %v3249, %v3249
        %v3252 = vpack.c.b16 %v3250, %v3250
        %s3255 = scalar_lea.vmem %s294, 176 [#allocation14]
        %3256 = vst [vmem:[%s3255] sm:$0xf] %v3251
        %3257 = vst [vmem:[%s3255 + $0x4] sm:$0xf] %v3252
        %s3258 = scalar_lea.vmem %s301, 352 [#allocation15]
        %3259 = vst [vmem:[%s3258] sm:$0xff] %v3242
        %3260 = vst [vmem:[%s3258 + $0x8] sm:$0xff] %v3243
        %s3261 = scalar_lea.vmem [#allocation2], 368
        %v3262 = vld [vmem:[%s3261] sm:$0xff]
        %v3263 = vld [vmem:[%s3261 + $0x8] sm:$0xff]
        %v3264 = vsub.f32 0.0, %v3187
        %v3265 = vsub.f32 0.0, %v3188
        %v3266 = vadd.f32 %v3264, %v3191
        %v3267 = vadd.f32 %v3265, %v3192
        %v3268 = vadd.f32 %v3187, %v3266
        %v3269 = vadd.f32 %v3188, %v3267
        %v3270 = vmul.f32 %v3191, -2.0
        %v3271 = vmul.f32 %v3192, -2.0
        %v3272 = vadd.f32 %v3191, %v3270
        %v3273 = vadd.f32 %v3192, %v3271
        %vm3274 = vcmp.gt.f32.partialorder %v3268, 1.0
        %vm3275 = vcmp.gt.f32.partialorder %v3269, 1.0
        %v3276 = vsel %vm3274, 1, 0
        %v3277 = vsel %vm3275, 1, 0
        %v3278 = vcvt.s32.f32 %v3276
        %v3279 = vcvt.s32.f32 %v3277
        %v3280 = vpack.c.bf16 %v3279, %v3278
        %v3281 = vsel %vm3274, 0.0, %v3268
        %v3282 = vsel %vm3275, 0.0, %v3269
        %v3283 = vadd.f32 %v3272, %v3262
        %v3284 = vadd.f32 %v3273, %v3263
        %v3285 = vadd.f32 %v3283, %v3228
        %v3286 = vadd.f32 %v3284, %v3232
        %3287 = vmatprep.subr.bf16.mxu0 %v1096
        %3288 = vmatpush1.bf16.msra.mxu0 %v1095
        %3289 = vmatprep.subr.bf16.mxu0 %v1098
        %3290 = vmatpush1.bf16.msra.mxu0 %v1097
        %3291 = vmatprep.subr.bf16.mxu0 %v1100
        %3292 = vmatpush1.bf16.msra.mxu0 %v1099
        %3293 = vmatprep.subr.bf16.mxu0 %v1102
        %3294 = vmatpush1.bf16.msra.mxu0 %v1101
        %3295 = vmatprep.subr.bf16.mxu0 %v1104
        %3296 = vmatpush1.bf16.msra.mxu0 %v1103
        %3297 = vmatprep.subr.bf16.mxu0 %v1106
        %3298 = vmatpush1.bf16.msra.mxu0 %v1105
        %3299 = vmatprep.subr.bf16.mxu0 %v1108
        %3300 = vmatpush1.bf16.msra.mxu0 %v1107
        %3301 = vmatprep.subr.bf16.mxu0 %v1110
        %3302 = vmatpush1.bf16.msra.mxu0 %v1109
        %3303 = vmatprep.subr.bf16.mxu0 0
        %3304 = vmatpush1.bf16.msra.mxu0 0
        %3305 = vmatprep.subr.bf16.mxu0 0
        %3306 = vmatpush1.bf16.msra.mxu0 0
        %3307 = vmatprep.subr.bf16.mxu0 0
        %3308 = vmatpush1.bf16.msra.mxu0 0
        %3309 = vmatprep.subr.bf16.mxu0 0
        %3310 = vmatpush1.bf16.msra.mxu0 0
        %3311 = vmatprep.subr.bf16.mxu0 0
        %3312 = vmatpush1.bf16.msra.mxu0 0
        %3313 = vmatprep.subr.bf16.mxu0 0
        %3314 = vmatpush1.bf16.msra.mxu0 0
        %3315 = vmatprep.subr.bf16.mxu0 0
        %3316 = vmatpush1.bf16.msra.mxu0 0
        %3317 = vmatprep.subr.bf16.mxu0 0
        %3318 = vmatpush1.bf16.msra.mxu0 0
        %3319 = vmatprep.mubr.bf16.mxu0 0
        %3320 = vmatmul.mubr.bf16.gmra.mrb[0].mxu0 %v3280
        %v3321 = vpop.f32.mrb[0].mxu0
        %v3322 = vadd.f32 0.0, %v3321
        %v3323 = vpop.f32.mrb[0].mxu0
        %v3324 = vadd.f32 0.0, %v3323
        %v3325 = vpop.f32.mrb[0].mxu0
        %v3326 = vadd.f32 0.0, %v3325
        %v3327 = vpop.f32.mrb[0].mxu0
        %v3328 = vadd.f32 0.0, %v3327
        %3329 = vdwg.mxu0
        %v3330 = vadd.f32 %v3246, %v3324
        %v3331 = vadd.f32 %v3247, %v3328
        %v3332 = vsub.f32 0.0, %v3242
        %v3333 = vsub.f32 0.0, %v3243
        %v3334 = vadd.f32 %v3332, %v3330
        %v3335 = vadd.f32 %v3333, %v3331
        %v3336 = vadd.f32 %v3242, %v3334
        %v3337 = vadd.f32 %v3243, %v3335
        %v3338 = vmul.f32 %v3330, -2.0
        %v3339 = vmul.f32 %v3331, -2.0
        %v3340 = vadd.f32 %v3330, %v3338
        %v3341 = vadd.f32 %v3331, %v3339
        %v3343 = vunpack.c.l.b16 %v3280
        %v3344 = vunpack.c.h.b16 %v3280
        %v3345 = vpack.c.b16 %v3343, %v3343
        %v3346 = vpack.c.b16 %v3344, %v3344
        %s3349 = scalar_lea.vmem %s294, 184 [#allocation14]
        %3350 = vst [vmem:[%s3349] sm:$0xf] %v3345
        %3351 = vst [vmem:[%s3349 + $0x4] sm:$0xf] %v3346
        %s3352 = scalar_lea.vmem %s301, 368 [#allocation15]
        %3353 = vst [vmem:[%s3352] sm:$0xff] %v3336
        %3354 = vst [vmem:[%s3352 + $0x8] sm:$0xff] %v3337
        %s3355 = scalar_lea.vmem [#allocation2], 384
        %v3356 = vld [vmem:[%s3355] sm:$0xff]
        %v3357 = vld [vmem:[%s3355 + $0x8] sm:$0xff]
        %v3358 = vsub.f32 0.0, %v3281
        %v3359 = vsub.f32 0.0, %v3282
        %v3360 = vadd.f32 %v3358, %v3285
        %v3361 = vadd.f32 %v3359, %v3286
        %v3362 = vadd.f32 %v3281, %v3360
        %v3363 = vadd.f32 %v3282, %v3361
        %v3364 = vmul.f32 %v3285, -2.0
        %v3365 = vmul.f32 %v3286, -2.0
        %v3366 = vadd.f32 %v3285, %v3364
        %v3367 = vadd.f32 %v3286, %v3365
        %vm3368 = vcmp.gt.f32.partialorder %v3362, 1.0
        %vm3369 = vcmp.gt.f32.partialorder %v3363, 1.0
        %v3370 = vsel %vm3368, 1, 0
        %v3371 = vsel %vm3369, 1, 0
        %v3372 = vcvt.s32.f32 %v3370
        %v3373 = vcvt.s32.f32 %v3371
        %v3374 = vpack.c.bf16 %v3373, %v3372
        %v3375 = vsel %vm3368, 0.0, %v3362
        %v3376 = vsel %vm3369, 0.0, %v3363
        %v3377 = vadd.f32 %v3366, %v3356
        %v3378 = vadd.f32 %v3367, %v3357
        %v3379 = vadd.f32 %v3377, %v3322
        %v3380 = vadd.f32 %v3378, %v3326
        %3381 = vmatprep.subr.bf16.mxu0 %v1096
        %3382 = vmatpush1.bf16.msra.mxu0 %v1095
        %3383 = vmatprep.subr.bf16.mxu0 %v1098
        %3384 = vmatpush1.bf16.msra.mxu0 %v1097
        %3385 = vmatprep.subr.bf16.mxu0 %v1100
        %3386 = vmatpush1.bf16.msra.mxu0 %v1099
        %3387 = vmatprep.subr.bf16.mxu0 %v1102
        %3388 = vmatpush1.bf16.msra.mxu0 %v1101
        %3389 = vmatprep.subr.bf16.mxu0 %v1104
        %3390 = vmatpush1.bf16.msra.mxu0 %v1103
        %3391 = vmatprep.subr.bf16.mxu0 %v1106
        %3392 = vmatpush1.bf16.msra.mxu0 %v1105
        %3393 = vmatprep.subr.bf16.mxu0 %v1108
        %3394 = vmatpush1.bf16.msra.mxu0 %v1107
        %3395 = vmatprep.subr.bf16.mxu0 %v1110
        %3396 = vmatpush1.bf16.msra.mxu0 %v1109
        %3397 = vmatprep.subr.bf16.mxu0 0
        %3398 = vmatpush1.bf16.msra.mxu0 0
        %3399 = vmatprep.subr.bf16.mxu0 0
        %3400 = vmatpush1.bf16.msra.mxu0 0
        %3401 = vmatprep.subr.bf16.mxu0 0
        %3402 = vmatpush1.bf16.msra.mxu0 0
        %3403 = vmatprep.subr.bf16.mxu0 0
        %3404 = vmatpush1.bf16.msra.mxu0 0
        %3405 = vmatprep.subr.bf16.mxu0 0
        %3406 = vmatpush1.bf16.msra.mxu0 0
        %3407 = vmatprep.subr.bf16.mxu0 0
        %3408 = vmatpush1.bf16.msra.mxu0 0
        %3409 = vmatprep.subr.bf16.mxu0 0
        %3410 = vmatpush1.bf16.msra.mxu0 0
        %3411 = vmatprep.subr.bf16.mxu0 0
        %3412 = vmatpush1.bf16.msra.mxu0 0
        %3413 = vmatprep.mubr.bf16.mxu0 0
        %3414 = vmatmul.mubr.bf16.gmra.mrb[0].mxu0 %v3374
        %v3415 = vpop.f32.mrb[0].mxu0
        %v3416 = vadd.f32 0.0, %v3415
        %v3417 = vpop.f32.mrb[0].mxu0
        %v3418 = vadd.f32 0.0, %v3417
        %v3419 = vpop.f32.mrb[0].mxu0
        %v3420 = vadd.f32 0.0, %v3419
        %v3421 = vpop.f32.mrb[0].mxu0
        %v3422 = vadd.f32 0.0, %v3421
        %3423 = vdwg.mxu0
        %v3424 = vadd.f32 %v3340, %v3418
        %v3425 = vadd.f32 %v3341, %v3422
        %v3426 = vsub.f32 0.0, %v3336
        %v3427 = vsub.f32 0.0, %v3337
        %v3428 = vadd.f32 %v3426, %v3424
        %v3429 = vadd.f32 %v3427, %v3425
        %v3430 = vadd.f32 %v3336, %v3428
        %v3431 = vadd.f32 %v3337, %v3429
        %v3432 = vmul.f32 %v3424, -2.0
        %v3433 = vmul.f32 %v3425, -2.0
        %v3434 = vadd.f32 %v3424, %v3432
        %v3435 = vadd.f32 %v3425, %v3433
        %v3437 = vunpack.c.l.b16 %v3374
        %v3438 = vunpack.c.h.b16 %v3374
        %v3439 = vpack.c.b16 %v3437, %v3437
        %v3440 = vpack.c.b16 %v3438, %v3438
        %s3443 = scalar_lea.vmem %s294, 192 [#allocation14]
        %3444 = vst [vmem:[%s3443] sm:$0xf] %v3439
        %3445 = vst [vmem:[%s3443 + $0x4] sm:$0xf] %v3440
        %s3446 = scalar_lea.vmem %s301, 384 [#allocation15]
        %3447 = vst [vmem:[%s3446] sm:$0xff] %v3430
        %3448 = vst [vmem:[%s3446 + $0x8] sm:$0xff] %v3431
        %s3449 = scalar_lea.vmem [#allocation2], 400
        %v3450 = vld [vmem:[%s3449] sm:$0xff]
        %v3451 = vld [vmem:[%s3449 + $0x8] sm:$0xff]
        %v3452 = vsub.f32 0.0, %v3375
        %v3453 = vsub.f32 0.0, %v3376
        %v3454 = vadd.f32 %v3452, %v3379
        %v3455 = vadd.f32 %v3453, %v3380
        %v3456 = vadd.f32 %v3375, %v3454
        %v3457 = vadd.f32 %v3376, %v3455
        %v3458 = vmul.f32 %v3379, -2.0
        %v3459 = vmul.f32 %v3380, -2.0
        %v3460 = vadd.f32 %v3379, %v3458
        %v3461 = vadd.f32 %v3380, %v3459
        %vm3462 = vcmp.gt.f32.partialorder %v3456, 1.0
        %vm3463 = vcmp.gt.f32.partialorder %v3457, 1.0
        %v3464 = vsel %vm3462, 1, 0
        %v3465 = vsel %vm3463, 1, 0
        %v3466 = vcvt.s32.f32 %v3464
        %v3467 = vcvt.s32.f32 %v3465
        %v3468 = vpack.c.bf16 %v3467, %v3466
        %v3469 = vsel %vm3462, 0.0, %v3456
        %v3470 = vsel %vm3463, 0.0, %v3457
        %v3471 = vadd.f32 %v3460, %v3450
        %v3472 = vadd.f32 %v3461, %v3451
        %v3473 = vadd.f32 %v3471, %v3416
        %v3474 = vadd.f32 %v3472, %v3420
        %3475 = vmatprep.subr.bf16.mxu0 %v1096
        %3476 = vmatpush1.bf16.msra.mxu0 %v1095
        %3477 = vmatprep.subr.bf16.mxu0 %v1098
        %3478 = vmatpush1.bf16.msra.mxu0 %v1097
        %3479 = vmatprep.subr.bf16.mxu0 %v1100
        %3480 = vmatpush1.bf16.msra.mxu0 %v1099
        %3481 = vmatprep.subr.bf16.mxu0 %v1102
        %3482 = vmatpush1.bf16.msra.mxu0 %v1101
        %3483 = vmatprep.subr.bf16.mxu0 %v1104
        %3484 = vmatpush1.bf16.msra.mxu0 %v1103
        %3485 = vmatprep.subr.bf16.mxu0 %v1106
        %3486 = vmatpush1.bf16.msra.mxu0 %v1105
        %3487 = vmatprep.subr.bf16.mxu0 %v1108
        %3488 = vmatpush1.bf16.msra.mxu0 %v1107
        %3489 = vmatprep.subr.bf16.mxu0 %v1110
        %3490 = vmatpush1.bf16.msra.mxu0 %v1109
        %3491 = vmatprep.subr.bf16.mxu0 0
        %3492 = vmatpush1.bf16.msra.mxu0 0
        %3493 = vmatprep.subr.bf16.mxu0 0
        %3494 = vmatpush1.bf16.msra.mxu0 0
        %3495 = vmatprep.subr.bf16.mxu0 0
        %3496 = vmatpush1.bf16.msra.mxu0 0
        %3497 = vmatprep.subr.bf16.mxu0 0
        %3498 = vmatpush1.bf16.msra.mxu0 0
        %3499 = vmatprep.subr.bf16.mxu0 0
        %3500 = vmatpush1.bf16.msra.mxu0 0
        %3501 = vmatprep.subr.bf16.mxu0 0
        %3502 = vmatpush1.bf16.msra.mxu0 0
        %3503 = vmatprep.subr.bf16.mxu0 0
        %3504 = vmatpush1.bf16.msra.mxu0 0
        %3505 = vmatprep.subr.bf16.mxu0 0
        %3506 = vmatpush1.bf16.msra.mxu0 0
        %3507 = vmatprep.mubr.bf16.mxu0 0
        %3508 = vmatmul.mubr.bf16.gmra.mrb[0].mxu0 %v3468
        %v3509 = vpop.f32.mrb[0].mxu0
        %v3510 = vadd.f32 0.0, %v3509
        %v3511 = vpop.f32.mrb[0].mxu0
        %v3512 = vadd.f32 0.0, %v3511
        %v3513 = vpop.f32.mrb[0].mxu0
        %v3514 = vadd.f32 0.0, %v3513
        %v3515 = vpop.f32.mrb[0].mxu0
        %v3516 = vadd.f32 0.0, %v3515
        %3517 = vdwg.mxu0
        %v3518 = vadd.f32 %v3434, %v3512
        %v3519 = vadd.f32 %v3435, %v3516
        %v3520 = vsub.f32 0.0, %v3430
        %v3521 = vsub.f32 0.0, %v3431
        %v3522 = vadd.f32 %v3520, %v3518
        %v3523 = vadd.f32 %v3521, %v3519
        %v3524 = vadd.f32 %v3430, %v3522
        %v3525 = vadd.f32 %v3431, %v3523
        %v3526 = vmul.f32 %v3518, -2.0
        %v3527 = vmul.f32 %v3519, -2.0
        %v3528 = vadd.f32 %v3518, %v3526
        %v3529 = vadd.f32 %v3519, %v3527
        %v3531 = vunpack.c.l.b16 %v3468
        %v3532 = vunpack.c.h.b16 %v3468
        %v3533 = vpack.c.b16 %v3531, %v3531
        %v3534 = vpack.c.b16 %v3532, %v3532
        %s3537 = scalar_lea.vmem %s294, 200 [#allocation14]
        %3538 = vst [vmem:[%s3537] sm:$0xf] %v3533
        %3539 = vst [vmem:[%s3537 + $0x4] sm:$0xf] %v3534
        %s3540 = scalar_lea.vmem %s301, 400 [#allocation15]
        %3541 = vst [vmem:[%s3540] sm:$0xff] %v3524
        %3542 = vst [vmem:[%s3540 + $0x8] sm:$0xff] %v3525
        %s3543 = scalar_lea.vmem [#allocation2], 416
        %v3544 = vld [vmem:[%s3543] sm:$0xff]
        %v3545 = vld [vmem:[%s3543 + $0x8] sm:$0xff]
        %v3546 = vsub.f32 0.0, %v3469
        %v3547 = vsub.f32 0.0, %v3470
        %v3548 = vadd.f32 %v3546, %v3473
        %v3549 = vadd.f32 %v3547, %v3474
        %v3550 = vadd.f32 %v3469, %v3548
        %v3551 = vadd.f32 %v3470, %v3549
        %v3552 = vmul.f32 %v3473, -2.0
        %v3553 = vmul.f32 %v3474, -2.0
        %v3554 = vadd.f32 %v3473, %v3552
        %v3555 = vadd.f32 %v3474, %v3553
        %vm3556 = vcmp.gt.f32.partialorder %v3550, 1.0
        %vm3557 = vcmp.gt.f32.partialorder %v3551, 1.0
        %v3558 = vsel %vm3556, 1, 0
        %v3559 = vsel %vm3557, 1, 0
        %v3560 = vcvt.s32.f32 %v3558
        %v3561 = vcvt.s32.f32 %v3559
        %v3562 = vpack.c.bf16 %v3561, %v3560
        %v3563 = vsel %vm3556, 0.0, %v3550
        %v3564 = vsel %vm3557, 0.0, %v3551
        %v3565 = vadd.f32 %v3554, %v3544
        %v3566 = vadd.f32 %v3555, %v3545
        %v3567 = vadd.f32 %v3565, %v3510
        %v3568 = vadd.f32 %v3566, %v3514
        %3569 = vmatprep.subr.bf16.mxu0 %v1096
        %3570 = vmatpush1.bf16.msra.mxu0 %v1095
        %3571 = vmatprep.subr.bf16.mxu0 %v1098
        %3572 = vmatpush1.bf16.msra.mxu0 %v1097
        %3573 = vmatprep.subr.bf16.mxu0 %v1100
        %3574 = vmatpush1.bf16.msra.mxu0 %v1099
        %3575 = vmatprep.subr.bf16.mxu0 %v1102
        %3576 = vmatpush1.bf16.msra.mxu0 %v1101
        %3577 = vmatprep.subr.bf16.mxu0 %v1104
        %3578 = vmatpush1.bf16.msra.mxu0 %v1103
        %3579 = vmatprep.subr.bf16.mxu0 %v1106
        %3580 = vmatpush1.bf16.msra.mxu0 %v1105
        %3581 = vmatprep.subr.bf16.mxu0 %v1108
        %3582 = vmatpush1.bf16.msra.mxu0 %v1107
        %3583 = vmatprep.subr.bf16.mxu0 %v1110
        %3584 = vmatpush1.bf16.msra.mxu0 %v1109
        %3585 = vmatprep.subr.bf16.mxu0 0
        %3586 = vmatpush1.bf16.msra.mxu0 0
        %3587 = vmatprep.subr.bf16.mxu0 0
        %3588 = vmatpush1.bf16.msra.mxu0 0
        %3589 = vmatprep.subr.bf16.mxu0 0
        %3590 = vmatpush1.bf16.msra.mxu0 0
        %3591 = vmatprep.subr.bf16.mxu0 0
        %3592 = vmatpush1.bf16.msra.mxu0 0
        %3593 = vmatprep.subr.bf16.mxu0 0
        %3594 = vmatpush1.bf16.msra.mxu0 0
        %3595 = vmatprep.subr.bf16.mxu0 0
        %3596 = vmatpush1.bf16.msra.mxu0 0
        %3597 = vmatprep.subr.bf16.mxu0 0
        %3598 = vmatpush1.bf16.msra.mxu0 0
        %3599 = vmatprep.subr.bf16.mxu0 0
        %3600 = vmatpush1.bf16.msra.mxu0 0
        %3601 = vmatprep.mubr.bf16.mxu0 0
        %3602 = vmatmul.mubr.bf16.gmra.mrb[0].mxu0 %v3562
        %v3603 = vpop.f32.mrb[0].mxu0
        %v3604 = vadd.f32 0.0, %v3603
        %v3605 = vpop.f32.mrb[0].mxu0
        %v3606 = vadd.f32 0.0, %v3605
        %v3607 = vpop.f32.mrb[0].mxu0
        %v3608 = vadd.f32 0.0, %v3607
        %v3609 = vpop.f32.mrb[0].mxu0
        %v3610 = vadd.f32 0.0, %v3609
        %3611 = vdwg.mxu0
        %v3612 = vadd.f32 %v3528, %v3606
        %v3613 = vadd.f32 %v3529, %v3610
        %v3614 = vsub.f32 0.0, %v3524
        %v3615 = vsub.f32 0.0, %v3525
        %v3616 = vadd.f32 %v3614, %v3612
        %v3617 = vadd.f32 %v3615, %v3613
        %v3618 = vadd.f32 %v3524, %v3616
        %v3619 = vadd.f32 %v3525, %v3617
        %v3620 = vmul.f32 %v3612, -2.0
        %v3621 = vmul.f32 %v3613, -2.0
        %v3622 = vadd.f32 %v3612, %v3620
        %v3623 = vadd.f32 %v3613, %v3621
        %v3625 = vunpack.c.l.b16 %v3562
        %v3626 = vunpack.c.h.b16 %v3562
        %v3627 = vpack.c.b16 %v3625, %v3625
        %v3628 = vpack.c.b16 %v3626, %v3626
        %s3631 = scalar_lea.vmem %s294, 208 [#allocation14]
        %3632 = vst [vmem:[%s3631] sm:$0xf] %v3627
        %3633 = vst [vmem:[%s3631 + $0x4] sm:$0xf] %v3628
        %s3634 = scalar_lea.vmem %s301, 416 [#allocation15]
        %3635 = vst [vmem:[%s3634] sm:$0xff] %v3618
        %3636 = vst [vmem:[%s3634 + $0x8] sm:$0xff] %v3619
        %s3637 = scalar_lea.vmem [#allocation2], 432
        %v3638 = vld [vmem:[%s3637] sm:$0xff]
        %v3639 = vld [vmem:[%s3637 + $0x8] sm:$0xff]
        %v3640 = vsub.f32 0.0, %v3563
        %v3641 = vsub.f32 0.0, %v3564
        %v3642 = vadd.f32 %v3640, %v3567
        %v3643 = vadd.f32 %v3641, %v3568
        %v3644 = vadd.f32 %v3563, %v3642
        %v3645 = vadd.f32 %v3564, %v3643
        %v3646 = vmul.f32 %v3567, -2.0
        %v3647 = vmul.f32 %v3568, -2.0
        %v3648 = vadd.f32 %v3567, %v3646
        %v3649 = vadd.f32 %v3568, %v3647
        %vm3650 = vcmp.gt.f32.partialorder %v3644, 1.0
        %vm3651 = vcmp.gt.f32.partialorder %v3645, 1.0
        %v3652 = vsel %vm3650, 1, 0
        %v3653 = vsel %vm3651, 1, 0
        %v3654 = vcvt.s32.f32 %v3652
        %v3655 = vcvt.s32.f32 %v3653
        %v3656 = vpack.c.bf16 %v3655, %v3654
        %v3657 = vsel %vm3650, 0.0, %v3644
        %v3658 = vsel %vm3651, 0.0, %v3645
        %v3659 = vadd.f32 %v3648, %v3638
        %v3660 = vadd.f32 %v3649, %v3639
        %v3661 = vadd.f32 %v3659, %v3604
        %v3662 = vadd.f32 %v3660, %v3608
        %3663 = vmatprep.subr.bf16.mxu0 %v1096
        %3664 = vmatpush1.bf16.msra.mxu0 %v1095
        %3665 = vmatprep.subr.bf16.mxu0 %v1098
        %3666 = vmatpush1.bf16.msra.mxu0 %v1097
        %3667 = vmatprep.subr.bf16.mxu0 %v1100
        %3668 = vmatpush1.bf16.msra.mxu0 %v1099
        %3669 = vmatprep.subr.bf16.mxu0 %v1102
        %3670 = vmatpush1.bf16.msra.mxu0 %v1101
        %3671 = vmatprep.subr.bf16.mxu0 %v1104
        %3672 = vmatpush1.bf16.msra.mxu0 %v1103
        %3673 = vmatprep.subr.bf16.mxu0 %v1106
        %3674 = vmatpush1.bf16.msra.mxu0 %v1105
        %3675 = vmatprep.subr.bf16.mxu0 %v1108
        %3676 = vmatpush1.bf16.msra.mxu0 %v1107
        %3677 = vmatprep.subr.bf16.mxu0 %v1110
        %3678 = vmatpush1.bf16.msra.mxu0 %v1109
        %3679 = vmatprep.subr.bf16.mxu0 0
        %3680 = vmatpush1.bf16.msra.mxu0 0
        %3681 = vmatprep.subr.bf16.mxu0 0
        %3682 = vmatpush1.bf16.msra.mxu0 0
        %3683 = vmatprep.subr.bf16.mxu0 0
        %3684 = vmatpush1.bf16.msra.mxu0 0
        %3685 = vmatprep.subr.bf16.mxu0 0
        %3686 = vmatpush1.bf16.msra.mxu0 0
        %3687 = vmatprep.subr.bf16.mxu0 0
        %3688 = vmatpush1.bf16.msra.mxu0 0
        %3689 = vmatprep.subr.bf16.mxu0 0
        %3690 = vmatpush1.bf16.msra.mxu0 0
        %3691 = vmatprep.subr.bf16.mxu0 0
        %3692 = vmatpush1.bf16.msra.mxu0 0
        %3693 = vmatprep.subr.bf16.mxu0 0
        %3694 = vmatpush1.bf16.msra.mxu0 0
        %3695 = vmatprep.mubr.bf16.mxu0 0
        %3696 = vmatmul.mubr.bf16.gmra.mrb[0].mxu0 %v3656
        %v3697 = vpop.f32.mrb[0].mxu0
        %v3698 = vadd.f32 0.0, %v3697
        %v3699 = vpop.f32.mrb[0].mxu0
        %v3700 = vadd.f32 0.0, %v3699
        %v3701 = vpop.f32.mrb[0].mxu0
        %v3702 = vadd.f32 0.0, %v3701
        %v3703 = vpop.f32.mrb[0].mxu0
        %v3704 = vadd.f32 0.0, %v3703
        %3705 = vdwg.mxu0
        %v3706 = vadd.f32 %v3622, %v3700
        %v3707 = vadd.f32 %v3623, %v3704
        %v3708 = vsub.f32 0.0, %v3618
        %v3709 = vsub.f32 0.0, %v3619
        %v3710 = vadd.f32 %v3708, %v3706
        %v3711 = vadd.f32 %v3709, %v3707
        %v3712 = vadd.f32 %v3618, %v3710
        %v3713 = vadd.f32 %v3619, %v3711
        %v3714 = vmul.f32 %v3706, -2.0
        %v3715 = vmul.f32 %v3707, -2.0
        %v3716 = vadd.f32 %v3706, %v3714
        %v3717 = vadd.f32 %v3707, %v3715
        %v3719 = vunpack.c.l.b16 %v3656
        %v3720 = vunpack.c.h.b16 %v3656
        %v3721 = vpack.c.b16 %v3719, %v3719
        %v3722 = vpack.c.b16 %v3720, %v3720
        %s3725 = scalar_lea.vmem %s294, 216 [#allocation14]
        %3726 = vst [vmem:[%s3725] sm:$0xf] %v3721
        %3727 = vst [vmem:[%s3725 + $0x4] sm:$0xf] %v3722
        %s3728 = scalar_lea.vmem %s301, 432 [#allocation15]
        %3729 = vst [vmem:[%s3728] sm:$0xff] %v3712
        %3730 = vst [vmem:[%s3728 + $0x8] sm:$0xff] %v3713
        %s3731 = scalar_lea.vmem [#allocation2], 448
        %v3732 = vld [vmem:[%s3731] sm:$0xff]
        %v3733 = vld [vmem:[%s3731 + $0x8] sm:$0xff]
        %v3734 = vsub.f32 0.0, %v3657
        %v3735 = vsub.f32 0.0, %v3658
        %v3736 = vadd.f32 %v3734, %v3661
        %v3737 = vadd.f32 %v3735, %v3662
        %v3738 = vadd.f32 %v3657, %v3736
        %v3739 = vadd.f32 %v3658, %v3737
        %v3740 = vmul.f32 %v3661, -2.0
        %v3741 = vmul.f32 %v3662, -2.0
        %v3742 = vadd.f32 %v3661, %v3740
        %v3743 = vadd.f32 %v3662, %v3741
        %vm3744 = vcmp.gt.f32.partialorder %v3738, 1.0
        %vm3745 = vcmp.gt.f32.partialorder %v3739, 1.0
        %v3746 = vsel %vm3744, 1, 0
        %v3747 = vsel %vm3745, 1, 0
        %v3748 = vcvt.s32.f32 %v3746
        %v3749 = vcvt.s32.f32 %v3747
        %v3750 = vpack.c.bf16 %v3749, %v3748
        %v3751 = vsel %vm3744, 0.0, %v3738
        %v3752 = vsel %vm3745, 0.0, %v3739
        %v3753 = vadd.f32 %v3742, %v3732
        %v3754 = vadd.f32 %v3743, %v3733
        %v3755 = vadd.f32 %v3753, %v3698
        %v3756 = vadd.f32 %v3754, %v3702
        %3757 = vmatprep.subr.bf16.mxu0 %v1096
        %3758 = vmatpush1.bf16.msra.mxu0 %v1095
        %3759 = vmatprep.subr.bf16.mxu0 %v1098
        %3760 = vmatpush1.bf16.msra.mxu0 %v1097
        %3761 = vmatprep.subr.bf16.mxu0 %v1100
        %3762 = vmatpush1.bf16.msra.mxu0 %v1099
        %3763 = vmatprep.subr.bf16.mxu0 %v1102
        %3764 = vmatpush1.bf16.msra.mxu0 %v1101
        %3765 = vmatprep.subr.bf16.mxu0 %v1104
        %3766 = vmatpush1.bf16.msra.mxu0 %v1103
        %3767 = vmatprep.subr.bf16.mxu0 %v1106
        %3768 = vmatpush1.bf16.msra.mxu0 %v1105
        %3769 = vmatprep.subr.bf16.mxu0 %v1108
        %3770 = vmatpush1.bf16.msra.mxu0 %v1107
        %3771 = vmatprep.subr.bf16.mxu0 %v1110
        %3772 = vmatpush1.bf16.msra.mxu0 %v1109
        %3773 = vmatprep.subr.bf16.mxu0 0
        %3774 = vmatpush1.bf16.msra.mxu0 0
        %3775 = vmatprep.subr.bf16.mxu0 0
        %3776 = vmatpush1.bf16.msra.mxu0 0
        %3777 = vmatprep.subr.bf16.mxu0 0
        %3778 = vmatpush1.bf16.msra.mxu0 0
        %3779 = vmatprep.subr.bf16.mxu0 0
        %3780 = vmatpush1.bf16.msra.mxu0 0
        %3781 = vmatprep.subr.bf16.mxu0 0
        %3782 = vmatpush1.bf16.msra.mxu0 0
        %3783 = vmatprep.subr.bf16.mxu0 0
        %3784 = vmatpush1.bf16.msra.mxu0 0
        %3785 = vmatprep.subr.bf16.mxu0 0
        %3786 = vmatpush1.bf16.msra.mxu0 0
        %3787 = vmatprep.subr.bf16.mxu0 0
        %3788 = vmatpush1.bf16.msra.mxu0 0
        %3789 = vmatprep.mubr.bf16.mxu0 0
        %3790 = vmatmul.mubr.bf16.gmra.mrb[0].mxu0 %v3750
        %v3791 = vpop.f32.mrb[0].mxu0
        %v3792 = vadd.f32 0.0, %v3791
        %v3793 = vpop.f32.mrb[0].mxu0
        %v3794 = vadd.f32 0.0, %v3793
        %v3795 = vpop.f32.mrb[0].mxu0
        %v3796 = vadd.f32 0.0, %v3795
        %v3797 = vpop.f32.mrb[0].mxu0
        %v3798 = vadd.f32 0.0, %v3797
        %3799 = vdwg.mxu0
        %v3800 = vadd.f32 %v3716, %v3794
        %v3801 = vadd.f32 %v3717, %v3798
        %v3802 = vsub.f32 0.0, %v3712
        %v3803 = vsub.f32 0.0, %v3713
        %v3804 = vadd.f32 %v3802, %v3800
        %v3805 = vadd.f32 %v3803, %v3801
        %v3806 = vadd.f32 %v3712, %v3804
        %v3807 = vadd.f32 %v3713, %v3805
        %v3808 = vmul.f32 %v3800, -2.0
        %v3809 = vmul.f32 %v3801, -2.0
        %v3810 = vadd.f32 %v3800, %v3808
        %v3811 = vadd.f32 %v3801, %v3809
        %v3813 = vunpack.c.l.b16 %v3750
        %v3814 = vunpack.c.h.b16 %v3750
        %v3815 = vpack.c.b16 %v3813, %v3813
        %v3816 = vpack.c.b16 %v3814, %v3814
        %s3819 = scalar_lea.vmem %s294, 224 [#allocation14]
        %3820 = vst [vmem:[%s3819] sm:$0xf] %v3815
        %3821 = vst [vmem:[%s3819 + $0x4] sm:$0xf] %v3816
        %s3822 = scalar_lea.vmem %s301, 448 [#allocation15]
        %3823 = vst [vmem:[%s3822] sm:$0xff] %v3806
        %3824 = vst [vmem:[%s3822 + $0x8] sm:$0xff] %v3807
        %s3825 = scalar_lea.vmem [#allocation2], 464
        %v3826 = vld [vmem:[%s3825] sm:$0xff]
        %v3827 = vld [vmem:[%s3825 + $0x8] sm:$0xff]
        %v3828 = vsub.f32 0.0, %v3751
        %v3829 = vsub.f32 0.0, %v3752
        %v3830 = vadd.f32 %v3828, %v3755
        %v3831 = vadd.f32 %v3829, %v3756
        %v3832 = vadd.f32 %v3751, %v3830
        %v3833 = vadd.f32 %v3752, %v3831
        %v3834 = vmul.f32 %v3755, -2.0
        %v3835 = vmul.f32 %v3756, -2.0
        %v3836 = vadd.f32 %v3755, %v3834
        %v3837 = vadd.f32 %v3756, %v3835
        %vm3838 = vcmp.gt.f32.partialorder %v3832, 1.0
        %vm3839 = vcmp.gt.f32.partialorder %v3833, 1.0
        %v3840 = vsel %vm3838, 1, 0
        %v3841 = vsel %vm3839, 1, 0
        %v3842 = vcvt.s32.f32 %v3840
        %v3843 = vcvt.s32.f32 %v3841
        %v3844 = vpack.c.bf16 %v3843, %v3842
        %v3845 = vsel %vm3838, 0.0, %v3832
        %v3846 = vsel %vm3839, 0.0, %v3833
        %v3847 = vadd.f32 %v3836, %v3826
        %v3848 = vadd.f32 %v3837, %v3827
        %v3849 = vadd.f32 %v3847, %v3792
        %v3850 = vadd.f32 %v3848, %v3796
        %3851 = vmatprep.subr.bf16.mxu0 %v1096
        %3852 = vmatpush1.bf16.msra.mxu0 %v1095
        %3853 = vmatprep.subr.bf16.mxu0 %v1098
        %3854 = vmatpush1.bf16.msra.mxu0 %v1097
        %3855 = vmatprep.subr.bf16.mxu0 %v1100
        %3856 = vmatpush1.bf16.msra.mxu0 %v1099
        %3857 = vmatprep.subr.bf16.mxu0 %v1102
        %3858 = vmatpush1.bf16.msra.mxu0 %v1101
        %3859 = vmatprep.subr.bf16.mxu0 %v1104
        %3860 = vmatpush1.bf16.msra.mxu0 %v1103
        %3861 = vmatprep.subr.bf16.mxu0 %v1106
        %3862 = vmatpush1.bf16.msra.mxu0 %v1105
        %3863 = vmatprep.subr.bf16.mxu0 %v1108
        %3864 = vmatpush1.bf16.msra.mxu0 %v1107
        %3865 = vmatprep.subr.bf16.mxu0 %v1110
        %3866 = vmatpush1.bf16.msra.mxu0 %v1109
        %3867 = vmatprep.subr.bf16.mxu0 0
        %3868 = vmatpush1.bf16.msra.mxu0 0
        %3869 = vmatprep.subr.bf16.mxu0 0
        %3870 = vmatpush1.bf16.msra.mxu0 0
        %3871 = vmatprep.subr.bf16.mxu0 0
        %3872 = vmatpush1.bf16.msra.mxu0 0
        %3873 = vmatprep.subr.bf16.mxu0 0
        %3874 = vmatpush1.bf16.msra.mxu0 0
        %3875 = vmatprep.subr.bf16.mxu0 0
        %3876 = vmatpush1.bf16.msra.mxu0 0
        %3877 = vmatprep.subr.bf16.mxu0 0
        %3878 = vmatpush1.bf16.msra.mxu0 0
        %3879 = vmatprep.subr.bf16.mxu0 0
        %3880 = vmatpush1.bf16.msra.mxu0 0
        %3881 = vmatprep.subr.bf16.mxu0 0
        %3882 = vmatpush1.bf16.msra.mxu0 0
        %3883 = vmatprep.mubr.bf16.mxu0 0
        %3884 = vmatmul.mubr.bf16.gmra.mrb[0].mxu0 %v3844
        %v3885 = vpop.f32.mrb[0].mxu0
        %v3886 = vadd.f32 0.0, %v3885
        %v3887 = vpop.f32.mrb[0].mxu0
        %v3888 = vadd.f32 0.0, %v3887
        %v3889 = vpop.f32.mrb[0].mxu0
        %v3890 = vadd.f32 0.0, %v3889
        %v3891 = vpop.f32.mrb[0].mxu0
        %v3892 = vadd.f32 0.0, %v3891
        %3893 = vdwg.mxu0
        %v3894 = vadd.f32 %v3810, %v3888
        %v3895 = vadd.f32 %v3811, %v3892
        %v3896 = vsub.f32 0.0, %v3806
        %v3897 = vsub.f32 0.0, %v3807
        %v3898 = vadd.f32 %v3896, %v3894
        %v3899 = vadd.f32 %v3897, %v3895
        %v3900 = vadd.f32 %v3806, %v3898
        %v3901 = vadd.f32 %v3807, %v3899
        %v3902 = vmul.f32 %v3894, -2.0
        %v3903 = vmul.f32 %v3895, -2.0
        %v3904 = vadd.f32 %v3894, %v3902
        %v3905 = vadd.f32 %v3895, %v3903
        %v3907 = vunpack.c.l.b16 %v3844
        %v3908 = vunpack.c.h.b16 %v3844
        %v3909 = vpack.c.b16 %v3907, %v3907
        %v3910 = vpack.c.b16 %v3908, %v3908
        %s3913 = scalar_lea.vmem %s294, 232 [#allocation14]
        %3914 = vst [vmem:[%s3913] sm:$0xf] %v3909
        %3915 = vst [vmem:[%s3913 + $0x4] sm:$0xf] %v3910
        %s3916 = scalar_lea.vmem %s301, 464 [#allocation15]
        %3917 = vst [vmem:[%s3916] sm:$0xff] %v3900
        %3918 = vst [vmem:[%s3916 + $0x8] sm:$0xff] %v3901
        %s3919 = scalar_lea.vmem [#allocation2], 480
        %v3920 = vld [vmem:[%s3919] sm:$0xff]
        %v3921 = vld [vmem:[%s3919 + $0x8] sm:$0xff]
        %v3922 = vsub.f32 0.0, %v3845
        %v3923 = vsub.f32 0.0, %v3846
        %v3924 = vadd.f32 %v3922, %v3849
        %v3925 = vadd.f32 %v3923, %v3850
        %v3926 = vadd.f32 %v3845, %v3924
        %v3927 = vadd.f32 %v3846, %v3925
        %v3928 = vmul.f32 %v3849, -2.0
        %v3929 = vmul.f32 %v3850, -2.0
        %v3930 = vadd.f32 %v3849, %v3928
        %v3931 = vadd.f32 %v3850, %v3929
        %vm3932 = vcmp.gt.f32.partialorder %v3926, 1.0
        %vm3933 = vcmp.gt.f32.partialorder %v3927, 1.0
        %v3934 = vsel %vm3932, 1, 0
        %v3935 = vsel %vm3933, 1, 0
        %v3936 = vcvt.s32.f32 %v3934
        %v3937 = vcvt.s32.f32 %v3935
        %v3938 = vpack.c.bf16 %v3937, %v3936
        %v3939 = vsel %vm3932, 0.0, %v3926
        %v3940 = vsel %vm3933, 0.0, %v3927
        %v3941 = vadd.f32 %v3930, %v3920
        %v3942 = vadd.f32 %v3931, %v3921
        %v3943 = vadd.f32 %v3941, %v3886
        %v3944 = vadd.f32 %v3942, %v3890
        %3945 = vmatprep.subr.bf16.mxu0 %v1096
        %3946 = vmatpush1.bf16.msra.mxu0 %v1095
        %3947 = vmatprep.subr.bf16.mxu0 %v1098
        %3948 = vmatpush1.bf16.msra.mxu0 %v1097
        %3949 = vmatprep.subr.bf16.mxu0 %v1100
        %3950 = vmatpush1.bf16.msra.mxu0 %v1099
        %3951 = vmatprep.subr.bf16.mxu0 %v1102
        %3952 = vmatpush1.bf16.msra.mxu0 %v1101
        %3953 = vmatprep.subr.bf16.mxu0 %v1104
        %3954 = vmatpush1.bf16.msra.mxu0 %v1103
        %3955 = vmatprep.subr.bf16.mxu0 %v1106
        %3956 = vmatpush1.bf16.msra.mxu0 %v1105
        %3957 = vmatprep.subr.bf16.mxu0 %v1108
        %3958 = vmatpush1.bf16.msra.mxu0 %v1107
        %3959 = vmatprep.subr.bf16.mxu0 %v1110
        %3960 = vmatpush1.bf16.msra.mxu0 %v1109
        %3961 = vmatprep.subr.bf16.mxu0 0
        %3962 = vmatpush1.bf16.msra.mxu0 0
        %3963 = vmatprep.subr.bf16.mxu0 0
        %3964 = vmatpush1.bf16.msra.mxu0 0
        %3965 = vmatprep.subr.bf16.mxu0 0
        %3966 = vmatpush1.bf16.msra.mxu0 0
        %3967 = vmatprep.subr.bf16.mxu0 0
        %3968 = vmatpush1.bf16.msra.mxu0 0
        %3969 = vmatprep.subr.bf16.mxu0 0
        %3970 = vmatpush1.bf16.msra.mxu0 0
        %3971 = vmatprep.subr.bf16.mxu0 0
        %3972 = vmatpush1.bf16.msra.mxu0 0
        %3973 = vmatprep.subr.bf16.mxu0 0
        %3974 = vmatpush1.bf16.msra.mxu0 0
        %3975 = vmatprep.subr.bf16.mxu0 0
        %3976 = vmatpush1.bf16.msra.mxu0 0
        %3977 = vmatprep.mubr.bf16.mxu0 0
        %3978 = vmatmul.mubr.bf16.gmra.mrb[0].mxu0 %v3938
        %v3979 = vpop.f32.mrb[0].mxu0
        %v3980 = vadd.f32 0.0, %v3979
        %v3981 = vpop.f32.mrb[0].mxu0
        %v3982 = vadd.f32 0.0, %v3981
        %v3983 = vpop.f32.mrb[0].mxu0
        %v3984 = vadd.f32 0.0, %v3983
        %v3985 = vpop.f32.mrb[0].mxu0
        %v3986 = vadd.f32 0.0, %v3985
        %3987 = vdwg.mxu0
        %v3988 = vadd.f32 %v3904, %v3982
        %v3989 = vadd.f32 %v3905, %v3986
        %v3990 = vsub.f32 0.0, %v3900
        %v3991 = vsub.f32 0.0, %v3901
        %v3992 = vadd.f32 %v3990, %v3988
        %v3993 = vadd.f32 %v3991, %v3989
        %v3994 = vadd.f32 %v3900, %v3992
        %v3995 = vadd.f32 %v3901, %v3993
        %v3996 = vmul.f32 %v3988, -2.0
        %v3997 = vmul.f32 %v3989, -2.0
        %v3998 = vadd.f32 %v3988, %v3996
        %v3999 = vadd.f32 %v3989, %v3997
        %v4001 = vunpack.c.l.b16 %v3938
        %v4002 = vunpack.c.h.b16 %v3938
        %v4003 = vpack.c.b16 %v4001, %v4001
        %v4004 = vpack.c.b16 %v4002, %v4002
        %s4007 = scalar_lea.vmem %s294, 240 [#allocation14]
        %4008 = vst [vmem:[%s4007] sm:$0xf] %v4003
        %4009 = vst [vmem:[%s4007 + $0x4] sm:$0xf] %v4004
        %s4010 = scalar_lea.vmem %s301, 480 [#allocation15]
        %4011 = vst [vmem:[%s4010] sm:$0xff] %v3994
        %4012 = vst [vmem:[%s4010 + $0x8] sm:$0xff] %v3995
        %s4013 = scalar_lea.vmem [#allocation2], 496
        %v4014 = vld [vmem:[%s4013] sm:$0xff]
        %v4015 = vld [vmem:[%s4013 + $0x8] sm:$0xff]
        %v4016 = vsub.f32 0.0, %v3939
        %v4017 = vsub.f32 0.0, %v3940
        %v4018 = vadd.f32 %v4016, %v3943
        %v4019 = vadd.f32 %v4017, %v3944
        %v4020 = vadd.f32 %v3939, %v4018
        %v4021 = vadd.f32 %v3940, %v4019
        %v4022 = vmul.f32 %v3943, -2.0
        %v4023 = vmul.f32 %v3944, -2.0
        %v4024 = vadd.f32 %v3943, %v4022
        %v4025 = vadd.f32 %v3944, %v4023
        %vm4026 = vcmp.gt.f32.partialorder %v4020, 1.0
        %vm4027 = vcmp.gt.f32.partialorder %v4021, 1.0
        %v4028 = vsel %vm4026, 1, 0
        %v4029 = vsel %vm4027, 1, 0
        %v4030 = vcvt.s32.f32 %v4028
        %v4031 = vcvt.s32.f32 %v4029
        %v4032 = vpack.c.bf16 %v4031, %v4030
        %v4033 = vsel %vm4026, 0.0, %v4020
        %v4034 = vsel %vm4027, 0.0, %v4021
        %v4035 = vadd.f32 %v4024, %v4014
        %v4036 = vadd.f32 %v4025, %v4015
        %v4037 = vadd.f32 %v4035, %v3980
        %v4038 = vadd.f32 %v4036, %v3984
        %4039 = vmatprep.subr.bf16.mxu0 %v1096
        %4040 = vmatpush1.bf16.msra.mxu0 %v1095
        %4041 = vmatprep.subr.bf16.mxu0 %v1098
        %4042 = vmatpush1.bf16.msra.mxu0 %v1097
        %4043 = vmatprep.subr.bf16.mxu0 %v1100
        %4044 = vmatpush1.bf16.msra.mxu0 %v1099
        %4045 = vmatprep.subr.bf16.mxu0 %v1102
        %4046 = vmatpush1.bf16.msra.mxu0 %v1101
        %4047 = vmatprep.subr.bf16.mxu0 %v1104
        %4048 = vmatpush1.bf16.msra.mxu0 %v1103
        %4049 = vmatprep.subr.bf16.mxu0 %v1106
        %4050 = vmatpush1.bf16.msra.mxu0 %v1105
        %4051 = vmatprep.subr.bf16.mxu0 %v1108
        %4052 = vmatpush1.bf16.msra.mxu0 %v1107
        %4053 = vmatprep.subr.bf16.mxu0 %v1110
        %4054 = vmatpush1.bf16.msra.mxu0 %v1109
        %4055 = vmatprep.subr.bf16.mxu0 0
        %4056 = vmatpush1.bf16.msra.mxu0 0
        %4057 = vmatprep.subr.bf16.mxu0 0
        %4058 = vmatpush1.bf16.msra.mxu0 0
        %4059 = vmatprep.subr.bf16.mxu0 0
        %4060 = vmatpush1.bf16.msra.mxu0 0
        %4061 = vmatprep.subr.bf16.mxu0 0
        %4062 = vmatpush1.bf16.msra.mxu0 0
        %4063 = vmatprep.subr.bf16.mxu0 0
        %4064 = vmatpush1.bf16.msra.mxu0 0
        %4065 = vmatprep.subr.bf16.mxu0 0
        %4066 = vmatpush1.bf16.msra.mxu0 0
        %4067 = vmatprep.subr.bf16.mxu0 0
        %4068 = vmatpush1.bf16.msra.mxu0 0
        %4069 = vmatprep.subr.bf16.mxu0 0
        %4070 = vmatpush1.bf16.msra.mxu0 0
        %4071 = vmatprep.mubr.bf16.mxu0 0
        %4072 = vmatmul.mubr.bf16.gmra.mrb[0].mxu0 %v4032
        %v4073 = vpop.f32.mrb[0].mxu0
        %v4074 = vadd.f32 0.0, %v4073
        %v4075 = vpop.f32.mrb[0].mxu0
        %v4076 = vadd.f32 0.0, %v4075
        %v4077 = vpop.f32.mrb[0].mxu0
        %v4078 = vadd.f32 0.0, %v4077
        %v4079 = vpop.f32.mrb[0].mxu0
        %v4080 = vadd.f32 0.0, %v4079
        %4081 = vdwg.mxu0
        %v4082 = vadd.f32 %v3998, %v4076
        %v4083 = vadd.f32 %v3999, %v4080
        %v4084 = vsub.f32 0.0, %v3994
        %v4085 = vsub.f32 0.0, %v3995
        %v4086 = vadd.f32 %v4084, %v4082
        %v4087 = vadd.f32 %v4085, %v4083
        %v4088 = vadd.f32 %v3994, %v4086
        %v4089 = vadd.f32 %v3995, %v4087
        %v4090 = vmul.f32 %v4082, -2.0
        %v4091 = vmul.f32 %v4083, -2.0
        %v4092 = vadd.f32 %v4082, %v4090
        %v4093 = vadd.f32 %v4083, %v4091
        %v4095 = vunpack.c.l.b16 %v4032
        %v4096 = vunpack.c.h.b16 %v4032
        %v4097 = vpack.c.b16 %v4095, %v4095
        %v4098 = vpack.c.b16 %v4096, %v4096
        %s4101 = scalar_lea.vmem %s294, 248 [#allocation14]
        %4102 = vst [vmem:[%s4101] sm:$0xf] %v4097
        %4103 = vst [vmem:[%s4101 + $0x4] sm:$0xf] %v4098
        %s4104 = scalar_lea.vmem %s301, 496 [#allocation15]
        %4105 = vst [vmem:[%s4104] sm:$0xff] %v4088
        %4106 = vst [vmem:[%s4104 + $0x8] sm:$0xff] %v4089
        %4107 = vst [vmem:[#allocation3] sm:$0xff] %v4033
        %4108 = vst [vmem:[#allocation3 + $0x8] sm:$0xff] %v4034
        %4109 = vst [vmem:[#allocation4] sm:$0xff] %v4037
        %4110 = vst [vmem:[#allocation4 + $0x8] sm:$0xff] %v4038
        %4111 = vst [vmem:[#allocation5] sm:$0xff] %v4074
        %4112 = vst [vmem:[#allocation5 + $0x8] sm:$0xff] %v4078
        %4113 = vst [vmem:[#allocation6] sm:$0xff] %v4088
        %4114 = vst [vmem:[#allocation6 + $0x8] sm:$0xff] %v4089
        %4115 = vst [vmem:[#allocation7] sm:$0xff] %v4092
        %4116 = vst [vmem:[#allocation7 + $0x8] sm:$0xff] %v4093
        %s4117 = sand.u32 %s118, 1
        %s4118 = scalar_lea.sflag [#allocation10], %s4117
        %s4119 = sand.u32 %s118, 1
        %s4120 = smul.addr %s4119, 256
        %s4121 = scalar_lea.vmem [#allocation14], %s4120
        %s4122 = sand.u32 %s146, 1
        %s4123 = scalar_lea.sflag [#allocation16], %s4122
        %s4124 = sand.u32 %s146, 1
        %s4125 = smul.addr %s4124, 512
        %s4126 = scalar_lea.vmem [#allocation15], %s4125
        // Predicated region
        $region49: #{memory_net_forward.1} parent=31 // pred_check
          %p4127 = pneg %p128
        $region50: #{memory_net_forward.1} parent=31 // pred_check_branch
          %4129 = sbr.rel (%p4127) target = $region52
        $region51: #{memory_net_forward.1} parent=31 // pred_region
          #allocation20 [shape = 'u32[6]{0}', space=smem, size = 0x18, scoped, tag = 'DMA stride descriptor']
          %s4130 = smul.u32 32, %s31
          %s4131 = smul.u32 2, %s30
          %s4133 = ssub.s32 4096, 4096
          %4134 = vsyncadd %s4118, %s4133
          %s4135 = smul.addr %s4130, 4
          %s4136 = sadd.s32 %s4131, %s4135
          %s4137 = smul.addr %s4136, 64
          %s4138 = scalar_lea.hbm %s3, %s4137
          %s4140 = sshll.u32 1, 14
          %s4141 = sxor.u32 4294967295, %s4140
          %s4144 = sshll.u32 7, 18
          %s4145 = sxor.u32 4294967295, %s4144
          %s4146 = sand.u32 0, %s4145
          %s4148 = sor.u32 %s4146, 0
          %s4150 = sshll.u32 3, 24
          %s4151 = sxor.u32 4294967295, %s4150
          %s4152 = sand.u32 %s4148, %s4151
          %s4154 = sor.u32 %s4152, 0
          %s4155 = sshll.u32 %s4121, 4
          %s4156 = int_to_ptr.vmem [resolvable:$true] %s4155
          %4162 = sst [smem:[#allocation20]] 128
          %s4163 = scalar_lea.smem [#allocation20], 1
          %4164 = sst [smem:[%s4163]] 256
          %s4165 = scalar_lea.smem [#allocation20], 2
          %4166 = sst [smem:[%s4165]] 2
          %s4167 = scalar_lea.smem [#allocation20], 3
          %4168 = sst [smem:[%s4167]] 64
          %s4169 = scalar_lea.smem [#allocation20], 4
          %4170 = sst [smem:[%s4169]] 64
          %s4171 = scalar_lea.smem [#allocation20], 5
          %4172 = sst [smem:[%s4171]] 4
          %4174 = dma.general %s4156, 4096, %s4138, %s4118, [#allocation19], [#allocation20], %s4154, 0
        $region52: #{memory_net_forward.1} parent=31 // pred_fallthru
          _
        // Predicated region
        $region53: #{memory_net_forward.1} parent=31 // pred_check
          %p4175 = pneg %p156
        $region54: #{memory_net_forward.1} parent=31 // pred_check_branch
          %4177 = sbr.rel (%p4175) target = $region56
        $region55: #{memory_net_forward.1} parent=31 // pred_region
          #allocation22 [shape = 'u32[6]{0}', space=smem, size = 0x18, scoped, tag = 'DMA stride descriptor']
          %s4178 = smul.u32 32, %s31
          %s4179 = smul.u32 2, %s30
          %s4181 = ssub.s32 8192, 8192
          %4182 = vsyncadd %s4123, %s4181
          %s4183 = smul.addr %s4178, 4
          %s4184 = sadd.s32 %s4179, %s4183
          %s4185 = smul.addr %s4184, 128
          %s4186 = scalar_lea.hbm %s4, %s4185
          %s4188 = sshll.u32 1, 14
          %s4189 = sxor.u32 4294967295, %s4188
          %s4192 = sshll.u32 7, 18
          %s4193 = sxor.u32 4294967295, %s4192
          %s4194 = sand.u32 0, %s4193
          %s4196 = sor.u32 %s4194, 0
          %s4198 = sshll.u32 3, 24
          %s4199 = sxor.u32 4294967295, %s4198
          %s4200 = sand.u32 %s4196, %s4199
          %s4202 = sor.u32 %s4200, 0
          %s4203 = sshll.u32 %s4126, 4
          %s4204 = int_to_ptr.vmem [resolvable:$true] %s4203
          %4210 = sst [smem:[#allocation22]] 256
          %s4211 = scalar_lea.smem [#allocation22], 1
          %4212 = sst [smem:[%s4211]] 512
          %s4213 = scalar_lea.smem [#allocation22], 2
          %4214 = sst [smem:[%s4213]] 2
          %s4215 = scalar_lea.smem [#allocation22], 3
          %4216 = sst [smem:[%s4215]] 128
          %s4217 = scalar_lea.smem [#allocation22], 4
          %4218 = sst [smem:[%s4217]] 128
          %s4219 = scalar_lea.smem [#allocation22], 5
          %4220 = sst [smem:[%s4219]] 8
          %4222 = dma.general %s4204, 8192, %s4186, %s4123, [#allocation21], [#allocation22], %s4202, 0
        $region56: #{memory_net_forward.1} parent=31 // pred_fallthru
          _
      $region32: #{memory_net_forward.1} parent=5 // pred_fallthru
        _
      %p4223 = scmp.le.s32.totalorder 2, %s21
      // Predicated region
      $region57: #{memory_net_forward.1} parent=5 // pred_check
        %p4224 = pneg %p4223
      $region58: #{memory_net_forward.1} parent=5 // pred_check_branch
        %4226 = sbr.rel (%p4224) target = $region60
      $region59: #{memory_net_forward.1} parent=5 // pred_region
        %s4227 = ssub.s32 %s21, 2
        // Predicated region
        $region61: #{memory_net_forward.1} parent=59 // pred_check
          %p4228 = pneg %p134
        $region62: #{memory_net_forward.1} parent=59 // pred_check_branch
          %4230 = sbr.rel (%p4228) target = $region64
        $region63: #{memory_net_forward.1} parent=59 // pred_region
          %s4231 = sand.u32 %s119, 1
          %s4232 = scalar_lea.sflag [#allocation10], %s4231
          %s4233 = sand.u32 %s119, 1
          %s4234 = smul.addr %s4233, 256
          %s4235 = scalar_lea.vmem [#allocation14], %s4234
          %4236 = dma.done %s4232, 4096
        $region64: #{memory_net_forward.1} parent=59 // pred_fallthru
          _
        // Predicated region
        $region65: #{memory_net_forward.1} parent=59 // pred_check
          %p4237 = pneg %p162
        $region66: #{memory_net_forward.1} parent=59 // pred_check_branch
          %4239 = sbr.rel (%p4237) target = $region68
        $region67: #{memory_net_forward.1} parent=59 // pred_region
          %s4240 = sand.u32 %s147, 1
          %s4241 = scalar_lea.sflag [#allocation16], %s4240
          %s4242 = sand.u32 %s147, 1
          %s4243 = smul.addr %s4242, 512
          %s4244 = scalar_lea.vmem [#allocation15], %s4243
          %4245 = dma.done %s4241, 8192
        $region68: #{memory_net_forward.1} parent=59 // pred_fallthru
          _
      $region60: #{memory_net_forward.1} parent=5 // pred_fallthru
        _
    $region6: #{memory_net_forward.1} parent=1 // loop_footer
      %s25 = sadd.s32 1, %s21
    $region7: #{memory_net_forward.1} parent=1 // loop_footer_branch
      %20 = sbr.rel target = $region3
    $region8: #{memory_net_forward.1} parent=1 // loop_exit
      _
    %4246 = vsyncpa [#allocation9], 1
    %s4247 = scalar_lea.sflag [#allocation9], 1
    %4248 = vsyncpa %s4247, 1
    %4249 = vsyncpa [#allocation12], 1
    %4250 = vsyncpa [#allocation10], 1
    %s4251 = scalar_lea.sflag [#allocation10], 1
    %4252 = vsyncpa %s4251, 1
    %4253 = vsyncpa [#allocation16], 1
    %s4254 = scalar_lea.sflag [#allocation16], 1
    %4255 = vsyncpa %s4254, 1

</llo_original>
